<compile_context>
chip_gen: v7x
topology: tpu7x:2x2x1
jax: 0.10.0
libtpu: 0.0.40
codegen_flags: <defaults>
</compile_context>

<pallas_src>
import numpy as np

import jax
import jax.numpy as jnp
from jax import lax
from jax.experimental import pallas as pl
from jax.experimental.pallas import tpu as pltpu


# ---------------------------------------------------------------------------
# Flat-canvas geometry.
#   Activations are stored as (channels, flat) with flat index = h * W_pad + w over a
#   zero-padded canvas.  With this layout, the conv read for output (ho, wo) and tap
#   (kh, kw) is simply flat index (ho*W_pad + wo) + (kh*W_pad + kw), i.e. a unit-stride
#   slice of the canvas, and the contraction over input channels is a 2-D matmul.
# ---------------------------------------------------------------------------
_W1P, _R1 = 30, 838   # conv1: 30x30 padded canvas, 838 = 27*30 + 28 output rows
_W2P, _R2 = 16, 222   # conv2: 16x16 padded canvas, 222 = 13*16 + 14
_W3P, _R3 = 7, 17     # conv3:  7x7 canvas (pad 0),  17 =  2*7  + 3


def _make_pool_select(n_out, w_src, w_dst, pad_dst, rows, cols):
    """0/1 matrix: pick the 2x2-pooled (stride-2) positions of the flat conv output and
    scatter them into the interior of the next conv's zero-padded flat canvas."""
    s = np.zeros((rows, cols), np.float32)
    for i in range(n_out):
        for j in range(n_out):
            s[2 * i * w_src + 2 * j, (i + pad_dst) * w_dst + (j + pad_dst)] = 1.0
    return s


_POOL1_SEL = _make_pool_select(14, _W1P, _W2P, 1, _R1 - 1 - _W1P, 16 * 16)  # (807, 256)
_POOL2_SEL = _make_pool_select(7, _W2P, _W3P, 0, _R2 - 1 - _W2P, 7 * 7)     # (205, 49)


# ---------------------------------------------------------------------------
# The single fused Pallas kernel (one image per grid step).
# ---------------------------------------------------------------------------
def _lenet_kernel(x_ref, w1_ref, b1_ref, s1_ref, t1_ref, sel1_ref,
                  w2_ref, b2_ref, s2_ref, t2_ref, sel2_ref,
                  w3_ref, s3_ref, t3_ref,
                  fc1w_ref, fc1b_ref, fc2w_ref, fc2b_ref, o_ref):
    f32 = jnp.float32
    x = x_ref[0]                                            # (1, 900): padded 30x30 input

    # ---- conv1 (1->6, 3x3, pad 1) + bias + ReLU + BN1 ----------------------------------
    acc1 = jnp.zeros((6, _R1), f32)
    for kh in range(3):
        for kw in range(3):
            s = kh * _W1P + kw
            acc1 = acc1 + w1_ref[kh, kw] * x[:, s:s + _R1]  # (6,1) * (1,R1) broadcast MAC
    y1 = jnp.maximum(acc1 + b1_ref[...], 0.0) * s1_ref[...] + t1_ref[...]

    # ---- maxpool 2x2 + build conv2's zero-padded 16x16 canvas --------------------------
    m1 = jnp.maximum(y1[:, 0:_R1 - 1], y1[:, 1:_R1])                 # pairwise max in w
    m1 = jnp.maximum(m1[:, 0:_R1 - 1 - _W1P], m1[:, _W1P:_R1 - 1])   # pairwise max in h
    c2 = jnp.dot(m1, sel1_ref[...], preferred_element_type=f32)      # (6, 256)

    # ---- conv2 (6->16, 3x3, pad 1) + bias + ReLU + BN2 ---------------------------------
    acc2 = jnp.zeros((16, _R2), f32)
    for kh in range(3):
        for kw in range(3):
            s = kh * _W2P + kw
            acc2 = acc2 + jnp.dot(w2_ref[kh, kw], c2[:, s:s + _R2],
                                  preferred_element_type=f32)
    y2 = jnp.maximum(acc2 + b2_ref[...], 0.0) * s2_ref[...] + t2_ref[...]

    # ---- maxpool 2x2 + build conv3's 7x7 canvas (pad 0) --------------------------------
    m2 = jnp.maximum(y2[:, 0:_R2 - 1], y2[:, 1:_R2])
    m2 = jnp.maximum(m2[:, 0:_R2 - 1 - _W2P], m2[:, _W2P:_R2 - 1])
    c3 = jnp.dot(m2, sel2_ref[...], preferred_element_type=f32)      # (16, 49)

    # ---- conv3 (16->64, 5x5, pad 0) + BN3 (conv bias folded into BN shift) -------------
    acc3 = jnp.zeros((64, _R3), f32)
    for kh in range(5):
        for kw in range(5):
            s = kh * _W3P + kw
            acc3 = acc3 + jnp.dot(w3_ref[kh, kw], c3[:, s:s + _R3],
                                  preferred_element_type=f32)
    y3 = acc3 * s3_ref[...] + t3_ref[...]                            # (64, 17)

    # ---- flatten (NCHW order via fc1 weight layout) + fc1 + ReLU + fc2 ------------------
    # TODO(synk): Dropout2d is identity in eval mode; stochastic dropout not implemented.
    h = fc1b_ref[...]                                                # (84, 1)
    for ho in range(3):
        for wo in range(3):
            p = ho * _W3P + wo
            h = h + jnp.dot(fc1w_ref[ho, wo], y3[:, p:p + 1],
                            preferred_element_type=f32)
    h = jnp.maximum(h, 0.0)
    out = jnp.dot(fc2w_ref[...], h, preferred_element_type=f32) + fc2b_ref[...]
    o_ref[0] = out                                                   # (40, 1)


# ---------------------------------------------------------------------------
# Host-side wrapper: weight re-layout, BN folding, single pallas_call.
# ---------------------------------------------------------------------------
def _bn_fold(gamma, beta, mean, var, eps=1e-5):
    scale = gamma / jnp.sqrt(var + eps)
    shift = beta - mean * scale
    return scale, shift


def _zero_index_map(ndim):
    zeros = (0,) * ndim
    return lambda b: zeros


def lenet_forward(x_nchw, p):
    B = x_nchw.shape[0]
    x = x_nchw.astype(jnp.float32).reshape(B, 28, 28)            # Cin == 1
    xp = jnp.pad(x, ((0, 0), (1, 1), (1, 1)))                    # (B, 30, 30)
    xflat = xp.reshape(B, 1, 30 * 30)                            # flat padded canvas

    s1, t1 = _bn_fold(p["bn1_gamma"], p["bn1_beta"], p["bn1_mean"], p["bn1_var"])
    s2, t2 = _bn_fold(p["bn2_gamma"], p["bn2_beta"], p["bn2_mean"], p["bn2_var"])
    s3, t3 = _bn_fold(p["bn3_gamma"], p["bn3_beta"], p["bn3_mean"], p["bn3_var"])

    # conv weights -> (KH, KW, Cout, Cin) so w[kh, kw] is a (Cout, Cin) matmul LHS.
    w1 = jnp.transpose(p["conv1_w"], (2, 3, 0, 1))
    w2 = jnp.transpose(p["conv2_w"], (2, 3, 0, 1))
    w3 = jnp.transpose(p["conv3_w"], (2, 3, 0, 1))

    consts = [
        w1, p["conv1_b"].reshape(6, 1), s1.reshape(6, 1), t1.reshape(6, 1),
        jnp.asarray(_POOL1_SEL),
        w2, p["conv2_b"].reshape(16, 1), s2.reshape(16, 1), t2.reshape(16, 1),
        jnp.asarray(_POOL2_SEL),
        # conv3 has no ReLU -> fold its bias into the BN shift (epilogue specialization).
        w3, s3.reshape(64, 1), (s3 * p["conv3_b"] + t3).reshape(64, 1),
        # fc1 weights arranged as (kh, kw, out=84, c=64): matches the kernel's
        # (channel, ho*7+wo) activation layout and PyTorch's NCHW flatten order.
        jnp.transpose(p["fc1_w"].reshape(84, 64, 3, 3), (2, 3, 0, 1)),
        p["fc1_b"].reshape(84, 1),
        p["fc2_w"],                                               # (40, 84)
        p["fc2_b"].reshape(40, 1),
    ]

    in_specs = [pl.BlockSpec((1, 1, 900), lambda b: (b, 0, 0))]
    in_specs += [pl.BlockSpec(tuple(c.shape), _zero_index_map(c.ndim)) for c in consts]

    out = pl.pallas_call(
        _lenet_kernel,
        out_shape=jax.ShapeDtypeStruct((B, 40, 1), jnp.float32),
        grid=(B,),
        in_specs=in_specs,
        out_specs=pl.BlockSpec((1, 40, 1), lambda b: (b, 0, 0)),
        compiler_params=pltpu.CompilerParams(dimension_semantics=("parallel",)),
    )(xflat, *consts)
    return out.reshape(B, 40)


# ---------------------------------------------------------------------------
# Pure-JAX reference (eval-mode semantics) for correctness checking.
# ---------------------------------------------------------------------------
def lenet_reference(x_nchw, p):
    hi = lax.Precision.HIGHEST
    x = x_nchw.astype(jnp.float32)

    def conv(z, w, b, pad):
        y = lax.conv_general_dilated(
            z, w, window_strides=(1, 1), padding=[(pad, pad), (pad, pad)],
            dimension_numbers=("NCHW", "OIHW", "NCHW"), precision=hi)
        return y + b.reshape(1, -1, 1, 1)

    def bn(z, g, be, m, v, eps=1e-5):
        g = g.reshape(1, -1, 1, 1); be = be.reshape(1, -1, 1, 1)
        m = m.reshape(1, -1, 1, 1); v = v.reshape(1, -1, 1, 1)
        return (z - m) / jnp.sqrt(v + eps) * g + be

    def pool(z):
        return lax.reduce_window(z, -jnp.inf, lax.max,
                                 (1, 1, 2, 2), (1, 1, 2, 2), "VALID")

    y = conv(x, p["conv1_w"], p["conv1_b"], 1)
    y = bn(jnp.maximum(y, 0.0), p["bn1_gamma"], p["bn1_beta"], p["bn1_mean"], p["bn1_var"])
    y = pool(y)
    y = conv(y, p["conv2_w"], p["conv2_b"], 1)
    y = bn(jnp.maximum(y, 0.0), p["bn2_gamma"], p["bn2_beta"], p["bn2_mean"], p["bn2_var"])
    y = pool(y)
    y = conv(y, p["conv3_w"], p["conv3_b"], 0)
    y = bn(y, p["bn3_gamma"], p["bn3_beta"], p["bn3_mean"], p["bn3_var"])
    y = y.reshape(y.shape[0], -1)                                 # NCHW flatten
    y = jnp.maximum(jnp.dot(y, p["fc1_w"].T, precision=hi) + p["fc1_b"], 0.0)
    return jnp.dot(y, p["fc2_w"].T, precision=hi) + p["fc2_b"]


# ---------------------------------------------------------------------------
# Deterministic parameter init (PyTorch-default-style uniform bounds).
# ---------------------------------------------------------------------------
def init_params(key):
    ks = iter(jax.random.split(key, 32))
    p = {}

    def uni(k, shape, bound):
        return jax.random.uniform(k, shape, jnp.float32, -bound, bound)

    def conv(name, cout, cin, kh, kw):
        fan_in = cin * kh * kw
        bound = 1.0 / (fan_in ** 0.5)
        p[name + "_w"] = uni(next(ks), (cout, cin, kh, kw), bound)
        p[name + "_b"] = uni(next(ks), (cout,), bound)

    def bn(name, c):
        p[name + "_gamma"] = jax.random.uniform(next(ks), (c,), jnp.float32, 0.8, 1.2)
        p[name + "_beta"] = uni(next(ks), (c,), 0.1)
        p[name + "_mean"] = uni(next(ks), (c,), 0.1)
        p[name + "_var"] = jax.random.uniform(next(ks), (c,), jnp.float32, 0.5, 1.5)

    def fc(name, nout, nin):
        bound = 1.0 / (nin ** 0.5)
        p[name + "_w"] = uni(next(ks), (nout, nin), bound)
        p[name + "_b"] = uni(next(ks), (nout,), bound)

    conv("conv1", 6, 1, 3, 3);   bn("bn1", 6)
    conv("conv2", 16, 6, 3, 3);  bn("bn2", 16)
    conv("conv3", 64, 16, 5, 5); bn("bn3", 64)
    fc("fc1", 84, 576)
    fc("fc2", 40, 84)
    return p


if __name__ == "__main__":
    key = jax.random.PRNGKey(0)
    k_x, k_p = jax.random.split(key)

    B = 2
    x = jax.random.normal(k_x, (B, 1, 28, 28), jnp.float32)   # NCHW like PyTorch
    params = init_params(k_p)

    out = jax.block_until_ready(jax.jit(lenet_forward)(x, params))
    assert out.shape == (B, 40), out.shape
    assert bool(jnp.all(jnp.isfinite(out)))

    ref = jax.block_until_ready(jax.jit(lenet_reference)(x, params))
    max_err = float(jnp.max(jnp.abs(out - ref)))
    assert max_err < 2e-2, f"mismatch vs reference: max abs err {max_err}"

    print("KERNEL_OK")
</pallas_src>

<mosaic_0001>
module attributes {stable_mosaic.version = 11 : i64} {
  func.func @_lenet_kernel(%arg0: i32, %arg1: memref<1x1x900xf32, #tpu.memory_space<vmem>>, %arg2: memref<3x3x6x1xf32, #tpu.memory_space<vmem>>, %arg3: memref<6x1xf32, #tpu.memory_space<vmem>>, %arg4: memref<6x1xf32, #tpu.memory_space<vmem>>, %arg5: memref<6x1xf32, #tpu.memory_space<vmem>>, %arg6: memref<807x256xf32, #tpu.memory_space<vmem>>, %arg7: memref<3x3x16x6xf32, #tpu.memory_space<vmem>>, %arg8: memref<16x1xf32, #tpu.memory_space<vmem>>, %arg9: memref<16x1xf32, #tpu.memory_space<vmem>>, %arg10: memref<16x1xf32, #tpu.memory_space<vmem>>, %arg11: memref<205x49xf32, #tpu.memory_space<vmem>>, %arg12: memref<5x5x64x16xf32, #tpu.memory_space<vmem>>, %arg13: memref<64x1xf32, #tpu.memory_space<vmem>>, %arg14: memref<64x1xf32, #tpu.memory_space<vmem>>, %arg15: memref<3x3x84x64xf32, #tpu.memory_space<vmem>>, %arg16: memref<84x1xf32, #tpu.memory_space<vmem>>, %arg17: memref<40x84xf32, #tpu.memory_space<vmem>>, %arg18: memref<40x1xf32, #tpu.memory_space<vmem>>, %arg19: memref<1x40x1xf32, #tpu.memory_space<vmem>>) attributes {dimension_semantics = [#tpu.dimension_semantics<parallel>], iteration_bounds = array<i64: 2>, scalar_prefetch = 0 : i64, scratch_operands = 0 : i64, tpu.core_type = #tpu.core_type<tc>, window_params = [{transform_indices = @transform_0, window_bounds = array<i64: 1, 1, 900>}, {pipeline_mode = #tpu.pipeline_mode<synchronous>, transform_indices = @transform_1, window_bounds = array<i64: 3, 3, 6, 1>}, {pipeline_mode = #tpu.pipeline_mode<synchronous>, transform_indices = @transform_2, window_bounds = array<i64: 6, 1>}, {pipeline_mode = #tpu.pipeline_mode<synchronous>, transform_indices = @transform_3, window_bounds = array<i64: 6, 1>}, {pipeline_mode = #tpu.pipeline_mode<synchronous>, transform_indices = @transform_4, window_bounds = array<i64: 6, 1>}, {pipeline_mode = #tpu.pipeline_mode<synchronous>, transform_indices = @transform_5, window_bounds = array<i64: 807, 256>}, {pipeline_mode = #tpu.pipeline_mode<synchronous>, transform_indices = @transform_6, window_bounds = array<i64: 3, 3, 16, 6>}, {pipeline_mode = #tpu.pipeline_mode<synchronous>, transform_indices = @transform_7, window_bounds = array<i64: 16, 1>}, {pipeline_mode = #tpu.pipeline_mode<synchronous>, transform_indices = @transform_8, window_bounds = array<i64: 16, 1>}, {pipeline_mode = #tpu.pipeline_mode<synchronous>, transform_indices = @transform_9, window_bounds = array<i64: 16, 1>}, {pipeline_mode = #tpu.pipeline_mode<synchronous>, transform_indices = @transform_10, window_bounds = array<i64: 205, 49>}, {pipeline_mode = #tpu.pipeline_mode<synchronous>, transform_indices = @transform_11, window_bounds = array<i64: 5, 5, 64, 16>}, {pipeline_mode = #tpu.pipeline_mode<synchronous>, transform_indices = @transform_12, window_bounds = array<i64: 64, 1>}, {pipeline_mode = #tpu.pipeline_mode<synchronous>, transform_indices = @transform_13, window_bounds = array<i64: 64, 1>}, {pipeline_mode = #tpu.pipeline_mode<synchronous>, transform_indices = @transform_14, window_bounds = array<i64: 3, 3, 84, 64>}, {pipeline_mode = #tpu.pipeline_mode<synchronous>, transform_indices = @transform_15, window_bounds = array<i64: 84, 1>}, {pipeline_mode = #tpu.pipeline_mode<synchronous>, transform_indices = @transform_16, window_bounds = array<i64: 40, 84>}, {pipeline_mode = #tpu.pipeline_mode<synchronous>, transform_indices = @transform_17, window_bounds = array<i64: 40, 1>}, {transform_indices = @transform_18, window_bounds = array<i64: 1, 40, 1>}]} {
    %c0 = arith.constant 0 : index
    %c0_0 = arith.constant 0 : index
    %c0_1 = arith.constant 0 : index
    %0 = vector.load %arg1[%c0, %c0_0, %c0_1] : memref<1x1x900xf32, #tpu.memory_space<vmem>>, vector<1x1x900xf32>
    %1 = vector.shape_cast %0 : vector<1x1x900xf32> to vector<1x900xf32>
    %cst = arith.constant 0.000000e+00 : f32
    %2 = vector.broadcast %cst : f32 to vector<6x838xf32>
    %c0_2 = arith.constant 0 : index
    %c0_3 = arith.constant 0 : index
    %c0_4 = arith.constant 0 : index
    %c0_5 = arith.constant 0 : index
    %3 = vector.load %arg2[%c0_2, %c0_3, %c0_4, %c0_5] : memref<3x3x6x1xf32, #tpu.memory_space<vmem>>, vector<1x1x6x1xf32>
    %4 = vector.shape_cast %3 : vector<1x1x6x1xf32> to vector<6x1xf32>
    %5 = vector.extract_strided_slice %1 {offsets = [0, 0], sizes = [1, 838], strides = [1, 1]} : vector<1x900xf32> to vector<1x838xf32>
    %6 = vector.broadcast %4 : vector<6x1xf32> to vector<6x838xf32>
    %7 = vector.broadcast %5 : vector<1x838xf32> to vector<6x838xf32>
    %8 = arith.mulf %6, %7 : vector<6x838xf32>
    %9 = arith.addf %2, %8 : vector<6x838xf32>
    %c0_6 = arith.constant 0 : index
    %c1 = arith.constant 1 : index
    %c0_7 = arith.constant 0 : index
    %c0_8 = arith.constant 0 : index
    %10 = vector.load %arg2[%c0_6, %c1, %c0_7, %c0_8] : memref<3x3x6x1xf32, #tpu.memory_space<vmem>>, vector<1x1x6x1xf32>
    %11 = vector.shape_cast %10 : vector<1x1x6x1xf32> to vector<6x1xf32>
    %12 = vector.extract_strided_slice %1 {offsets = [0, 1], sizes = [1, 838], strides = [1, 1]} : vector<1x900xf32> to vector<1x838xf32>
    %13 = vector.broadcast %11 : vector<6x1xf32> to vector<6x838xf32>
    %14 = vector.broadcast %12 : vector<1x838xf32> to vector<6x838xf32>
    %15 = arith.mulf %13, %14 : vector<6x838xf32>
    %16 = arith.addf %9, %15 : vector<6x838xf32>
    %c0_9 = arith.constant 0 : index
    %c2 = arith.constant 2 : index
    %c0_10 = arith.constant 0 : index
    %c0_11 = arith.constant 0 : index
    %17 = vector.load %arg2[%c0_9, %c2, %c0_10, %c0_11] : memref<3x3x6x1xf32, #tpu.memory_space<vmem>>, vector<1x1x6x1xf32>
    %18 = vector.shape_cast %17 : vector<1x1x6x1xf32> to vector<6x1xf32>
    %19 = vector.extract_strided_slice %1 {offsets = [0, 2], sizes = [1, 838], strides = [1, 1]} : vector<1x900xf32> to vector<1x838xf32>
    %20 = vector.broadcast %18 : vector<6x1xf32> to vector<6x838xf32>
    %21 = vector.broadcast %19 : vector<1x838xf32> to vector<6x838xf32>
    %22 = arith.mulf %20, %21 : vector<6x838xf32>
    %23 = arith.addf %16, %22 : vector<6x838xf32>
    %c1_12 = arith.constant 1 : index
    %c0_13 = arith.constant 0 : index
    %c0_14 = arith.constant 0 : index
    %c0_15 = arith.constant 0 : index
    %24 = vector.load %arg2[%c1_12, %c0_13, %c0_14, %c0_15] : memref<3x3x6x1xf32, #tpu.memory_space<vmem>>, vector<1x1x6x1xf32>
    %25 = vector.shape_cast %24 : vector<1x1x6x1xf32> to vector<6x1xf32>
    %26 = vector.extract_strided_slice %1 {offsets = [0, 30], sizes = [1, 838], strides = [1, 1]} : vector<1x900xf32> to vector<1x838xf32>
    %27 = vector.broadcast %25 : vector<6x1xf32> to vector<6x838xf32>
    %28 = vector.broadcast %26 : vector<1x838xf32> to vector<6x838xf32>
    %29 = arith.mulf %27, %28 : vector<6x838xf32>
    %30 = arith.addf %23, %29 : vector<6x838xf32>
    %c1_16 = arith.constant 1 : index
    %c1_17 = arith.constant 1 : index
    %c0_18 = arith.constant 0 : index
    %c0_19 = arith.constant 0 : index
    %31 = vector.load %arg2[%c1_16, %c1_17, %c0_18, %c0_19] : memref<3x3x6x1xf32, #tpu.memory_space<vmem>>, vector<1x1x6x1xf32>
    %32 = vector.shape_cast %31 : vector<1x1x6x1xf32> to vector<6x1xf32>
    %33 = vector.extract_strided_slice %1 {offsets = [0, 31], sizes = [1, 838], strides = [1, 1]} : vector<1x900xf32> to vector<1x838xf32>
    %34 = vector.broadcast %32 : vector<6x1xf32> to vector<6x838xf32>
    %35 = vector.broadcast %33 : vector<1x838xf32> to vector<6x838xf32>
    %36 = arith.mulf %34, %35 : vector<6x838xf32>
    %37 = arith.addf %30, %36 : vector<6x838xf32>
    %c1_20 = arith.constant 1 : index
    %c2_21 = arith.constant 2 : index
    %c0_22 = arith.constant 0 : index
    %c0_23 = arith.constant 0 : index
    %38 = vector.load %arg2[%c1_20, %c2_21, %c0_22, %c0_23] : memref<3x3x6x1xf32, #tpu.memory_space<vmem>>, vector<1x1x6x1xf32>
    %39 = vector.shape_cast %38 : vector<1x1x6x1xf32> to vector<6x1xf32>
    %40 = vector.extract_strided_slice %1 {offsets = [0, 32], sizes = [1, 838], strides = [1, 1]} : vector<1x900xf32> to vector<1x838xf32>
    %41 = vector.broadcast %39 : vector<6x1xf32> to vector<6x838xf32>
    %42 = vector.broadcast %40 : vector<1x838xf32> to vector<6x838xf32>
    %43 = arith.mulf %41, %42 : vector<6x838xf32>
    %44 = arith.addf %37, %43 : vector<6x838xf32>
    %c2_24 = arith.constant 2 : index
    %c0_25 = arith.constant 0 : index
    %c0_26 = arith.constant 0 : index
    %c0_27 = arith.constant 0 : index
    %45 = vector.load %arg2[%c2_24, %c0_25, %c0_26, %c0_27] : memref<3x3x6x1xf32, #tpu.memory_space<vmem>>, vector<1x1x6x1xf32>
    %46 = vector.shape_cast %45 : vector<1x1x6x1xf32> to vector<6x1xf32>
    %47 = vector.extract_strided_slice %1 {offsets = [0, 60], sizes = [1, 838], strides = [1, 1]} : vector<1x900xf32> to vector<1x838xf32>
    %48 = vector.broadcast %46 : vector<6x1xf32> to vector<6x838xf32>
    %49 = vector.broadcast %47 : vector<1x838xf32> to vector<6x838xf32>
    %50 = arith.mulf %48, %49 : vector<6x838xf32>
    %51 = arith.addf %44, %50 : vector<6x838xf32>
    %c2_28 = arith.constant 2 : index
    %c1_29 = arith.constant 1 : index
    %c0_30 = arith.constant 0 : index
    %c0_31 = arith.constant 0 : index
    %52 = vector.load %arg2[%c2_28, %c1_29, %c0_30, %c0_31] : memref<3x3x6x1xf32, #tpu.memory_space<vmem>>, vector<1x1x6x1xf32>
    %53 = vector.shape_cast %52 : vector<1x1x6x1xf32> to vector<6x1xf32>
    %54 = vector.extract_strided_slice %1 {offsets = [0, 61], sizes = [1, 838], strides = [1, 1]} : vector<1x900xf32> to vector<1x838xf32>
    %55 = vector.broadcast %53 : vector<6x1xf32> to vector<6x838xf32>
    %56 = vector.broadcast %54 : vector<1x838xf32> to vector<6x838xf32>
    %57 = arith.mulf %55, %56 : vector<6x838xf32>
    %58 = arith.addf %51, %57 : vector<6x838xf32>
    %c2_32 = arith.constant 2 : index
    %c2_33 = arith.constant 2 : index
    %c0_34 = arith.constant 0 : index
    %c0_35 = arith.constant 0 : index
    %59 = vector.load %arg2[%c2_32, %c2_33, %c0_34, %c0_35] : memref<3x3x6x1xf32, #tpu.memory_space<vmem>>, vector<1x1x6x1xf32>
    %60 = vector.shape_cast %59 : vector<1x1x6x1xf32> to vector<6x1xf32>
    %61 = vector.extract_strided_slice %1 {offsets = [0, 62], sizes = [1, 838], strides = [1, 1]} : vector<1x900xf32> to vector<1x838xf32>
    %62 = vector.broadcast %60 : vector<6x1xf32> to vector<6x838xf32>
    %63 = vector.broadcast %61 : vector<1x838xf32> to vector<6x838xf32>
    %64 = arith.mulf %62, %63 : vector<6x838xf32>
    %65 = arith.addf %58, %64 : vector<6x838xf32>
    %c0_36 = arith.constant 0 : index
    %c0_37 = arith.constant 0 : index
    %66 = vector.load %arg3[%c0_36, %c0_37] : memref<6x1xf32, #tpu.memory_space<vmem>>, vector<6x1xf32>
    %67 = vector.broadcast %66 : vector<6x1xf32> to vector<6x838xf32>
    %68 = arith.addf %65, %67 : vector<6x838xf32>
    %cst_38 = arith.constant 0.000000e+00 : f32
    %69 = vector.broadcast %cst_38 : f32 to vector<6x838xf32>
    %70 = arith.maximumf %68, %69 : vector<6x838xf32>
    %c0_39 = arith.constant 0 : index
    %c0_40 = arith.constant 0 : index
    %71 = vector.load %arg4[%c0_39, %c0_40] : memref<6x1xf32, #tpu.memory_space<vmem>>, vector<6x1xf32>
    %72 = vector.broadcast %71 : vector<6x1xf32> to vector<6x838xf32>
    %73 = arith.mulf %70, %72 : vector<6x838xf32>
    %c0_41 = arith.constant 0 : index
    %c0_42 = arith.constant 0 : index
    %74 = vector.load %arg5[%c0_41, %c0_42] : memref<6x1xf32, #tpu.memory_space<vmem>>, vector<6x1xf32>
    %75 = vector.broadcast %74 : vector<6x1xf32> to vector<6x838xf32>
    %76 = arith.addf %73, %75 : vector<6x838xf32>
    %77 = vector.extract_strided_slice %76 {offsets = [0, 0], sizes = [6, 837], strides = [1, 1]} : vector<6x838xf32> to vector<6x837xf32>
    %78 = vector.extract_strided_slice %76 {offsets = [0, 1], sizes = [6, 837], strides = [1, 1]} : vector<6x838xf32> to vector<6x837xf32>
    %79 = arith.maximumf %77, %78 : vector<6x837xf32>
    %80 = vector.extract_strided_slice %79 {offsets = [0, 0], sizes = [6, 807], strides = [1, 1]} : vector<6x837xf32> to vector<6x807xf32>
    %81 = vector.extract_strided_slice %79 {offsets = [0, 30], sizes = [6, 807], strides = [1, 1]} : vector<6x837xf32> to vector<6x807xf32>
    %82 = arith.maximumf %80, %81 : vector<6x807xf32>
    %c0_43 = arith.constant 0 : index
    %c0_44 = arith.constant 0 : index
    %83 = vector.load %arg6[%c0_43, %c0_44] : memref<807x256xf32, #tpu.memory_space<vmem>>, vector<807x256xf32>
    %cst_45 = arith.constant dense<0.000000e+00> : vector<6x256xf32>
    %84 = tpu.matmul %82, %83, %cst_45 {dimension_numbers = #tpu.dot_dimension_numbers<[1], [0], [0], [1], [0, 0, 1, 1], [], []>} : vector<6x807xf32>, vector<807x256xf32>, vector<6x256xf32> -> vector<6x256xf32>
    %cst_46 = arith.constant 0.000000e+00 : f32
    %85 = vector.broadcast %cst_46 : f32 to vector<16x222xf32>
    %c0_47 = arith.constant 0 : index
    %c0_48 = arith.constant 0 : index
    %c0_49 = arith.constant 0 : index
    %c0_50 = arith.constant 0 : index
    %86 = vector.load %arg7[%c0_47, %c0_48, %c0_49, %c0_50] : memref<3x3x16x6xf32, #tpu.memory_space<vmem>>, vector<1x1x16x6xf32>
    %87 = vector.shape_cast %86 : vector<1x1x16x6xf32> to vector<16x6xf32>
    %88 = vector.extract_strided_slice %84 {offsets = [0, 0], sizes = [6, 222], strides = [1, 1]} : vector<6x256xf32> to vector<6x222xf32>
    %cst_51 = arith.constant dense<0.000000e+00> : vector<16x222xf32>
    %89 = tpu.matmul %87, %88, %cst_51 {dimension_numbers = #tpu.dot_dimension_numbers<[1], [0], [0], [1], [0, 0, 1, 1], [], []>} : vector<16x6xf32>, vector<6x222xf32>, vector<16x222xf32> -> vector<16x222xf32>
    %90 = arith.addf %85, %89 : vector<16x222xf32>
    %c0_52 = arith.constant 0 : index
    %c1_53 = arith.constant 1 : index
    %c0_54 = arith.constant 0 : index
    %c0_55 = arith.constant 0 : index
    %91 = vector.load %arg7[%c0_52, %c1_53, %c0_54, %c0_55] : memref<3x3x16x6xf32, #tpu.memory_space<vmem>>, vector<1x1x16x6xf32>
    %92 = vector.shape_cast %91 : vector<1x1x16x6xf32> to vector<16x6xf32>
    %93 = vector.extract_strided_slice %84 {offsets = [0, 1], sizes = [6, 222], strides = [1, 1]} : vector<6x256xf32> to vector<6x222xf32>
    %cst_56 = arith.constant dense<0.000000e+00> : vector<16x222xf32>
    %94 = tpu.matmul %92, %93, %cst_56 {dimension_numbers = #tpu.dot_dimension_numbers<[1], [0], [0], [1], [0, 0, 1, 1], [], []>} : vector<16x6xf32>, vector<6x222xf32>, vector<16x222xf32> -> vector<16x222xf32>
    %95 = arith.addf %90, %94 : vector<16x222xf32>
    %c0_57 = arith.constant 0 : index
    %c2_58 = arith.constant 2 : index
    %c0_59 = arith.constant 0 : index
    %c0_60 = arith.constant 0 : index
    %96 = vector.load %arg7[%c0_57, %c2_58, %c0_59, %c0_60] : memref<3x3x16x6xf32, #tpu.memory_space<vmem>>, vector<1x1x16x6xf32>
    %97 = vector.shape_cast %96 : vector<1x1x16x6xf32> to vector<16x6xf32>
    %98 = vector.extract_strided_slice %84 {offsets = [0, 2], sizes = [6, 222], strides = [1, 1]} : vector<6x256xf32> to vector<6x222xf32>
    %cst_61 = arith.constant dense<0.000000e+00> : vector<16x222xf32>
    %99 = tpu.matmul %97, %98, %cst_61 {dimension_numbers = #tpu.dot_dimension_numbers<[1], [0], [0], [1], [0, 0, 1, 1], [], []>} : vector<16x6xf32>, vector<6x222xf32>, vector<16x222xf32> -> vector<16x222xf32>
    %100 = arith.addf %95, %99 : vector<16x222xf32>
    %c1_62 = arith.constant 1 : index
    %c0_63 = arith.constant 0 : index
    %c0_64 = arith.constant 0 : index
    %c0_65 = arith.constant 0 : index
    %101 = vector.load %arg7[%c1_62, %c0_63, %c0_64, %c0_65] : memref<3x3x16x6xf32, #tpu.memory_space<vmem>>, vector<1x1x16x6xf32>
    %102 = vector.shape_cast %101 : vector<1x1x16x6xf32> to vector<16x6xf32>
    %103 = vector.extract_strided_slice %84 {offsets = [0, 16], sizes = [6, 222], strides = [1, 1]} : vector<6x256xf32> to vector<6x222xf32>
    %cst_66 = arith.constant dense<0.000000e+00> : vector<16x222xf32>
    %104 = tpu.matmul %102, %103, %cst_66 {dimension_numbers = #tpu.dot_dimension_numbers<[1], [0], [0], [1], [0, 0, 1, 1], [], []>} : vector<16x6xf32>, vector<6x222xf32>, vector<16x222xf32> -> vector<16x222xf32>
    %105 = arith.addf %100, %104 : vector<16x222xf32>
    %c1_67 = arith.constant 1 : index
    %c1_68 = arith.constant 1 : index
    %c0_69 = arith.constant 0 : index
    %c0_70 = arith.constant 0 : index
    %106 = vector.load %arg7[%c1_67, %c1_68, %c0_69, %c0_70] : memref<3x3x16x6xf32, #tpu.memory_space<vmem>>, vector<1x1x16x6xf32>
    %107 = vector.shape_cast %106 : vector<1x1x16x6xf32> to vector<16x6xf32>
    %108 = vector.extract_strided_slice %84 {offsets = [0, 17], sizes = [6, 222], strides = [1, 1]} : vector<6x256xf32> to vector<6x222xf32>
    %cst_71 = arith.constant dense<0.000000e+00> : vector<16x222xf32>
    %109 = tpu.matmul %107, %108, %cst_71 {dimension_numbers = #tpu.dot_dimension_numbers<[1], [0], [0], [1], [0, 0, 1, 1], [], []>} : vector<16x6xf32>, vector<6x222xf32>, vector<16x222xf32> -> vector<16x222xf32>
    %110 = arith.addf %105, %109 : vector<16x222xf32>
    %c1_72 = arith.constant 1 : index
    %c2_73 = arith.constant 2 : index
    %c0_74 = arith.constant 0 : index
    %c0_75 = arith.constant 0 : index
    %111 = vector.load %arg7[%c1_72, %c2_73, %c0_74, %c0_75] : memref<3x3x16x6xf32, #tpu.memory_space<vmem>>, vector<1x1x16x6xf32>
    %112 = vector.shape_cast %111 : vector<1x1x16x6xf32> to vector<16x6xf32>
    %113 = vector.extract_strided_slice %84 {offsets = [0, 18], sizes = [6, 222], strides = [1, 1]} : vector<6x256xf32> to vector<6x222xf32>
    %cst_76 = arith.constant dense<0.000000e+00> : vector<16x222xf32>
    %114 = tpu.matmul %112, %113, %cst_76 {dimension_numbers = #tpu.dot_dimension_numbers<[1], [0], [0], [1], [0, 0, 1, 1], [], []>} : vector<16x6xf32>, vector<6x222xf32>, vector<16x222xf32> -> vector<16x222xf32>
    %115 = arith.addf %110, %114 : vector<16x222xf32>
    %c2_77 = arith.constant 2 : index
    %c0_78 = arith.constant 0 : index
    %c0_79 = arith.constant 0 : index
    %c0_80 = arith.constant 0 : index
    %116 = vector.load %arg7[%c2_77, %c0_78, %c0_79, %c0_80] : memref<3x3x16x6xf32, #tpu.memory_space<vmem>>, vector<1x1x16x6xf32>
    %117 = vector.shape_cast %116 : vector<1x1x16x6xf32> to vector<16x6xf32>
    %118 = vector.extract_strided_slice %84 {offsets = [0, 32], sizes = [6, 222], strides = [1, 1]} : vector<6x256xf32> to vector<6x222xf32>
    %cst_81 = arith.constant dense<0.000000e+00> : vector<16x222xf32>
    %119 = tpu.matmul %117, %118, %cst_81 {dimension_numbers = #tpu.dot_dimension_numbers<[1], [0], [0], [1], [0, 0, 1, 1], [], []>} : vector<16x6xf32>, vector<6x222xf32>, vector<16x222xf32> -> vector<16x222xf32>
    %120 = arith.addf %115, %119 : vector<16x222xf32>
    %c2_82 = arith.constant 2 : index
    %c1_83 = arith.constant 1 : index
    %c0_84 = arith.constant 0 : index
    %c0_85 = arith.constant 0 : index
    %121 = vector.load %arg7[%c2_82, %c1_83, %c0_84, %c0_85] : memref<3x3x16x6xf32, #tpu.memory_space<vmem>>, vector<1x1x16x6xf32>
    %122 = vector.shape_cast %121 : vector<1x1x16x6xf32> to vector<16x6xf32>
    %123 = vector.extract_strided_slice %84 {offsets = [0, 33], sizes = [6, 222], strides = [1, 1]} : vector<6x256xf32> to vector<6x222xf32>
    %cst_86 = arith.constant dense<0.000000e+00> : vector<16x222xf32>
    %124 = tpu.matmul %122, %123, %cst_86 {dimension_numbers = #tpu.dot_dimension_numbers<[1], [0], [0], [1], [0, 0, 1, 1], [], []>} : vector<16x6xf32>, vector<6x222xf32>, vector<16x222xf32> -> vector<16x222xf32>
    %125 = arith.addf %120, %124 : vector<16x222xf32>
    %c2_87 = arith.constant 2 : index
    %c2_88 = arith.constant 2 : index
    %c0_89 = arith.constant 0 : index
    %c0_90 = arith.constant 0 : index
    %126 = vector.load %arg7[%c2_87, %c2_88, %c0_89, %c0_90] : memref<3x3x16x6xf32, #tpu.memory_space<vmem>>, vector<1x1x16x6xf32>
    %127 = vector.shape_cast %126 : vector<1x1x16x6xf32> to vector<16x6xf32>
    %128 = vector.extract_strided_slice %84 {offsets = [0, 34], sizes = [6, 222], strides = [1, 1]} : vector<6x256xf32> to vector<6x222xf32>
    %cst_91 = arith.constant dense<0.000000e+00> : vector<16x222xf32>
    %129 = tpu.matmul %127, %128, %cst_91 {dimension_numbers = #tpu.dot_dimension_numbers<[1], [0], [0], [1], [0, 0, 1, 1], [], []>} : vector<16x6xf32>, vector<6x222xf32>, vector<16x222xf32> -> vector<16x222xf32>
    %130 = arith.addf %125, %129 : vector<16x222xf32>
    %c0_92 = arith.constant 0 : index
    %c0_93 = arith.constant 0 : index
    %131 = vector.load %arg8[%c0_92, %c0_93] : memref<16x1xf32, #tpu.memory_space<vmem>>, vector<16x1xf32>
    %132 = vector.broadcast %131 : vector<16x1xf32> to vector<16x222xf32>
    %133 = arith.addf %130, %132 : vector<16x222xf32>
    %cst_94 = arith.constant 0.000000e+00 : f32
    %134 = vector.broadcast %cst_94 : f32 to vector<16x222xf32>
    %135 = arith.maximumf %133, %134 : vector<16x222xf32>
    %c0_95 = arith.constant 0 : index
    %c0_96 = arith.constant 0 : index
    %136 = vector.load %arg9[%c0_95, %c0_96] : memref<16x1xf32, #tpu.memory_space<vmem>>, vector<16x1xf32>
    %137 = vector.broadcast %136 : vector<16x1xf32> to vector<16x222xf32>
    %138 = arith.mulf %135, %137 : vector<16x222xf32>
    %c0_97 = arith.constant 0 : index
    %c0_98 = arith.constant 0 : index
    %139 = vector.load %arg10[%c0_97, %c0_98] : memref<16x1xf32, #tpu.memory_space<vmem>>, vector<16x1xf32>
    %140 = vector.broadcast %139 : vector<16x1xf32> to vector<16x222xf32>
    %141 = arith.addf %138, %140 : vector<16x222xf32>
    %142 = vector.extract_strided_slice %141 {offsets = [0, 0], sizes = [16, 221], strides = [1, 1]} : vector<16x222xf32> to vector<16x221xf32>
    %143 = vector.extract_strided_slice %141 {offsets = [0, 1], sizes = [16, 221], strides = [1, 1]} : vector<16x222xf32> to vector<16x221xf32>
    %144 = arith.maximumf %142, %143 : vector<16x221xf32>
    %145 = vector.extract_strided_slice %144 {offsets = [0, 0], sizes = [16, 205], strides = [1, 1]} : vector<16x221xf32> to vector<16x205xf32>
    %146 = vector.extract_strided_slice %144 {offsets = [0, 16], sizes = [16, 205], strides = [1, 1]} : vector<16x221xf32> to vector<16x205xf32>
    %147 = arith.maximumf %145, %146 : vector<16x205xf32>
    %c0_99 = arith.constant 0 : index
    %c0_100 = arith.constant 0 : index
    %148 = vector.load %arg11[%c0_99, %c0_100] : memref<205x49xf32, #tpu.memory_space<vmem>>, vector<205x49xf32>
    %cst_101 = arith.constant dense<0.000000e+00> : vector<16x49xf32>
    %149 = tpu.matmul %147, %148, %cst_101 {dimension_numbers = #tpu.dot_dimension_numbers<[1], [0], [0], [1], [0, 0, 1, 1], [], []>} : vector<16x205xf32>, vector<205x49xf32>, vector<16x49xf32> -> vector<16x49xf32>
    %cst_102 = arith.constant 0.000000e+00 : f32
    %150 = vector.broadcast %cst_102 : f32 to vector<64x17xf32>
    %c0_103 = arith.constant 0 : index
    %c0_104 = arith.constant 0 : index
    %c0_105 = arith.constant 0 : index
    %c0_106 = arith.constant 0 : index
    %151 = vector.load %arg12[%c0_103, %c0_104, %c0_105, %c0_106] : memref<5x5x64x16xf32, #tpu.memory_space<vmem>>, vector<1x1x64x16xf32>
    %152 = vector.shape_cast %151 : vector<1x1x64x16xf32> to vector<64x16xf32>
    %153 = vector.extract_strided_slice %149 {offsets = [0, 0], sizes = [16, 17], strides = [1, 1]} : vector<16x49xf32> to vector<16x17xf32>
    %cst_107 = arith.constant dense<0.000000e+00> : vector<64x17xf32>
    %154 = tpu.matmul %152, %153, %cst_107 {dimension_numbers = #tpu.dot_dimension_numbers<[1], [0], [0], [1], [0, 0, 1, 1], [], []>} : vector<64x16xf32>, vector<16x17xf32>, vector<64x17xf32> -> vector<64x17xf32>
    %155 = arith.addf %150, %154 : vector<64x17xf32>
    %c0_108 = arith.constant 0 : index
    %c1_109 = arith.constant 1 : index
    %c0_110 = arith.constant 0 : index
    %c0_111 = arith.constant 0 : index
    %156 = vector.load %arg12[%c0_108, %c1_109, %c0_110, %c0_111] : memref<5x5x64x16xf32, #tpu.memory_space<vmem>>, vector<1x1x64x16xf32>
    %157 = vector.shape_cast %156 : vector<1x1x64x16xf32> to vector<64x16xf32>
    %158 = vector.extract_strided_slice %149 {offsets = [0, 1], sizes = [16, 17], strides = [1, 1]} : vector<16x49xf32> to vector<16x17xf32>
    %cst_112 = arith.constant dense<0.000000e+00> : vector<64x17xf32>
    %159 = tpu.matmul %157, %158, %cst_112 {dimension_numbers = #tpu.dot_dimension_numbers<[1], [0], [0], [1], [0, 0, 1, 1], [], []>} : vector<64x16xf32>, vector<16x17xf32>, vector<64x17xf32> -> vector<64x17xf32>
    %160 = arith.addf %155, %159 : vector<64x17xf32>
    %c0_113 = arith.constant 0 : index
    %c2_114 = arith.constant 2 : index
    %c0_115 = arith.constant 0 : index
    %c0_116 = arith.constant 0 : index
    %161 = vector.load %arg12[%c0_113, %c2_114, %c0_115, %c0_116] : memref<5x5x64x16xf32, #tpu.memory_space<vmem>>, vector<1x1x64x16xf32>
    %162 = vector.shape_cast %161 : vector<1x1x64x16xf32> to vector<64x16xf32>
    %163 = vector.extract_strided_slice %149 {offsets = [0, 2], sizes = [16, 17], strides = [1, 1]} : vector<16x49xf32> to vector<16x17xf32>
    %cst_117 = arith.constant dense<0.000000e+00> : vector<64x17xf32>
    %164 = tpu.matmul %162, %163, %cst_117 {dimension_numbers = #tpu.dot_dimension_numbers<[1], [0], [0], [1], [0, 0, 1, 1], [], []>} : vector<64x16xf32>, vector<16x17xf32>, vector<64x17xf32> -> vector<64x17xf32>
    %165 = arith.addf %160, %164 : vector<64x17xf32>
    %c0_118 = arith.constant 0 : index
    %c3 = arith.constant 3 : index
    %c0_119 = arith.constant 0 : index
    %c0_120 = arith.constant 0 : index
    %166 = vector.load %arg12[%c0_118, %c3, %c0_119, %c0_120] : memref<5x5x64x16xf32, #tpu.memory_space<vmem>>, vector<1x1x64x16xf32>
    %167 = vector.shape_cast %166 : vector<1x1x64x16xf32> to vector<64x16xf32>
    %168 = vector.extract_strided_slice %149 {offsets = [0, 3], sizes = [16, 17], strides = [1, 1]} : vector<16x49xf32> to vector<16x17xf32>
    %cst_121 = arith.constant dense<0.000000e+00> : vector<64x17xf32>
    %169 = tpu.matmul %167, %168, %cst_121 {dimension_numbers = #tpu.dot_dimension_numbers<[1], [0], [0], [1], [0, 0, 1, 1], [], []>} : vector<64x16xf32>, vector<16x17xf32>, vector<64x17xf32> -> vector<64x17xf32>
    %170 = arith.addf %165, %169 : vector<64x17xf32>
    %c0_122 = arith.constant 0 : index
    %c4 = arith.constant 4 : index
    %c0_123 = arith.constant 0 : index
    %c0_124 = arith.constant 0 : index
    %171 = vector.load %arg12[%c0_122, %c4, %c0_123, %c0_124] : memref<5x5x64x16xf32, #tpu.memory_space<vmem>>, vector<1x1x64x16xf32>
    %172 = vector.shape_cast %171 : vector<1x1x64x16xf32> to vector<64x16xf32>
    %173 = vector.extract_strided_slice %149 {offsets = [0, 4], sizes = [16, 17], strides = [1, 1]} : vector<16x49xf32> to vector<16x17xf32>
    %cst_125 = arith.constant dense<0.000000e+00> : vector<64x17xf32>
    %174 = tpu.matmul %172, %173, %cst_125 {dimension_numbers = #tpu.dot_dimension_numbers<[1], [0], [0], [1], [0, 0, 1, 1], [], []>} : vector<64x16xf32>, vector<16x17xf32>, vector<64x17xf32> -> vector<64x17xf32>
    %175 = arith.addf %170, %174 : vector<64x17xf32>
    %c1_126 = arith.constant 1 : index
    %c0_127 = arith.constant 0 : index
    %c0_128 = arith.constant 0 : index
    %c0_129 = arith.constant 0 : index
    %176 = vector.load %arg12[%c1_126, %c0_127, %c0_128, %c0_129] : memref<5x5x64x16xf32, #tpu.memory_space<vmem>>, vector<1x1x64x16xf32>
    %177 = vector.shape_cast %176 : vector<1x1x64x16xf32> to vector<64x16xf32>
    %178 = vector.extract_strided_slice %149 {offsets = [0, 7], sizes = [16, 17], strides = [1, 1]} : vector<16x49xf32> to vector<16x17xf32>
    %cst_130 = arith.constant dense<0.000000e+00> : vector<64x17xf32>
    %179 = tpu.matmul %177, %178, %cst_130 {dimension_numbers = #tpu.dot_dimension_numbers<[1], [0], [0], [1], [0, 0, 1, 1], [], []>} : vector<64x16xf32>, vector<16x17xf32>, vector<64x17xf32> -> vector<64x17xf32>
    %180 = arith.addf %175, %179 : vector<64x17xf32>
    %c1_131 = arith.constant 1 : index
    %c1_132 = arith.constant 1 : index
    %c0_133 = arith.constant 0 : index
    %c0_134 = arith.constant 0 : index
    %181 = vector.load %arg12[%c1_131, %c1_132, %c0_133, %c0_134] : memref<5x5x64x16xf32, #tpu.memory_space<vmem>>, vector<1x1x64x16xf32>
    %182 = vector.shape_cast %181 : vector<1x1x64x16xf32> to vector<64x16xf32>
    %183 = vector.extract_strided_slice %149 {offsets = [0, 8], sizes = [16, 17], strides = [1, 1]} : vector<16x49xf32> to vector<16x17xf32>
    %cst_135 = arith.constant dense<0.000000e+00> : vector<64x17xf32>
    %184 = tpu.matmul %182, %183, %cst_135 {dimension_numbers = #tpu.dot_dimension_numbers<[1], [0], [0], [1], [0, 0, 1, 1], [], []>} : vector<64x16xf32>, vector<16x17xf32>, vector<64x17xf32> -> vector<64x17xf32>
    %185 = arith.addf %180, %184 : vector<64x17xf32>
    %c1_136 = arith.constant 1 : index
    %c2_137 = arith.constant 2 : index
    %c0_138 = arith.constant 0 : index
    %c0_139 = arith.constant 0 : index
    %186 = vector.load %arg12[%c1_136, %c2_137, %c0_138, %c0_139] : memref<5x5x64x16xf32, #tpu.memory_space<vmem>>, vector<1x1x64x16xf32>
    %187 = vector.shape_cast %186 : vector<1x1x64x16xf32> to vector<64x16xf32>
    %188 = vector.extract_strided_slice %149 {offsets = [0, 9], sizes = [16, 17], strides = [1, 1]} : vector<16x49xf32> to vector<16x17xf32>
    %cst_140 = arith.constant dense<0.000000e+00> : vector<64x17xf32>
    %189 = tpu.matmul %187, %188, %cst_140 {dimension_numbers = #tpu.dot_dimension_numbers<[1], [0], [0], [1], [0, 0, 1, 1], [], []>} : vector<64x16xf32>, vector<16x17xf32>, vector<64x17xf32> -> vector<64x17xf32>
    %190 = arith.addf %185, %189 : vector<64x17xf32>
    %c1_141 = arith.constant 1 : index
    %c3_142 = arith.constant 3 : index
    %c0_143 = arith.constant 0 : index
    %c0_144 = arith.constant 0 : index
    %191 = vector.load %arg12[%c1_141, %c3_142, %c0_143, %c0_144] : memref<5x5x64x16xf32, #tpu.memory_space<vmem>>, vector<1x1x64x16xf32>
    %192 = vector.shape_cast %191 : vector<1x1x64x16xf32> to vector<64x16xf32>
    %193 = vector.extract_strided_slice %149 {offsets = [0, 10], sizes = [16, 17], strides = [1, 1]} : vector<16x49xf32> to vector<16x17xf32>
    %cst_145 = arith.constant dense<0.000000e+00> : vector<64x17xf32>
    %194 = tpu.matmul %192, %193, %cst_145 {dimension_numbers = #tpu.dot_dimension_numbers<[1], [0], [0], [1], [0, 0, 1, 1], [], []>} : vector<64x16xf32>, vector<16x17xf32>, vector<64x17xf32> -> vector<64x17xf32>
    %195 = arith.addf %190, %194 : vector<64x17xf32>
    %c1_146 = arith.constant 1 : index
    %c4_147 = arith.constant 4 : index
    %c0_148 = arith.constant 0 : index
    %c0_149 = arith.constant 0 : index
    %196 = vector.load %arg12[%c1_146, %c4_147, %c0_148, %c0_149] : memref<5x5x64x16xf32, #tpu.memory_space<vmem>>, vector<1x1x64x16xf32>
    %197 = vector.shape_cast %196 : vector<1x1x64x16xf32> to vector<64x16xf32>
    %198 = vector.extract_strided_slice %149 {offsets = [0, 11], sizes = [16, 17], strides = [1, 1]} : vector<16x49xf32> to vector<16x17xf32>
    %cst_150 = arith.constant dense<0.000000e+00> : vector<64x17xf32>
    %199 = tpu.matmul %197, %198, %cst_150 {dimension_numbers = #tpu.dot_dimension_numbers<[1], [0], [0], [1], [0, 0, 1, 1], [], []>} : vector<64x16xf32>, vector<16x17xf32>, vector<64x17xf32> -> vector<64x17xf32>
    %200 = arith.addf %195, %199 : vector<64x17xf32>
    %c2_151 = arith.constant 2 : index
    %c0_152 = arith.constant 0 : index
    %c0_153 = arith.constant 0 : index
    %c0_154 = arith.constant 0 : index
    %201 = vector.load %arg12[%c2_151, %c0_152, %c0_153, %c0_154] : memref<5x5x64x16xf32, #tpu.memory_space<vmem>>, vector<1x1x64x16xf32>
    %202 = vector.shape_cast %201 : vector<1x1x64x16xf32> to vector<64x16xf32>
    %203 = vector.extract_strided_slice %149 {offsets = [0, 14], sizes = [16, 17], strides = [1, 1]} : vector<16x49xf32> to vector<16x17xf32>
    %cst_155 = arith.constant dense<0.000000e+00> : vector<64x17xf32>
    %204 = tpu.matmul %202, %203, %cst_155 {dimension_numbers = #tpu.dot_dimension_numbers<[1], [0], [0], [1], [0, 0, 1, 1], [], []>} : vector<64x16xf32>, vector<16x17xf32>, vector<64x17xf32> -> vector<64x17xf32>
    %205 = arith.addf %200, %204 : vector<64x17xf32>
    %c2_156 = arith.constant 2 : index
    %c1_157 = arith.constant 1 : index
    %c0_158 = arith.constant 0 : index
    %c0_159 = arith.constant 0 : index
    %206 = vector.load %arg12[%c2_156, %c1_157, %c0_158, %c0_159] : memref<5x5x64x16xf32, #tpu.memory_space<vmem>>, vector<1x1x64x16xf32>
    %207 = vector.shape_cast %206 : vector<1x1x64x16xf32> to vector<64x16xf32>
    %208 = vector.extract_strided_slice %149 {offsets = [0, 15], sizes = [16, 17], strides = [1, 1]} : vector<16x49xf32> to vector<16x17xf32>
    %cst_160 = arith.constant dense<0.000000e+00> : vector<64x17xf32>
    %209 = tpu.matmul %207, %208, %cst_160 {dimension_numbers = #tpu.dot_dimension_numbers<[1], [0], [0], [1], [0, 0, 1, 1], [], []>} : vector<64x16xf32>, vector<16x17xf32>, vector<64x17xf32> -> vector<64x17xf32>
    %210 = arith.addf %205, %209 : vector<64x17xf32>
    %c2_161 = arith.constant 2 : index
    %c2_162 = arith.constant 2 : index
    %c0_163 = arith.constant 0 : index
    %c0_164 = arith.constant 0 : index
    %211 = vector.load %arg12[%c2_161, %c2_162, %c0_163, %c0_164] : memref<5x5x64x16xf32, #tpu.memory_space<vmem>>, vector<1x1x64x16xf32>
    %212 = vector.shape_cast %211 : vector<1x1x64x16xf32> to vector<64x16xf32>
    %213 = vector.extract_strided_slice %149 {offsets = [0, 16], sizes = [16, 17], strides = [1, 1]} : vector<16x49xf32> to vector<16x17xf32>
    %cst_165 = arith.constant dense<0.000000e+00> : vector<64x17xf32>
    %214 = tpu.matmul %212, %213, %cst_165 {dimension_numbers = #tpu.dot_dimension_numbers<[1], [0], [0], [1], [0, 0, 1, 1], [], []>} : vector<64x16xf32>, vector<16x17xf32>, vector<64x17xf32> -> vector<64x17xf32>
    %215 = arith.addf %210, %214 : vector<64x17xf32>
    %c2_166 = arith.constant 2 : index
    %c3_167 = arith.constant 3 : index
    %c0_168 = arith.constant 0 : index
    %c0_169 = arith.constant 0 : index
    %216 = vector.load %arg12[%c2_166, %c3_167, %c0_168, %c0_169] : memref<5x5x64x16xf32, #tpu.memory_space<vmem>>, vector<1x1x64x16xf32>
    %217 = vector.shape_cast %216 : vector<1x1x64x16xf32> to vector<64x16xf32>
    %218 = vector.extract_strided_slice %149 {offsets = [0, 17], sizes = [16, 17], strides = [1, 1]} : vector<16x49xf32> to vector<16x17xf32>
    %cst_170 = arith.constant dense<0.000000e+00> : vector<64x17xf32>
    %219 = tpu.matmul %217, %218, %cst_170 {dimension_numbers = #tpu.dot_dimension_numbers<[1], [0], [0], [1], [0, 0, 1, 1], [], []>} : vector<64x16xf32>, vector<16x17xf32>, vector<64x17xf32> -> vector<64x17xf32>
    %220 = arith.addf %215, %219 : vector<64x17xf32>
    %c2_171 = arith.constant 2 : index
    %c4_172 = arith.constant 4 : index
    %c0_173 = arith.constant 0 : index
    %c0_174 = arith.constant 0 : index
    %221 = vector.load %arg12[%c2_171, %c4_172, %c0_173, %c0_174] : memref<5x5x64x16xf32, #tpu.memory_space<vmem>>, vector<1x1x64x16xf32>
    %222 = vector.shape_cast %221 : vector<1x1x64x16xf32> to vector<64x16xf32>
    %223 = vector.extract_strided_slice %149 {offsets = [0, 18], sizes = [16, 17], strides = [1, 1]} : vector<16x49xf32> to vector<16x17xf32>
    %cst_175 = arith.constant dense<0.000000e+00> : vector<64x17xf32>
    %224 = tpu.matmul %222, %223, %cst_175 {dimension_numbers = #tpu.dot_dimension_numbers<[1], [0], [0], [1], [0, 0, 1, 1], [], []>} : vector<64x16xf32>, vector<16x17xf32>, vector<64x17xf32> -> vector<64x17xf32>
    %225 = arith.addf %220, %224 : vector<64x17xf32>
    %c3_176 = arith.constant 3 : index
    %c0_177 = arith.constant 0 : index
    %c0_178 = arith.constant 0 : index
    %c0_179 = arith.constant 0 : index
    %226 = vector.load %arg12[%c3_176, %c0_177, %c0_178, %c0_179] : memref<5x5x64x16xf32, #tpu.memory_space<vmem>>, vector<1x1x64x16xf32>
    %227 = vector.shape_cast %226 : vector<1x1x64x16xf32> to vector<64x16xf32>
    %228 = vector.extract_strided_slice %149 {offsets = [0, 21], sizes = [16, 17], strides = [1, 1]} : vector<16x49xf32> to vector<16x17xf32>
    %cst_180 = arith.constant dense<0.000000e+00> : vector<64x17xf32>
    %229 = tpu.matmul %227, %228, %cst_180 {dimension_numbers = #tpu.dot_dimension_numbers<[1], [0], [0], [1], [0, 0, 1, 1], [], []>} : vector<64x16xf32>, vector<16x17xf32>, vector<64x17xf32> -> vector<64x17xf32>
    %230 = arith.addf %225, %229 : vector<64x17xf32>
    %c3_181 = arith.constant 3 : index
    %c1_182 = arith.constant 1 : index
    %c0_183 = arith.constant 0 : index
    %c0_184 = arith.constant 0 : index
    %231 = vector.load %arg12[%c3_181, %c1_182, %c0_183, %c0_184] : memref<5x5x64x16xf32, #tpu.memory_space<vmem>>, vector<1x1x64x16xf32>
    %232 = vector.shape_cast %231 : vector<1x1x64x16xf32> to vector<64x16xf32>
    %233 = vector.extract_strided_slice %149 {offsets = [0, 22], sizes = [16, 17], strides = [1, 1]} : vector<16x49xf32> to vector<16x17xf32>
    %cst_185 = arith.constant dense<0.000000e+00> : vector<64x17xf32>
    %234 = tpu.matmul %232, %233, %cst_185 {dimension_numbers = #tpu.dot_dimension_numbers<[1], [0], [0], [1], [0, 0, 1, 1], [], []>} : vector<64x16xf32>, vector<16x17xf32>, vector<64x17xf32> -> vector<64x17xf32>
    %235 = arith.addf %230, %234 : vector<64x17xf32>
    %c3_186 = arith.constant 3 : index
    %c2_187 = arith.constant 2 : index
    %c0_188 = arith.constant 0 : index
    %c0_189 = arith.constant 0 : index
    %236 = vector.load %arg12[%c3_186, %c2_187, %c0_188, %c0_189] : memref<5x5x64x16xf32, #tpu.memory_space<vmem>>, vector<1x1x64x16xf32>
    %237 = vector.shape_cast %236 : vector<1x1x64x16xf32> to vector<64x16xf32>
    %238 = vector.extract_strided_slice %149 {offsets = [0, 23], sizes = [16, 17], strides = [1, 1]} : vector<16x49xf32> to vector<16x17xf32>
    %cst_190 = arith.constant dense<0.000000e+00> : vector<64x17xf32>
    %239 = tpu.matmul %237, %238, %cst_190 {dimension_numbers = #tpu.dot_dimension_numbers<[1], [0], [0], [1], [0, 0, 1, 1], [], []>} : vector<64x16xf32>, vector<16x17xf32>, vector<64x17xf32> -> vector<64x17xf32>
    %240 = arith.addf %235, %239 : vector<64x17xf32>
    %c3_191 = arith.constant 3 : index
    %c3_192 = arith.constant 3 : index
    %c0_193 = arith.constant 0 : index
    %c0_194 = arith.constant 0 : index
    %241 = vector.load %arg12[%c3_191, %c3_192, %c0_193, %c0_194] : memref<5x5x64x16xf32, #tpu.memory_space<vmem>>, vector<1x1x64x16xf32>
    %242 = vector.shape_cast %241 : vector<1x1x64x16xf32> to vector<64x16xf32>
    %243 = vector.extract_strided_slice %149 {offsets = [0, 24], sizes = [16, 17], strides = [1, 1]} : vector<16x49xf32> to vector<16x17xf32>
    %cst_195 = arith.constant dense<0.000000e+00> : vector<64x17xf32>
    %244 = tpu.matmul %242, %243, %cst_195 {dimension_numbers = #tpu.dot_dimension_numbers<[1], [0], [0], [1], [0, 0, 1, 1], [], []>} : vector<64x16xf32>, vector<16x17xf32>, vector<64x17xf32> -> vector<64x17xf32>
    %245 = arith.addf %240, %244 : vector<64x17xf32>
    %c3_196 = arith.constant 3 : index
    %c4_197 = arith.constant 4 : index
    %c0_198 = arith.constant 0 : index
    %c0_199 = arith.constant 0 : index
    %246 = vector.load %arg12[%c3_196, %c4_197, %c0_198, %c0_199] : memref<5x5x64x16xf32, #tpu.memory_space<vmem>>, vector<1x1x64x16xf32>
    %247 = vector.shape_cast %246 : vector<1x1x64x16xf32> to vector<64x16xf32>
    %248 = vector.extract_strided_slice %149 {offsets = [0, 25], sizes = [16, 17], strides = [1, 1]} : vector<16x49xf32> to vector<16x17xf32>
    %cst_200 = arith.constant dense<0.000000e+00> : vector<64x17xf32>
    %249 = tpu.matmul %247, %248, %cst_200 {dimension_numbers = #tpu.dot_dimension_numbers<[1], [0], [0], [1], [0, 0, 1, 1], [], []>} : vector<64x16xf32>, vector<16x17xf32>, vector<64x17xf32> -> vector<64x17xf32>
    %250 = arith.addf %245, %249 : vector<64x17xf32>
    %c4_201 = arith.constant 4 : index
    %c0_202 = arith.constant 0 : index
    %c0_203 = arith.constant 0 : index
    %c0_204 = arith.constant 0 : index
    %251 = vector.load %arg12[%c4_201, %c0_202, %c0_203, %c0_204] : memref<5x5x64x16xf32, #tpu.memory_space<vmem>>, vector<1x1x64x16xf32>
    %252 = vector.shape_cast %251 : vector<1x1x64x16xf32> to vector<64x16xf32>
    %253 = vector.extract_strided_slice %149 {offsets = [0, 28], sizes = [16, 17], strides = [1, 1]} : vector<16x49xf32> to vector<16x17xf32>
    %cst_205 = arith.constant dense<0.000000e+00> : vector<64x17xf32>
    %254 = tpu.matmul %252, %253, %cst_205 {dimension_numbers = #tpu.dot_dimension_numbers<[1], [0], [0], [1], [0, 0, 1, 1], [], []>} : vector<64x16xf32>, vector<16x17xf32>, vector<64x17xf32> -> vector<64x17xf32>
    %255 = arith.addf %250, %254 : vector<64x17xf32>
    %c4_206 = arith.constant 4 : index
    %c1_207 = arith.constant 1 : index
    %c0_208 = arith.constant 0 : index
    %c0_209 = arith.constant 0 : index
    %256 = vector.load %arg12[%c4_206, %c1_207, %c0_208, %c0_209] : memref<5x5x64x16xf32, #tpu.memory_space<vmem>>, vector<1x1x64x16xf32>
    %257 = vector.shape_cast %256 : vector<1x1x64x16xf32> to vector<64x16xf32>
    %258 = vector.extract_strided_slice %149 {offsets = [0, 29], sizes = [16, 17], strides = [1, 1]} : vector<16x49xf32> to vector<16x17xf32>
    %cst_210 = arith.constant dense<0.000000e+00> : vector<64x17xf32>
    %259 = tpu.matmul %257, %258, %cst_210 {dimension_numbers = #tpu.dot_dimension_numbers<[1], [0], [0], [1], [0, 0, 1, 1], [], []>} : vector<64x16xf32>, vector<16x17xf32>, vector<64x17xf32> -> vector<64x17xf32>
    %260 = arith.addf %255, %259 : vector<64x17xf32>
    %c4_211 = arith.constant 4 : index
    %c2_212 = arith.constant 2 : index
    %c0_213 = arith.constant 0 : index
    %c0_214 = arith.constant 0 : index
    %261 = vector.load %arg12[%c4_211, %c2_212, %c0_213, %c0_214] : memref<5x5x64x16xf32, #tpu.memory_space<vmem>>, vector<1x1x64x16xf32>
    %262 = vector.shape_cast %261 : vector<1x1x64x16xf32> to vector<64x16xf32>
    %263 = vector.extract_strided_slice %149 {offsets = [0, 30], sizes = [16, 17], strides = [1, 1]} : vector<16x49xf32> to vector<16x17xf32>
    %cst_215 = arith.constant dense<0.000000e+00> : vector<64x17xf32>
    %264 = tpu.matmul %262, %263, %cst_215 {dimension_numbers = #tpu.dot_dimension_numbers<[1], [0], [0], [1], [0, 0, 1, 1], [], []>} : vector<64x16xf32>, vector<16x17xf32>, vector<64x17xf32> -> vector<64x17xf32>
    %265 = arith.addf %260, %264 : vector<64x17xf32>
    %c4_216 = arith.constant 4 : index
    %c3_217 = arith.constant 3 : index
    %c0_218 = arith.constant 0 : index
    %c0_219 = arith.constant 0 : index
    %266 = vector.load %arg12[%c4_216, %c3_217, %c0_218, %c0_219] : memref<5x5x64x16xf32, #tpu.memory_space<vmem>>, vector<1x1x64x16xf32>
    %267 = vector.shape_cast %266 : vector<1x1x64x16xf32> to vector<64x16xf32>
    %268 = vector.extract_strided_slice %149 {offsets = [0, 31], sizes = [16, 17], strides = [1, 1]} : vector<16x49xf32> to vector<16x17xf32>
    %cst_220 = arith.constant dense<0.000000e+00> : vector<64x17xf32>
    %269 = tpu.matmul %267, %268, %cst_220 {dimension_numbers = #tpu.dot_dimension_numbers<[1], [0], [0], [1], [0, 0, 1, 1], [], []>} : vector<64x16xf32>, vector<16x17xf32>, vector<64x17xf32> -> vector<64x17xf32>
    %270 = arith.addf %265, %269 : vector<64x17xf32>
    %c4_221 = arith.constant 4 : index
    %c4_222 = arith.constant 4 : index
    %c0_223 = arith.constant 0 : index
    %c0_224 = arith.constant 0 : index
    %271 = vector.load %arg12[%c4_221, %c4_222, %c0_223, %c0_224] : memref<5x5x64x16xf32, #tpu.memory_space<vmem>>, vector<1x1x64x16xf32>
    %272 = vector.shape_cast %271 : vector<1x1x64x16xf32> to vector<64x16xf32>
    %273 = vector.extract_strided_slice %149 {offsets = [0, 32], sizes = [16, 17], strides = [1, 1]} : vector<16x49xf32> to vector<16x17xf32>
    %cst_225 = arith.constant dense<0.000000e+00> : vector<64x17xf32>
    %274 = tpu.matmul %272, %273, %cst_225 {dimension_numbers = #tpu.dot_dimension_numbers<[1], [0], [0], [1], [0, 0, 1, 1], [], []>} : vector<64x16xf32>, vector<16x17xf32>, vector<64x17xf32> -> vector<64x17xf32>
    %275 = arith.addf %270, %274 : vector<64x17xf32>
    %c0_226 = arith.constant 0 : index
    %c0_227 = arith.constant 0 : index
    %276 = vector.load %arg13[%c0_226, %c0_227] : memref<64x1xf32, #tpu.memory_space<vmem>>, vector<64x1xf32>
    %277 = vector.broadcast %276 : vector<64x1xf32> to vector<64x17xf32>
    %278 = arith.mulf %275, %277 : vector<64x17xf32>
    %c0_228 = arith.constant 0 : index
    %c0_229 = arith.constant 0 : index
    %279 = vector.load %arg14[%c0_228, %c0_229] : memref<64x1xf32, #tpu.memory_space<vmem>>, vector<64x1xf32>
    %280 = vector.broadcast %279 : vector<64x1xf32> to vector<64x17xf32>
    %281 = arith.addf %278, %280 : vector<64x17xf32>
    %c0_230 = arith.constant 0 : index
    %c0_231 = arith.constant 0 : index
    %282 = vector.load %arg16[%c0_230, %c0_231] : memref<84x1xf32, #tpu.memory_space<vmem>>, vector<84x1xf32>
    %c0_232 = arith.constant 0 : index
    %c0_233 = arith.constant 0 : index
    %c0_234 = arith.constant 0 : index
    %c0_235 = arith.constant 0 : index
    %283 = vector.load %arg15[%c0_232, %c0_233, %c0_234, %c0_235] : memref<3x3x84x64xf32, #tpu.memory_space<vmem>>, vector<1x1x84x64xf32>
    %284 = vector.shape_cast %283 : vector<1x1x84x64xf32> to vector<84x64xf32>
    %285 = vector.extract_strided_slice %281 {offsets = [0, 0], sizes = [64, 1], strides = [1, 1]} : vector<64x17xf32> to vector<64x1xf32>
    %cst_236 = arith.constant dense<0.000000e+00> : vector<84x1xf32>
    %286 = tpu.matmul %284, %285, %cst_236 {dimension_numbers = #tpu.dot_dimension_numbers<[1], [0], [0], [1], [0, 0, 1, 1], [], []>} : vector<84x64xf32>, vector<64x1xf32>, vector<84x1xf32> -> vector<84x1xf32>
    %287 = arith.addf %282, %286 : vector<84x1xf32>
    %c0_237 = arith.constant 0 : index
    %c1_238 = arith.constant 1 : index
    %c0_239 = arith.constant 0 : index
    %c0_240 = arith.constant 0 : index
    %288 = vector.load %arg15[%c0_237, %c1_238, %c0_239, %c0_240] : memref<3x3x84x64xf32, #tpu.memory_space<vmem>>, vector<1x1x84x64xf32>
    %289 = vector.shape_cast %288 : vector<1x1x84x64xf32> to vector<84x64xf32>
    %290 = vector.extract_strided_slice %281 {offsets = [0, 1], sizes = [64, 1], strides = [1, 1]} : vector<64x17xf32> to vector<64x1xf32>
    %cst_241 = arith.constant dense<0.000000e+00> : vector<84x1xf32>
    %291 = tpu.matmul %289, %290, %cst_241 {dimension_numbers = #tpu.dot_dimension_numbers<[1], [0], [0], [1], [0, 0, 1, 1], [], []>} : vector<84x64xf32>, vector<64x1xf32>, vector<84x1xf32> -> vector<84x1xf32>
    %292 = arith.addf %287, %291 : vector<84x1xf32>
    %c0_242 = arith.constant 0 : index
    %c2_243 = arith.constant 2 : index
    %c0_244 = arith.constant 0 : index
    %c0_245 = arith.constant 0 : index
    %293 = vector.load %arg15[%c0_242, %c2_243, %c0_244, %c0_245] : memref<3x3x84x64xf32, #tpu.memory_space<vmem>>, vector<1x1x84x64xf32>
    %294 = vector.shape_cast %293 : vector<1x1x84x64xf32> to vector<84x64xf32>
    %295 = vector.extract_strided_slice %281 {offsets = [0, 2], sizes = [64, 1], strides = [1, 1]} : vector<64x17xf32> to vector<64x1xf32>
    %cst_246 = arith.constant dense<0.000000e+00> : vector<84x1xf32>
    %296 = tpu.matmul %294, %295, %cst_246 {dimension_numbers = #tpu.dot_dimension_numbers<[1], [0], [0], [1], [0, 0, 1, 1], [], []>} : vector<84x64xf32>, vector<64x1xf32>, vector<84x1xf32> -> vector<84x1xf32>
    %297 = arith.addf %292, %296 : vector<84x1xf32>
    %c1_247 = arith.constant 1 : index
    %c0_248 = arith.constant 0 : index
    %c0_249 = arith.constant 0 : index
    %c0_250 = arith.constant 0 : index
    %298 = vector.load %arg15[%c1_247, %c0_248, %c0_249, %c0_250] : memref<3x3x84x64xf32, #tpu.memory_space<vmem>>, vector<1x1x84x64xf32>
    %299 = vector.shape_cast %298 : vector<1x1x84x64xf32> to vector<84x64xf32>
    %300 = vector.extract_strided_slice %281 {offsets = [0, 7], sizes = [64, 1], strides = [1, 1]} : vector<64x17xf32> to vector<64x1xf32>
    %cst_251 = arith.constant dense<0.000000e+00> : vector<84x1xf32>
    %301 = tpu.matmul %299, %300, %cst_251 {dimension_numbers = #tpu.dot_dimension_numbers<[1], [0], [0], [1], [0, 0, 1, 1], [], []>} : vector<84x64xf32>, vector<64x1xf32>, vector<84x1xf32> -> vector<84x1xf32>
    %302 = arith.addf %297, %301 : vector<84x1xf32>
    %c1_252 = arith.constant 1 : index
    %c1_253 = arith.constant 1 : index
    %c0_254 = arith.constant 0 : index
    %c0_255 = arith.constant 0 : index
    %303 = vector.load %arg15[%c1_252, %c1_253, %c0_254, %c0_255] : memref<3x3x84x64xf32, #tpu.memory_space<vmem>>, vector<1x1x84x64xf32>
    %304 = vector.shape_cast %303 : vector<1x1x84x64xf32> to vector<84x64xf32>
    %305 = vector.extract_strided_slice %281 {offsets = [0, 8], sizes = [64, 1], strides = [1, 1]} : vector<64x17xf32> to vector<64x1xf32>
    %cst_256 = arith.constant dense<0.000000e+00> : vector<84x1xf32>
    %306 = tpu.matmul %304, %305, %cst_256 {dimension_numbers = #tpu.dot_dimension_numbers<[1], [0], [0], [1], [0, 0, 1, 1], [], []>} : vector<84x64xf32>, vector<64x1xf32>, vector<84x1xf32> -> vector<84x1xf32>
    %307 = arith.addf %302, %306 : vector<84x1xf32>
    %c1_257 = arith.constant 1 : index
    %c2_258 = arith.constant 2 : index
    %c0_259 = arith.constant 0 : index
    %c0_260 = arith.constant 0 : index
    %308 = vector.load %arg15[%c1_257, %c2_258, %c0_259, %c0_260] : memref<3x3x84x64xf32, #tpu.memory_space<vmem>>, vector<1x1x84x64xf32>
    %309 = vector.shape_cast %308 : vector<1x1x84x64xf32> to vector<84x64xf32>
    %310 = vector.extract_strided_slice %281 {offsets = [0, 9], sizes = [64, 1], strides = [1, 1]} : vector<64x17xf32> to vector<64x1xf32>
    %cst_261 = arith.constant dense<0.000000e+00> : vector<84x1xf32>
    %311 = tpu.matmul %309, %310, %cst_261 {dimension_numbers = #tpu.dot_dimension_numbers<[1], [0], [0], [1], [0, 0, 1, 1], [], []>} : vector<84x64xf32>, vector<64x1xf32>, vector<84x1xf32> -> vector<84x1xf32>
    %312 = arith.addf %307, %311 : vector<84x1xf32>
    %c2_262 = arith.constant 2 : index
    %c0_263 = arith.constant 0 : index
    %c0_264 = arith.constant 0 : index
    %c0_265 = arith.constant 0 : index
    %313 = vector.load %arg15[%c2_262, %c0_263, %c0_264, %c0_265] : memref<3x3x84x64xf32, #tpu.memory_space<vmem>>, vector<1x1x84x64xf32>
    %314 = vector.shape_cast %313 : vector<1x1x84x64xf32> to vector<84x64xf32>
    %315 = vector.extract_strided_slice %281 {offsets = [0, 14], sizes = [64, 1], strides = [1, 1]} : vector<64x17xf32> to vector<64x1xf32>
    %cst_266 = arith.constant dense<0.000000e+00> : vector<84x1xf32>
    %316 = tpu.matmul %314, %315, %cst_266 {dimension_numbers = #tpu.dot_dimension_numbers<[1], [0], [0], [1], [0, 0, 1, 1], [], []>} : vector<84x64xf32>, vector<64x1xf32>, vector<84x1xf32> -> vector<84x1xf32>
    %317 = arith.addf %312, %316 : vector<84x1xf32>
    %c2_267 = arith.constant 2 : index
    %c1_268 = arith.constant 1 : index
    %c0_269 = arith.constant 0 : index
    %c0_270 = arith.constant 0 : index
    %318 = vector.load %arg15[%c2_267, %c1_268, %c0_269, %c0_270] : memref<3x3x84x64xf32, #tpu.memory_space<vmem>>, vector<1x1x84x64xf32>
    %319 = vector.shape_cast %318 : vector<1x1x84x64xf32> to vector<84x64xf32>
    %320 = vector.extract_strided_slice %281 {offsets = [0, 15], sizes = [64, 1], strides = [1, 1]} : vector<64x17xf32> to vector<64x1xf32>
    %cst_271 = arith.constant dense<0.000000e+00> : vector<84x1xf32>
    %321 = tpu.matmul %319, %320, %cst_271 {dimension_numbers = #tpu.dot_dimension_numbers<[1], [0], [0], [1], [0, 0, 1, 1], [], []>} : vector<84x64xf32>, vector<64x1xf32>, vector<84x1xf32> -> vector<84x1xf32>
    %322 = arith.addf %317, %321 : vector<84x1xf32>
    %c2_272 = arith.constant 2 : index
    %c2_273 = arith.constant 2 : index
    %c0_274 = arith.constant 0 : index
    %c0_275 = arith.constant 0 : index
    %323 = vector.load %arg15[%c2_272, %c2_273, %c0_274, %c0_275] : memref<3x3x84x64xf32, #tpu.memory_space<vmem>>, vector<1x1x84x64xf32>
    %324 = vector.shape_cast %323 : vector<1x1x84x64xf32> to vector<84x64xf32>
    %325 = vector.extract_strided_slice %281 {offsets = [0, 16], sizes = [64, 1], strides = [1, 1]} : vector<64x17xf32> to vector<64x1xf32>
    %cst_276 = arith.constant dense<0.000000e+00> : vector<84x1xf32>
    %326 = tpu.matmul %324, %325, %cst_276 {dimension_numbers = #tpu.dot_dimension_numbers<[1], [0], [0], [1], [0, 0, 1, 1], [], []>} : vector<84x64xf32>, vector<64x1xf32>, vector<84x1xf32> -> vector<84x1xf32>
    %327 = arith.addf %322, %326 : vector<84x1xf32>
    %cst_277 = arith.constant 0.000000e+00 : f32
    %328 = vector.broadcast %cst_277 : f32 to vector<84x1xf32>
    %329 = arith.maximumf %327, %328 : vector<84x1xf32>
    %c0_278 = arith.constant 0 : index
    %c0_279 = arith.constant 0 : index
    %330 = vector.load %arg17[%c0_278, %c0_279] : memref<40x84xf32, #tpu.memory_space<vmem>>, vector<40x84xf32>
    %cst_280 = arith.constant dense<0.000000e+00> : vector<40x1xf32>
    %331 = tpu.matmul %330, %329, %cst_280 {dimension_numbers = #tpu.dot_dimension_numbers<[1], [0], [0], [1], [0, 0, 1, 1], [], []>} : vector<40x84xf32>, vector<84x1xf32>, vector<40x1xf32> -> vector<40x1xf32>
    %c0_281 = arith.constant 0 : index
    %c0_282 = arith.constant 0 : index
    %332 = vector.load %arg18[%c0_281, %c0_282] : memref<40x1xf32, #tpu.memory_space<vmem>>, vector<40x1xf32>
    %333 = arith.addf %331, %332 : vector<40x1xf32>
    %c0_283 = arith.constant 0 : index
    %c0_284 = arith.constant 0 : index
    %c0_285 = arith.constant 0 : index
    %334 = vector.load %arg19[%c0_283, %c0_284, %c0_285] : memref<1x40x1xf32, #tpu.memory_space<vmem>>, vector<1x40x1xf32>
    %335 = vector.shape_cast %334 : vector<1x40x1xf32> to vector<40x1xf32>
    %336 = vector.shape_cast %333 : vector<40x1xf32> to vector<1x40x1xf32>
    tpu.vector_store %arg19[%c0_283, %c0_284, %c0_285], %336 {strides = array<i32>} : memref<1x40x1xf32, #tpu.memory_space<vmem>>, vector<1x40x1xf32>,
    return
  }
  func.func @transform_0(%arg0: i32) -> (i32, i32, i32) {
    %c0_i32 = arith.constant 0 : i32
    %c0_i32_0 = arith.constant 0 : i32
    %c0_i32_1 = arith.constant 0 : i32
    return %arg0, %c0_i32, %c0_i32_0 : i32, i32, i32
  }
  func.func @transform_1(%arg0: i32) -> (i32, i32, i32, i32) {
    %c0_i32 = arith.constant 0 : i32
    %c0_i32_0 = arith.constant 0 : i32
    %c0_i32_1 = arith.constant 0 : i32
    %c0_i32_2 = arith.constant 0 : i32
    %c0_i32_3 = arith.constant 0 : i32
    return %c0_i32, %c0_i32_0, %c0_i32_1, %c0_i32_2 : i32, i32, i32, i32
  }
  func.func @transform_2(%arg0: i32) -> (i32, i32) {
    %c0_i32 = arith.constant 0 : i32
    %c0_i32_0 = arith.constant 0 : i32
    %c0_i32_1 = arith.constant 0 : i32
    return %c0_i32, %c0_i32_0 : i32, i32
  }
  func.func @transform_3(%arg0: i32) -> (i32, i32) {
    %c0_i32 = arith.constant 0 : i32
    %c0_i32_0 = arith.constant 0 : i32
    %c0_i32_1 = arith.constant 0 : i32
    return %c0_i32, %c0_i32_0 : i32, i32
  }
  func.func @transform_4(%arg0: i32) -> (i32, i32) {
    %c0_i32 = arith.constant 0 : i32
    %c0_i32_0 = arith.constant 0 : i32
    %c0_i32_1 = arith.constant 0 : i32
    return %c0_i32, %c0_i32_0 : i32, i32
  }
  func.func @transform_5(%arg0: i32) -> (i32, i32) {
    %c0_i32 = arith.constant 0 : i32
    %c0_i32_0 = arith.constant 0 : i32
    %c0_i32_1 = arith.constant 0 : i32
    return %c0_i32, %c0_i32_0 : i32, i32
  }
  func.func @transform_6(%arg0: i32) -> (i32, i32, i32, i32) {
    %c0_i32 = arith.constant 0 : i32
    %c0_i32_0 = arith.constant 0 : i32
    %c0_i32_1 = arith.constant 0 : i32
    %c0_i32_2 = arith.constant 0 : i32
    %c0_i32_3 = arith.constant 0 : i32
    return %c0_i32, %c0_i32_0, %c0_i32_1, %c0_i32_2 : i32, i32, i32, i32
  }
  func.func @transform_7(%arg0: i32) -> (i32, i32) {
    %c0_i32 = arith.constant 0 : i32
    %c0_i32_0 = arith.constant 0 : i32
    %c0_i32_1 = arith.constant 0 : i32
    return %c0_i32, %c0_i32_0 : i32, i32
  }
  func.func @transform_8(%arg0: i32) -> (i32, i32) {
    %c0_i32 = arith.constant 0 : i32
    %c0_i32_0 = arith.constant 0 : i32
    %c0_i32_1 = arith.constant 0 : i32
    return %c0_i32, %c0_i32_0 : i32, i32
  }
  func.func @transform_9(%arg0: i32) -> (i32, i32) {
    %c0_i32 = arith.constant 0 : i32
    %c0_i32_0 = arith.constant 0 : i32
    %c0_i32_1 = arith.constant 0 : i32
    return %c0_i32, %c0_i32_0 : i32, i32
  }
  func.func @transform_10(%arg0: i32) -> (i32, i32) {
    %c0_i32 = arith.constant 0 : i32
    %c0_i32_0 = arith.constant 0 : i32
    %c0_i32_1 = arith.constant 0 : i32
    return %c0_i32, %c0_i32_0 : i32, i32
  }
  func.func @transform_11(%arg0: i32) -> (i32, i32, i32, i32) {
    %c0_i32 = arith.constant 0 : i32
    %c0_i32_0 = arith.constant 0 : i32
    %c0_i32_1 = arith.constant 0 : i32
    %c0_i32_2 = arith.constant 0 : i32
    %c0_i32_3 = arith.constant 0 : i32
    return %c0_i32, %c0_i32_0, %c0_i32_1, %c0_i32_2 : i32, i32, i32, i32
  }
  func.func @transform_12(%arg0: i32) -> (i32, i32) {
    %c0_i32 = arith.constant 0 : i32
    %c0_i32_0 = arith.constant 0 : i32
    %c0_i32_1 = arith.constant 0 : i32
    return %c0_i32, %c0_i32_0 : i32, i32
  }
  func.func @transform_13(%arg0: i32) -> (i32, i32) {
    %c0_i32 = arith.constant 0 : i32
    %c0_i32_0 = arith.constant 0 : i32
    %c0_i32_1 = arith.constant 0 : i32
    return %c0_i32, %c0_i32_0 : i32, i32
  }
  func.func @transform_14(%arg0: i32) -> (i32, i32, i32, i32) {
    %c0_i32 = arith.constant 0 : i32
    %c0_i32_0 = arith.constant 0 : i32
    %c0_i32_1 = arith.constant 0 : i32
    %c0_i32_2 = arith.constant 0 : i32
    %c0_i32_3 = arith.constant 0 : i32
    return %c0_i32, %c0_i32_0, %c0_i32_1, %c0_i32_2 : i32, i32, i32, i32
  }
  func.func @transform_15(%arg0: i32) -> (i32, i32) {
    %c0_i32 = arith.constant 0 : i32
    %c0_i32_0 = arith.constant 0 : i32
    %c0_i32_1 = arith.constant 0 : i32
    return %c0_i32, %c0_i32_0 : i32, i32
  }
  func.func @transform_16(%arg0: i32) -> (i32, i32) {
    %c0_i32 = arith.constant 0 : i32
    %c0_i32_0 = arith.constant 0 : i32
    %c0_i32_1 = arith.constant 0 : i32
    return %c0_i32, %c0_i32_0 : i32, i32
  }
  func.func @transform_17(%arg0: i32) -> (i32, i32) {
    %c0_i32 = arith.constant 0 : i32
    %c0_i32_0 = arith.constant 0 : i32
    %c0_i32_1 = arith.constant 0 : i32
    return %c0_i32, %c0_i32_0 : i32, i32
  }
  func.func @transform_18(%arg0: i32) -> (i32, i32, i32) {
    %c0_i32 = arith.constant 0 : i32
    %c0_i32_0 = arith.constant 0 : i32
    %c0_i32_1 = arith.constant 0 : i32
    return %arg0, %c0_i32, %c0_i32_0 : i32, i32, i32
  }
}

</mosaic_0001>

<llo_original>
// kernel: lenet_forward.1
$region0: #{lenet_forward.1}
  #allocation0 [shape = 'u32[]', space=smem, size = 0x4, offset = 0x4, fixed_abs, tag = 'smem constant byte address 0x4 - core index']
  #allocation1 [shape = 'u32[144,128]{1,0:T(1,128)}', space=vmem, size = 0x12000, scoped, tag = 'internal scratch']
  %s0 = inlined_call_operand.vmem [shape: f32[2,1,900], index: 0, kind: input, shape index: {}]
  %s1 = inlined_call_operand.vmem [shape: f32[3,3,6,1], index: 1, kind: input, shape index: {}]
  %s2 = inlined_call_operand.vmem [shape: f32[6,1], index: 2, kind: input, shape index: {}]
  %s3 = inlined_call_operand.vmem [shape: f32[6,1], index: 3, kind: input, shape index: {}]
  %s4 = inlined_call_operand.vmem [shape: f32[6,1], index: 4, kind: input, shape index: {}]
  %s5 = inlined_call_operand.vmem [shape: f32[807,256], index: 5, kind: input, shape index: {}]
  %s6 = inlined_call_operand.vmem [shape: f32[3,3,16,6], index: 6, kind: input, shape index: {}]
  %s7 = inlined_call_operand.vmem [shape: f32[16,1], index: 7, kind: input, shape index: {}]
  %s8 = inlined_call_operand.vmem [shape: f32[16,1], index: 8, kind: input, shape index: {}]
  %s9 = inlined_call_operand.vmem [shape: f32[16,1], index: 9, kind: input, shape index: {}]
  %s10 = inlined_call_operand.vmem [shape: f32[205,49], index: 10, kind: input, shape index: {}]
  %s11 = inlined_call_operand.vmem [shape: f32[5,5,64,16], index: 11, kind: input, shape index: {}]
  %s12 = inlined_call_operand.vmem [shape: f32[64,1], index: 12, kind: input, shape index: {}]
  %s13 = inlined_call_operand.vmem [shape: f32[64,1], index: 13, kind: input, shape index: {}]
  %s14 = inlined_call_operand.vmem [shape: f32[3,3,84,64], index: 14, kind: input, shape index: {}]
  %s15 = inlined_call_operand.vmem [shape: f32[84,1], index: 15, kind: input, shape index: {}]
  %s16 = inlined_call_operand.vmem [shape: f32[40,84], index: 16, kind: input, shape index: {}]
  %s17 = inlined_call_operand.vmem [shape: f32[40,1], index: 17, kind: input, shape index: {}]
  %s18 = inlined_call_operand.vmem [shape: f32[2,40,1], index: 18, kind: output, shape index: {}]
  %s19 = sld [smem:[#allocation0]]
  $region105: #{lenet_forward.1} parent=0
    _
  %s21 = ssub.s32 1, %s19
  %s22 = scalar_select 0, %s21, %s19
  loop: start=0, step=1, limit=4
  $region2: #{lenet_forward.1} parent=0 // loop_pre_header
    _
  $region3: #{lenet_forward.1} parent=0 // loop_header
    %s24 = sphi 0, %s28
    %p25 = scmp.ge.s32.totalorder %s24, 4
    %s34 = sphi 0, %s36
    %s37 = sphi 0, %s34
    %s38 = sphi 0, %s37
    %s54 = sphi 0, %s38
    %s58 = sphi 0, %s58
    %s60 = sphi 0, %s58
    %s61 = sphi 0, %s60
    %s75 = sphi 0, %s61
    %s79 = sphi 0, %s79
    %s81 = sphi 0, %s79
    %s82 = sphi 0, %s81
    %s96 = sphi 0, %s82
    %s100 = sphi 0, %s100
    %s102 = sphi 0, %s100
    %s103 = sphi 0, %s102
    %s117 = sphi 0, %s103
    %s121 = sphi 0, %s121
    %s123 = sphi 0, %s121
    %s124 = sphi 0, %s123
    %s138 = sphi 0, %s124
    %s142 = sphi 0, %s142
    %s144 = sphi 0, %s142
    %s145 = sphi 0, %s144
    %s159 = sphi 0, %s145
    %s163 = sphi 0, %s163
    %s165 = sphi 0, %s163
    %s166 = sphi 0, %s165
    %s180 = sphi 0, %s166
    %s184 = sphi 0, %s184
    %s186 = sphi 0, %s184
    %s187 = sphi 0, %s186
    %s201 = sphi 0, %s187
    %s205 = sphi 0, %s205
    %s207 = sphi 0, %s205
    %s208 = sphi 0, %s207
    %s222 = sphi 0, %s208
    %s226 = sphi 0, %s226
    %s228 = sphi 0, %s226
    %s229 = sphi 0, %s228
    %s243 = sphi 0, %s229
    %s247 = sphi 0, %s247
    %s249 = sphi 0, %s247
    %s250 = sphi 0, %s249
    %s264 = sphi 0, %s250
    %s268 = sphi 0, %s268
    %s270 = sphi 0, %s268
    %s271 = sphi 0, %s270
    %s285 = sphi 0, %s271
    %s289 = sphi 0, %s289
    %s291 = sphi 0, %s289
    %s292 = sphi 0, %s291
    %s306 = sphi 0, %s292
    %s310 = sphi 0, %s310
    %s312 = sphi 0, %s310
    %s313 = sphi 0, %s312
    %s327 = sphi 0, %s313
    %s331 = sphi 0, %s331
    %s333 = sphi 0, %s331
    %s334 = sphi 0, %s333
    %s348 = sphi 0, %s334
    %s352 = sphi 0, %s352
    %s354 = sphi 0, %s352
    %s355 = sphi 0, %s354
    %s369 = sphi 0, %s355
    %s373 = sphi 0, %s373
    %s375 = sphi 0, %s373
    %s376 = sphi 0, %s375
    %s390 = sphi 0, %s376
    %s394 = sphi 0, %s394
    %s396 = sphi 0, %s394
    %s397 = sphi 0, %s396
    %s411 = sphi 0, %s397
    %s417 = sphi 0, %s419
    %s420 = sphi 0, %s417
    %s421 = sphi 0, %s420
    %s437 = sphi 0, %s421
  $region4: #{lenet_forward.1} parent=0 // loop_header_branch
    %27 = sbr.rel (%p25) target = $region8
  $region5: #{lenet_forward.1} parent=0 // loop_body
    %s29 = ssub.s32 %s24, 1
    %s30 = ssub.s32 %s24, 2
    %s31 = sadd.s32 %s24, 1
    %s32 = ssub.s32 %s24, %s31
    %p33 = scmp.eq.s32.totalorder %s32, 0
    %s35 = sadd.s32 %s34, 1
    %s36 = scalar_select %p33, %s34, %s35
    %p39 = pneg %p33
    %p40 = scmp.eq.s32.totalorder %s24, 1
    %p41 = por %p39, %p40
    %p42 = scmp.ne.s32.totalorder %s34, %s37
    %p43 = scmp.eq.s32.totalorder %s24, 0
    %p44 = por %p42, %p43
    %p45 = scmp.ne.s32.totalorder %s34, %s37
    %p46 = scmp.eq.s32.totalorder %s29, 1
    %p47 = por %p45, %p46
    %p48 = scmp.ne.s32.totalorder %s37, %s38
    %p49 = scmp.eq.s32.totalorder %s29, 0
    %p50 = por %p48, %p49
    %p51 = scmp.ne.s32.totalorder %s37, %s38
    %p52 = scmp.eq.s32.totalorder %s30, 1
    %p53 = por %p51, %p52
    %p55 = scmp.ne.s32.totalorder %s38, %s54
    %p56 = scmp.eq.s32.totalorder %s30, 0
    %p57 = por %p55, %p56
    %s59 = sadd.s32 %s58, 1
    %p62 = scmp.eq.s32.totalorder %s24, 1
    %p63 = scmp.ne.s32.totalorder %s58, %s60
    %p64 = scmp.eq.s32.totalorder %s24, 0
    %p65 = por %p63, %p64
    %p66 = scmp.ne.s32.totalorder %s58, %s60
    %p67 = scmp.eq.s32.totalorder %s29, 1
    %p68 = por %p66, %p67
    %p69 = scmp.ne.s32.totalorder %s60, %s61
    %p70 = scmp.eq.s32.totalorder %s29, 0
    %p71 = por %p69, %p70
    %p72 = scmp.ne.s32.totalorder %s60, %s61
    %p73 = scmp.eq.s32.totalorder %s30, 1
    %p74 = por %p72, %p73
    %p76 = scmp.ne.s32.totalorder %s61, %s75
    %p77 = scmp.eq.s32.totalorder %s30, 0
    %p78 = por %p76, %p77
    %s80 = sadd.s32 %s79, 1
    %p83 = scmp.eq.s32.totalorder %s24, 1
    %p84 = scmp.ne.s32.totalorder %s79, %s81
    %p85 = scmp.eq.s32.totalorder %s24, 0
    %p86 = por %p84, %p85
    %p87 = scmp.ne.s32.totalorder %s79, %s81
    %p88 = scmp.eq.s32.totalorder %s29, 1
    %p89 = por %p87, %p88
    %p90 = scmp.ne.s32.totalorder %s81, %s82
    %p91 = scmp.eq.s32.totalorder %s29, 0
    %p92 = por %p90, %p91
    %p93 = scmp.ne.s32.totalorder %s81, %s82
    %p94 = scmp.eq.s32.totalorder %s30, 1
    %p95 = por %p93, %p94
    %p97 = scmp.ne.s32.totalorder %s82, %s96
    %p98 = scmp.eq.s32.totalorder %s30, 0
    %p99 = por %p97, %p98
    %s101 = sadd.s32 %s100, 1
    %p104 = scmp.eq.s32.totalorder %s24, 1
    %p105 = scmp.ne.s32.totalorder %s100, %s102
    %p106 = scmp.eq.s32.totalorder %s24, 0
    %p107 = por %p105, %p106
    %p108 = scmp.ne.s32.totalorder %s100, %s102
    %p109 = scmp.eq.s32.totalorder %s29, 1
    %p110 = por %p108, %p109
    %p111 = scmp.ne.s32.totalorder %s102, %s103
    %p112 = scmp.eq.s32.totalorder %s29, 0
    %p113 = por %p111, %p112
    %p114 = scmp.ne.s32.totalorder %s102, %s103
    %p115 = scmp.eq.s32.totalorder %s30, 1
    %p116 = por %p114, %p115
    %p118 = scmp.ne.s32.totalorder %s103, %s117
    %p119 = scmp.eq.s32.totalorder %s30, 0
    %p120 = por %p118, %p119
    %s122 = sadd.s32 %s121, 1
    %p125 = scmp.eq.s32.totalorder %s24, 1
    %p126 = scmp.ne.s32.totalorder %s121, %s123
    %p127 = scmp.eq.s32.totalorder %s24, 0
    %p128 = por %p126, %p127
    %p129 = scmp.ne.s32.totalorder %s121, %s123
    %p130 = scmp.eq.s32.totalorder %s29, 1
    %p131 = por %p129, %p130
    %p132 = scmp.ne.s32.totalorder %s123, %s124
    %p133 = scmp.eq.s32.totalorder %s29, 0
    %p134 = por %p132, %p133
    %p135 = scmp.ne.s32.totalorder %s123, %s124
    %p136 = scmp.eq.s32.totalorder %s30, 1
    %p137 = por %p135, %p136
    %p139 = scmp.ne.s32.totalorder %s124, %s138
    %p140 = scmp.eq.s32.totalorder %s30, 0
    %p141 = por %p139, %p140
    %s143 = sadd.s32 %s142, 1
    %p146 = scmp.eq.s32.totalorder %s24, 1
    %p147 = scmp.ne.s32.totalorder %s142, %s144
    %p148 = scmp.eq.s32.totalorder %s24, 0
    %p149 = por %p147, %p148
    %p150 = scmp.ne.s32.totalorder %s142, %s144
    %p151 = scmp.eq.s32.totalorder %s29, 1
    %p152 = por %p150, %p151
    %p153 = scmp.ne.s32.totalorder %s144, %s145
    %p154 = scmp.eq.s32.totalorder %s29, 0
    %p155 = por %p153, %p154
    %p156 = scmp.ne.s32.totalorder %s144, %s145
    %p157 = scmp.eq.s32.totalorder %s30, 1
    %p158 = por %p156, %p157
    %p160 = scmp.ne.s32.totalorder %s145, %s159
    %p161 = scmp.eq.s32.totalorder %s30, 0
    %p162 = por %p160, %p161
    %s164 = sadd.s32 %s163, 1
    %p167 = scmp.eq.s32.totalorder %s24, 1
    %p168 = scmp.ne.s32.totalorder %s163, %s165
    %p169 = scmp.eq.s32.totalorder %s24, 0
    %p170 = por %p168, %p169
    %p171 = scmp.ne.s32.totalorder %s163, %s165
    %p172 = scmp.eq.s32.totalorder %s29, 1
    %p173 = por %p171, %p172
    %p174 = scmp.ne.s32.totalorder %s165, %s166
    %p175 = scmp.eq.s32.totalorder %s29, 0
    %p176 = por %p174, %p175
    %p177 = scmp.ne.s32.totalorder %s165, %s166
    %p178 = scmp.eq.s32.totalorder %s30, 1
    %p179 = por %p177, %p178
    %p181 = scmp.ne.s32.totalorder %s166, %s180
    %p182 = scmp.eq.s32.totalorder %s30, 0
    %p183 = por %p181, %p182
    %s185 = sadd.s32 %s184, 1
    %p188 = scmp.eq.s32.totalorder %s24, 1
    %p189 = scmp.ne.s32.totalorder %s184, %s186
    %p190 = scmp.eq.s32.totalorder %s24, 0
    %p191 = por %p189, %p190
    %p192 = scmp.ne.s32.totalorder %s184, %s186
    %p193 = scmp.eq.s32.totalorder %s29, 1
    %p194 = por %p192, %p193
    %p195 = scmp.ne.s32.totalorder %s186, %s187
    %p196 = scmp.eq.s32.totalorder %s29, 0
    %p197 = por %p195, %p196
    %p198 = scmp.ne.s32.totalorder %s186, %s187
    %p199 = scmp.eq.s32.totalorder %s30, 1
    %p200 = por %p198, %p199
    %p202 = scmp.ne.s32.totalorder %s187, %s201
    %p203 = scmp.eq.s32.totalorder %s30, 0
    %p204 = por %p202, %p203
    %s206 = sadd.s32 %s205, 1
    %p209 = scmp.eq.s32.totalorder %s24, 1
    %p210 = scmp.ne.s32.totalorder %s205, %s207
    %p211 = scmp.eq.s32.totalorder %s24, 0
    %p212 = por %p210, %p211
    %p213 = scmp.ne.s32.totalorder %s205, %s207
    %p214 = scmp.eq.s32.totalorder %s29, 1
    %p215 = por %p213, %p214
    %p216 = scmp.ne.s32.totalorder %s207, %s208
    %p217 = scmp.eq.s32.totalorder %s29, 0
    %p218 = por %p216, %p217
    %p219 = scmp.ne.s32.totalorder %s207, %s208
    %p220 = scmp.eq.s32.totalorder %s30, 1
    %p221 = por %p219, %p220
    %p223 = scmp.ne.s32.totalorder %s208, %s222
    %p224 = scmp.eq.s32.totalorder %s30, 0
    %p225 = por %p223, %p224
    %s227 = sadd.s32 %s226, 1
    %p230 = scmp.eq.s32.totalorder %s24, 1
    %p231 = scmp.ne.s32.totalorder %s226, %s228
    %p232 = scmp.eq.s32.totalorder %s24, 0
    %p233 = por %p231, %p232
    %p234 = scmp.ne.s32.totalorder %s226, %s228
    %p235 = scmp.eq.s32.totalorder %s29, 1
    %p236 = por %p234, %p235
    %p237 = scmp.ne.s32.totalorder %s228, %s229
    %p238 = scmp.eq.s32.totalorder %s29, 0
    %p239 = por %p237, %p238
    %p240 = scmp.ne.s32.totalorder %s228, %s229
    %p241 = scmp.eq.s32.totalorder %s30, 1
    %p242 = por %p240, %p241
    %p244 = scmp.ne.s32.totalorder %s229, %s243
    %p245 = scmp.eq.s32.totalorder %s30, 0
    %p246 = por %p244, %p245
    %s248 = sadd.s32 %s247, 1
    %p251 = scmp.eq.s32.totalorder %s24, 1
    %p252 = scmp.ne.s32.totalorder %s247, %s249
    %p253 = scmp.eq.s32.totalorder %s24, 0
    %p254 = por %p252, %p253
    %p255 = scmp.ne.s32.totalorder %s247, %s249
    %p256 = scmp.eq.s32.totalorder %s29, 1
    %p257 = por %p255, %p256
    %p258 = scmp.ne.s32.totalorder %s249, %s250
    %p259 = scmp.eq.s32.totalorder %s29, 0
    %p260 = por %p258, %p259
    %p261 = scmp.ne.s32.totalorder %s249, %s250
    %p262 = scmp.eq.s32.totalorder %s30, 1
    %p263 = por %p261, %p262
    %p265 = scmp.ne.s32.totalorder %s250, %s264
    %p266 = scmp.eq.s32.totalorder %s30, 0
    %p267 = por %p265, %p266
    %s269 = sadd.s32 %s268, 1
    %p272 = scmp.eq.s32.totalorder %s24, 1
    %p273 = scmp.ne.s32.totalorder %s268, %s270
    %p274 = scmp.eq.s32.totalorder %s24, 0
    %p275 = por %p273, %p274
    %p276 = scmp.ne.s32.totalorder %s268, %s270
    %p277 = scmp.eq.s32.totalorder %s29, 1
    %p278 = por %p276, %p277
    %p279 = scmp.ne.s32.totalorder %s270, %s271
    %p280 = scmp.eq.s32.totalorder %s29, 0
    %p281 = por %p279, %p280
    %p282 = scmp.ne.s32.totalorder %s270, %s271
    %p283 = scmp.eq.s32.totalorder %s30, 1
    %p284 = por %p282, %p283
    %p286 = scmp.ne.s32.totalorder %s271, %s285
    %p287 = scmp.eq.s32.totalorder %s30, 0
    %p288 = por %p286, %p287
    %s290 = sadd.s32 %s289, 1
    %p293 = scmp.eq.s32.totalorder %s24, 1
    %p294 = scmp.ne.s32.totalorder %s289, %s291
    %p295 = scmp.eq.s32.totalorder %s24, 0
    %p296 = por %p294, %p295
    %p297 = scmp.ne.s32.totalorder %s289, %s291
    %p298 = scmp.eq.s32.totalorder %s29, 1
    %p299 = por %p297, %p298
    %p300 = scmp.ne.s32.totalorder %s291, %s292
    %p301 = scmp.eq.s32.totalorder %s29, 0
    %p302 = por %p300, %p301
    %p303 = scmp.ne.s32.totalorder %s291, %s292
    %p304 = scmp.eq.s32.totalorder %s30, 1
    %p305 = por %p303, %p304
    %p307 = scmp.ne.s32.totalorder %s292, %s306
    %p308 = scmp.eq.s32.totalorder %s30, 0
    %p309 = por %p307, %p308
    %s311 = sadd.s32 %s310, 1
    %p314 = scmp.eq.s32.totalorder %s24, 1
    %p315 = scmp.ne.s32.totalorder %s310, %s312
    %p316 = scmp.eq.s32.totalorder %s24, 0
    %p317 = por %p315, %p316
    %p318 = scmp.ne.s32.totalorder %s310, %s312
    %p319 = scmp.eq.s32.totalorder %s29, 1
    %p320 = por %p318, %p319
    %p321 = scmp.ne.s32.totalorder %s312, %s313
    %p322 = scmp.eq.s32.totalorder %s29, 0
    %p323 = por %p321, %p322
    %p324 = scmp.ne.s32.totalorder %s312, %s313
    %p325 = scmp.eq.s32.totalorder %s30, 1
    %p326 = por %p324, %p325
    %p328 = scmp.ne.s32.totalorder %s313, %s327
    %p329 = scmp.eq.s32.totalorder %s30, 0
    %p330 = por %p328, %p329
    %s332 = sadd.s32 %s331, 1
    %p335 = scmp.eq.s32.totalorder %s24, 1
    %p336 = scmp.ne.s32.totalorder %s331, %s333
    %p337 = scmp.eq.s32.totalorder %s24, 0
    %p338 = por %p336, %p337
    %p339 = scmp.ne.s32.totalorder %s331, %s333
    %p340 = scmp.eq.s32.totalorder %s29, 1
    %p341 = por %p339, %p340
    %p342 = scmp.ne.s32.totalorder %s333, %s334
    %p343 = scmp.eq.s32.totalorder %s29, 0
    %p344 = por %p342, %p343
    %p345 = scmp.ne.s32.totalorder %s333, %s334
    %p346 = scmp.eq.s32.totalorder %s30, 1
    %p347 = por %p345, %p346
    %p349 = scmp.ne.s32.totalorder %s334, %s348
    %p350 = scmp.eq.s32.totalorder %s30, 0
    %p351 = por %p349, %p350
    %s353 = sadd.s32 %s352, 1
    %p356 = scmp.eq.s32.totalorder %s24, 1
    %p357 = scmp.ne.s32.totalorder %s352, %s354
    %p358 = scmp.eq.s32.totalorder %s24, 0
    %p359 = por %p357, %p358
    %p360 = scmp.ne.s32.totalorder %s352, %s354
    %p361 = scmp.eq.s32.totalorder %s29, 1
    %p362 = por %p360, %p361
    %p363 = scmp.ne.s32.totalorder %s354, %s355
    %p364 = scmp.eq.s32.totalorder %s29, 0
    %p365 = por %p363, %p364
    %p366 = scmp.ne.s32.totalorder %s354, %s355
    %p367 = scmp.eq.s32.totalorder %s30, 1
    %p368 = por %p366, %p367
    %p370 = scmp.ne.s32.totalorder %s355, %s369
    %p371 = scmp.eq.s32.totalorder %s30, 0
    %p372 = por %p370, %p371
    %s374 = sadd.s32 %s373, 1
    %p377 = scmp.eq.s32.totalorder %s24, 1
    %p378 = scmp.ne.s32.totalorder %s373, %s375
    %p379 = scmp.eq.s32.totalorder %s24, 0
    %p380 = por %p378, %p379
    %p381 = scmp.ne.s32.totalorder %s373, %s375
    %p382 = scmp.eq.s32.totalorder %s29, 1
    %p383 = por %p381, %p382
    %p384 = scmp.ne.s32.totalorder %s375, %s376
    %p385 = scmp.eq.s32.totalorder %s29, 0
    %p386 = por %p384, %p385
    %p387 = scmp.ne.s32.totalorder %s375, %s376
    %p388 = scmp.eq.s32.totalorder %s30, 1
    %p389 = por %p387, %p388
    %p391 = scmp.ne.s32.totalorder %s376, %s390
    %p392 = scmp.eq.s32.totalorder %s30, 0
    %p393 = por %p391, %p392
    %s395 = sadd.s32 %s394, 1
    %p398 = scmp.eq.s32.totalorder %s24, 1
    %p399 = scmp.ne.s32.totalorder %s394, %s396
    %p400 = scmp.eq.s32.totalorder %s24, 0
    %p401 = por %p399, %p400
    %p402 = scmp.ne.s32.totalorder %s394, %s396
    %p403 = scmp.eq.s32.totalorder %s29, 1
    %p404 = por %p402, %p403
    %p405 = scmp.ne.s32.totalorder %s396, %s397
    %p406 = scmp.eq.s32.totalorder %s29, 0
    %p407 = por %p405, %p406
    %p408 = scmp.ne.s32.totalorder %s396, %s397
    %p409 = scmp.eq.s32.totalorder %s30, 1
    %p410 = por %p408, %p409
    %p412 = scmp.ne.s32.totalorder %s397, %s411
    %p413 = scmp.eq.s32.totalorder %s30, 0
    %p414 = por %p412, %p413
    %s415 = ssub.s32 %s24, %s31
    %p416 = scmp.eq.s32.totalorder %s415, 0
    %s418 = sadd.s32 %s417, 1
    %s419 = scalar_select %p416, %s417, %s418
    %p422 = pneg %p416
    %p423 = scmp.eq.s32.totalorder %s24, 1
    %p424 = por %p422, %p423
    %p425 = scmp.ne.s32.totalorder %s417, %s420
    %p426 = scmp.eq.s32.totalorder %s24, 0
    %p427 = por %p425, %p426
    %p428 = scmp.ne.s32.totalorder %s417, %s420
    %p429 = scmp.eq.s32.totalorder %s29, 1
    %p430 = por %p428, %p429
    %p431 = scmp.ne.s32.totalorder %s420, %s421
    %p432 = scmp.eq.s32.totalorder %s29, 0
    %p433 = por %p431, %p432
    %p434 = scmp.ne.s32.totalorder %s420, %s421
    %p435 = scmp.eq.s32.totalorder %s30, 1
    %p436 = por %p434, %p435
    %p438 = scmp.ne.s32.totalorder %s421, %s437
    %p439 = scmp.eq.s32.totalorder %s30, 0
    %p440 = por %p438, %p439
    %p441 = scmp.le.s32.totalorder 1, %s24
    %p442 = scmp.lt.s32.totalorder %s24, 3
    %p443 = pnand %p441, %p442
    %p444 = pneg %p443
    // Predicated region
    $region9: #{lenet_forward.1} parent=5 // pred_check
      _
    $region10: #{lenet_forward.1} parent=5 // pred_check_branch
      %446 = sbr.rel (%p443) target = $region12
    $region11: #{lenet_forward.1} parent=5 // pred_region
      %s447 = ssub.s32 %s24, 1
      // Predicated region
      $region13: #{lenet_forward.1} parent=11 // pred_check
        %p448 = pneg %p71
      $region14: #{lenet_forward.1} parent=11 // pred_check_branch
        %450 = sbr.rel (%p448) target = $region16
      $region15: #{lenet_forward.1} parent=11 // pred_region
        _
      $region16: #{lenet_forward.1} parent=11 // pred_fallthru
        _
      // Predicated region
      $region17: #{lenet_forward.1} parent=11 // pred_check
        %p451 = pneg %p92
      $region18: #{lenet_forward.1} parent=11 // pred_check_branch
        %453 = sbr.rel (%p451) target = $region20
      $region19: #{lenet_forward.1} parent=11 // pred_region
        _
      $region20: #{lenet_forward.1} parent=11 // pred_fallthru
        _
      // Predicated region
      $region21: #{lenet_forward.1} parent=11 // pred_check
        %p454 = pneg %p113
      $region22: #{lenet_forward.1} parent=11 // pred_check_branch
        %456 = sbr.rel (%p454) target = $region24
      $region23: #{lenet_forward.1} parent=11 // pred_region
        _
      $region24: #{lenet_forward.1} parent=11 // pred_fallthru
        _
      // Predicated region
      $region25: #{lenet_forward.1} parent=11 // pred_check
        %p457 = pneg %p134
      $region26: #{lenet_forward.1} parent=11 // pred_check_branch
        %459 = sbr.rel (%p457) target = $region28
      $region27: #{lenet_forward.1} parent=11 // pred_region
        _
      $region28: #{lenet_forward.1} parent=11 // pred_fallthru
        _
      // Predicated region
      $region29: #{lenet_forward.1} parent=11 // pred_check
        %p460 = pneg %p155
      $region30: #{lenet_forward.1} parent=11 // pred_check_branch
        %462 = sbr.rel (%p460) target = $region32
      $region31: #{lenet_forward.1} parent=11 // pred_region
        _
      $region32: #{lenet_forward.1} parent=11 // pred_fallthru
        _
      // Predicated region
      $region33: #{lenet_forward.1} parent=11 // pred_check
        %p463 = pneg %p176
      $region34: #{lenet_forward.1} parent=11 // pred_check_branch
        %465 = sbr.rel (%p463) target = $region36
      $region35: #{lenet_forward.1} parent=11 // pred_region
        _
      $region36: #{lenet_forward.1} parent=11 // pred_fallthru
        _
      // Predicated region
      $region37: #{lenet_forward.1} parent=11 // pred_check
        %p466 = pneg %p197
      $region38: #{lenet_forward.1} parent=11 // pred_check_branch
        %468 = sbr.rel (%p466) target = $region40
      $region39: #{lenet_forward.1} parent=11 // pred_region
        _
      $region40: #{lenet_forward.1} parent=11 // pred_fallthru
        _
      // Predicated region
      $region41: #{lenet_forward.1} parent=11 // pred_check
        %p469 = pneg %p218
      $region42: #{lenet_forward.1} parent=11 // pred_check_branch
        %471 = sbr.rel (%p469) target = $region44
      $region43: #{lenet_forward.1} parent=11 // pred_region
        _
      $region44: #{lenet_forward.1} parent=11 // pred_fallthru
        _
      // Predicated region
      $region45: #{lenet_forward.1} parent=11 // pred_check
        %p472 = pneg %p239
      $region46: #{lenet_forward.1} parent=11 // pred_check_branch
        %474 = sbr.rel (%p472) target = $region48
      $region47: #{lenet_forward.1} parent=11 // pred_region
        _
      $region48: #{lenet_forward.1} parent=11 // pred_fallthru
        _
      // Predicated region
      $region49: #{lenet_forward.1} parent=11 // pred_check
        %p475 = pneg %p260
      $region50: #{lenet_forward.1} parent=11 // pred_check_branch
        %477 = sbr.rel (%p475) target = $region52
      $region51: #{lenet_forward.1} parent=11 // pred_region
        _
      $region52: #{lenet_forward.1} parent=11 // pred_fallthru
        _
      // Predicated region
      $region53: #{lenet_forward.1} parent=11 // pred_check
        %p478 = pneg %p281
      $region54: #{lenet_forward.1} parent=11 // pred_check_branch
        %480 = sbr.rel (%p478) target = $region56
      $region55: #{lenet_forward.1} parent=11 // pred_region
        _
      $region56: #{lenet_forward.1} parent=11 // pred_fallthru
        _
      // Predicated region
      $region57: #{lenet_forward.1} parent=11 // pred_check
        %p481 = pneg %p302
      $region58: #{lenet_forward.1} parent=11 // pred_check_branch
        %483 = sbr.rel (%p481) target = $region60
      $region59: #{lenet_forward.1} parent=11 // pred_region
        _
      $region60: #{lenet_forward.1} parent=11 // pred_fallthru
        _
      // Predicated region
      $region61: #{lenet_forward.1} parent=11 // pred_check
        %p484 = pneg %p323
      $region62: #{lenet_forward.1} parent=11 // pred_check_branch
        %486 = sbr.rel (%p484) target = $region64
      $region63: #{lenet_forward.1} parent=11 // pred_region
        _
      $region64: #{lenet_forward.1} parent=11 // pred_fallthru
        _
      // Predicated region
      $region65: #{lenet_forward.1} parent=11 // pred_check
        %p487 = pneg %p344
      $region66: #{lenet_forward.1} parent=11 // pred_check_branch
        %489 = sbr.rel (%p487) target = $region68
      $region67: #{lenet_forward.1} parent=11 // pred_region
        _
      $region68: #{lenet_forward.1} parent=11 // pred_fallthru
        _
      // Predicated region
      $region69: #{lenet_forward.1} parent=11 // pred_check
        %p490 = pneg %p365
      $region70: #{lenet_forward.1} parent=11 // pred_check_branch
        %492 = sbr.rel (%p490) target = $region72
      $region71: #{lenet_forward.1} parent=11 // pred_region
        _
      $region72: #{lenet_forward.1} parent=11 // pred_fallthru
        _
      // Predicated region
      $region73: #{lenet_forward.1} parent=11 // pred_check
        %p493 = pneg %p386
      $region74: #{lenet_forward.1} parent=11 // pred_check_branch
        %495 = sbr.rel (%p493) target = $region76
      $region75: #{lenet_forward.1} parent=11 // pred_region
        _
      $region76: #{lenet_forward.1} parent=11 // pred_fallthru
        _
      // Predicated region
      $region77: #{lenet_forward.1} parent=11 // pred_check
        %p496 = pneg %p407
      $region78: #{lenet_forward.1} parent=11 // pred_check_branch
        %498 = sbr.rel (%p496) target = $region80
      $region79: #{lenet_forward.1} parent=11 // pred_region
        _
      $region80: #{lenet_forward.1} parent=11 // pred_fallthru
        _
    $region12: #{lenet_forward.1} parent=5 // pred_fallthru
      _
    %p499 = scmp.lt.s32.totalorder %s24, 2
    // Predicated region
    $region81: #{lenet_forward.1} parent=5 // pred_check
      %p500 = pneg %p499
    $region82: #{lenet_forward.1} parent=5 // pred_check_branch
      %502 = sbr.rel (%p500) target = $region84
    $region83: #{lenet_forward.1} parent=5 // pred_region
      // Predicated region
      $region85: #{lenet_forward.1} parent=83 // pred_check
        %p503 = pneg %p44
      $region86: #{lenet_forward.1} parent=83 // pred_check_branch
        %505 = sbr.rel (%p503) target = $region88
      $region87: #{lenet_forward.1} parent=83 // pred_region
        %p506 = scmp.lt.s32.totalorder %s24, 1
        %s507 = scalar_select %p506, %s24, 1
        %s508 = smul.addr %s507, 8
        %s509 = scalar_lea.vmem %s0, %s508
      $region88: #{lenet_forward.1} parent=83 // pred_fallthru
        _
    $region84: #{lenet_forward.1} parent=5 // pred_fallthru
      _
    %p510 = scmp.le.s32.totalorder 1, %s24
    %p511 = scmp.lt.s32.totalorder %s24, 3
    %p512 = pnand %p510, %p511
    %p513 = pneg %p512
    // Predicated region
    $region89: #{lenet_forward.1} parent=5 // pred_check
      _
    $region90: #{lenet_forward.1} parent=5 // pred_check_branch
      %515 = sbr.rel (%p512) target = $region92
    $region91: #{lenet_forward.1} parent=5 // pred_region
      %s516 = ssub.s32 %s24, 1
      %p517 = scmp.lt.s32.totalorder %s29, 1
      %s518 = scalar_select %p517, %s29, 1
      %s519 = smul.addr %s518, 8
      %s520 = scalar_lea.vmem %s0, %s519
      %p521 = pneg %p50
      %p522 = pneg %p47
      %p523 = pneg %p71
      %p524 = pneg %p68
      %p525 = pneg %p92
      %p526 = pneg %p89
      %p527 = pneg %p113
      %p528 = pneg %p110
      %p529 = pneg %p134
      %p530 = pneg %p131
      %p531 = pneg %p155
      %p532 = pneg %p152
      %p533 = pneg %p176
      %p534 = pneg %p173
      %p535 = pneg %p197
      %p536 = pneg %p194
      %p537 = pneg %p218
      %p538 = pneg %p215
      %p539 = pneg %p239
      %p540 = pneg %p236
      %p541 = pneg %p260
      %p542 = pneg %p257
      %p543 = pneg %p281
      %p544 = pneg %p278
      %p545 = pneg %p302
      %p546 = pneg %p299
      %p547 = pneg %p323
      %p548 = pneg %p320
      %p549 = pneg %p344
      %p550 = pneg %p341
      %p551 = pneg %p365
      %p552 = pneg %p362
      %p553 = pneg %p386
      %p554 = pneg %p383
      %p555 = pneg %p407
      %p556 = pneg %p404
      %p557 = pneg %p433
      %p558 = pneg %p430
      %p559 = scmp.lt.s32.totalorder %s29, 1
      %s560 = scalar_select %p559, %s29, 1
      %s561 = smul.addr %s560, 5
      %s562 = smul.addr %s561, 8
      %s563 = scalar_lea.vmem %s18, %s562
      %p564 = scmp.lt.s32.totalorder %s29, 1
      %s565 = scalar_select %p564, %s29, 1
      %s566 = smul.addr %s565, 8
      %s567 = scalar_lea.vmem %s0, %s566
      %p568 = scmp.lt.s32.totalorder %s29, 1
      %s569 = scalar_select %p568, %s29, 1
      %s570 = smul.addr %s569, 5
      %s571 = smul.addr %s570, 8
      %s572 = scalar_lea.vmem %s18, %s571
      %v573 = vld [vmem:[%s567] sm:$0xff]
      %v574 = vld [vmem:[%s1] sm:$0x3f]
      %576 = vset.pattern.permute.xlu0 0
      %577 = vperm.xlu0 %576, %v574
      %v578 = vpop.permute.xlu0 %577
      %v581 = vlaneseq
      %v582 = vshrl.u32 %v581, 7
      %v583 = vsub.s32 0, %v582
      %v584 = vrot.slane %v573, %v583
      %v585 = vlaneseq
      %v586 = vshrl.u32 %v585, 7
      %v587 = vsub.s32 1, %v586
      %v588 = vrot.slane %v573, %v587
      %v589 = vlaneseq
      %v590 = vshrl.u32 %v589, 7
      %v591 = vsub.s32 2, %v590
      %v592 = vrot.slane %v573, %v591
      %v593 = vlaneseq
      %v594 = vshrl.u32 %v593, 7
      %v595 = vsub.s32 3, %v594
      %v596 = vrot.slane %v573, %v595
      %v597 = vlaneseq
      %v598 = vshrl.u32 %v597, 7
      %v599 = vsub.s32 4, %v598
      %v600 = vrot.slane %v573, %v599
      %v601 = vlaneseq
      %v602 = vshrl.u32 %v601, 7
      %v603 = vsub.s32 5, %v602
      %v604 = vrot.slane %v573, %v603
      %v605 = vlaneseq
      %v606 = vshrl.u32 %v605, 7
      %v607 = vsub.s32 6, %v606
      %v608 = vrot.slane %v573, %v607
      %v616 = vmul.f32 %v578, %v584
      %v617 = vmul.f32 %v578, %v588
      %v618 = vmul.f32 %v578, %v592
      %v619 = vmul.f32 %v578, %v596
      %v620 = vmul.f32 %v578, %v600
      %v621 = vmul.f32 %v578, %v604
      %v622 = vmul.f32 %v578, %v608
      %v623 = vadd.f32 %v616, 0.0
      %v624 = vadd.f32 %v617, 0.0
      %v625 = vadd.f32 %v618, 0.0
      %v626 = vadd.f32 %v619, 0.0
      %v627 = vadd.f32 %v620, 0.0
      %v628 = vadd.f32 %v621, 0.0
      %v629 = vadd.f32 %v622, 0.0
      %s630 = scalar_lea.vmem %s1, 8
      %v631 = vld [vmem:[%s630] sm:$0x3f]
      %633 = vset.pattern.permute.xlu0 0
      %634 = vperm.xlu0 %633, %v631
      %v635 = vpop.permute.xlu0 %634
      %v637 = vmul.f32 %v635, %v584
      %v638 = vmul.f32 %v635, %v588
      %v639 = vmul.f32 %v635, %v592
      %v640 = vmul.f32 %v635, %v596
      %v641 = vmul.f32 %v635, %v600
      %v642 = vmul.f32 %v635, %v604
      %v643 = vmul.f32 %v635, %v608
      %651 = vrot.lane.b32.xlu0 %v637, 127
      %v652 = vpop.permute.xlu0 %651
      %653 = vrot.lane.b32.xlu0 %v638, 127
      %v654 = vpop.permute.xlu0 %653
      %655 = vrot.lane.b32.xlu0 %v639, 127
      %v656 = vpop.permute.xlu0 %655
      %657 = vrot.lane.b32.xlu0 %v640, 127
      %v658 = vpop.permute.xlu0 %657
      %659 = vrot.lane.b32.xlu0 %v641, 127
      %v660 = vpop.permute.xlu0 %659
      %661 = vrot.lane.b32.xlu0 %v642, 127
      %v662 = vpop.permute.xlu0 %661
      %663 = vrot.lane.b32.xlu0 %v643, 127
      %v664 = vpop.permute.xlu0 %663
      %vm665 = vcmask 1039360
      %v666 = vsel %vm665, %v652, %v654
      %v667 = vsel %vm665, %v654, %v656
      %v668 = vsel %vm665, %v656, %v658
      %v669 = vsel %vm665, %v658, %v660
      %v670 = vsel %vm665, %v660, %v662
      %v671 = vsel %vm665, %v662, %v664
      %v679 = vadd.f32 %v623, %v666
      %v680 = vadd.f32 %v624, %v667
      %v681 = vadd.f32 %v625, %v668
      %v682 = vadd.f32 %v626, %v669
      %v683 = vadd.f32 %v627, %v670
      %v684 = vadd.f32 %v628, %v671
      %v685 = vadd.f32 %v629, %v664
      %s686 = scalar_lea.vmem %s1, 16
      %v687 = vld [vmem:[%s686] sm:$0x3f]
      %689 = vset.pattern.permute.xlu0 0
      %690 = vperm.xlu0 %689, %v687
      %v691 = vpop.permute.xlu0 %690
      %v693 = vmul.f32 %v691, %v584
      %v694 = vmul.f32 %v691, %v588
      %v695 = vmul.f32 %v691, %v592
      %v696 = vmul.f32 %v691, %v596
      %v697 = vmul.f32 %v691, %v600
      %v698 = vmul.f32 %v691, %v604
      %v699 = vmul.f32 %v691, %v608
      %707 = vrot.lane.b32.xlu0 %v693, 126
      %v708 = vpop.permute.xlu0 %707
      %709 = vrot.lane.b32.xlu0 %v694, 126
      %v710 = vpop.permute.xlu0 %709
      %711 = vrot.lane.b32.xlu0 %v695, 126
      %v712 = vpop.permute.xlu0 %711
      %713 = vrot.lane.b32.xlu0 %v696, 126
      %v714 = vpop.permute.xlu0 %713
      %715 = vrot.lane.b32.xlu0 %v697, 126
      %v716 = vpop.permute.xlu0 %715
      %717 = vrot.lane.b32.xlu0 %v698, 126
      %v718 = vpop.permute.xlu0 %717
      %719 = vrot.lane.b32.xlu0 %v699, 126
      %v720 = vpop.permute.xlu0 %719
      %vm721 = vcmask 1031168
      %v722 = vsel %vm721, %v708, %v710
      %v723 = vsel %vm721, %v710, %v712
      %v724 = vsel %vm721, %v712, %v714
      %v725 = vsel %vm721, %v714, %v716
      %v726 = vsel %vm721, %v716, %v718
      %v727 = vsel %vm721, %v718, %v720
      %v735 = vadd.f32 %v679, %v722
      %v736 = vadd.f32 %v680, %v723
      %v737 = vadd.f32 %v681, %v724
      %v738 = vadd.f32 %v682, %v725
      %v739 = vadd.f32 %v683, %v726
      %v740 = vadd.f32 %v684, %v727
      %v741 = vadd.f32 %v685, %v720
      %s742 = scalar_lea.vmem %s1, 24
      %v743 = vld [vmem:[%s742] sm:$0x3f]
      %745 = vset.pattern.permute.xlu0 0
      %746 = vperm.xlu0 %745, %v743
      %v747 = vpop.permute.xlu0 %746
      %v749 = vmul.f32 %v747, %v584
      %v750 = vmul.f32 %v747, %v588
      %v751 = vmul.f32 %v747, %v592
      %v752 = vmul.f32 %v747, %v596
      %v753 = vmul.f32 %v747, %v600
      %v754 = vmul.f32 %v747, %v604
      %v755 = vmul.f32 %v747, %v608
      %763 = vrot.lane.b32.xlu0 %v749, 98
      %v764 = vpop.permute.xlu0 %763
      %765 = vrot.lane.b32.xlu0 %v750, 98
      %v766 = vpop.permute.xlu0 %765
      %767 = vrot.lane.b32.xlu0 %v751, 98
      %v768 = vpop.permute.xlu0 %767
      %769 = vrot.lane.b32.xlu0 %v752, 98
      %v770 = vpop.permute.xlu0 %769
      %771 = vrot.lane.b32.xlu0 %v753, 98
      %v772 = vpop.permute.xlu0 %771
      %773 = vrot.lane.b32.xlu0 %v754, 98
      %v774 = vpop.permute.xlu0 %773
      %775 = vrot.lane.b32.xlu0 %v755, 98
      %v776 = vpop.permute.xlu0 %775
      %vm777 = vcmask 801792
      %v778 = vsel %vm777, %v764, %v766
      %v779 = vsel %vm777, %v766, %v768
      %v780 = vsel %vm777, %v768, %v770
      %v781 = vsel %vm777, %v770, %v772
      %v782 = vsel %vm777, %v772, %v774
      %v783 = vsel %vm777, %v774, %v776
      %v791 = vadd.f32 %v735, %v778
      %v792 = vadd.f32 %v736, %v779
      %v793 = vadd.f32 %v737, %v780
      %v794 = vadd.f32 %v738, %v781
      %v795 = vadd.f32 %v739, %v782
      %v796 = vadd.f32 %v740, %v783
      %v797 = vadd.f32 %v741, %v776
      %s798 = scalar_lea.vmem %s1, 32
      %v799 = vld [vmem:[%s798] sm:$0x3f]
      %801 = vset.pattern.permute.xlu0 0
      %802 = vperm.xlu0 %801, %v799
      %v803 = vpop.permute.xlu0 %802
      %v805 = vmul.f32 %v803, %v584
      %v806 = vmul.f32 %v803, %v588
      %v807 = vmul.f32 %v803, %v592
      %v808 = vmul.f32 %v803, %v596
      %v809 = vmul.f32 %v803, %v600
      %v810 = vmul.f32 %v803, %v604
      %v811 = vmul.f32 %v803, %v608
      %819 = vrot.lane.b32.xlu0 %v805, 97
      %v820 = vpop.permute.xlu0 %819
      %821 = vrot.lane.b32.xlu0 %v806, 97
      %v822 = vpop.permute.xlu0 %821
      %823 = vrot.lane.b32.xlu0 %v807, 97
      %v824 = vpop.permute.xlu0 %823
      %825 = vrot.lane.b32.xlu0 %v808, 97
      %v826 = vpop.permute.xlu0 %825
      %827 = vrot.lane.b32.xlu0 %v809, 97
      %v828 = vpop.permute.xlu0 %827
      %829 = vrot.lane.b32.xlu0 %v810, 97
      %v830 = vpop.permute.xlu0 %829
      %831 = vrot.lane.b32.xlu0 %v811, 97
      %v832 = vpop.permute.xlu0 %831
      %vm833 = vcmask 793600
      %v834 = vsel %vm833, %v820, %v822
      %v835 = vsel %vm833, %v822, %v824
      %v836 = vsel %vm833, %v824, %v826
      %v837 = vsel %vm833, %v826, %v828
      %v838 = vsel %vm833, %v828, %v830
      %v839 = vsel %vm833, %v830, %v832
      %v847 = vadd.f32 %v791, %v834
      %v848 = vadd.f32 %v792, %v835
      %v849 = vadd.f32 %v793, %v836
      %v850 = vadd.f32 %v794, %v837
      %v851 = vadd.f32 %v795, %v838
      %v852 = vadd.f32 %v796, %v839
      %v853 = vadd.f32 %v797, %v832
      %s854 = scalar_lea.vmem %s1, 40
      %v855 = vld [vmem:[%s854] sm:$0x3f]
      %857 = vset.pattern.permute.xlu0 0
      %858 = vperm.xlu0 %857, %v855
      %v859 = vpop.permute.xlu0 %858
      %v861 = vmul.f32 %v859, %v584
      %v862 = vmul.f32 %v859, %v588
      %v863 = vmul.f32 %v859, %v592
      %v864 = vmul.f32 %v859, %v596
      %v865 = vmul.f32 %v859, %v600
      %v866 = vmul.f32 %v859, %v604
      %v867 = vmul.f32 %v859, %v608
      %875 = vrot.lane.b32.xlu0 %v861, 96
      %v876 = vpop.permute.xlu0 %875
      %877 = vrot.lane.b32.xlu0 %v862, 96
      %v878 = vpop.permute.xlu0 %877
      %879 = vrot.lane.b32.xlu0 %v863, 96
      %v880 = vpop.permute.xlu0 %879
      %881 = vrot.lane.b32.xlu0 %v864, 96
      %v882 = vpop.permute.xlu0 %881
      %883 = vrot.lane.b32.xlu0 %v865, 96
      %v884 = vpop.permute.xlu0 %883
      %885 = vrot.lane.b32.xlu0 %v866, 96
      %v886 = vpop.permute.xlu0 %885
      %887 = vrot.lane.b32.xlu0 %v867, 96
      %v888 = vpop.permute.xlu0 %887
      %vm889 = vcmask 785408
      %v890 = vsel %vm889, %v876, %v878
      %v891 = vsel %vm889, %v878, %v880
      %v892 = vsel %vm889, %v880, %v882
      %v893 = vsel %vm889, %v882, %v884
      %v894 = vsel %vm889, %v884, %v886
      %v895 = vsel %vm889, %v886, %v888
      %v903 = vadd.f32 %v847, %v890
      %v904 = vadd.f32 %v848, %v891
      %v905 = vadd.f32 %v849, %v892
      %v906 = vadd.f32 %v850, %v893
      %v907 = vadd.f32 %v851, %v894
      %v908 = vadd.f32 %v852, %v895
      %v909 = vadd.f32 %v853, %v888
      %s910 = scalar_lea.vmem %s1, 48
      %v911 = vld [vmem:[%s910] sm:$0x3f]
      %913 = vset.pattern.permute.xlu0 0
      %914 = vperm.xlu0 %913, %v911
      %v915 = vpop.permute.xlu0 %914
      %v917 = vlaneseq
      %v918 = vshrl.u32 %v917, 7
      %v919 = vsub.s32 7, %v918
      %v920 = vrot.slane %v573, %v919
      %v922 = vmul.f32 %v915, %v584
      %v923 = vmul.f32 %v915, %v588
      %v924 = vmul.f32 %v915, %v592
      %v925 = vmul.f32 %v915, %v596
      %v926 = vmul.f32 %v915, %v600
      %v927 = vmul.f32 %v915, %v604
      %v928 = vmul.f32 %v915, %v608
      %v929 = vmul.f32 %v915, %v920
      %938 = vrot.lane.b32.xlu0 %v922, 68
      %v939 = vpop.permute.xlu0 %938
      %940 = vrot.lane.b32.xlu0 %v923, 68
      %v941 = vpop.permute.xlu0 %940
      %942 = vrot.lane.b32.xlu0 %v924, 68
      %v943 = vpop.permute.xlu0 %942
      %944 = vrot.lane.b32.xlu0 %v925, 68
      %v945 = vpop.permute.xlu0 %944
      %946 = vrot.lane.b32.xlu0 %v926, 68
      %v947 = vpop.permute.xlu0 %946
      %948 = vrot.lane.b32.xlu0 %v927, 68
      %v949 = vpop.permute.xlu0 %948
      %950 = vrot.lane.b32.xlu0 %v928, 68
      %v951 = vpop.permute.xlu0 %950
      %952 = vrot.lane.b32.xlu0 %v929, 68
      %v953 = vpop.permute.xlu0 %952
      %vm954 = vcmask 556032
      %v955 = vsel %vm954, %v939, %v941
      %v956 = vsel %vm954, %v941, %v943
      %v957 = vsel %vm954, %v943, %v945
      %v958 = vsel %vm954, %v945, %v947
      %v959 = vsel %vm954, %v947, %v949
      %v960 = vsel %vm954, %v949, %v951
      %v961 = vsel %vm954, %v951, %v953
      %v969 = vadd.f32 %v903, %v955
      %v970 = vadd.f32 %v904, %v956
      %v971 = vadd.f32 %v905, %v957
      %v972 = vadd.f32 %v906, %v958
      %v973 = vadd.f32 %v907, %v959
      %v974 = vadd.f32 %v908, %v960
      %v975 = vadd.f32 %v909, %v961
      %s976 = scalar_lea.vmem %s1, 56
      %v977 = vld [vmem:[%s976] sm:$0x3f]
      %979 = vset.pattern.permute.xlu0 0
      %980 = vperm.xlu0 %979, %v977
      %v981 = vpop.permute.xlu0 %980
      %v983 = vmul.f32 %v981, %v584
      %v984 = vmul.f32 %v981, %v588
      %v985 = vmul.f32 %v981, %v592
      %v986 = vmul.f32 %v981, %v596
      %v987 = vmul.f32 %v981, %v600
      %v988 = vmul.f32 %v981, %v604
      %v989 = vmul.f32 %v981, %v608
      %v990 = vmul.f32 %v981, %v920
      %999 = vrot.lane.b32.xlu0 %v983, 67
      %v1000 = vpop.permute.xlu0 %999
      %1001 = vrot.lane.b32.xlu0 %v984, 67
      %v1002 = vpop.permute.xlu0 %1001
      %1003 = vrot.lane.b32.xlu0 %v985, 67
      %v1004 = vpop.permute.xlu0 %1003
      %1005 = vrot.lane.b32.xlu0 %v986, 67
      %v1006 = vpop.permute.xlu0 %1005
      %1007 = vrot.lane.b32.xlu0 %v987, 67
      %v1008 = vpop.permute.xlu0 %1007
      %1009 = vrot.lane.b32.xlu0 %v988, 67
      %v1010 = vpop.permute.xlu0 %1009
      %1011 = vrot.lane.b32.xlu0 %v989, 67
      %v1012 = vpop.permute.xlu0 %1011
      %1013 = vrot.lane.b32.xlu0 %v990, 67
      %v1014 = vpop.permute.xlu0 %1013
      %vm1015 = vcmask 547840
      %v1016 = vsel %vm1015, %v1000, %v1002
      %v1017 = vsel %vm1015, %v1002, %v1004
      %v1018 = vsel %vm1015, %v1004, %v1006
      %v1019 = vsel %vm1015, %v1006, %v1008
      %v1020 = vsel %vm1015, %v1008, %v1010
      %v1021 = vsel %vm1015, %v1010, %v1012
      %v1022 = vsel %vm1015, %v1012, %v1014
      %v1030 = vadd.f32 %v969, %v1016
      %v1031 = vadd.f32 %v970, %v1017
      %v1032 = vadd.f32 %v971, %v1018
      %v1033 = vadd.f32 %v972, %v1019
      %v1034 = vadd.f32 %v973, %v1020
      %v1035 = vadd.f32 %v974, %v1021
      %v1036 = vadd.f32 %v975, %v1022
      %s1037 = scalar_lea.vmem %s1, 64
      %v1038 = vld [vmem:[%s1037] sm:$0x3f]
      %1040 = vset.pattern.permute.xlu0 0
      %1041 = vperm.xlu0 %1040, %v1038
      %v1042 = vpop.permute.xlu0 %1041
      %v1044 = vmul.f32 %v1042, %v584
      %v1045 = vmul.f32 %v1042, %v588
      %v1046 = vmul.f32 %v1042, %v592
      %v1047 = vmul.f32 %v1042, %v596
      %v1048 = vmul.f32 %v1042, %v600
      %v1049 = vmul.f32 %v1042, %v604
      %v1050 = vmul.f32 %v1042, %v608
      %v1051 = vmul.f32 %v1042, %v920
      %1060 = vrot.lane.b32.xlu0 %v1044, 66
      %v1061 = vpop.permute.xlu0 %1060
      %1062 = vrot.lane.b32.xlu0 %v1045, 66
      %v1063 = vpop.permute.xlu0 %1062
      %1064 = vrot.lane.b32.xlu0 %v1046, 66
      %v1065 = vpop.permute.xlu0 %1064
      %1066 = vrot.lane.b32.xlu0 %v1047, 66
      %v1067 = vpop.permute.xlu0 %1066
      %1068 = vrot.lane.b32.xlu0 %v1048, 66
      %v1069 = vpop.permute.xlu0 %1068
      %1070 = vrot.lane.b32.xlu0 %v1049, 66
      %v1071 = vpop.permute.xlu0 %1070
      %1072 = vrot.lane.b32.xlu0 %v1050, 66
      %v1073 = vpop.permute.xlu0 %1072
      %1074 = vrot.lane.b32.xlu0 %v1051, 66
      %v1075 = vpop.permute.xlu0 %1074
      %vm1076 = vcmask 539648
      %v1077 = vsel %vm1076, %v1061, %v1063
      %v1078 = vsel %vm1076, %v1063, %v1065
      %v1079 = vsel %vm1076, %v1065, %v1067
      %v1080 = vsel %vm1076, %v1067, %v1069
      %v1081 = vsel %vm1076, %v1069, %v1071
      %v1082 = vsel %vm1076, %v1071, %v1073
      %v1083 = vsel %vm1076, %v1073, %v1075
      %v1091 = vadd.f32 %v1030, %v1077
      %v1092 = vadd.f32 %v1031, %v1078
      %v1093 = vadd.f32 %v1032, %v1079
      %v1094 = vadd.f32 %v1033, %v1080
      %v1095 = vadd.f32 %v1034, %v1081
      %v1096 = vadd.f32 %v1035, %v1082
      %v1097 = vadd.f32 %v1036, %v1083
      %v1098 = vld [vmem:[%s2] sm:$0x3f]
      %1100 = vset.pattern.permute.xlu0 0
      %1101 = vperm.xlu0 %1100, %v1098
      %v1102 = vpop.permute.xlu0 %1101
      %v1104 = vadd.f32 %v1091, %v1102
      %v1105 = vadd.f32 %v1092, %v1102
      %v1106 = vadd.f32 %v1093, %v1102
      %v1107 = vadd.f32 %v1094, %v1102
      %v1108 = vadd.f32 %v1095, %v1102
      %v1109 = vadd.f32 %v1096, %v1102
      %v1110 = vadd.f32 %v1097, %v1102
      %v1111 = vmax.f32 %v1104, 0.0
      %v1112 = vmax.f32 %v1105, 0.0
      %v1113 = vmax.f32 %v1106, 0.0
      %v1114 = vmax.f32 %v1107, 0.0
      %v1115 = vmax.f32 %v1108, 0.0
      %v1116 = vmax.f32 %v1109, 0.0
      %v1117 = vmax.f32 %v1110, 0.0
      %v1118 = vld [vmem:[%s3] sm:$0x3f]
      %1120 = vset.pattern.permute.xlu0 0
      %1121 = vperm.xlu0 %1120, %v1118
      %v1122 = vpop.permute.xlu0 %1121
      %v1124 = vmul.f32 %v1111, %v1122
      %v1125 = vmul.f32 %v1112, %v1122
      %v1126 = vmul.f32 %v1113, %v1122
      %v1127 = vmul.f32 %v1114, %v1122
      %v1128 = vmul.f32 %v1115, %v1122
      %v1129 = vmul.f32 %v1116, %v1122
      %v1130 = vmul.f32 %v1117, %v1122
      %v1131 = vld [vmem:[%s4] sm:$0x3f]
      %1133 = vset.pattern.permute.xlu0 0
      %1134 = vperm.xlu0 %1133, %v1131
      %v1135 = vpop.permute.xlu0 %1134
      %v1137 = vadd.f32 %v1124, %v1135
      %v1138 = vadd.f32 %v1125, %v1135
      %v1139 = vadd.f32 %v1126, %v1135
      %v1140 = vadd.f32 %v1127, %v1135
      %v1141 = vadd.f32 %v1128, %v1135
      %v1142 = vadd.f32 %v1129, %v1135
      %v1143 = vadd.f32 %v1130, %v1135
      %1151 = vrot.lane.b32.xlu0 %v1137, 127
      %v1152 = vpop.permute.xlu0 %1151
      %1153 = vrot.lane.b32.xlu0 %v1138, 127
      %v1154 = vpop.permute.xlu0 %1153
      %1155 = vrot.lane.b32.xlu0 %v1139, 127
      %v1156 = vpop.permute.xlu0 %1155
      %1157 = vrot.lane.b32.xlu0 %v1140, 127
      %v1158 = vpop.permute.xlu0 %1157
      %1159 = vrot.lane.b32.xlu0 %v1141, 127
      %v1160 = vpop.permute.xlu0 %1159
      %1161 = vrot.lane.b32.xlu0 %v1142, 127
      %v1162 = vpop.permute.xlu0 %1161
      %1163 = vrot.lane.b32.xlu0 %v1143, 127
      %v1164 = vpop.permute.xlu0 %1163
      %v1165 = vsel %vm665, %v1152, %v1154
      %v1166 = vsel %vm665, %v1154, %v1156
      %v1167 = vsel %vm665, %v1156, %v1158
      %v1168 = vsel %vm665, %v1158, %v1160
      %v1169 = vsel %vm665, %v1160, %v1162
      %v1170 = vsel %vm665, %v1162, %v1164
      %v1178 = vmax.f32 %v1137, %v1165
      %v1179 = vmax.f32 %v1138, %v1166
      %v1180 = vmax.f32 %v1139, %v1167
      %v1181 = vmax.f32 %v1140, %v1168
      %v1182 = vmax.f32 %v1141, %v1169
      %v1183 = vmax.f32 %v1142, %v1170
      %v1184 = vmax.f32 %v1143, %v1164
      %1192 = vrot.lane.b32.xlu0 %v1178, 98
      %v1193 = vpop.permute.xlu0 %1192
      %1194 = vrot.lane.b32.xlu0 %v1179, 98
      %v1195 = vpop.permute.xlu0 %1194
      %1196 = vrot.lane.b32.xlu0 %v1180, 98
      %v1197 = vpop.permute.xlu0 %1196
      %1198 = vrot.lane.b32.xlu0 %v1181, 98
      %v1199 = vpop.permute.xlu0 %1198
      %1200 = vrot.lane.b32.xlu0 %v1182, 98
      %v1201 = vpop.permute.xlu0 %1200
      %1202 = vrot.lane.b32.xlu0 %v1183, 98
      %v1203 = vpop.permute.xlu0 %1202
      %1204 = vrot.lane.b32.xlu0 %v1184, 98
      %v1205 = vpop.permute.xlu0 %1204
      %v1206 = vsel %vm777, %v1193, %v1195
      %v1207 = vsel %vm777, %v1195, %v1197
      %v1208 = vsel %vm777, %v1197, %v1199
      %v1209 = vsel %vm777, %v1199, %v1201
      %v1210 = vsel %vm777, %v1201, %v1203
      %v1211 = vsel %vm777, %v1203, %v1205
      %v1219 = vmax.f32 %v1178, %v1206
      %v1220 = vmax.f32 %v1179, %v1207
      %v1221 = vmax.f32 %v1180, %v1208
      %v1222 = vmax.f32 %v1181, %v1209
      %v1223 = vmax.f32 %v1182, %v1210
      %v1224 = vmax.f32 %v1183, %v1211
      %v1225 = vmax.f32 %v1184, %v1205
      %v1226 = vld [vmem:[%s5] sm:$0xff]
      %v1227 = vld [vmem:[%s5 + $0x8] sm:$0xff]
      %v1228 = vld [vmem:[%s5 + $0x10] sm:$0xff]
      %v1229 = vld [vmem:[%s5 + $0x18] sm:$0xff]
      %v1230 = vld [vmem:[%s5 + $0x20] sm:$0xff]
      %v1231 = vld [vmem:[%s5 + $0x28] sm:$0xff]
      %v1232 = vld [vmem:[%s5 + $0x30] sm:$0xff]
      %v1233 = vld [vmem:[%s5 + $0x38] sm:$0xff]
      %v1234 = vld [vmem:[%s5 + $0x40] sm:$0xff]
      %v1235 = vld [vmem:[%s5 + $0x48] sm:$0xff]
      %v1236 = vld [vmem:[%s5 + $0x50] sm:$0xff]
      %v1237 = vld [vmem:[%s5 + $0x58] sm:$0xff]
      %v1238 = vld [vmem:[%s5 + $0x60] sm:$0xff]
      %v1239 = vld [vmem:[%s5 + $0x68] sm:$0xff]
      %v1240 = vld [vmem:[%s5 + $0x70] sm:$0xff]
      %v1241 = vld [vmem:[%s5 + $0x78] sm:$0xff]
      %v1242 = vld [vmem:[%s5 + $0x80] sm:$0xff]
      %v1243 = vld [vmem:[%s5 + $0x88] sm:$0xff]
      %v1244 = vld [vmem:[%s5 + $0x90] sm:$0xff]
      %v1245 = vld [vmem:[%s5 + $0x98] sm:$0xff]
      %v1246 = vld [vmem:[%s5 + $0xa0] sm:$0xff]
      %v1247 = vld [vmem:[%s5 + $0xa8] sm:$0xff]
      %v1248 = vld [vmem:[%s5 + $0xb0] sm:$0xff]
      %v1249 = vld [vmem:[%s5 + $0xb8] sm:$0xff]
      %v1250 = vld [vmem:[%s5 + $0xc0] sm:$0xff]
      %v1251 = vld [vmem:[%s5 + $0xc8] sm:$0xff]
      %v1252 = vld [vmem:[%s5 + $0xd0] sm:$0xff]
      %v1253 = vld [vmem:[%s5 + $0xd8] sm:$0xff]
      %v1254 = vld [vmem:[%s5 + $0xe0] sm:$0xff]
      %v1255 = vld [vmem:[%s5 + $0xe8] sm:$0xff]
      %v1256 = vld [vmem:[%s5 + $0xf0] sm:$0xff]
      %v1257 = vld [vmem:[%s5 + $0xf8] sm:$0xff]
      %v1258 = vld [vmem:[%s5 + $0x100] sm:$0xff]
      %v1259 = vld [vmem:[%s5 + $0x108] sm:$0xff]
      %v1260 = vld [vmem:[%s5 + $0x110] sm:$0xff]
      %v1261 = vld [vmem:[%s5 + $0x118] sm:$0xff]
      %v1262 = vld [vmem:[%s5 + $0x120] sm:$0xff]
      %v1263 = vld [vmem:[%s5 + $0x128] sm:$0xff]
      %v1264 = vld [vmem:[%s5 + $0x130] sm:$0xff]
      %v1265 = vld [vmem:[%s5 + $0x138] sm:$0xff]
      %v1266 = vld [vmem:[%s5 + $0x140] sm:$0xff]
      %v1267 = vld [vmem:[%s5 + $0x148] sm:$0xff]
      %v1268 = vld [vmem:[%s5 + $0x150] sm:$0xff]
      %v1269 = vld [vmem:[%s5 + $0x158] sm:$0xff]
      %v1270 = vld [vmem:[%s5 + $0x160] sm:$0xff]
      %v1271 = vld [vmem:[%s5 + $0x168] sm:$0xff]
      %v1272 = vld [vmem:[%s5 + $0x170] sm:$0xff]
      %v1273 = vld [vmem:[%s5 + $0x178] sm:$0xff]
      %v1274 = vld [vmem:[%s5 + $0x180] sm:$0xff]
      %v1275 = vld [vmem:[%s5 + $0x188] sm:$0xff]
      %v1276 = vld [vmem:[%s5 + $0x190] sm:$0xff]
      %v1277 = vld [vmem:[%s5 + $0x198] sm:$0xff]
      %v1278 = vld [vmem:[%s5 + $0x1a0] sm:$0xff]
      %v1279 = vld [vmem:[%s5 + $0x1a8] sm:$0xff]
      %v1280 = vld [vmem:[%s5 + $0x1b0] sm:$0xff]
      %v1281 = vld [vmem:[%s5 + $0x1b8] sm:$0xff]
      %v1282 = vld [vmem:[%s5 + $0x1c0] sm:$0xff]
      %v1283 = vld [vmem:[%s5 + $0x1c8] sm:$0xff]
      %v1284 = vld [vmem:[%s5 + $0x1d0] sm:$0xff]
      %v1285 = vld [vmem:[%s5 + $0x1d8] sm:$0xff]
      %v1286 = vld [vmem:[%s5 + $0x1e0] sm:$0xff]
      %v1287 = vld [vmem:[%s5 + $0x1e8] sm:$0xff]
      %v1288 = vld [vmem:[%s5 + $0x1f0] sm:$0xff]
      %v1289 = vld [vmem:[%s5 + $0x1f8] sm:$0xff]
      %v1290 = vld [vmem:[%s5 + $0x200] sm:$0xff]
      %v1291 = vld [vmem:[%s5 + $0x208] sm:$0xff]
      %v1292 = vld [vmem:[%s5 + $0x210] sm:$0xff]
      %v1293 = vld [vmem:[%s5 + $0x218] sm:$0xff]
      %v1294 = vld [vmem:[%s5 + $0x220] sm:$0xff]
      %v1295 = vld [vmem:[%s5 + $0x228] sm:$0xff]
      %v1296 = vld [vmem:[%s5 + $0x230] sm:$0xff]
      %v1297 = vld [vmem:[%s5 + $0x238] sm:$0xff]
      %v1298 = vld [vmem:[%s5 + $0x240] sm:$0xff]
      %v1299 = vld [vmem:[%s5 + $0x248] sm:$0xff]
      %v1300 = vld [vmem:[%s5 + $0x250] sm:$0xff]
      %v1301 = vld [vmem:[%s5 + $0x258] sm:$0xff]
      %v1302 = vld [vmem:[%s5 + $0x260] sm:$0xff]
      %v1303 = vld [vmem:[%s5 + $0x268] sm:$0xff]
      %v1304 = vld [vmem:[%s5 + $0x270] sm:$0xff]
      %v1305 = vld [vmem:[%s5 + $0x278] sm:$0xff]
      %v1306 = vld [vmem:[%s5 + $0x280] sm:$0xff]
      %v1307 = vld [vmem:[%s5 + $0x288] sm:$0xff]
      %v1308 = vld [vmem:[%s5 + $0x290] sm:$0xff]
      %v1309 = vld [vmem:[%s5 + $0x298] sm:$0xff]
      %v1310 = vld [vmem:[%s5 + $0x2a0] sm:$0xff]
      %v1311 = vld [vmem:[%s5 + $0x2a8] sm:$0xff]
      %v1312 = vld [vmem:[%s5 + $0x2b0] sm:$0xff]
      %v1313 = vld [vmem:[%s5 + $0x2b8] sm:$0xff]
      %v1314 = vld [vmem:[%s5 + $0x2c0] sm:$0xff]
      %v1315 = vld [vmem:[%s5 + $0x2c8] sm:$0xff]
      %v1316 = vld [vmem:[%s5 + $0x2d0] sm:$0xff]
      %v1317 = vld [vmem:[%s5 + $0x2d8] sm:$0xff]
      %v1318 = vld [vmem:[%s5 + $0x2e0] sm:$0xff]
      %v1319 = vld [vmem:[%s5 + $0x2e8] sm:$0xff]
      %v1320 = vld [vmem:[%s5 + $0x2f0] sm:$0xff]
      %v1321 = vld [vmem:[%s5 + $0x2f8] sm:$0xff]
      %v1322 = vld [vmem:[%s5 + $0x300] sm:$0xff]
      %v1323 = vld [vmem:[%s5 + $0x308] sm:$0xff]
      %v1324 = vld [vmem:[%s5 + $0x310] sm:$0xff]
      %v1325 = vld [vmem:[%s5 + $0x318] sm:$0xff]
      %v1326 = vld [vmem:[%s5 + $0x320] sm:$0xff]
      %v1327 = vld [vmem:[%s5 + $0x328] sm:$0xff]
      %v1328 = vld [vmem:[%s5 + $0x330] sm:$0xff]
      %v1329 = vld [vmem:[%s5 + $0x338] sm:$0xff]
      %v1330 = vld [vmem:[%s5 + $0x340] sm:$0xff]
      %v1331 = vld [vmem:[%s5 + $0x348] sm:$0xff]
      %v1332 = vld [vmem:[%s5 + $0x350] sm:$0xff]
      %v1333 = vld [vmem:[%s5 + $0x358] sm:$0xff]
      %v1334 = vld [vmem:[%s5 + $0x360] sm:$0xff]
      %v1335 = vld [vmem:[%s5 + $0x368] sm:$0xff]
      %v1336 = vld [vmem:[%s5 + $0x370] sm:$0xff]
      %v1337 = vld [vmem:[%s5 + $0x378] sm:$0xff]
      %v1338 = vld [vmem:[%s5 + $0x380] sm:$0xff]
      %v1339 = vld [vmem:[%s5 + $0x388] sm:$0xff]
      %v1340 = vld [vmem:[%s5 + $0x390] sm:$0xff]
      %v1341 = vld [vmem:[%s5 + $0x398] sm:$0xff]
      %v1342 = vld [vmem:[%s5 + $0x3a0] sm:$0xff]
      %v1343 = vld [vmem:[%s5 + $0x3a8] sm:$0xff]
      %v1344 = vld [vmem:[%s5 + $0x3b0] sm:$0xff]
      %v1345 = vld [vmem:[%s5 + $0x3b8] sm:$0xff]
      %v1346 = vld [vmem:[%s5 + $0x3c0] sm:$0xff]
      %v1347 = vld [vmem:[%s5 + $0x3c8] sm:$0xff]
      %v1348 = vld [vmem:[%s5 + $0x3d0] sm:$0xff]
      %v1349 = vld [vmem:[%s5 + $0x3d8] sm:$0xff]
      %v1350 = vld [vmem:[%s5 + $0x3e0] sm:$0xff]
      %v1351 = vld [vmem:[%s5 + $0x3e8] sm:$0xff]
      %v1352 = vld [vmem:[%s5 + $0x3f0] sm:$0xff]
      %v1353 = vld [vmem:[%s5 + $0x3f8] sm:$0xff]
      %v1354 = vld [vmem:[%s5 + $0x400] sm:$0xff]
      %v1355 = vld [vmem:[%s5 + $0x408] sm:$0xff]
      %v1356 = vld [vmem:[%s5 + $0x410] sm:$0xff]
      %v1357 = vld [vmem:[%s5 + $0x418] sm:$0xff]
      %v1358 = vld [vmem:[%s5 + $0x420] sm:$0xff]
      %v1359 = vld [vmem:[%s5 + $0x428] sm:$0xff]
      %v1360 = vld [vmem:[%s5 + $0x430] sm:$0xff]
      %v1361 = vld [vmem:[%s5 + $0x438] sm:$0xff]
      %v1362 = vld [vmem:[%s5 + $0x440] sm:$0xff]
      %v1363 = vld [vmem:[%s5 + $0x448] sm:$0xff]
      %v1364 = vld [vmem:[%s5 + $0x450] sm:$0xff]
      %v1365 = vld [vmem:[%s5 + $0x458] sm:$0xff]
      %v1366 = vld [vmem:[%s5 + $0x460] sm:$0xff]
      %v1367 = vld [vmem:[%s5 + $0x468] sm:$0xff]
      %v1368 = vld [vmem:[%s5 + $0x470] sm:$0xff]
      %v1369 = vld [vmem:[%s5 + $0x478] sm:$0xff]
      %v1370 = vld [vmem:[%s5 + $0x480] sm:$0xff]
      %v1371 = vld [vmem:[%s5 + $0x488] sm:$0xff]
      %v1372 = vld [vmem:[%s5 + $0x490] sm:$0xff]
      %v1373 = vld [vmem:[%s5 + $0x498] sm:$0xff]
      %v1374 = vld [vmem:[%s5 + $0x4a0] sm:$0xff]
      %v1375 = vld [vmem:[%s5 + $0x4a8] sm:$0xff]
      %v1376 = vld [vmem:[%s5 + $0x4b0] sm:$0xff]
      %v1377 = vld [vmem:[%s5 + $0x4b8] sm:$0xff]
      %v1378 = vld [vmem:[%s5 + $0x4c0] sm:$0xff]
      %v1379 = vld [vmem:[%s5 + $0x4c8] sm:$0xff]
      %v1380 = vld [vmem:[%s5 + $0x4d0] sm:$0xff]
      %v1381 = vld [vmem:[%s5 + $0x4d8] sm:$0xff]
      %v1382 = vld [vmem:[%s5 + $0x4e0] sm:$0xff]
      %v1383 = vld [vmem:[%s5 + $0x4e8] sm:$0xff]
      %v1384 = vld [vmem:[%s5 + $0x4f0] sm:$0xff]
      %v1385 = vld [vmem:[%s5 + $0x4f8] sm:$0xff]
      %v1386 = vld [vmem:[%s5 + $0x500] sm:$0xff]
      %v1387 = vld [vmem:[%s5 + $0x508] sm:$0xff]
      %v1388 = vld [vmem:[%s5 + $0x510] sm:$0xff]
      %v1389 = vld [vmem:[%s5 + $0x518] sm:$0xff]
      %v1390 = vld [vmem:[%s5 + $0x520] sm:$0xff]
      %v1391 = vld [vmem:[%s5 + $0x528] sm:$0xff]
      %v1392 = vld [vmem:[%s5 + $0x530] sm:$0xff]
      %v1393 = vld [vmem:[%s5 + $0x538] sm:$0xff]
      %v1394 = vld [vmem:[%s5 + $0x540] sm:$0xff]
      %v1395 = vld [vmem:[%s5 + $0x548] sm:$0xff]
      %v1396 = vld [vmem:[%s5 + $0x550] sm:$0xff]
      %v1397 = vld [vmem:[%s5 + $0x558] sm:$0xff]
      %v1398 = vld [vmem:[%s5 + $0x560] sm:$0xff]
      %v1399 = vld [vmem:[%s5 + $0x568] sm:$0xff]
      %v1400 = vld [vmem:[%s5 + $0x570] sm:$0xff]
      %v1401 = vld [vmem:[%s5 + $0x578] sm:$0xff]
      %v1402 = vld [vmem:[%s5 + $0x580] sm:$0xff]
      %v1403 = vld [vmem:[%s5 + $0x588] sm:$0xff]
      %v1404 = vld [vmem:[%s5 + $0x590] sm:$0xff]
      %v1405 = vld [vmem:[%s5 + $0x598] sm:$0xff]
      %v1406 = vld [vmem:[%s5 + $0x5a0] sm:$0xff]
      %v1407 = vld [vmem:[%s5 + $0x5a8] sm:$0xff]
      %v1408 = vld [vmem:[%s5 + $0x5b0] sm:$0xff]
      %v1409 = vld [vmem:[%s5 + $0x5b8] sm:$0xff]
      %v1410 = vld [vmem:[%s5 + $0x5c0] sm:$0xff]
      %v1411 = vld [vmem:[%s5 + $0x5c8] sm:$0xff]
      %v1412 = vld [vmem:[%s5 + $0x5d0] sm:$0xff]
      %v1413 = vld [vmem:[%s5 + $0x5d8] sm:$0xff]
      %v1414 = vld [vmem:[%s5 + $0x5e0] sm:$0xff]
      %v1415 = vld [vmem:[%s5 + $0x5e8] sm:$0xff]
      %v1416 = vld [vmem:[%s5 + $0x5f0] sm:$0xff]
      %v1417 = vld [vmem:[%s5 + $0x5f8] sm:$0xff]
      %v1418 = vld [vmem:[%s5 + $0x600] sm:$0xff]
      %v1419 = vld [vmem:[%s5 + $0x608] sm:$0xff]
      %v1420 = vld [vmem:[%s5 + $0x610] sm:$0xff]
      %v1421 = vld [vmem:[%s5 + $0x618] sm:$0xff]
      %v1422 = vld [vmem:[%s5 + $0x620] sm:$0xff]
      %v1423 = vld [vmem:[%s5 + $0x628] sm:$0xff]
      %v1424 = vld [vmem:[%s5 + $0x630] sm:$0xff]
      %v1425 = vld [vmem:[%s5 + $0x638] sm:$0xff]
      %v1426 = vld [vmem:[%s5 + $0x640] sm:$0x7f]
      %v1427 = vld [vmem:[%s5 + $0x648] sm:$0x7f]
      %vm1428 = vcmask 318464
      %v1430 = vsel %vm1428, %v1225, 0
      %vm1432 = vcmask 1046528
      %v1434 = vsel %vm1432, %v1426, 0
      %v1437 = vsel %vm1432, %v1427, 0
      %1439 = vmatprep.subr.mxu0 %v1227
      %1440 = vmatpush1.msra.mxu0 %v1226
      %1441 = vmatprep.subr.mxu0 %v1229
      %1442 = vmatpush1.msra.mxu0 %v1228
      %1443 = vmatprep.subr.mxu0 %v1231
      %1444 = vmatpush1.msra.mxu0 %v1230
      %1445 = vmatprep.subr.mxu0 %v1233
      %1446 = vmatpush1.msra.mxu0 %v1232
      %1447 = vmatprep.subr.mxu0 %v1235
      %1448 = vmatpush1.msra.mxu0 %v1234
      %1449 = vmatprep.subr.mxu0 %v1237
      %1450 = vmatpush1.msra.mxu0 %v1236
      %1451 = vmatprep.subr.mxu0 %v1239
      %1452 = vmatpush1.msra.mxu0 %v1238
      %1453 = vmatprep.subr.mxu0 %v1241
      %1454 = vmatpush1.msra.mxu0 %v1240
      %1455 = vmatprep.subr.mxu0 %v1243
      %1456 = vmatpush1.msra.mxu0 %v1242
      %1457 = vmatprep.subr.mxu0 %v1245
      %1458 = vmatpush1.msra.mxu0 %v1244
      %1459 = vmatprep.subr.mxu0 %v1247
      %1460 = vmatpush1.msra.mxu0 %v1246
      %1461 = vmatprep.subr.mxu0 %v1249
      %1462 = vmatpush1.msra.mxu0 %v1248
      %1463 = vmatprep.subr.mxu0 %v1251
      %1464 = vmatpush1.msra.mxu0 %v1250
      %1465 = vmatprep.subr.mxu0 %v1253
      %1466 = vmatpush1.msra.mxu0 %v1252
      %1467 = vmatprep.subr.mxu0 %v1255
      %1468 = vmatpush1.msra.mxu0 %v1254
      %1469 = vmatprep.subr.mxu0 %v1257
      %1470 = vmatpush1.msra.mxu0 %v1256
      %1471 = vmatprep.subr.mxu0 %v1259
      %1472 = vmatpush1.msra.mxu0 %v1258
      %1473 = vmatprep.subr.mxu0 %v1261
      %1474 = vmatpush1.msra.mxu0 %v1260
      %1475 = vmatprep.subr.mxu0 %v1263
      %1476 = vmatpush1.msra.mxu0 %v1262
      %1477 = vmatprep.subr.mxu0 %v1265
      %1478 = vmatpush1.msra.mxu0 %v1264
      %1479 = vmatprep.subr.mxu0 %v1267
      %1480 = vmatpush1.msra.mxu0 %v1266
      %1481 = vmatprep.subr.mxu0 %v1269
      %1482 = vmatpush1.msra.mxu0 %v1268
      %1483 = vmatprep.subr.mxu0 %v1271
      %1484 = vmatpush1.msra.mxu0 %v1270
      %1485 = vmatprep.subr.mxu0 %v1273
      %1486 = vmatpush1.msra.mxu0 %v1272
      %1487 = vmatprep.subr.mxu0 %v1275
      %1488 = vmatpush1.msra.mxu0 %v1274
      %1489 = vmatprep.subr.mxu0 %v1277
      %1490 = vmatpush1.msra.mxu0 %v1276
      %1491 = vmatprep.subr.mxu0 %v1279
      %1492 = vmatpush1.msra.mxu0 %v1278
      %1493 = vmatprep.subr.mxu0 %v1281
      %1494 = vmatpush1.msra.mxu0 %v1280
      %1495 = vmatprep.subr.mxu0 %v1283
      %1496 = vmatpush1.msra.mxu0 %v1282
      %1497 = vmatprep.subr.mxu0 %v1285
      %1498 = vmatpush1.msra.mxu0 %v1284
      %1499 = vmatprep.subr.mxu0 %v1287
      %1500 = vmatpush1.msra.mxu0 %v1286
      %1501 = vmatprep.subr.mxu0 %v1289
      %1502 = vmatpush1.msra.mxu0 %v1288
      %1503 = vmatprep.mubr.f32.mxu0 %v1220
      %1504 = vmatmul.mubr.f32.gmra.mrb[0].mxu0 %v1219
      %v1505 = vpop.f32.mrb[0].mxu0
      %v1506 = vadd.f32 0.0, %v1505
      %v1507 = vpop.f32.mrb[0].mxu0
      %v1508 = vadd.f32 0.0, %v1507
      %1509 = vdwg.mxu0
      %1510 = vmatprep.subr.mxu0 %v1291
      %1511 = vmatpush1.msra.mxu0 %v1290
      %1512 = vmatprep.subr.mxu0 %v1293
      %1513 = vmatpush1.msra.mxu0 %v1292
      %1514 = vmatprep.subr.mxu0 %v1295
      %1515 = vmatpush1.msra.mxu0 %v1294
      %1516 = vmatprep.subr.mxu0 %v1297
      %1517 = vmatpush1.msra.mxu0 %v1296
      %1518 = vmatprep.subr.mxu0 %v1299
      %1519 = vmatpush1.msra.mxu0 %v1298
      %1520 = vmatprep.subr.mxu0 %v1301
      %1521 = vmatpush1.msra.mxu0 %v1300
      %1522 = vmatprep.subr.mxu0 %v1303
      %1523 = vmatpush1.msra.mxu0 %v1302
      %1524 = vmatprep.subr.mxu0 %v1305
      %1525 = vmatpush1.msra.mxu0 %v1304
      %1526 = vmatprep.subr.mxu0 %v1307
      %1527 = vmatpush1.msra.mxu0 %v1306
      %1528 = vmatprep.subr.mxu0 %v1309
      %1529 = vmatpush1.msra.mxu0 %v1308
      %1530 = vmatprep.subr.mxu0 %v1311
      %1531 = vmatpush1.msra.mxu0 %v1310
      %1532 = vmatprep.subr.mxu0 %v1313
      %1533 = vmatpush1.msra.mxu0 %v1312
      %1534 = vmatprep.subr.mxu0 %v1315
      %1535 = vmatpush1.msra.mxu0 %v1314
      %1536 = vmatprep.subr.mxu0 %v1317
      %1537 = vmatpush1.msra.mxu0 %v1316
      %1538 = vmatprep.subr.mxu0 %v1319
      %1539 = vmatpush1.msra.mxu0 %v1318
      %1540 = vmatprep.subr.mxu0 %v1321
      %1541 = vmatpush1.msra.mxu0 %v1320
      %1542 = vmatprep.subr.mxu0 %v1323
      %1543 = vmatpush1.msra.mxu0 %v1322
      %1544 = vmatprep.subr.mxu0 %v1325
      %1545 = vmatpush1.msra.mxu0 %v1324
      %1546 = vmatprep.subr.mxu0 %v1327
      %1547 = vmatpush1.msra.mxu0 %v1326
      %1548 = vmatprep.subr.mxu0 %v1329
      %1549 = vmatpush1.msra.mxu0 %v1328
      %1550 = vmatprep.subr.mxu0 %v1331
      %1551 = vmatpush1.msra.mxu0 %v1330
      %1552 = vmatprep.subr.mxu0 %v1333
      %1553 = vmatpush1.msra.mxu0 %v1332
      %1554 = vmatprep.subr.mxu0 %v1335
      %1555 = vmatpush1.msra.mxu0 %v1334
      %1556 = vmatprep.subr.mxu0 %v1337
      %1557 = vmatpush1.msra.mxu0 %v1336
      %1558 = vmatprep.subr.mxu0 %v1339
      %1559 = vmatpush1.msra.mxu0 %v1338
      %1560 = vmatprep.subr.mxu0 %v1341
      %1561 = vmatpush1.msra.mxu0 %v1340
      %1562 = vmatprep.subr.mxu0 %v1343
      %1563 = vmatpush1.msra.mxu0 %v1342
      %1564 = vmatprep.subr.mxu0 %v1345
      %1565 = vmatpush1.msra.mxu0 %v1344
      %1566 = vmatprep.subr.mxu0 %v1347
      %1567 = vmatpush1.msra.mxu0 %v1346
      %1568 = vmatprep.subr.mxu0 %v1349
      %1569 = vmatpush1.msra.mxu0 %v1348
      %1570 = vmatprep.subr.mxu0 %v1351
      %1571 = vmatpush1.msra.mxu0 %v1350
      %1572 = vmatprep.subr.mxu0 %v1353
      %1573 = vmatpush1.msra.mxu0 %v1352
      %1574 = vmatprep.mubr.f32.mxu0 %v1222
      %1575 = vmatmul.mubr.f32.gmra.mrb[0].mxu0 %v1221
      %v1576 = vpop.f32.mrb[0].mxu0
      %v1577 = vadd.f32 %v1506, %v1576
      %v1578 = vpop.f32.mrb[0].mxu0
      %v1579 = vadd.f32 %v1508, %v1578
      %1580 = vdwg.mxu0
      %1581 = vmatprep.subr.mxu0 %v1355
      %1582 = vmatpush1.msra.mxu0 %v1354
      %1583 = vmatprep.subr.mxu0 %v1357
      %1584 = vmatpush1.msra.mxu0 %v1356
      %1585 = vmatprep.subr.mxu0 %v1359
      %1586 = vmatpush1.msra.mxu0 %v1358
      %1587 = vmatprep.subr.mxu0 %v1361
      %1588 = vmatpush1.msra.mxu0 %v1360
      %1589 = vmatprep.subr.mxu0 %v1363
      %1590 = vmatpush1.msra.mxu0 %v1362
      %1591 = vmatprep.subr.mxu0 %v1365
      %1592 = vmatpush1.msra.mxu0 %v1364
      %1593 = vmatprep.subr.mxu0 %v1367
      %1594 = vmatpush1.msra.mxu0 %v1366
      %1595 = vmatprep.subr.mxu0 %v1369
      %1596 = vmatpush1.msra.mxu0 %v1368
      %1597 = vmatprep.subr.mxu0 %v1371
      %1598 = vmatpush1.msra.mxu0 %v1370
      %1599 = vmatprep.subr.mxu0 %v1373
      %1600 = vmatpush1.msra.mxu0 %v1372
      %1601 = vmatprep.subr.mxu0 %v1375
      %1602 = vmatpush1.msra.mxu0 %v1374
      %1603 = vmatprep.subr.mxu0 %v1377
      %1604 = vmatpush1.msra.mxu0 %v1376
      %1605 = vmatprep.subr.mxu0 %v1379
      %1606 = vmatpush1.msra.mxu0 %v1378
      %1607 = vmatprep.subr.mxu0 %v1381
      %1608 = vmatpush1.msra.mxu0 %v1380
      %1609 = vmatprep.subr.mxu0 %v1383
      %1610 = vmatpush1.msra.mxu0 %v1382
      %1611 = vmatprep.subr.mxu0 %v1385
      %1612 = vmatpush1.msra.mxu0 %v1384
      %1613 = vmatprep.subr.mxu0 %v1387
      %1614 = vmatpush1.msra.mxu0 %v1386
      %1615 = vmatprep.subr.mxu0 %v1389
      %1616 = vmatpush1.msra.mxu0 %v1388
      %1617 = vmatprep.subr.mxu0 %v1391
      %1618 = vmatpush1.msra.mxu0 %v1390
      %1619 = vmatprep.subr.mxu0 %v1393
      %1620 = vmatpush1.msra.mxu0 %v1392
      %1621 = vmatprep.subr.mxu0 %v1395
      %1622 = vmatpush1.msra.mxu0 %v1394
      %1623 = vmatprep.subr.mxu0 %v1397
      %1624 = vmatpush1.msra.mxu0 %v1396
      %1625 = vmatprep.subr.mxu0 %v1399
      %1626 = vmatpush1.msra.mxu0 %v1398
      %1627 = vmatprep.subr.mxu0 %v1401
      %1628 = vmatpush1.msra.mxu0 %v1400
      %1629 = vmatprep.subr.mxu0 %v1403
      %1630 = vmatpush1.msra.mxu0 %v1402
      %1631 = vmatprep.subr.mxu0 %v1405
      %1632 = vmatpush1.msra.mxu0 %v1404
      %1633 = vmatprep.subr.mxu0 %v1407
      %1634 = vmatpush1.msra.mxu0 %v1406
      %1635 = vmatprep.subr.mxu0 %v1409
      %1636 = vmatpush1.msra.mxu0 %v1408
      %1637 = vmatprep.subr.mxu0 %v1411
      %1638 = vmatpush1.msra.mxu0 %v1410
      %1639 = vmatprep.subr.mxu0 %v1413
      %1640 = vmatpush1.msra.mxu0 %v1412
      %1641 = vmatprep.subr.mxu0 %v1415
      %1642 = vmatpush1.msra.mxu0 %v1414
      %1643 = vmatprep.subr.mxu0 %v1417
      %1644 = vmatpush1.msra.mxu0 %v1416
      %1645 = vmatprep.mubr.f32.mxu0 %v1224
      %1646 = vmatmul.mubr.f32.gmra.mrb[0].mxu0 %v1223
      %v1647 = vpop.f32.mrb[0].mxu0
      %v1648 = vadd.f32 %v1577, %v1647
      %v1649 = vpop.f32.mrb[0].mxu0
      %v1650 = vadd.f32 %v1579, %v1649
      %1651 = vdwg.mxu0
      %1652 = vmatprep.subr.mxu0 %v1419
      %1653 = vmatpush1.msra.mxu0 %v1418
      %1654 = vmatprep.subr.mxu0 %v1421
      %1655 = vmatpush1.msra.mxu0 %v1420
      %1656 = vmatprep.subr.mxu0 %v1423
      %1657 = vmatpush1.msra.mxu0 %v1422
      %1658 = vmatprep.subr.mxu0 %v1425
      %1659 = vmatpush1.msra.mxu0 %v1424
      %1660 = vmatprep.subr.mxu0 %v1437
      %1661 = vmatpush1.msra.mxu0 %v1434
      %1662 = vmatprep.subr.mxu0 0.0
      %1663 = vmatpush1.msra.mxu0 0.0
      %1664 = vmatprep.subr.mxu0 0.0
      %1665 = vmatpush1.msra.mxu0 0.0
      %1666 = vmatprep.subr.mxu0 0.0
      %1667 = vmatpush1.msra.mxu0 0.0
      %1668 = vmatprep.subr.mxu0 0.0
      %1669 = vmatpush1.msra.mxu0 0.0
      %1670 = vmatprep.subr.mxu0 0.0
      %1671 = vmatpush1.msra.mxu0 0.0
      %1672 = vmatprep.subr.mxu0 0.0
      %1673 = vmatpush1.msra.mxu0 0.0
      %1674 = vmatprep.subr.mxu0 0.0
      %1675 = vmatpush1.msra.mxu0 0.0
      %1676 = vmatprep.subr.mxu0 0.0
      %1677 = vmatpush1.msra.mxu0 0.0
      %1678 = vmatprep.subr.mxu0 0.0
      %1679 = vmatpush1.msra.mxu0 0.0
      %1680 = vmatprep.subr.mxu0 0.0
      %1681 = vmatpush1.msra.mxu0 0.0
      %1682 = vmatprep.subr.mxu0 0.0
      %1683 = vmatpush1.msra.mxu0 0.0
      %1684 = vmatprep.subr.mxu0 0.0
      %1685 = vmatpush1.msra.mxu0 0.0
      %1686 = vmatprep.subr.mxu0 0.0
      %1687 = vmatpush1.msra.mxu0 0.0
      %1688 = vmatprep.subr.mxu0 0.0
      %1689 = vmatpush1.msra.mxu0 0.0
      %1690 = vmatprep.subr.mxu0 0.0
      %1691 = vmatpush1.msra.mxu0 0.0
      %1692 = vmatprep.subr.mxu0 0.0
      %1693 = vmatpush1.msra.mxu0 0.0
      %1694 = vmatprep.subr.mxu0 0.0
      %1695 = vmatpush1.msra.mxu0 0.0
      %1696 = vmatprep.subr.mxu0 0.0
      %1697 = vmatpush1.msra.mxu0 0.0
      %1698 = vmatprep.subr.mxu0 0.0
      %1699 = vmatpush1.msra.mxu0 0.0
      %1700 = vmatprep.subr.mxu0 0.0
      %1701 = vmatpush1.msra.mxu0 0.0
      %1702 = vmatprep.subr.mxu0 0.0
      %1703 = vmatpush1.msra.mxu0 0.0
      %1704 = vmatprep.subr.mxu0 0.0
      %1705 = vmatpush1.msra.mxu0 0.0
      %1706 = vmatprep.subr.mxu0 0.0
      %1707 = vmatpush1.msra.mxu0 0.0
      %1708 = vmatprep.subr.mxu0 0.0
      %1709 = vmatpush1.msra.mxu0 0.0
      %1710 = vmatprep.subr.mxu0 0.0
      %1711 = vmatpush1.msra.mxu0 0.0
      %1712 = vmatprep.subr.mxu0 0.0
      %1713 = vmatpush1.msra.mxu0 0.0
      %1714 = vmatprep.subr.mxu0 0.0
      %1715 = vmatpush1.msra.mxu0 0.0
      %1716 = vmatprep.mubr.f32.mxu0 0.0
      %1717 = vmatmul.mubr.f32.gmra.mrb[0].mxu0 %v1430
      %v1718 = vpop.f32.mrb[0].mxu0
      %v1719 = vadd.f32 %v1648, %v1718
      %v1720 = vpop.f32.mrb[0].mxu0
      %v1721 = vadd.f32 %v1650, %v1720
      %1722 = vdwg.mxu0
      %v1723 = vld [vmem:[%s6] sm:$0xff]
      %v1724 = vld [vmem:[%s6 + $0x8] sm:$0xff]
      %s1725 = scalar_lea.vmem %s6, 16
      %v1726 = vld [vmem:[%s1725] sm:$0xff]
      %v1727 = vld [vmem:[%s1725 + $0x8] sm:$0xff]
      %1730 = vrot.lane.b32.xlu0 %v1719, 127
      %v1731 = vpop.permute.xlu0 %1730
      %1732 = vrot.lane.b32.xlu0 %v1721, 127
      %v1733 = vpop.permute.xlu0 %1732
      %v1734 = vsel %vm665, %v1731, %v1733
      %vm1735 = vcmask 48128
      %v1737 = vsel %vm1735, %v1726, 0
      %v1740 = vsel %vm1735, %v1727, 0
      %vm1742 = vcmask 1045504
      %v1743 = vsel %vm1742, %v1734, 0
      %v1745 = vsel %vm1742, %v1733, 0
      %1747 = vmatprep.subr.mxu0 %v1745
      %1748 = vmatpush1.msra.mxu0 %v1743
      %1749 = vmatprep.subr.mxu0 0.0
      %1750 = vmatpush1.msra.mxu0 0.0
      %1751 = vmatprep.subr.mxu0 0.0
      %1752 = vmatpush1.msra.mxu0 0.0
      %1753 = vmatprep.subr.mxu0 0.0
      %1754 = vmatpush1.msra.mxu0 0.0
      %1755 = vmatprep.subr.mxu0 0.0
      %1756 = vmatpush1.msra.mxu0 0.0
      %1757 = vmatprep.subr.mxu0 0.0
      %1758 = vmatpush1.msra.mxu0 0.0
      %1759 = vmatprep.subr.mxu0 0.0
      %1760 = vmatpush1.msra.mxu0 0.0
      %1761 = vmatprep.subr.mxu0 0.0
      %1762 = vmatpush1.msra.mxu0 0.0
      %1763 = vmatprep.subr.mxu0 0.0
      %1764 = vmatpush1.msra.mxu0 0.0
      %1765 = vmatprep.subr.mxu0 0.0
      %1766 = vmatpush1.msra.mxu0 0.0
      %1767 = vmatprep.subr.mxu0 0.0
      %1768 = vmatpush1.msra.mxu0 0.0
      %1769 = vmatprep.subr.mxu0 0.0
      %1770 = vmatpush1.msra.mxu0 0.0
      %1771 = vmatprep.subr.mxu0 0.0
      %1772 = vmatpush1.msra.mxu0 0.0
      %1773 = vmatprep.subr.mxu0 0.0
      %1774 = vmatpush1.msra.mxu0 0.0
      %1775 = vmatprep.subr.mxu0 0.0
      %1776 = vmatpush1.msra.mxu0 0.0
      %1777 = vmatprep.subr.mxu0 0.0
      %1778 = vmatpush1.msra.mxu0 0.0
      %1779 = vmatprep.subr.mxu0 0.0
      %1780 = vmatpush1.msra.mxu0 0.0
      %1781 = vmatprep.subr.mxu0 0.0
      %1782 = vmatpush1.msra.mxu0 0.0
      %1783 = vmatprep.subr.mxu0 0.0
      %1784 = vmatpush1.msra.mxu0 0.0
      %1785 = vmatprep.subr.mxu0 0.0
      %1786 = vmatpush1.msra.mxu0 0.0
      %1787 = vmatprep.subr.mxu0 0.0
      %1788 = vmatpush1.msra.mxu0 0.0
      %1789 = vmatprep.subr.mxu0 0.0
      %1790 = vmatpush1.msra.mxu0 0.0
      %1791 = vmatprep.subr.mxu0 0.0
      %1792 = vmatpush1.msra.mxu0 0.0
      %1793 = vmatprep.subr.mxu0 0.0
      %1794 = vmatpush1.msra.mxu0 0.0
      %1795 = vmatprep.subr.mxu0 0.0
      %1796 = vmatpush1.msra.mxu0 0.0
      %1797 = vmatprep.subr.mxu0 0.0
      %1798 = vmatpush1.msra.mxu0 0.0
      %1799 = vmatprep.subr.mxu0 0.0
      %1800 = vmatpush1.msra.mxu0 0.0
      %1801 = vmatprep.subr.mxu0 0.0
      %1802 = vmatpush1.msra.mxu0 0.0
      %1803 = vmatprep.subr.mxu0 0.0
      %1804 = vmatpush1.msra.mxu0 0.0
      %1805 = vmatprep.subr.mxu0 0.0
      %1806 = vmatpush1.msra.mxu0 0.0
      %1807 = vmatprep.subr.mxu0 0.0
      %1808 = vmatpush1.msra.mxu0 0.0
      %1809 = vmatprep.subr.mxu0 0.0
      %1810 = vmatpush1.msra.mxu0 0.0
      %1811 = vmatprep.mubr.f32.mxu0 0.0
      %1812 = vmatmul.mubr.f32.gmra.mrb[0].mxu0 %v1737
      %v1813 = vpop.f32.mrb[0].mxu0
      %v1814 = vadd.f32 0.0, %v1813
      %v1815 = vpop.f32.mrb[0].mxu0
      %v1816 = vadd.f32 0.0, %v1815
      %1817 = vmatprep.mubr.f32.mxu0 0.0
      %1818 = vmatmul.mubr.f32.gmra.mrb[0].mxu0 %v1740
      %v1819 = vpop.f32.mrb[0].mxu0
      %v1820 = vadd.f32 0.0, %v1819
      %v1821 = vpop.f32.mrb[0].mxu0
      %v1822 = vadd.f32 0.0, %v1821
      %1823 = vdwg.mxu0
      %v1825 = vsel %vm1735, %v1723, 0
      %v1828 = vsel %vm1735, %v1724, 0
      %v1830 = vsel %vm1742, %v1719, 0
      %v1832 = vsel %vm1742, %v1721, 0
      %1834 = vmatprep.subr.mxu0 %v1832
      %1835 = vmatpush1.msra.mxu0 %v1830
      %1836 = vmatprep.subr.mxu0 0.0
      %1837 = vmatpush1.msra.mxu0 0.0
      %1838 = vmatprep.subr.mxu0 0.0
      %1839 = vmatpush1.msra.mxu0 0.0
      %1840 = vmatprep.subr.mxu0 0.0
      %1841 = vmatpush1.msra.mxu0 0.0
      %1842 = vmatprep.subr.mxu0 0.0
      %1843 = vmatpush1.msra.mxu0 0.0
      %1844 = vmatprep.subr.mxu0 0.0
      %1845 = vmatpush1.msra.mxu0 0.0
      %1846 = vmatprep.subr.mxu0 0.0
      %1847 = vmatpush1.msra.mxu0 0.0
      %1848 = vmatprep.subr.mxu0 0.0
      %1849 = vmatpush1.msra.mxu0 0.0
      %1850 = vmatprep.subr.mxu0 0.0
      %1851 = vmatpush1.msra.mxu0 0.0
      %1852 = vmatprep.subr.mxu0 0.0
      %1853 = vmatpush1.msra.mxu0 0.0
      %1854 = vmatprep.subr.mxu0 0.0
      %1855 = vmatpush1.msra.mxu0 0.0
      %1856 = vmatprep.subr.mxu0 0.0
      %1857 = vmatpush1.msra.mxu0 0.0
      %1858 = vmatprep.subr.mxu0 0.0
      %1859 = vmatpush1.msra.mxu0 0.0
      %1860 = vmatprep.subr.mxu0 0.0
      %1861 = vmatpush1.msra.mxu0 0.0
      %1862 = vmatprep.subr.mxu0 0.0
      %1863 = vmatpush1.msra.mxu0 0.0
      %1864 = vmatprep.subr.mxu0 0.0
      %1865 = vmatpush1.msra.mxu0 0.0
      %1866 = vmatprep.subr.mxu0 0.0
      %1867 = vmatpush1.msra.mxu0 0.0
      %1868 = vmatprep.subr.mxu0 0.0
      %1869 = vmatpush1.msra.mxu0 0.0
      %1870 = vmatprep.subr.mxu0 0.0
      %1871 = vmatpush1.msra.mxu0 0.0
      %1872 = vmatprep.subr.mxu0 0.0
      %1873 = vmatpush1.msra.mxu0 0.0
      %1874 = vmatprep.subr.mxu0 0.0
      %1875 = vmatpush1.msra.mxu0 0.0
      %1876 = vmatprep.subr.mxu0 0.0
      %1877 = vmatpush1.msra.mxu0 0.0
      %1878 = vmatprep.subr.mxu0 0.0
      %1879 = vmatpush1.msra.mxu0 0.0
      %1880 = vmatprep.subr.mxu0 0.0
      %1881 = vmatpush1.msra.mxu0 0.0
      %1882 = vmatprep.subr.mxu0 0.0
      %1883 = vmatpush1.msra.mxu0 0.0
      %1884 = vmatprep.subr.mxu0 0.0
      %1885 = vmatpush1.msra.mxu0 0.0
      %1886 = vmatprep.subr.mxu0 0.0
      %1887 = vmatpush1.msra.mxu0 0.0
      %1888 = vmatprep.subr.mxu0 0.0
      %1889 = vmatpush1.msra.mxu0 0.0
      %1890 = vmatprep.subr.mxu0 0.0
      %1891 = vmatpush1.msra.mxu0 0.0
      %1892 = vmatprep.subr.mxu0 0.0
      %1893 = vmatpush1.msra.mxu0 0.0
      %1894 = vmatprep.subr.mxu0 0.0
      %1895 = vmatpush1.msra.mxu0 0.0
      %1896 = vmatprep.subr.mxu0 0.0
      %1897 = vmatpush1.msra.mxu0 0.0
      %1898 = vmatprep.mubr.f32.mxu0 0.0
      %1899 = vmatmul.mubr.f32.gmra.mrb[0].mxu0 %v1825
      %v1900 = vpop.f32.mrb[0].mxu0
      %v1901 = vadd.f32 %v1814, %v1900
      %v1902 = vpop.f32.mrb[0].mxu0
      %v1903 = vadd.f32 %v1816, %v1902
      %1904 = vmatprep.mubr.f32.mxu0 0.0
      %1905 = vmatmul.mubr.f32.gmra.mrb[0].mxu0 %v1828
      %v1906 = vpop.f32.mrb[0].mxu0
      %v1907 = vadd.f32 %v1820, %v1906
      %v1908 = vpop.f32.mrb[0].mxu0
      %v1909 = vadd.f32 %v1822, %v1908
      %1910 = vdwg.mxu0
      %s1911 = scalar_lea.vmem %s6, 32
      %v1912 = vld [vmem:[%s1911] sm:$0xff]
      %v1913 = vld [vmem:[%s1911 + $0x8] sm:$0xff]
      %1914 = vrot.lane.b32.xlu0 %v1719, 126
      %v1915 = vpop.permute.xlu0 %1914
      %1916 = vrot.lane.b32.xlu0 %v1721, 126
      %v1917 = vpop.permute.xlu0 %1916
      %v1918 = vsel %vm721, %v1915, %v1917
      %v1920 = vsel %vm1735, %v1912, 0
      %v1923 = vsel %vm1735, %v1913, 0
      %v1925 = vsel %vm1742, %v1918, 0
      %v1927 = vsel %vm1742, %v1917, 0
      %1929 = vmatprep.subr.mxu0 %v1927
      %1930 = vmatpush1.msra.mxu0 %v1925
      %1931 = vmatprep.subr.mxu0 0.0
      %1932 = vmatpush1.msra.mxu0 0.0
      %1933 = vmatprep.subr.mxu0 0.0
      %1934 = vmatpush1.msra.mxu0 0.0
      %1935 = vmatprep.subr.mxu0 0.0
      %1936 = vmatpush1.msra.mxu0 0.0
      %1937 = vmatprep.subr.mxu0 0.0
      %1938 = vmatpush1.msra.mxu0 0.0
      %1939 = vmatprep.subr.mxu0 0.0
      %1940 = vmatpush1.msra.mxu0 0.0
      %1941 = vmatprep.subr.mxu0 0.0
      %1942 = vmatpush1.msra.mxu0 0.0
      %1943 = vmatprep.subr.mxu0 0.0
      %1944 = vmatpush1.msra.mxu0 0.0
      %1945 = vmatprep.subr.mxu0 0.0
      %1946 = vmatpush1.msra.mxu0 0.0
      %1947 = vmatprep.subr.mxu0 0.0
      %1948 = vmatpush1.msra.mxu0 0.0
      %1949 = vmatprep.subr.mxu0 0.0
      %1950 = vmatpush1.msra.mxu0 0.0
      %1951 = vmatprep.subr.mxu0 0.0
      %1952 = vmatpush1.msra.mxu0 0.0
      %1953 = vmatprep.subr.mxu0 0.0
      %1954 = vmatpush1.msra.mxu0 0.0
      %1955 = vmatprep.subr.mxu0 0.0
      %1956 = vmatpush1.msra.mxu0 0.0
      %1957 = vmatprep.subr.mxu0 0.0
      %1958 = vmatpush1.msra.mxu0 0.0
      %1959 = vmatprep.subr.mxu0 0.0
      %1960 = vmatpush1.msra.mxu0 0.0
      %1961 = vmatprep.subr.mxu0 0.0
      %1962 = vmatpush1.msra.mxu0 0.0
      %1963 = vmatprep.subr.mxu0 0.0
      %1964 = vmatpush1.msra.mxu0 0.0
      %1965 = vmatprep.subr.mxu0 0.0
      %1966 = vmatpush1.msra.mxu0 0.0
      %1967 = vmatprep.subr.mxu0 0.0
      %1968 = vmatpush1.msra.mxu0 0.0
      %1969 = vmatprep.subr.mxu0 0.0
      %1970 = vmatpush1.msra.mxu0 0.0
      %1971 = vmatprep.subr.mxu0 0.0
      %1972 = vmatpush1.msra.mxu0 0.0
      %1973 = vmatprep.subr.mxu0 0.0
      %1974 = vmatpush1.msra.mxu0 0.0
      %1975 = vmatprep.subr.mxu0 0.0
      %1976 = vmatpush1.msra.mxu0 0.0
      %1977 = vmatprep.subr.mxu0 0.0
      %1978 = vmatpush1.msra.mxu0 0.0
      %1979 = vmatprep.subr.mxu0 0.0
      %1980 = vmatpush1.msra.mxu0 0.0
      %1981 = vmatprep.subr.mxu0 0.0
      %1982 = vmatpush1.msra.mxu0 0.0
      %1983 = vmatprep.subr.mxu0 0.0
      %1984 = vmatpush1.msra.mxu0 0.0
      %1985 = vmatprep.subr.mxu0 0.0
      %1986 = vmatpush1.msra.mxu0 0.0
      %1987 = vmatprep.subr.mxu0 0.0
      %1988 = vmatpush1.msra.mxu0 0.0
      %1989 = vmatprep.subr.mxu0 0.0
      %1990 = vmatpush1.msra.mxu0 0.0
      %1991 = vmatprep.subr.mxu0 0.0
      %1992 = vmatpush1.msra.mxu0 0.0
      %1993 = vmatprep.mubr.f32.mxu0 0.0
      %1994 = vmatmul.mubr.f32.gmra.mrb[0].mxu0 %v1920
      %v1995 = vpop.f32.mrb[0].mxu0
      %v1996 = vadd.f32 0.0, %v1995
      %v1997 = vpop.f32.mrb[0].mxu0
      %v1998 = vadd.f32 0.0, %v1997
      %1999 = vmatprep.mubr.f32.mxu0 0.0
      %2000 = vmatmul.mubr.f32.gmra.mrb[0].mxu0 %v1923
      %v2001 = vpop.f32.mrb[0].mxu0
      %v2002 = vadd.f32 0.0, %v2001
      %v2003 = vpop.f32.mrb[0].mxu0
      %v2004 = vadd.f32 0.0, %v2003
      %2005 = vdwg.mxu0
      %v2006 = vadd.f32 %v1901, %v1996
      %v2007 = vadd.f32 %v1903, %v1998
      %v2008 = vadd.f32 %v1907, %v2002
      %v2009 = vadd.f32 %v1909, %v2004
      %s2010 = scalar_lea.vmem %s6, 48
      %v2011 = vld [vmem:[%s2010] sm:$0xff]
      %v2012 = vld [vmem:[%s2010 + $0x8] sm:$0xff]
      %2013 = vrot.lane.b32.xlu0 %v1719, 112
      %v2014 = vpop.permute.xlu0 %2013
      %2015 = vrot.lane.b32.xlu0 %v1721, 112
      %v2016 = vpop.permute.xlu0 %2015
      %vm2017 = vcmask 916480
      %v2018 = vsel %vm2017, %v2014, %v2016
      %v2020 = vsel %vm1735, %v2011, 0
      %v2023 = vsel %vm1735, %v2012, 0
      %v2025 = vsel %vm1742, %v2018, 0
      %v2027 = vsel %vm1742, %v2016, 0
      %2029 = vmatprep.subr.mxu0 %v2027
      %2030 = vmatpush1.msra.mxu0 %v2025
      %2031 = vmatprep.subr.mxu0 0.0
      %2032 = vmatpush1.msra.mxu0 0.0
      %2033 = vmatprep.subr.mxu0 0.0
      %2034 = vmatpush1.msra.mxu0 0.0
      %2035 = vmatprep.subr.mxu0 0.0
      %2036 = vmatpush1.msra.mxu0 0.0
      %2037 = vmatprep.subr.mxu0 0.0
      %2038 = vmatpush1.msra.mxu0 0.0
      %2039 = vmatprep.subr.mxu0 0.0
      %2040 = vmatpush1.msra.mxu0 0.0
      %2041 = vmatprep.subr.mxu0 0.0
      %2042 = vmatpush1.msra.mxu0 0.0
      %2043 = vmatprep.subr.mxu0 0.0
      %2044 = vmatpush1.msra.mxu0 0.0
      %2045 = vmatprep.subr.mxu0 0.0
      %2046 = vmatpush1.msra.mxu0 0.0
      %2047 = vmatprep.subr.mxu0 0.0
      %2048 = vmatpush1.msra.mxu0 0.0
      %2049 = vmatprep.subr.mxu0 0.0
      %2050 = vmatpush1.msra.mxu0 0.0
      %2051 = vmatprep.subr.mxu0 0.0
      %2052 = vmatpush1.msra.mxu0 0.0
      %2053 = vmatprep.subr.mxu0 0.0
      %2054 = vmatpush1.msra.mxu0 0.0
      %2055 = vmatprep.subr.mxu0 0.0
      %2056 = vmatpush1.msra.mxu0 0.0
      %2057 = vmatprep.subr.mxu0 0.0
      %2058 = vmatpush1.msra.mxu0 0.0
      %2059 = vmatprep.subr.mxu0 0.0
      %2060 = vmatpush1.msra.mxu0 0.0
      %2061 = vmatprep.subr.mxu0 0.0
      %2062 = vmatpush1.msra.mxu0 0.0
      %2063 = vmatprep.subr.mxu0 0.0
      %2064 = vmatpush1.msra.mxu0 0.0
      %2065 = vmatprep.subr.mxu0 0.0
      %2066 = vmatpush1.msra.mxu0 0.0
      %2067 = vmatprep.subr.mxu0 0.0
      %2068 = vmatpush1.msra.mxu0 0.0
      %2069 = vmatprep.subr.mxu0 0.0
      %2070 = vmatpush1.msra.mxu0 0.0
      %2071 = vmatprep.subr.mxu0 0.0
      %2072 = vmatpush1.msra.mxu0 0.0
      %2073 = vmatprep.subr.mxu0 0.0
      %2074 = vmatpush1.msra.mxu0 0.0
      %2075 = vmatprep.subr.mxu0 0.0
      %2076 = vmatpush1.msra.mxu0 0.0
      %2077 = vmatprep.subr.mxu0 0.0
      %2078 = vmatpush1.msra.mxu0 0.0
      %2079 = vmatprep.subr.mxu0 0.0
      %2080 = vmatpush1.msra.mxu0 0.0
      %2081 = vmatprep.subr.mxu0 0.0
      %2082 = vmatpush1.msra.mxu0 0.0
      %2083 = vmatprep.subr.mxu0 0.0
      %2084 = vmatpush1.msra.mxu0 0.0
      %2085 = vmatprep.subr.mxu0 0.0
      %2086 = vmatpush1.msra.mxu0 0.0
      %2087 = vmatprep.subr.mxu0 0.0
      %2088 = vmatpush1.msra.mxu0 0.0
      %2089 = vmatprep.subr.mxu0 0.0
      %2090 = vmatpush1.msra.mxu0 0.0
      %2091 = vmatprep.subr.mxu0 0.0
      %2092 = vmatpush1.msra.mxu0 0.0
      %2093 = vmatprep.mubr.f32.mxu0 0.0
      %2094 = vmatmul.mubr.f32.gmra.mrb[0].mxu0 %v2020
      %v2095 = vpop.f32.mrb[0].mxu0
      %v2096 = vadd.f32 0.0, %v2095
      %v2097 = vpop.f32.mrb[0].mxu0
      %v2098 = vadd.f32 0.0, %v2097
      %2099 = vmatprep.mubr.f32.mxu0 0.0
      %2100 = vmatmul.mubr.f32.gmra.mrb[0].mxu0 %v2023
      %v2101 = vpop.f32.mrb[0].mxu0
      %v2102 = vadd.f32 0.0, %v2101
      %v2103 = vpop.f32.mrb[0].mxu0
      %v2104 = vadd.f32 0.0, %v2103
      %2105 = vdwg.mxu0
      %v2106 = vadd.f32 %v2006, %v2096
      %v2107 = vadd.f32 %v2007, %v2098
      %v2108 = vadd.f32 %v2008, %v2102
      %v2109 = vadd.f32 %v2009, %v2104
      %s2110 = scalar_lea.vmem %s6, 64
      %v2111 = vld [vmem:[%s2110] sm:$0xff]
      %v2112 = vld [vmem:[%s2110 + $0x8] sm:$0xff]
      %2113 = vrot.lane.b32.xlu0 %v1719, 111
      %v2114 = vpop.permute.xlu0 %2113
      %2115 = vrot.lane.b32.xlu0 %v1721, 111
      %v2116 = vpop.permute.xlu0 %2115
      %vm2117 = vcmask 908288
      %v2118 = vsel %vm2117, %v2114, %v2116
      %v2120 = vsel %vm1735, %v2111, 0
      %v2123 = vsel %vm1735, %v2112, 0
      %v2125 = vsel %vm1742, %v2118, 0
      %v2127 = vsel %vm1742, %v2116, 0
      %2129 = vmatprep.subr.mxu0 %v2127
      %2130 = vmatpush1.msra.mxu0 %v2125
      %2131 = vmatprep.subr.mxu0 0.0
      %2132 = vmatpush1.msra.mxu0 0.0
      %2133 = vmatprep.subr.mxu0 0.0
      %2134 = vmatpush1.msra.mxu0 0.0
      %2135 = vmatprep.subr.mxu0 0.0
      %2136 = vmatpush1.msra.mxu0 0.0
      %2137 = vmatprep.subr.mxu0 0.0
      %2138 = vmatpush1.msra.mxu0 0.0
      %2139 = vmatprep.subr.mxu0 0.0
      %2140 = vmatpush1.msra.mxu0 0.0
      %2141 = vmatprep.subr.mxu0 0.0
      %2142 = vmatpush1.msra.mxu0 0.0
      %2143 = vmatprep.subr.mxu0 0.0
      %2144 = vmatpush1.msra.mxu0 0.0
      %2145 = vmatprep.subr.mxu0 0.0
      %2146 = vmatpush1.msra.mxu0 0.0
      %2147 = vmatprep.subr.mxu0 0.0
      %2148 = vmatpush1.msra.mxu0 0.0
      %2149 = vmatprep.subr.mxu0 0.0
      %2150 = vmatpush1.msra.mxu0 0.0
      %2151 = vmatprep.subr.mxu0 0.0
      %2152 = vmatpush1.msra.mxu0 0.0
      %2153 = vmatprep.subr.mxu0 0.0
      %2154 = vmatpush1.msra.mxu0 0.0
      %2155 = vmatprep.subr.mxu0 0.0
      %2156 = vmatpush1.msra.mxu0 0.0
      %2157 = vmatprep.subr.mxu0 0.0
      %2158 = vmatpush1.msra.mxu0 0.0
      %2159 = vmatprep.subr.mxu0 0.0
      %2160 = vmatpush1.msra.mxu0 0.0
      %2161 = vmatprep.subr.mxu0 0.0
      %2162 = vmatpush1.msra.mxu0 0.0
      %2163 = vmatprep.subr.mxu0 0.0
      %2164 = vmatpush1.msra.mxu0 0.0
      %2165 = vmatprep.subr.mxu0 0.0
      %2166 = vmatpush1.msra.mxu0 0.0
      %2167 = vmatprep.subr.mxu0 0.0
      %2168 = vmatpush1.msra.mxu0 0.0
      %2169 = vmatprep.subr.mxu0 0.0
      %2170 = vmatpush1.msra.mxu0 0.0
      %2171 = vmatprep.subr.mxu0 0.0
      %2172 = vmatpush1.msra.mxu0 0.0
      %2173 = vmatprep.subr.mxu0 0.0
      %2174 = vmatpush1.msra.mxu0 0.0
      %2175 = vmatprep.subr.mxu0 0.0
      %2176 = vmatpush1.msra.mxu0 0.0
      %2177 = vmatprep.subr.mxu0 0.0
      %2178 = vmatpush1.msra.mxu0 0.0
      %2179 = vmatprep.subr.mxu0 0.0
      %2180 = vmatpush1.msra.mxu0 0.0
      %2181 = vmatprep.subr.mxu0 0.0
      %2182 = vmatpush1.msra.mxu0 0.0
      %2183 = vmatprep.subr.mxu0 0.0
      %2184 = vmatpush1.msra.mxu0 0.0
      %2185 = vmatprep.subr.mxu0 0.0
      %2186 = vmatpush1.msra.mxu0 0.0
      %2187 = vmatprep.subr.mxu0 0.0
      %2188 = vmatpush1.msra.mxu0 0.0
      %2189 = vmatprep.subr.mxu0 0.0
      %2190 = vmatpush1.msra.mxu0 0.0
      %2191 = vmatprep.subr.mxu0 0.0
      %2192 = vmatpush1.msra.mxu0 0.0
      %2193 = vmatprep.mubr.f32.mxu0 0.0
      %2194 = vmatmul.mubr.f32.gmra.mrb[0].mxu0 %v2120
      %v2195 = vpop.f32.mrb[0].mxu0
      %v2196 = vadd.f32 0.0, %v2195
      %v2197 = vpop.f32.mrb[0].mxu0
      %v2198 = vadd.f32 0.0, %v2197
      %2199 = vmatprep.mubr.f32.mxu0 0.0
      %2200 = vmatmul.mubr.f32.gmra.mrb[0].mxu0 %v2123
      %v2201 = vpop.f32.mrb[0].mxu0
      %v2202 = vadd.f32 0.0, %v2201
      %v2203 = vpop.f32.mrb[0].mxu0
      %v2204 = vadd.f32 0.0, %v2203
      %2205 = vdwg.mxu0
      %v2206 = vadd.f32 %v2106, %v2196
      %v2207 = vadd.f32 %v2107, %v2198
      %v2208 = vadd.f32 %v2108, %v2202
      %v2209 = vadd.f32 %v2109, %v2204
      %s2210 = scalar_lea.vmem %s6, 80
      %v2211 = vld [vmem:[%s2210] sm:$0xff]
      %v2212 = vld [vmem:[%s2210 + $0x8] sm:$0xff]
      %2213 = vrot.lane.b32.xlu0 %v1719, 110
      %v2214 = vpop.permute.xlu0 %2213
      %2215 = vrot.lane.b32.xlu0 %v1721, 110
      %v2216 = vpop.permute.xlu0 %2215
      %vm2217 = vcmask 900096
      %v2218 = vsel %vm2217, %v2214, %v2216
      %v2220 = vsel %vm1735, %v2211, 0
      %v2223 = vsel %vm1735, %v2212, 0
      %v2225 = vsel %vm1742, %v2218, 0
      %v2227 = vsel %vm1742, %v2216, 0
      %2229 = vmatprep.subr.mxu0 %v2227
      %2230 = vmatpush1.msra.mxu0 %v2225
      %2231 = vmatprep.subr.mxu0 0.0
      %2232 = vmatpush1.msra.mxu0 0.0
      %2233 = vmatprep.subr.mxu0 0.0
      %2234 = vmatpush1.msra.mxu0 0.0
      %2235 = vmatprep.subr.mxu0 0.0
      %2236 = vmatpush1.msra.mxu0 0.0
      %2237 = vmatprep.subr.mxu0 0.0
      %2238 = vmatpush1.msra.mxu0 0.0
      %2239 = vmatprep.subr.mxu0 0.0
      %2240 = vmatpush1.msra.mxu0 0.0
      %2241 = vmatprep.subr.mxu0 0.0
      %2242 = vmatpush1.msra.mxu0 0.0
      %2243 = vmatprep.subr.mxu0 0.0
      %2244 = vmatpush1.msra.mxu0 0.0
      %2245 = vmatprep.subr.mxu0 0.0
      %2246 = vmatpush1.msra.mxu0 0.0
      %2247 = vmatprep.subr.mxu0 0.0
      %2248 = vmatpush1.msra.mxu0 0.0
      %2249 = vmatprep.subr.mxu0 0.0
      %2250 = vmatpush1.msra.mxu0 0.0
      %2251 = vmatprep.subr.mxu0 0.0
      %2252 = vmatpush1.msra.mxu0 0.0
      %2253 = vmatprep.subr.mxu0 0.0
      %2254 = vmatpush1.msra.mxu0 0.0
      %2255 = vmatprep.subr.mxu0 0.0
      %2256 = vmatpush1.msra.mxu0 0.0
      %2257 = vmatprep.subr.mxu0 0.0
      %2258 = vmatpush1.msra.mxu0 0.0
      %2259 = vmatprep.subr.mxu0 0.0
      %2260 = vmatpush1.msra.mxu0 0.0
      %2261 = vmatprep.subr.mxu0 0.0
      %2262 = vmatpush1.msra.mxu0 0.0
      %2263 = vmatprep.subr.mxu0 0.0
      %2264 = vmatpush1.msra.mxu0 0.0
      %2265 = vmatprep.subr.mxu0 0.0
      %2266 = vmatpush1.msra.mxu0 0.0
      %2267 = vmatprep.subr.mxu0 0.0
      %2268 = vmatpush1.msra.mxu0 0.0
      %2269 = vmatprep.subr.mxu0 0.0
      %2270 = vmatpush1.msra.mxu0 0.0
      %2271 = vmatprep.subr.mxu0 0.0
      %2272 = vmatpush1.msra.mxu0 0.0
      %2273 = vmatprep.subr.mxu0 0.0
      %2274 = vmatpush1.msra.mxu0 0.0
      %2275 = vmatprep.subr.mxu0 0.0
      %2276 = vmatpush1.msra.mxu0 0.0
      %2277 = vmatprep.subr.mxu0 0.0
      %2278 = vmatpush1.msra.mxu0 0.0
      %2279 = vmatprep.subr.mxu0 0.0
      %2280 = vmatpush1.msra.mxu0 0.0
      %2281 = vmatprep.subr.mxu0 0.0
      %2282 = vmatpush1.msra.mxu0 0.0
      %2283 = vmatprep.subr.mxu0 0.0
      %2284 = vmatpush1.msra.mxu0 0.0
      %2285 = vmatprep.subr.mxu0 0.0
      %2286 = vmatpush1.msra.mxu0 0.0
      %2287 = vmatprep.subr.mxu0 0.0
      %2288 = vmatpush1.msra.mxu0 0.0
      %2289 = vmatprep.subr.mxu0 0.0
      %2290 = vmatpush1.msra.mxu0 0.0
      %2291 = vmatprep.subr.mxu0 0.0
      %2292 = vmatpush1.msra.mxu0 0.0
      %2293 = vmatprep.mubr.f32.mxu0 0.0
      %2294 = vmatmul.mubr.f32.gmra.mrb[0].mxu0 %v2220
      %v2295 = vpop.f32.mrb[0].mxu0
      %v2296 = vadd.f32 0.0, %v2295
      %v2297 = vpop.f32.mrb[0].mxu0
      %v2298 = vadd.f32 0.0, %v2297
      %2299 = vmatprep.mubr.f32.mxu0 0.0
      %2300 = vmatmul.mubr.f32.gmra.mrb[0].mxu0 %v2223
      %v2301 = vpop.f32.mrb[0].mxu0
      %v2302 = vadd.f32 0.0, %v2301
      %v2303 = vpop.f32.mrb[0].mxu0
      %v2304 = vadd.f32 0.0, %v2303
      %2305 = vdwg.mxu0
      %v2306 = vadd.f32 %v2206, %v2296
      %v2307 = vadd.f32 %v2207, %v2298
      %v2308 = vadd.f32 %v2208, %v2302
      %v2309 = vadd.f32 %v2209, %v2304
      %s2310 = scalar_lea.vmem %s6, 96
      %v2311 = vld [vmem:[%s2310] sm:$0xff]
      %v2312 = vld [vmem:[%s2310 + $0x8] sm:$0xff]
      %2313 = vrot.lane.b32.xlu0 %v1719, 96
      %v2314 = vpop.permute.xlu0 %2313
      %2315 = vrot.lane.b32.xlu0 %v1721, 96
      %v2316 = vpop.permute.xlu0 %2315
      %v2317 = vsel %vm889, %v2314, %v2316
      %v2319 = vsel %vm1735, %v2311, 0
      %v2322 = vsel %vm1735, %v2312, 0
      %v2324 = vsel %vm1742, %v2317, 0
      %v2326 = vsel %vm1742, %v2316, 0
      %2328 = vmatprep.subr.mxu0 %v2326
      %2329 = vmatpush1.msra.mxu0 %v2324
      %2330 = vmatprep.subr.mxu0 0.0
      %2331 = vmatpush1.msra.mxu0 0.0
      %2332 = vmatprep.subr.mxu0 0.0
      %2333 = vmatpush1.msra.mxu0 0.0
      %2334 = vmatprep.subr.mxu0 0.0
      %2335 = vmatpush1.msra.mxu0 0.0
      %2336 = vmatprep.subr.mxu0 0.0
      %2337 = vmatpush1.msra.mxu0 0.0
      %2338 = vmatprep.subr.mxu0 0.0
      %2339 = vmatpush1.msra.mxu0 0.0
      %2340 = vmatprep.subr.mxu0 0.0
      %2341 = vmatpush1.msra.mxu0 0.0
      %2342 = vmatprep.subr.mxu0 0.0
      %2343 = vmatpush1.msra.mxu0 0.0
      %2344 = vmatprep.subr.mxu0 0.0
      %2345 = vmatpush1.msra.mxu0 0.0
      %2346 = vmatprep.subr.mxu0 0.0
      %2347 = vmatpush1.msra.mxu0 0.0
      %2348 = vmatprep.subr.mxu0 0.0
      %2349 = vmatpush1.msra.mxu0 0.0
      %2350 = vmatprep.subr.mxu0 0.0
      %2351 = vmatpush1.msra.mxu0 0.0
      %2352 = vmatprep.subr.mxu0 0.0
      %2353 = vmatpush1.msra.mxu0 0.0
      %2354 = vmatprep.subr.mxu0 0.0
      %2355 = vmatpush1.msra.mxu0 0.0
      %2356 = vmatprep.subr.mxu0 0.0
      %2357 = vmatpush1.msra.mxu0 0.0
      %2358 = vmatprep.subr.mxu0 0.0
      %2359 = vmatpush1.msra.mxu0 0.0
      %2360 = vmatprep.subr.mxu0 0.0
      %2361 = vmatpush1.msra.mxu0 0.0
      %2362 = vmatprep.subr.mxu0 0.0
      %2363 = vmatpush1.msra.mxu0 0.0
      %2364 = vmatprep.subr.mxu0 0.0
      %2365 = vmatpush1.msra.mxu0 0.0
      %2366 = vmatprep.subr.mxu0 0.0
      %2367 = vmatpush1.msra.mxu0 0.0
      %2368 = vmatprep.subr.mxu0 0.0
      %2369 = vmatpush1.msra.mxu0 0.0
      %2370 = vmatprep.subr.mxu0 0.0
      %2371 = vmatpush1.msra.mxu0 0.0
      %2372 = vmatprep.subr.mxu0 0.0
      %2373 = vmatpush1.msra.mxu0 0.0
      %2374 = vmatprep.subr.mxu0 0.0
      %2375 = vmatpush1.msra.mxu0 0.0
      %2376 = vmatprep.subr.mxu0 0.0
      %2377 = vmatpush1.msra.mxu0 0.0
      %2378 = vmatprep.subr.mxu0 0.0
      %2379 = vmatpush1.msra.mxu0 0.0
      %2380 = vmatprep.subr.mxu0 0.0
      %2381 = vmatpush1.msra.mxu0 0.0
      %2382 = vmatprep.subr.mxu0 0.0
      %2383 = vmatpush1.msra.mxu0 0.0
      %2384 = vmatprep.subr.mxu0 0.0
      %2385 = vmatpush1.msra.mxu0 0.0
      %2386 = vmatprep.subr.mxu0 0.0
      %2387 = vmatpush1.msra.mxu0 0.0
      %2388 = vmatprep.subr.mxu0 0.0
      %2389 = vmatpush1.msra.mxu0 0.0
      %2390 = vmatprep.subr.mxu0 0.0
      %2391 = vmatpush1.msra.mxu0 0.0
      %2392 = vmatprep.mubr.f32.mxu0 0.0
      %2393 = vmatmul.mubr.f32.gmra.mrb[0].mxu0 %v2319
      %v2394 = vpop.f32.mrb[0].mxu0
      %v2395 = vadd.f32 0.0, %v2394
      %v2396 = vpop.f32.mrb[0].mxu0
      %v2397 = vadd.f32 0.0, %v2396
      %2398 = vmatprep.mubr.f32.mxu0 0.0
      %2399 = vmatmul.mubr.f32.gmra.mrb[0].mxu0 %v2322
      %v2400 = vpop.f32.mrb[0].mxu0
      %v2401 = vadd.f32 0.0, %v2400
      %v2402 = vpop.f32.mrb[0].mxu0
      %v2403 = vadd.f32 0.0, %v2402
      %2404 = vdwg.mxu0
      %v2405 = vadd.f32 %v2306, %v2395
      %v2406 = vadd.f32 %v2307, %v2397
      %v2407 = vadd.f32 %v2308, %v2401
      %v2408 = vadd.f32 %v2309, %v2403
      %s2409 = scalar_lea.vmem %s6, 112
      %v2410 = vld [vmem:[%s2409] sm:$0xff]
      %v2411 = vld [vmem:[%s2409 + $0x8] sm:$0xff]
      %2412 = vrot.lane.b32.xlu0 %v1719, 95
      %v2413 = vpop.permute.xlu0 %2412
      %2414 = vrot.lane.b32.xlu0 %v1721, 95
      %v2415 = vpop.permute.xlu0 %2414
      %vm2416 = vcmask 777216
      %v2417 = vsel %vm2416, %v2413, %v2415
      %v2419 = vsel %vm1735, %v2410, 0
      %v2422 = vsel %vm1735, %v2411, 0
      %v2424 = vsel %vm1742, %v2417, 0
      %v2426 = vsel %vm1742, %v2415, 0
      %2428 = vmatprep.subr.mxu0 %v2426
      %2429 = vmatpush1.msra.mxu0 %v2424
      %2430 = vmatprep.subr.mxu0 0.0
      %2431 = vmatpush1.msra.mxu0 0.0
      %2432 = vmatprep.subr.mxu0 0.0
      %2433 = vmatpush1.msra.mxu0 0.0
      %2434 = vmatprep.subr.mxu0 0.0
      %2435 = vmatpush1.msra.mxu0 0.0
      %2436 = vmatprep.subr.mxu0 0.0
      %2437 = vmatpush1.msra.mxu0 0.0
      %2438 = vmatprep.subr.mxu0 0.0
      %2439 = vmatpush1.msra.mxu0 0.0
      %2440 = vmatprep.subr.mxu0 0.0
      %2441 = vmatpush1.msra.mxu0 0.0
      %2442 = vmatprep.subr.mxu0 0.0
      %2443 = vmatpush1.msra.mxu0 0.0
      %2444 = vmatprep.subr.mxu0 0.0
      %2445 = vmatpush1.msra.mxu0 0.0
      %2446 = vmatprep.subr.mxu0 0.0
      %2447 = vmatpush1.msra.mxu0 0.0
      %2448 = vmatprep.subr.mxu0 0.0
      %2449 = vmatpush1.msra.mxu0 0.0
      %2450 = vmatprep.subr.mxu0 0.0
      %2451 = vmatpush1.msra.mxu0 0.0
      %2452 = vmatprep.subr.mxu0 0.0
      %2453 = vmatpush1.msra.mxu0 0.0
      %2454 = vmatprep.subr.mxu0 0.0
      %2455 = vmatpush1.msra.mxu0 0.0
      %2456 = vmatprep.subr.mxu0 0.0
      %2457 = vmatpush1.msra.mxu0 0.0
      %2458 = vmatprep.subr.mxu0 0.0
      %2459 = vmatpush1.msra.mxu0 0.0
      %2460 = vmatprep.subr.mxu0 0.0
      %2461 = vmatpush1.msra.mxu0 0.0
      %2462 = vmatprep.subr.mxu0 0.0
      %2463 = vmatpush1.msra.mxu0 0.0
      %2464 = vmatprep.subr.mxu0 0.0
      %2465 = vmatpush1.msra.mxu0 0.0
      %2466 = vmatprep.subr.mxu0 0.0
      %2467 = vmatpush1.msra.mxu0 0.0
      %2468 = vmatprep.subr.mxu0 0.0
      %2469 = vmatpush1.msra.mxu0 0.0
      %2470 = vmatprep.subr.mxu0 0.0
      %2471 = vmatpush1.msra.mxu0 0.0
      %2472 = vmatprep.subr.mxu0 0.0
      %2473 = vmatpush1.msra.mxu0 0.0
      %2474 = vmatprep.subr.mxu0 0.0
      %2475 = vmatpush1.msra.mxu0 0.0
      %2476 = vmatprep.subr.mxu0 0.0
      %2477 = vmatpush1.msra.mxu0 0.0
      %2478 = vmatprep.subr.mxu0 0.0
      %2479 = vmatpush1.msra.mxu0 0.0
      %2480 = vmatprep.subr.mxu0 0.0
      %2481 = vmatpush1.msra.mxu0 0.0
      %2482 = vmatprep.subr.mxu0 0.0
      %2483 = vmatpush1.msra.mxu0 0.0
      %2484 = vmatprep.subr.mxu0 0.0
      %2485 = vmatpush1.msra.mxu0 0.0
      %2486 = vmatprep.subr.mxu0 0.0
      %2487 = vmatpush1.msra.mxu0 0.0
      %2488 = vmatprep.subr.mxu0 0.0
      %2489 = vmatpush1.msra.mxu0 0.0
      %2490 = vmatprep.subr.mxu0 0.0
      %2491 = vmatpush1.msra.mxu0 0.0
      %2492 = vmatprep.mubr.f32.mxu0 0.0
      %2493 = vmatmul.mubr.f32.gmra.mrb[0].mxu0 %v2419
      %v2494 = vpop.f32.mrb[0].mxu0
      %v2495 = vadd.f32 0.0, %v2494
      %v2496 = vpop.f32.mrb[0].mxu0
      %v2497 = vadd.f32 0.0, %v2496
      %2498 = vmatprep.mubr.f32.mxu0 0.0
      %2499 = vmatmul.mubr.f32.gmra.mrb[0].mxu0 %v2422
      %v2500 = vpop.f32.mrb[0].mxu0
      %v2501 = vadd.f32 0.0, %v2500
      %v2502 = vpop.f32.mrb[0].mxu0
      %v2503 = vadd.f32 0.0, %v2502
      %2504 = vdwg.mxu0
      %v2505 = vadd.f32 %v2405, %v2495
      %v2506 = vadd.f32 %v2406, %v2497
      %v2507 = vadd.f32 %v2407, %v2501
      %v2508 = vadd.f32 %v2408, %v2503
      %s2509 = scalar_lea.vmem %s6, 128
      %v2510 = vld [vmem:[%s2509] sm:$0xff]
      %v2511 = vld [vmem:[%s2509 + $0x8] sm:$0xff]
      %2512 = vrot.lane.b32.xlu0 %v1719, 94
      %v2513 = vpop.permute.xlu0 %2512
      %2514 = vrot.lane.b32.xlu0 %v1721, 94
      %v2515 = vpop.permute.xlu0 %2514
      %vm2516 = vcmask 769024
      %v2517 = vsel %vm2516, %v2513, %v2515
      %v2519 = vsel %vm1735, %v2510, 0
      %v2522 = vsel %vm1735, %v2511, 0
      %v2524 = vsel %vm1742, %v2517, 0
      %v2526 = vsel %vm1742, %v2515, 0
      %2528 = vmatprep.subr.mxu0 %v2526
      %2529 = vmatpush1.msra.mxu0 %v2524
      %2530 = vmatprep.subr.mxu0 0.0
      %2531 = vmatpush1.msra.mxu0 0.0
      %2532 = vmatprep.subr.mxu0 0.0
      %2533 = vmatpush1.msra.mxu0 0.0
      %2534 = vmatprep.subr.mxu0 0.0
      %2535 = vmatpush1.msra.mxu0 0.0
      %2536 = vmatprep.subr.mxu0 0.0
      %2537 = vmatpush1.msra.mxu0 0.0
      %2538 = vmatprep.subr.mxu0 0.0
      %2539 = vmatpush1.msra.mxu0 0.0
      %2540 = vmatprep.subr.mxu0 0.0
      %2541 = vmatpush1.msra.mxu0 0.0
      %2542 = vmatprep.subr.mxu0 0.0
      %2543 = vmatpush1.msra.mxu0 0.0
      %2544 = vmatprep.subr.mxu0 0.0
      %2545 = vmatpush1.msra.mxu0 0.0
      %2546 = vmatprep.subr.mxu0 0.0
      %2547 = vmatpush1.msra.mxu0 0.0
      %2548 = vmatprep.subr.mxu0 0.0
      %2549 = vmatpush1.msra.mxu0 0.0
      %2550 = vmatprep.subr.mxu0 0.0
      %2551 = vmatpush1.msra.mxu0 0.0
      %2552 = vmatprep.subr.mxu0 0.0
      %2553 = vmatpush1.msra.mxu0 0.0
      %2554 = vmatprep.subr.mxu0 0.0
      %2555 = vmatpush1.msra.mxu0 0.0
      %2556 = vmatprep.subr.mxu0 0.0
      %2557 = vmatpush1.msra.mxu0 0.0
      %2558 = vmatprep.subr.mxu0 0.0
      %2559 = vmatpush1.msra.mxu0 0.0
      %2560 = vmatprep.subr.mxu0 0.0
      %2561 = vmatpush1.msra.mxu0 0.0
      %2562 = vmatprep.subr.mxu0 0.0
      %2563 = vmatpush1.msra.mxu0 0.0
      %2564 = vmatprep.subr.mxu0 0.0
      %2565 = vmatpush1.msra.mxu0 0.0
      %2566 = vmatprep.subr.mxu0 0.0
      %2567 = vmatpush1.msra.mxu0 0.0
      %2568 = vmatprep.subr.mxu0 0.0
      %2569 = vmatpush1.msra.mxu0 0.0
      %2570 = vmatprep.subr.mxu0 0.0
      %2571 = vmatpush1.msra.mxu0 0.0
      %2572 = vmatprep.subr.mxu0 0.0
      %2573 = vmatpush1.msra.mxu0 0.0
      %2574 = vmatprep.subr.mxu0 0.0
      %2575 = vmatpush1.msra.mxu0 0.0
      %2576 = vmatprep.subr.mxu0 0.0
      %2577 = vmatpush1.msra.mxu0 0.0
      %2578 = vmatprep.subr.mxu0 0.0
      %2579 = vmatpush1.msra.mxu0 0.0
      %2580 = vmatprep.subr.mxu0 0.0
      %2581 = vmatpush1.msra.mxu0 0.0
      %2582 = vmatprep.subr.mxu0 0.0
      %2583 = vmatpush1.msra.mxu0 0.0
      %2584 = vmatprep.subr.mxu0 0.0
      %2585 = vmatpush1.msra.mxu0 0.0
      %2586 = vmatprep.subr.mxu0 0.0
      %2587 = vmatpush1.msra.mxu0 0.0
      %2588 = vmatprep.subr.mxu0 0.0
      %2589 = vmatpush1.msra.mxu0 0.0
      %2590 = vmatprep.subr.mxu0 0.0
      %2591 = vmatpush1.msra.mxu0 0.0
      %2592 = vmatprep.mubr.f32.mxu0 0.0
      %2593 = vmatmul.mubr.f32.gmra.mrb[0].mxu0 %v2519
      %v2594 = vpop.f32.mrb[0].mxu0
      %v2595 = vadd.f32 0.0, %v2594
      %v2596 = vpop.f32.mrb[0].mxu0
      %v2597 = vadd.f32 0.0, %v2596
      %2598 = vmatprep.mubr.f32.mxu0 0.0
      %2599 = vmatmul.mubr.f32.gmra.mrb[0].mxu0 %v2522
      %v2600 = vpop.f32.mrb[0].mxu0
      %v2601 = vadd.f32 0.0, %v2600
      %v2602 = vpop.f32.mrb[0].mxu0
      %v2603 = vadd.f32 0.0, %v2602
      %2604 = vdwg.mxu0
      %v2605 = vadd.f32 %v2505, %v2595
      %v2606 = vadd.f32 %v2506, %v2597
      %v2607 = vadd.f32 %v2507, %v2601
      %v2608 = vadd.f32 %v2508, %v2603
      %v2609 = vld [vmem:[%s7] sm:$0xff]
      %v2610 = vld [vmem:[%s7 + $0x8] sm:$0xff]
      %2612 = vset.pattern.permute.xlu0 0
      %2613 = vperm.xlu0 %2612, %v2609
      %v2614 = vpop.permute.xlu0 %2613
      %2617 = vset.pattern.permute.xlu0 0
      %2618 = vperm.xlu0 %2617, %v2610
      %v2619 = vpop.permute.xlu0 %2618
      %v2621 = vadd.f32 %v2605, %v2614
      %v2622 = vadd.f32 %v2606, %v2614
      %v2623 = vadd.f32 %v2607, %v2619
      %v2624 = vadd.f32 %v2608, %v2619
      %v2625 = vmax.f32 %v2621, 0.0
      %v2626 = vmax.f32 %v2622, 0.0
      %v2627 = vmax.f32 %v2623, 0.0
      %v2628 = vmax.f32 %v2624, 0.0
      %v2629 = vld [vmem:[%s8] sm:$0xff]
      %v2630 = vld [vmem:[%s8 + $0x8] sm:$0xff]
      %2632 = vset.pattern.permute.xlu0 0
      %2633 = vperm.xlu0 %2632, %v2629
      %v2634 = vpop.permute.xlu0 %2633
      %2637 = vset.pattern.permute.xlu0 0
      %2638 = vperm.xlu0 %2637, %v2630
      %v2639 = vpop.permute.xlu0 %2638
      %v2641 = vmul.f32 %v2625, %v2634
      %v2642 = vmul.f32 %v2626, %v2634
      %v2643 = vmul.f32 %v2627, %v2639
      %v2644 = vmul.f32 %v2628, %v2639
      %v2645 = vld [vmem:[%s9] sm:$0xff]
      %v2646 = vld [vmem:[%s9 + $0x8] sm:$0xff]
      %2648 = vset.pattern.permute.xlu0 0
      %2649 = vperm.xlu0 %2648, %v2645
      %v2650 = vpop.permute.xlu0 %2649
      %2653 = vset.pattern.permute.xlu0 0
      %2654 = vperm.xlu0 %2653, %v2646
      %v2655 = vpop.permute.xlu0 %2654
      %v2657 = vadd.f32 %v2641, %v2650
      %v2658 = vadd.f32 %v2642, %v2650
      %v2659 = vadd.f32 %v2643, %v2655
      %v2660 = vadd.f32 %v2644, %v2655
      %2665 = vrot.lane.b32.xlu0 %v2657, 127
      %v2666 = vpop.permute.xlu0 %2665
      %2667 = vrot.lane.b32.xlu0 %v2658, 127
      %v2668 = vpop.permute.xlu0 %2667
      %2669 = vrot.lane.b32.xlu0 %v2659, 127
      %v2670 = vpop.permute.xlu0 %2669
      %2671 = vrot.lane.b32.xlu0 %v2660, 127
      %v2672 = vpop.permute.xlu0 %2671
      %v2673 = vsel %vm665, %v2666, %v2668
      %v2674 = vsel %vm665, %v2670, %v2672
      %v2679 = vmax.f32 %v2657, %v2673
      %v2680 = vmax.f32 %v2658, %v2668
      %v2681 = vmax.f32 %v2659, %v2674
      %v2682 = vmax.f32 %v2660, %v2672
      %2687 = vrot.lane.b32.xlu0 %v2679, 112
      %v2688 = vpop.permute.xlu0 %2687
      %2689 = vrot.lane.b32.xlu0 %v2680, 112
      %v2690 = vpop.permute.xlu0 %2689
      %2691 = vrot.lane.b32.xlu0 %v2681, 112
      %v2692 = vpop.permute.xlu0 %2691
      %2693 = vrot.lane.b32.xlu0 %v2682, 112
      %v2694 = vpop.permute.xlu0 %2693
      %v2695 = vsel %vm2017, %v2688, %v2690
      %v2696 = vsel %vm2017, %v2692, %v2694
      %v2701 = vmax.f32 %v2679, %v2695
      %v2702 = vmax.f32 %v2680, %v2690
      %v2703 = vmax.f32 %v2681, %v2696
      %v2704 = vmax.f32 %v2682, %v2694
      %v2705 = vld [vmem:[%s10] sm:$0xff]
      %v2706 = vld [vmem:[%s10 + $0x8] sm:$0xff]
      %v2707 = vld [vmem:[%s10 + $0x10] sm:$0xff]
      %v2708 = vld [vmem:[%s10 + $0x18] sm:$0xff]
      %v2709 = vld [vmem:[%s10 + $0x20] sm:$0xff]
      %v2710 = vld [vmem:[%s10 + $0x28] sm:$0xff]
      %v2711 = vld [vmem:[%s10 + $0x30] sm:$0xff]
      %v2712 = vld [vmem:[%s10 + $0x38] sm:$0xff]
      %v2713 = vld [vmem:[%s10 + $0x40] sm:$0xff]
      %v2714 = vld [vmem:[%s10 + $0x48] sm:$0xff]
      %v2715 = vld [vmem:[%s10 + $0x50] sm:$0xff]
      %v2716 = vld [vmem:[%s10 + $0x58] sm:$0xff]
      %v2717 = vld [vmem:[%s10 + $0x60] sm:$0xff]
      %v2718 = vld [vmem:[%s10 + $0x68] sm:$0xff]
      %v2719 = vld [vmem:[%s10 + $0x70] sm:$0xff]
      %v2720 = vld [vmem:[%s10 + $0x78] sm:$0xff]
      %v2721 = vld [vmem:[%s10 + $0x80] sm:$0xff]
      %v2722 = vld [vmem:[%s10 + $0x88] sm:$0xff]
      %v2723 = vld [vmem:[%s10 + $0x90] sm:$0xff]
      %v2724 = vld [vmem:[%s10 + $0x98] sm:$0xff]
      %v2725 = vld [vmem:[%s10 + $0xa0] sm:$0xff]
      %v2726 = vld [vmem:[%s10 + $0xa8] sm:$0xff]
      %v2727 = vld [vmem:[%s10 + $0xb0] sm:$0xff]
      %v2728 = vld [vmem:[%s10 + $0xb8] sm:$0xff]
      %v2729 = vld [vmem:[%s10 + $0xc0] sm:$0xff]
      %v2730 = vld [vmem:[%s10 + $0xc8] sm:$0x1f]
      %vm2731 = vcmask 629760
      %v2733 = vsel %vm2731, %v2702, 0
      %v2736 = vsel %vm2731, %v2704, 0
      %vm2738 = vcmask 1044480
      %v2740 = vsel %vm2738, %v2730, 0
      %2742 = vmatprep.subr.mxu0 0.0
      %2743 = vmatpush1.msra.mxu0 %v2705
      %2744 = vmatprep.subr.mxu0 0.0
      %2745 = vmatpush1.msra.mxu0 %v2706
      %2746 = vmatprep.subr.mxu0 0.0
      %2747 = vmatpush1.msra.mxu0 %v2707
      %2748 = vmatprep.subr.mxu0 0.0
      %2749 = vmatpush1.msra.mxu0 %v2708
      %2750 = vmatprep.subr.mxu0 0.0
      %2751 = vmatpush1.msra.mxu0 %v2709
      %2752 = vmatprep.subr.mxu0 0.0
      %2753 = vmatpush1.msra.mxu0 %v2710
      %2754 = vmatprep.subr.mxu0 0.0
      %2755 = vmatpush1.msra.mxu0 %v2711
      %2756 = vmatprep.subr.mxu0 0.0
      %2757 = vmatpush1.msra.mxu0 %v2712
      %2758 = vmatprep.subr.mxu0 0.0
      %2759 = vmatpush1.msra.mxu0 %v2713
      %2760 = vmatprep.subr.mxu0 0.0
      %2761 = vmatpush1.msra.mxu0 %v2714
      %2762 = vmatprep.subr.mxu0 0.0
      %2763 = vmatpush1.msra.mxu0 %v2715
      %2764 = vmatprep.subr.mxu0 0.0
      %2765 = vmatpush1.msra.mxu0 %v2716
      %2766 = vmatprep.subr.mxu0 0.0
      %2767 = vmatpush1.msra.mxu0 %v2717
      %2768 = vmatprep.subr.mxu0 0.0
      %2769 = vmatpush1.msra.mxu0 %v2718
      %2770 = vmatprep.subr.mxu0 0.0
      %2771 = vmatpush1.msra.mxu0 %v2719
      %2772 = vmatprep.subr.mxu0 0.0
      %2773 = vmatpush1.msra.mxu0 %v2720
      %2774 = vmatprep.subr.mxu0 0.0
      %2775 = vmatpush1.msra.mxu0 %v2721
      %2776 = vmatprep.subr.mxu0 0.0
      %2777 = vmatpush1.msra.mxu0 %v2722
      %2778 = vmatprep.subr.mxu0 0.0
      %2779 = vmatpush1.msra.mxu0 %v2723
      %2780 = vmatprep.subr.mxu0 0.0
      %2781 = vmatpush1.msra.mxu0 %v2724
      %2782 = vmatprep.subr.mxu0 0.0
      %2783 = vmatpush1.msra.mxu0 %v2725
      %2784 = vmatprep.subr.mxu0 0.0
      %2785 = vmatpush1.msra.mxu0 %v2726
      %2786 = vmatprep.subr.mxu0 0.0
      %2787 = vmatpush1.msra.mxu0 %v2727
      %2788 = vmatprep.subr.mxu0 0.0
      %2789 = vmatpush1.msra.mxu0 %v2728
      %2790 = vmatprep.subr.mxu0 0.0
      %2791 = vmatpush1.msra.mxu0 %v2729
      %2792 = vmatprep.subr.mxu0 0.0
      %2793 = vmatpush1.msra.mxu0 %v2740
      %2794 = vmatprep.subr.mxu0 0.0
      %2795 = vmatpush1.msra.mxu0 0.0
      %2796 = vmatprep.subr.mxu0 0.0
      %2797 = vmatpush1.msra.mxu0 0.0
      %2798 = vmatprep.subr.mxu0 0.0
      %2799 = vmatpush1.msra.mxu0 0.0
      %2800 = vmatprep.subr.mxu0 0.0
      %2801 = vmatpush1.msra.mxu0 0.0
      %2802 = vmatprep.subr.mxu0 0.0
      %2803 = vmatpush1.msra.mxu0 0.0
      %2804 = vmatprep.subr.mxu0 0.0
      %2805 = vmatpush1.msra.mxu0 0.0
      %2806 = vmatprep.mubr.f32.mxu0 %v2733
      %2807 = vmatmul.mubr.f32.gmra.mrb[0].mxu0 %v2701
      %v2808 = vpop.f32.mrb[0].mxu0
      %v2809 = vadd.f32 0.0, %v2808
      %v2810 = vpop.f32.mrb[0].mxu0
      %2811 = vmatprep.mubr.f32.mxu0 %v2736
      %2812 = vmatmul.mubr.f32.gmra.mrb[0].mxu0 %v2703
      %v2813 = vpop.f32.mrb[0].mxu0
      %v2814 = vadd.f32 0.0, %v2813
      %v2815 = vpop.f32.mrb[0].mxu0
      %2816 = vdwg.mxu0
      %v2817 = vld [vmem:[%s11] sm:$0xff]
      %v2818 = vld [vmem:[%s11 + $0x8] sm:$0xff]
      %v2819 = vld [vmem:[%s11 + $0x10] sm:$0xff]
      %v2820 = vld [vmem:[%s11 + $0x18] sm:$0xff]
      %v2821 = vld [vmem:[%s11 + $0x20] sm:$0xff]
      %v2822 = vld [vmem:[%s11 + $0x28] sm:$0xff]
      %v2823 = vld [vmem:[%s11 + $0x30] sm:$0xff]
      %v2824 = vld [vmem:[%s11 + $0x38] sm:$0xff]
      %s2825 = scalar_lea.vmem %s11, 64
      %v2826 = vld [vmem:[%s2825] sm:$0xff]
      %v2827 = vld [vmem:[%s2825 + $0x8] sm:$0xff]
      %v2828 = vld [vmem:[%s2825 + $0x10] sm:$0xff]
      %v2829 = vld [vmem:[%s2825 + $0x18] sm:$0xff]
      %v2830 = vld [vmem:[%s2825 + $0x20] sm:$0xff]
      %v2831 = vld [vmem:[%s2825 + $0x28] sm:$0xff]
      %v2832 = vld [vmem:[%s2825 + $0x30] sm:$0xff]
      %v2833 = vld [vmem:[%s2825 + $0x38] sm:$0xff]
      %2836 = vrot.lane.b32.xlu0 %v2809, 127
      %v2837 = vpop.permute.xlu0 %2836
      %2838 = vrot.lane.b32.xlu0 %v2814, 127
      %v2839 = vpop.permute.xlu0 %2838
      %vm2842 = vcmask 130048
      %v2844 = vsel %vm2842, %v2826, 0
      %v2847 = vsel %vm2842, %v2827, 0
      %v2850 = vsel %vm2842, %v2828, 0
      %v2853 = vsel %vm2842, %v2829, 0
      %v2856 = vsel %vm2842, %v2830, 0
      %v2859 = vsel %vm2842, %v2831, 0
      %v2862 = vsel %vm2842, %v2832, 0
      %v2865 = vsel %vm2842, %v2833, 0
      %2867 = vmatprep.subr.mxu0 0.0
      %2868 = vmatpush1.msra.mxu0 %v2837
      %2869 = vmatprep.subr.mxu0 0.0
      %2870 = vmatpush1.msra.mxu0 %v2839
      %2871 = vmatprep.subr.mxu0 0.0
      %2872 = vmatpush1.msra.mxu0 0.0
      %2873 = vmatprep.subr.mxu0 0.0
      %2874 = vmatpush1.msra.mxu0 0.0
      %2875 = vmatprep.subr.mxu0 0.0
      %2876 = vmatpush1.msra.mxu0 0.0
      %2877 = vmatprep.subr.mxu0 0.0
      %2878 = vmatpush1.msra.mxu0 0.0
      %2879 = vmatprep.subr.mxu0 0.0
      %2880 = vmatpush1.msra.mxu0 0.0
      %2881 = vmatprep.subr.mxu0 0.0
      %2882 = vmatpush1.msra.mxu0 0.0
      %2883 = vmatprep.subr.mxu0 0.0
      %2884 = vmatpush1.msra.mxu0 0.0
      %2885 = vmatprep.subr.mxu0 0.0
      %2886 = vmatpush1.msra.mxu0 0.0
      %2887 = vmatprep.subr.mxu0 0.0
      %2888 = vmatpush1.msra.mxu0 0.0
      %2889 = vmatprep.subr.mxu0 0.0
      %2890 = vmatpush1.msra.mxu0 0.0
      %2891 = vmatprep.subr.mxu0 0.0
      %2892 = vmatpush1.msra.mxu0 0.0
      %2893 = vmatprep.subr.mxu0 0.0
      %2894 = vmatpush1.msra.mxu0 0.0
      %2895 = vmatprep.subr.mxu0 0.0
      %2896 = vmatpush1.msra.mxu0 0.0
      %2897 = vmatprep.subr.mxu0 0.0
      %2898 = vmatpush1.msra.mxu0 0.0
      %2899 = vmatprep.subr.mxu0 0.0
      %2900 = vmatpush1.msra.mxu0 0.0
      %2901 = vmatprep.subr.mxu0 0.0
      %2902 = vmatpush1.msra.mxu0 0.0
      %2903 = vmatprep.subr.mxu0 0.0
      %2904 = vmatpush1.msra.mxu0 0.0
      %2905 = vmatprep.subr.mxu0 0.0
      %2906 = vmatpush1.msra.mxu0 0.0
      %2907 = vmatprep.subr.mxu0 0.0
      %2908 = vmatpush1.msra.mxu0 0.0
      %2909 = vmatprep.subr.mxu0 0.0
      %2910 = vmatpush1.msra.mxu0 0.0
      %2911 = vmatprep.subr.mxu0 0.0
      %2912 = vmatpush1.msra.mxu0 0.0
      %2913 = vmatprep.subr.mxu0 0.0
      %2914 = vmatpush1.msra.mxu0 0.0
      %2915 = vmatprep.subr.mxu0 0.0
      %2916 = vmatpush1.msra.mxu0 0.0
      %2917 = vmatprep.subr.mxu0 0.0
      %2918 = vmatpush1.msra.mxu0 0.0
      %2919 = vmatprep.subr.mxu0 0.0
      %2920 = vmatpush1.msra.mxu0 0.0
      %2921 = vmatprep.subr.mxu0 0.0
      %2922 = vmatpush1.msra.mxu0 0.0
      %2923 = vmatprep.subr.mxu0 0.0
      %2924 = vmatpush1.msra.mxu0 0.0
      %2925 = vmatprep.subr.mxu0 0.0
      %2926 = vmatpush1.msra.mxu0 0.0
      %2927 = vmatprep.subr.mxu0 0.0
      %2928 = vmatpush1.msra.mxu0 0.0
      %2929 = vmatprep.subr.mxu0 0.0
      %2930 = vmatpush1.msra.mxu0 0.0
      %2931 = vmatprep.mubr.f32.mxu0 0.0
      %2932 = vmatmul.mubr.f32.gmra.mrb[0].mxu0 %v2844
      %v2933 = vpop.f32.mrb[0].mxu0
      %v2934 = vadd.f32 0.0, %v2933
      %v2935 = vpop.f32.mrb[0].mxu0
      %2936 = vmatprep.mubr.f32.mxu0 0.0
      %2937 = vmatmul.mubr.f32.gmra.mrb[0].mxu0 %v2847
      %v2938 = vpop.f32.mrb[0].mxu0
      %v2939 = vadd.f32 0.0, %v2938
      %v2940 = vpop.f32.mrb[0].mxu0
      %2941 = vmatprep.mubr.f32.mxu0 0.0
      %2942 = vmatmul.mubr.f32.gmra.mrb[0].mxu0 %v2850
      %v2943 = vpop.f32.mrb[0].mxu0
      %v2944 = vadd.f32 0.0, %v2943
      %v2945 = vpop.f32.mrb[0].mxu0
      %2946 = vmatprep.mubr.f32.mxu0 0.0
      %2947 = vmatmul.mubr.f32.gmra.mrb[0].mxu0 %v2853
      %v2948 = vpop.f32.mrb[0].mxu0
      %v2949 = vadd.f32 0.0, %v2948
      %v2950 = vpop.f32.mrb[0].mxu0
      %2951 = vmatprep.mubr.f32.mxu0 0.0
      %2952 = vmatmul.mubr.f32.gmra.mrb[0].mxu0 %v2856
      %v2953 = vpop.f32.mrb[0].mxu0
      %v2954 = vadd.f32 0.0, %v2953
      %v2955 = vpop.f32.mrb[0].mxu0
      %2956 = vmatprep.mubr.f32.mxu0 0.0
      %2957 = vmatmul.mubr.f32.gmra.mrb[0].mxu0 %v2859
      %v2958 = vpop.f32.mrb[0].mxu0
      %v2959 = vadd.f32 0.0, %v2958
      %v2960 = vpop.f32.mrb[0].mxu0
      %2961 = vmatprep.mubr.f32.mxu0 0.0
      %2962 = vmatmul.mubr.f32.gmra.mrb[0].mxu0 %v2862
      %v2963 = vpop.f32.mrb[0].mxu0
      %v2964 = vadd.f32 0.0, %v2963
      %v2965 = vpop.f32.mrb[0].mxu0
      %2966 = vmatprep.mubr.f32.mxu0 0.0
      %2967 = vmatmul.mubr.f32.gmra.mrb[0].mxu0 %v2865
      %v2968 = vpop.f32.mrb[0].mxu0
      %v2969 = vadd.f32 0.0, %v2968
      %v2970 = vpop.f32.mrb[0].mxu0
      %2971 = vdwg.mxu0
      %v2973 = vsel %vm2842, %v2817, 0
      %v2976 = vsel %vm2842, %v2818, 0
      %v2979 = vsel %vm2842, %v2819, 0
      %v2982 = vsel %vm2842, %v2820, 0
      %v2985 = vsel %vm2842, %v2821, 0
      %v2988 = vsel %vm2842, %v2822, 0
      %v2991 = vsel %vm2842, %v2823, 0
      %v2994 = vsel %vm2842, %v2824, 0
      %2996 = vmatprep.subr.mxu0 0.0
      %2997 = vmatpush1.msra.mxu0 %v2809
      %2998 = vmatprep.subr.mxu0 0.0
      %2999 = vmatpush1.msra.mxu0 %v2814
      %3000 = vmatprep.subr.mxu0 0.0
      %3001 = vmatpush1.msra.mxu0 0.0
      %3002 = vmatprep.subr.mxu0 0.0
      %3003 = vmatpush1.msra.mxu0 0.0
      %3004 = vmatprep.subr.mxu0 0.0
      %3005 = vmatpush1.msra.mxu0 0.0
      %3006 = vmatprep.subr.mxu0 0.0
      %3007 = vmatpush1.msra.mxu0 0.0
      %3008 = vmatprep.subr.mxu0 0.0
      %3009 = vmatpush1.msra.mxu0 0.0
      %3010 = vmatprep.subr.mxu0 0.0
      %3011 = vmatpush1.msra.mxu0 0.0
      %3012 = vmatprep.subr.mxu0 0.0
      %3013 = vmatpush1.msra.mxu0 0.0
      %3014 = vmatprep.subr.mxu0 0.0
      %3015 = vmatpush1.msra.mxu0 0.0
      %3016 = vmatprep.subr.mxu0 0.0
      %3017 = vmatpush1.msra.mxu0 0.0
      %3018 = vmatprep.subr.mxu0 0.0
      %3019 = vmatpush1.msra.mxu0 0.0
      %3020 = vmatprep.subr.mxu0 0.0
      %3021 = vmatpush1.msra.mxu0 0.0
      %3022 = vmatprep.subr.mxu0 0.0
      %3023 = vmatpush1.msra.mxu0 0.0
      %3024 = vmatprep.subr.mxu0 0.0
      %3025 = vmatpush1.msra.mxu0 0.0
      %3026 = vmatprep.subr.mxu0 0.0
      %3027 = vmatpush1.msra.mxu0 0.0
      %3028 = vmatprep.subr.mxu0 0.0
      %3029 = vmatpush1.msra.mxu0 0.0
      %3030 = vmatprep.subr.mxu0 0.0
      %3031 = vmatpush1.msra.mxu0 0.0
      %3032 = vmatprep.subr.mxu0 0.0
      %3033 = vmatpush1.msra.mxu0 0.0
      %3034 = vmatprep.subr.mxu0 0.0
      %3035 = vmatpush1.msra.mxu0 0.0
      %3036 = vmatprep.subr.mxu0 0.0
      %3037 = vmatpush1.msra.mxu0 0.0
      %3038 = vmatprep.subr.mxu0 0.0
      %3039 = vmatpush1.msra.mxu0 0.0
      %3040 = vmatprep.subr.mxu0 0.0
      %3041 = vmatpush1.msra.mxu0 0.0
      %3042 = vmatprep.subr.mxu0 0.0
      %3043 = vmatpush1.msra.mxu0 0.0
      %3044 = vmatprep.subr.mxu0 0.0
      %3045 = vmatpush1.msra.mxu0 0.0
      %3046 = vmatprep.subr.mxu0 0.0
      %3047 = vmatpush1.msra.mxu0 0.0
      %3048 = vmatprep.subr.mxu0 0.0
      %3049 = vmatpush1.msra.mxu0 0.0
      %3050 = vmatprep.subr.mxu0 0.0
      %3051 = vmatpush1.msra.mxu0 0.0
      %3052 = vmatprep.subr.mxu0 0.0
      %3053 = vmatpush1.msra.mxu0 0.0
      %3054 = vmatprep.subr.mxu0 0.0
      %3055 = vmatpush1.msra.mxu0 0.0
      %3056 = vmatprep.subr.mxu0 0.0
      %3057 = vmatpush1.msra.mxu0 0.0
      %3058 = vmatprep.subr.mxu0 0.0
      %3059 = vmatpush1.msra.mxu0 0.0
      %3060 = vmatprep.mubr.f32.mxu0 0.0
      %3061 = vmatmul.mubr.f32.gmra.mrb[0].mxu0 %v2973
      %v3062 = vpop.f32.mrb[0].mxu0
      %v3063 = vadd.f32 %v2934, %v3062
      %v3064 = vpop.f32.mrb[0].mxu0
      %3065 = vmatprep.mubr.f32.mxu0 0.0
      %3066 = vmatmul.mubr.f32.gmra.mrb[0].mxu0 %v2976
      %v3067 = vpop.f32.mrb[0].mxu0
      %v3068 = vadd.f32 %v2939, %v3067
      %v3069 = vpop.f32.mrb[0].mxu0
      %3070 = vmatprep.mubr.f32.mxu0 0.0
      %3071 = vmatmul.mubr.f32.gmra.mrb[0].mxu0 %v2979
      %v3072 = vpop.f32.mrb[0].mxu0
      %v3073 = vadd.f32 %v2944, %v3072
      %v3074 = vpop.f32.mrb[0].mxu0
      %3075 = vmatprep.mubr.f32.mxu0 0.0
      %3076 = vmatmul.mubr.f32.gmra.mrb[0].mxu0 %v2982
      %v3077 = vpop.f32.mrb[0].mxu0
      %v3078 = vadd.f32 %v2949, %v3077
      %v3079 = vpop.f32.mrb[0].mxu0
      %3080 = vmatprep.mubr.f32.mxu0 0.0
      %3081 = vmatmul.mubr.f32.gmra.mrb[0].mxu0 %v2985
      %v3082 = vpop.f32.mrb[0].mxu0
      %v3083 = vadd.f32 %v2954, %v3082
      %v3084 = vpop.f32.mrb[0].mxu0
      %3085 = vmatprep.mubr.f32.mxu0 0.0
      %3086 = vmatmul.mubr.f32.gmra.mrb[0].mxu0 %v2988
      %v3087 = vpop.f32.mrb[0].mxu0
      %v3088 = vadd.f32 %v2959, %v3087
      %v3089 = vpop.f32.mrb[0].mxu0
      %3090 = vmatprep.mubr.f32.mxu0 0.0
      %3091 = vmatmul.mubr.f32.gmra.mrb[0].mxu0 %v2991
      %v3092 = vpop.f32.mrb[0].mxu0
      %v3093 = vadd.f32 %v2964, %v3092
      %v3094 = vpop.f32.mrb[0].mxu0
      %3095 = vmatprep.mubr.f32.mxu0 0.0
      %3096 = vmatmul.mubr.f32.gmra.mrb[0].mxu0 %v2994
      %v3097 = vpop.f32.mrb[0].mxu0
      %v3098 = vadd.f32 %v2969, %v3097
      %v3099 = vpop.f32.mrb[0].mxu0
      %3100 = vdwg.mxu0
      %s3101 = scalar_lea.vmem %s11, 128
      %v3102 = vld [vmem:[%s3101] sm:$0xff]
      %v3103 = vld [vmem:[%s3101 + $0x8] sm:$0xff]
      %v3104 = vld [vmem:[%s3101 + $0x10] sm:$0xff]
      %v3105 = vld [vmem:[%s3101 + $0x18] sm:$0xff]
      %v3106 = vld [vmem:[%s3101 + $0x20] sm:$0xff]
      %v3107 = vld [vmem:[%s3101 + $0x28] sm:$0xff]
      %v3108 = vld [vmem:[%s3101 + $0x30] sm:$0xff]
      %v3109 = vld [vmem:[%s3101 + $0x38] sm:$0xff]
      %3110 = vrot.lane.b32.xlu0 %v2809, 126
      %v3111 = vpop.permute.xlu0 %3110
      %3112 = vrot.lane.b32.xlu0 %v2814, 126
      %v3113 = vpop.permute.xlu0 %3112
      %v3117 = vsel %vm2842, %v3102, 0
      %v3120 = vsel %vm2842, %v3103, 0
      %v3123 = vsel %vm2842, %v3104, 0
      %v3126 = vsel %vm2842, %v3105, 0
      %v3129 = vsel %vm2842, %v3106, 0
      %v3132 = vsel %vm2842, %v3107, 0
      %v3135 = vsel %vm2842, %v3108, 0
      %v3138 = vsel %vm2842, %v3109, 0
      %3140 = vmatprep.subr.mxu0 0.0
      %3141 = vmatpush1.msra.mxu0 %v3111
      %3142 = vmatprep.subr.mxu0 0.0
      %3143 = vmatpush1.msra.mxu0 %v3113
      %3144 = vmatprep.subr.mxu0 0.0
      %3145 = vmatpush1.msra.mxu0 0.0
      %3146 = vmatprep.subr.mxu0 0.0
      %3147 = vmatpush1.msra.mxu0 0.0
      %3148 = vmatprep.subr.mxu0 0.0
      %3149 = vmatpush1.msra.mxu0 0.0
      %3150 = vmatprep.subr.mxu0 0.0
      %3151 = vmatpush1.msra.mxu0 0.0
      %3152 = vmatprep.subr.mxu0 0.0
      %3153 = vmatpush1.msra.mxu0 0.0
      %3154 = vmatprep.subr.mxu0 0.0
      %3155 = vmatpush1.msra.mxu0 0.0
      %3156 = vmatprep.subr.mxu0 0.0
      %3157 = vmatpush1.msra.mxu0 0.0
      %3158 = vmatprep.subr.mxu0 0.0
      %3159 = vmatpush1.msra.mxu0 0.0
      %3160 = vmatprep.subr.mxu0 0.0
      %3161 = vmatpush1.msra.mxu0 0.0
      %3162 = vmatprep.subr.mxu0 0.0
      %3163 = vmatpush1.msra.mxu0 0.0
      %3164 = vmatprep.subr.mxu0 0.0
      %3165 = vmatpush1.msra.mxu0 0.0
      %3166 = vmatprep.subr.mxu0 0.0
      %3167 = vmatpush1.msra.mxu0 0.0
      %3168 = vmatprep.subr.mxu0 0.0
      %3169 = vmatpush1.msra.mxu0 0.0
      %3170 = vmatprep.subr.mxu0 0.0
      %3171 = vmatpush1.msra.mxu0 0.0
      %3172 = vmatprep.subr.mxu0 0.0
      %3173 = vmatpush1.msra.mxu0 0.0
      %3174 = vmatprep.subr.mxu0 0.0
      %3175 = vmatpush1.msra.mxu0 0.0
      %3176 = vmatprep.subr.mxu0 0.0
      %3177 = vmatpush1.msra.mxu0 0.0
      %3178 = vmatprep.subr.mxu0 0.0
      %3179 = vmatpush1.msra.mxu0 0.0
      %3180 = vmatprep.subr.mxu0 0.0
      %3181 = vmatpush1.msra.mxu0 0.0
      %3182 = vmatprep.subr.mxu0 0.0
      %3183 = vmatpush1.msra.mxu0 0.0
      %3184 = vmatprep.subr.mxu0 0.0
      %3185 = vmatpush1.msra.mxu0 0.0
      %3186 = vmatprep.subr.mxu0 0.0
      %3187 = vmatpush1.msra.mxu0 0.0
      %3188 = vmatprep.subr.mxu0 0.0
      %3189 = vmatpush1.msra.mxu0 0.0
      %3190 = vmatprep.subr.mxu0 0.0
      %3191 = vmatpush1.msra.mxu0 0.0
      %3192 = vmatprep.subr.mxu0 0.0
      %3193 = vmatpush1.msra.mxu0 0.0
      %3194 = vmatprep.subr.mxu0 0.0
      %3195 = vmatpush1.msra.mxu0 0.0
      %3196 = vmatprep.subr.mxu0 0.0
      %3197 = vmatpush1.msra.mxu0 0.0
      %3198 = vmatprep.subr.mxu0 0.0
      %3199 = vmatpush1.msra.mxu0 0.0
      %3200 = vmatprep.subr.mxu0 0.0
      %3201 = vmatpush1.msra.mxu0 0.0
      %3202 = vmatprep.subr.mxu0 0.0
      %3203 = vmatpush1.msra.mxu0 0.0
      %3204 = vmatprep.mubr.f32.mxu0 0.0
      %3205 = vmatmul.mubr.f32.gmra.mrb[0].mxu0 %v3117
      %v3206 = vpop.f32.mrb[0].mxu0
      %v3207 = vadd.f32 0.0, %v3206
      %v3208 = vpop.f32.mrb[0].mxu0
      %3209 = vmatprep.mubr.f32.mxu0 0.0
      %3210 = vmatmul.mubr.f32.gmra.mrb[0].mxu0 %v3120
      %v3211 = vpop.f32.mrb[0].mxu0
      %v3212 = vadd.f32 0.0, %v3211
      %v3213 = vpop.f32.mrb[0].mxu0
      %3214 = vmatprep.mubr.f32.mxu0 0.0
      %3215 = vmatmul.mubr.f32.gmra.mrb[0].mxu0 %v3123
      %v3216 = vpop.f32.mrb[0].mxu0
      %v3217 = vadd.f32 0.0, %v3216
      %v3218 = vpop.f32.mrb[0].mxu0
      %3219 = vmatprep.mubr.f32.mxu0 0.0
      %3220 = vmatmul.mubr.f32.gmra.mrb[0].mxu0 %v3126
      %v3221 = vpop.f32.mrb[0].mxu0
      %v3222 = vadd.f32 0.0, %v3221
      %v3223 = vpop.f32.mrb[0].mxu0
      %3224 = vmatprep.mubr.f32.mxu0 0.0
      %3225 = vmatmul.mubr.f32.gmra.mrb[0].mxu0 %v3129
      %v3226 = vpop.f32.mrb[0].mxu0
      %v3227 = vadd.f32 0.0, %v3226
      %v3228 = vpop.f32.mrb[0].mxu0
      %3229 = vmatprep.mubr.f32.mxu0 0.0
      %3230 = vmatmul.mubr.f32.gmra.mrb[0].mxu0 %v3132
      %v3231 = vpop.f32.mrb[0].mxu0
      %v3232 = vadd.f32 0.0, %v3231
      %v3233 = vpop.f32.mrb[0].mxu0
      %3234 = vmatprep.mubr.f32.mxu0 0.0
      %3235 = vmatmul.mubr.f32.gmra.mrb[0].mxu0 %v3135
      %v3236 = vpop.f32.mrb[0].mxu0
      %v3237 = vadd.f32 0.0, %v3236
      %v3238 = vpop.f32.mrb[0].mxu0
      %3239 = vmatprep.mubr.f32.mxu0 0.0
      %3240 = vmatmul.mubr.f32.gmra.mrb[0].mxu0 %v3138
      %v3241 = vpop.f32.mrb[0].mxu0
      %v3242 = vadd.f32 0.0, %v3241
      %v3243 = vpop.f32.mrb[0].mxu0
      %3244 = vdwg.mxu0
      %v3245 = vadd.f32 %v3063, %v3207
      %v3246 = vadd.f32 %v3068, %v3212
      %v3247 = vadd.f32 %v3073, %v3217
      %v3248 = vadd.f32 %v3078, %v3222
      %v3249 = vadd.f32 %v3083, %v3227
      %v3250 = vadd.f32 %v3088, %v3232
      %v3251 = vadd.f32 %v3093, %v3237
      %v3252 = vadd.f32 %v3098, %v3242
      %s3253 = scalar_lea.vmem %s11, 192
      %v3254 = vld [vmem:[%s3253] sm:$0xff]
      %v3255 = vld [vmem:[%s3253 + $0x8] sm:$0xff]
      %v3256 = vld [vmem:[%s3253 + $0x10] sm:$0xff]
      %v3257 = vld [vmem:[%s3253 + $0x18] sm:$0xff]
      %v3258 = vld [vmem:[%s3253 + $0x20] sm:$0xff]
      %v3259 = vld [vmem:[%s3253 + $0x28] sm:$0xff]
      %v3260 = vld [vmem:[%s3253 + $0x30] sm:$0xff]
      %v3261 = vld [vmem:[%s3253 + $0x38] sm:$0xff]
      %3262 = vrot.lane.b32.xlu0 %v2809, 125
      %v3263 = vpop.permute.xlu0 %3262
      %3264 = vrot.lane.b32.xlu0 %v2814, 125
      %v3265 = vpop.permute.xlu0 %3264
      %v3269 = vsel %vm2842, %v3254, 0
      %v3272 = vsel %vm2842, %v3255, 0
      %v3275 = vsel %vm2842, %v3256, 0
      %v3278 = vsel %vm2842, %v3257, 0
      %v3281 = vsel %vm2842, %v3258, 0
      %v3284 = vsel %vm2842, %v3259, 0
      %v3287 = vsel %vm2842, %v3260, 0
      %v3290 = vsel %vm2842, %v3261, 0
      %3292 = vmatprep.subr.mxu0 0.0
      %3293 = vmatpush1.msra.mxu0 %v3263
      %3294 = vmatprep.subr.mxu0 0.0
      %3295 = vmatpush1.msra.mxu0 %v3265
      %3296 = vmatprep.subr.mxu0 0.0
      %3297 = vmatpush1.msra.mxu0 0.0
      %3298 = vmatprep.subr.mxu0 0.0
      %3299 = vmatpush1.msra.mxu0 0.0
      %3300 = vmatprep.subr.mxu0 0.0
      %3301 = vmatpush1.msra.mxu0 0.0
      %3302 = vmatprep.subr.mxu0 0.0
      %3303 = vmatpush1.msra.mxu0 0.0
      %3304 = vmatprep.subr.mxu0 0.0
      %3305 = vmatpush1.msra.mxu0 0.0
      %3306 = vmatprep.subr.mxu0 0.0
      %3307 = vmatpush1.msra.mxu0 0.0
      %3308 = vmatprep.subr.mxu0 0.0
      %3309 = vmatpush1.msra.mxu0 0.0
      %3310 = vmatprep.subr.mxu0 0.0
      %3311 = vmatpush1.msra.mxu0 0.0
      %3312 = vmatprep.subr.mxu0 0.0
      %3313 = vmatpush1.msra.mxu0 0.0
      %3314 = vmatprep.subr.mxu0 0.0
      %3315 = vmatpush1.msra.mxu0 0.0
      %3316 = vmatprep.subr.mxu0 0.0
      %3317 = vmatpush1.msra.mxu0 0.0
      %3318 = vmatprep.subr.mxu0 0.0
      %3319 = vmatpush1.msra.mxu0 0.0
      %3320 = vmatprep.subr.mxu0 0.0
      %3321 = vmatpush1.msra.mxu0 0.0
      %3322 = vmatprep.subr.mxu0 0.0
      %3323 = vmatpush1.msra.mxu0 0.0
      %3324 = vmatprep.subr.mxu0 0.0
      %3325 = vmatpush1.msra.mxu0 0.0
      %3326 = vmatprep.subr.mxu0 0.0
      %3327 = vmatpush1.msra.mxu0 0.0
      %3328 = vmatprep.subr.mxu0 0.0
      %3329 = vmatpush1.msra.mxu0 0.0
      %3330 = vmatprep.subr.mxu0 0.0
      %3331 = vmatpush1.msra.mxu0 0.0
      %3332 = vmatprep.subr.mxu0 0.0
      %3333 = vmatpush1.msra.mxu0 0.0
      %3334 = vmatprep.subr.mxu0 0.0
      %3335 = vmatpush1.msra.mxu0 0.0
      %3336 = vmatprep.subr.mxu0 0.0
      %3337 = vmatpush1.msra.mxu0 0.0
      %3338 = vmatprep.subr.mxu0 0.0
      %3339 = vmatpush1.msra.mxu0 0.0
      %3340 = vmatprep.subr.mxu0 0.0
      %3341 = vmatpush1.msra.mxu0 0.0
      %3342 = vmatprep.subr.mxu0 0.0
      %3343 = vmatpush1.msra.mxu0 0.0
      %3344 = vmatprep.subr.mxu0 0.0
      %3345 = vmatpush1.msra.mxu0 0.0
      %3346 = vmatprep.subr.mxu0 0.0
      %3347 = vmatpush1.msra.mxu0 0.0
      %3348 = vmatprep.subr.mxu0 0.0
      %3349 = vmatpush1.msra.mxu0 0.0
      %3350 = vmatprep.subr.mxu0 0.0
      %3351 = vmatpush1.msra.mxu0 0.0
      %3352 = vmatprep.subr.mxu0 0.0
      %3353 = vmatpush1.msra.mxu0 0.0
      %3354 = vmatprep.subr.mxu0 0.0
      %3355 = vmatpush1.msra.mxu0 0.0
      %3356 = vmatprep.mubr.f32.mxu0 0.0
      %3357 = vmatmul.mubr.f32.gmra.mrb[0].mxu0 %v3269
      %v3358 = vpop.f32.mrb[0].mxu0
      %v3359 = vadd.f32 0.0, %v3358
      %v3360 = vpop.f32.mrb[0].mxu0
      %3361 = vmatprep.mubr.f32.mxu0 0.0
      %3362 = vmatmul.mubr.f32.gmra.mrb[0].mxu0 %v3272
      %v3363 = vpop.f32.mrb[0].mxu0
      %v3364 = vadd.f32 0.0, %v3363
      %v3365 = vpop.f32.mrb[0].mxu0
      %3366 = vmatprep.mubr.f32.mxu0 0.0
      %3367 = vmatmul.mubr.f32.gmra.mrb[0].mxu0 %v3275
      %v3368 = vpop.f32.mrb[0].mxu0
      %v3369 = vadd.f32 0.0, %v3368
      %v3370 = vpop.f32.mrb[0].mxu0
      %3371 = vmatprep.mubr.f32.mxu0 0.0
      %3372 = vmatmul.mubr.f32.gmra.mrb[0].mxu0 %v3278
      %v3373 = vpop.f32.mrb[0].mxu0
      %v3374 = vadd.f32 0.0, %v3373
      %v3375 = vpop.f32.mrb[0].mxu0
      %3376 = vmatprep.mubr.f32.mxu0 0.0
      %3377 = vmatmul.mubr.f32.gmra.mrb[0].mxu0 %v3281
      %v3378 = vpop.f32.mrb[0].mxu0
      %v3379 = vadd.f32 0.0, %v3378
      %v3380 = vpop.f32.mrb[0].mxu0
      %3381 = vmatprep.mubr.f32.mxu0 0.0
      %3382 = vmatmul.mubr.f32.gmra.mrb[0].mxu0 %v3284
      %v3383 = vpop.f32.mrb[0].mxu0
      %v3384 = vadd.f32 0.0, %v3383
      %v3385 = vpop.f32.mrb[0].mxu0
      %3386 = vmatprep.mubr.f32.mxu0 0.0
      %3387 = vmatmul.mubr.f32.gmra.mrb[0].mxu0 %v3287
      %v3388 = vpop.f32.mrb[0].mxu0
      %v3389 = vadd.f32 0.0, %v3388
      %v3390 = vpop.f32.mrb[0].mxu0
      %3391 = vmatprep.mubr.f32.mxu0 0.0
      %3392 = vmatmul.mubr.f32.gmra.mrb[0].mxu0 %v3290
      %v3393 = vpop.f32.mrb[0].mxu0
      %v3394 = vadd.f32 0.0, %v3393
      %v3395 = vpop.f32.mrb[0].mxu0
      %3396 = vdwg.mxu0
      %v3397 = vadd.f32 %v3245, %v3359
      %v3398 = vadd.f32 %v3246, %v3364
      %v3399 = vadd.f32 %v3247, %v3369
      %v3400 = vadd.f32 %v3248, %v3374
      %v3401 = vadd.f32 %v3249, %v3379
      %v3402 = vadd.f32 %v3250, %v3384
      %v3403 = vadd.f32 %v3251, %v3389
      %v3404 = vadd.f32 %v3252, %v3394
      %s3405 = scalar_lea.vmem %s11, 256
      %v3406 = vld [vmem:[%s3405] sm:$0xff]
      %v3407 = vld [vmem:[%s3405 + $0x8] sm:$0xff]
      %v3408 = vld [vmem:[%s3405 + $0x10] sm:$0xff]
      %v3409 = vld [vmem:[%s3405 + $0x18] sm:$0xff]
      %v3410 = vld [vmem:[%s3405 + $0x20] sm:$0xff]
      %v3411 = vld [vmem:[%s3405 + $0x28] sm:$0xff]
      %v3412 = vld [vmem:[%s3405 + $0x30] sm:$0xff]
      %v3413 = vld [vmem:[%s3405 + $0x38] sm:$0xff]
      %3414 = vrot.lane.b32.xlu0 %v2809, 124
      %v3415 = vpop.permute.xlu0 %3414
      %3416 = vrot.lane.b32.xlu0 %v2814, 124
      %v3417 = vpop.permute.xlu0 %3416
      %v3421 = vsel %vm2842, %v3406, 0
      %v3424 = vsel %vm2842, %v3407, 0
      %v3427 = vsel %vm2842, %v3408, 0
      %v3430 = vsel %vm2842, %v3409, 0
      %v3433 = vsel %vm2842, %v3410, 0
      %v3436 = vsel %vm2842, %v3411, 0
      %v3439 = vsel %vm2842, %v3412, 0
      %v3442 = vsel %vm2842, %v3413, 0
      %3444 = vmatprep.subr.mxu0 0.0
      %3445 = vmatpush1.msra.mxu0 %v3415
      %3446 = vmatprep.subr.mxu0 0.0
      %3447 = vmatpush1.msra.mxu0 %v3417
      %3448 = vmatprep.subr.mxu0 0.0
      %3449 = vmatpush1.msra.mxu0 0.0
      %3450 = vmatprep.subr.mxu0 0.0
      %3451 = vmatpush1.msra.mxu0 0.0
      %3452 = vmatprep.subr.mxu0 0.0
      %3453 = vmatpush1.msra.mxu0 0.0
      %3454 = vmatprep.subr.mxu0 0.0
      %3455 = vmatpush1.msra.mxu0 0.0
      %3456 = vmatprep.subr.mxu0 0.0
      %3457 = vmatpush1.msra.mxu0 0.0
      %3458 = vmatprep.subr.mxu0 0.0
      %3459 = vmatpush1.msra.mxu0 0.0
      %3460 = vmatprep.subr.mxu0 0.0
      %3461 = vmatpush1.msra.mxu0 0.0
      %3462 = vmatprep.subr.mxu0 0.0
      %3463 = vmatpush1.msra.mxu0 0.0
      %3464 = vmatprep.subr.mxu0 0.0
      %3465 = vmatpush1.msra.mxu0 0.0
      %3466 = vmatprep.subr.mxu0 0.0
      %3467 = vmatpush1.msra.mxu0 0.0
      %3468 = vmatprep.subr.mxu0 0.0
      %3469 = vmatpush1.msra.mxu0 0.0
      %3470 = vmatprep.subr.mxu0 0.0
      %3471 = vmatpush1.msra.mxu0 0.0
      %3472 = vmatprep.subr.mxu0 0.0
      %3473 = vmatpush1.msra.mxu0 0.0
      %3474 = vmatprep.subr.mxu0 0.0
      %3475 = vmatpush1.msra.mxu0 0.0
      %3476 = vmatprep.subr.mxu0 0.0
      %3477 = vmatpush1.msra.mxu0 0.0
      %3478 = vmatprep.subr.mxu0 0.0
      %3479 = vmatpush1.msra.mxu0 0.0
      %3480 = vmatprep.subr.mxu0 0.0
      %3481 = vmatpush1.msra.mxu0 0.0
      %3482 = vmatprep.subr.mxu0 0.0
      %3483 = vmatpush1.msra.mxu0 0.0
      %3484 = vmatprep.subr.mxu0 0.0
      %3485 = vmatpush1.msra.mxu0 0.0
      %3486 = vmatprep.subr.mxu0 0.0
      %3487 = vmatpush1.msra.mxu0 0.0
      %3488 = vmatprep.subr.mxu0 0.0
      %3489 = vmatpush1.msra.mxu0 0.0
      %3490 = vmatprep.subr.mxu0 0.0
      %3491 = vmatpush1.msra.mxu0 0.0
      %3492 = vmatprep.subr.mxu0 0.0
      %3493 = vmatpush1.msra.mxu0 0.0
      %3494 = vmatprep.subr.mxu0 0.0
      %3495 = vmatpush1.msra.mxu0 0.0
      %3496 = vmatprep.subr.mxu0 0.0
      %3497 = vmatpush1.msra.mxu0 0.0
      %3498 = vmatprep.subr.mxu0 0.0
      %3499 = vmatpush1.msra.mxu0 0.0
      %3500 = vmatprep.subr.mxu0 0.0
      %3501 = vmatpush1.msra.mxu0 0.0
      %3502 = vmatprep.subr.mxu0 0.0
      %3503 = vmatpush1.msra.mxu0 0.0
      %3504 = vmatprep.subr.mxu0 0.0
      %3505 = vmatpush1.msra.mxu0 0.0
      %3506 = vmatprep.subr.mxu0 0.0
      %3507 = vmatpush1.msra.mxu0 0.0
      %3508 = vmatprep.mubr.f32.mxu0 0.0
      %3509 = vmatmul.mubr.f32.gmra.mrb[0].mxu0 %v3421
      %v3510 = vpop.f32.mrb[0].mxu0
      %v3511 = vadd.f32 0.0, %v3510
      %v3512 = vpop.f32.mrb[0].mxu0
      %3513 = vmatprep.mubr.f32.mxu0 0.0
      %3514 = vmatmul.mubr.f32.gmra.mrb[0].mxu0 %v3424
      %v3515 = vpop.f32.mrb[0].mxu0
      %v3516 = vadd.f32 0.0, %v3515
      %v3517 = vpop.f32.mrb[0].mxu0
      %3518 = vmatprep.mubr.f32.mxu0 0.0
      %3519 = vmatmul.mubr.f32.gmra.mrb[0].mxu0 %v3427
      %v3520 = vpop.f32.mrb[0].mxu0
      %v3521 = vadd.f32 0.0, %v3520
      %v3522 = vpop.f32.mrb[0].mxu0
      %3523 = vmatprep.mubr.f32.mxu0 0.0
      %3524 = vmatmul.mubr.f32.gmra.mrb[0].mxu0 %v3430
      %v3525 = vpop.f32.mrb[0].mxu0
      %v3526 = vadd.f32 0.0, %v3525
      %v3527 = vpop.f32.mrb[0].mxu0
      %3528 = vmatprep.mubr.f32.mxu0 0.0
      %3529 = vmatmul.mubr.f32.gmra.mrb[0].mxu0 %v3433
      %v3530 = vpop.f32.mrb[0].mxu0
      %v3531 = vadd.f32 0.0, %v3530
      %v3532 = vpop.f32.mrb[0].mxu0
      %3533 = vmatprep.mubr.f32.mxu0 0.0
      %3534 = vmatmul.mubr.f32.gmra.mrb[0].mxu0 %v3436
      %v3535 = vpop.f32.mrb[0].mxu0
      %v3536 = vadd.f32 0.0, %v3535
      %v3537 = vpop.f32.mrb[0].mxu0
      %3538 = vmatprep.mubr.f32.mxu0 0.0
      %3539 = vmatmul.mubr.f32.gmra.mrb[0].mxu0 %v3439
      %v3540 = vpop.f32.mrb[0].mxu0
      %v3541 = vadd.f32 0.0, %v3540
      %v3542 = vpop.f32.mrb[0].mxu0
      %3543 = vmatprep.mubr.f32.mxu0 0.0
      %3544 = vmatmul.mubr.f32.gmra.mrb[0].mxu0 %v3442
      %v3545 = vpop.f32.mrb[0].mxu0
      %v3546 = vadd.f32 0.0, %v3545
      %v3547 = vpop.f32.mrb[0].mxu0
      %3548 = vdwg.mxu0
      %v3549 = vadd.f32 %v3397, %v3511
      %v3550 = vadd.f32 %v3398, %v3516
      %v3551 = vadd.f32 %v3399, %v3521
      %v3552 = vadd.f32 %v3400, %v3526
      %v3553 = vadd.f32 %v3401, %v3531
      %v3554 = vadd.f32 %v3402, %v3536
      %v3555 = vadd.f32 %v3403, %v3541
      %v3556 = vadd.f32 %v3404, %v3546
      %s3557 = scalar_lea.vmem %s11, 320
      %v3558 = vld [vmem:[%s3557] sm:$0xff]
      %v3559 = vld [vmem:[%s3557 + $0x8] sm:$0xff]
      %v3560 = vld [vmem:[%s3557 + $0x10] sm:$0xff]
      %v3561 = vld [vmem:[%s3557 + $0x18] sm:$0xff]
      %v3562 = vld [vmem:[%s3557 + $0x20] sm:$0xff]
      %v3563 = vld [vmem:[%s3557 + $0x28] sm:$0xff]
      %v3564 = vld [vmem:[%s3557 + $0x30] sm:$0xff]
      %v3565 = vld [vmem:[%s3557 + $0x38] sm:$0xff]
      %3566 = vrot.lane.b32.xlu0 %v2809, 121
      %v3567 = vpop.permute.xlu0 %3566
      %3568 = vrot.lane.b32.xlu0 %v2814, 121
      %v3569 = vpop.permute.xlu0 %3568
      %v3573 = vsel %vm2842, %v3558, 0
      %v3576 = vsel %vm2842, %v3559, 0
      %v3579 = vsel %vm2842, %v3560, 0
      %v3582 = vsel %vm2842, %v3561, 0
      %v3585 = vsel %vm2842, %v3562, 0
      %v3588 = vsel %vm2842, %v3563, 0
      %v3591 = vsel %vm2842, %v3564, 0
      %v3594 = vsel %vm2842, %v3565, 0
      %3596 = vmatprep.subr.mxu0 0.0
      %3597 = vmatpush1.msra.mxu0 %v3567
      %3598 = vmatprep.subr.mxu0 0.0
      %3599 = vmatpush1.msra.mxu0 %v3569
      %3600 = vmatprep.subr.mxu0 0.0
      %3601 = vmatpush1.msra.mxu0 0.0
      %3602 = vmatprep.subr.mxu0 0.0
      %3603 = vmatpush1.msra.mxu0 0.0
      %3604 = vmatprep.subr.mxu0 0.0
      %3605 = vmatpush1.msra.mxu0 0.0
      %3606 = vmatprep.subr.mxu0 0.0
      %3607 = vmatpush1.msra.mxu0 0.0
      %3608 = vmatprep.subr.mxu0 0.0
      %3609 = vmatpush1.msra.mxu0 0.0
      %3610 = vmatprep.subr.mxu0 0.0
      %3611 = vmatpush1.msra.mxu0 0.0
      %3612 = vmatprep.subr.mxu0 0.0
      %3613 = vmatpush1.msra.mxu0 0.0
      %3614 = vmatprep.subr.mxu0 0.0
      %3615 = vmatpush1.msra.mxu0 0.0
      %3616 = vmatprep.subr.mxu0 0.0
      %3617 = vmatpush1.msra.mxu0 0.0
      %3618 = vmatprep.subr.mxu0 0.0
      %3619 = vmatpush1.msra.mxu0 0.0
      %3620 = vmatprep.subr.mxu0 0.0
      %3621 = vmatpush1.msra.mxu0 0.0
      %3622 = vmatprep.subr.mxu0 0.0
      %3623 = vmatpush1.msra.mxu0 0.0
      %3624 = vmatprep.subr.mxu0 0.0
      %3625 = vmatpush1.msra.mxu0 0.0
      %3626 = vmatprep.subr.mxu0 0.0
      %3627 = vmatpush1.msra.mxu0 0.0
      %3628 = vmatprep.subr.mxu0 0.0
      %3629 = vmatpush1.msra.mxu0 0.0
      %3630 = vmatprep.subr.mxu0 0.0
      %3631 = vmatpush1.msra.mxu0 0.0
      %3632 = vmatprep.subr.mxu0 0.0
      %3633 = vmatpush1.msra.mxu0 0.0
      %3634 = vmatprep.subr.mxu0 0.0
      %3635 = vmatpush1.msra.mxu0 0.0
      %3636 = vmatprep.subr.mxu0 0.0
      %3637 = vmatpush1.msra.mxu0 0.0
      %3638 = vmatprep.subr.mxu0 0.0
      %3639 = vmatpush1.msra.mxu0 0.0
      %3640 = vmatprep.subr.mxu0 0.0
      %3641 = vmatpush1.msra.mxu0 0.0
      %3642 = vmatprep.subr.mxu0 0.0
      %3643 = vmatpush1.msra.mxu0 0.0
      %3644 = vmatprep.subr.mxu0 0.0
      %3645 = vmatpush1.msra.mxu0 0.0
      %3646 = vmatprep.subr.mxu0 0.0
      %3647 = vmatpush1.msra.mxu0 0.0
      %3648 = vmatprep.subr.mxu0 0.0
      %3649 = vmatpush1.msra.mxu0 0.0
      %3650 = vmatprep.subr.mxu0 0.0
      %3651 = vmatpush1.msra.mxu0 0.0
      %3652 = vmatprep.subr.mxu0 0.0
      %3653 = vmatpush1.msra.mxu0 0.0
      %3654 = vmatprep.subr.mxu0 0.0
      %3655 = vmatpush1.msra.mxu0 0.0
      %3656 = vmatprep.subr.mxu0 0.0
      %3657 = vmatpush1.msra.mxu0 0.0
      %3658 = vmatprep.subr.mxu0 0.0
      %3659 = vmatpush1.msra.mxu0 0.0
      %3660 = vmatprep.mubr.f32.mxu0 0.0
      %3661 = vmatmul.mubr.f32.gmra.mrb[0].mxu0 %v3573
      %v3662 = vpop.f32.mrb[0].mxu0
      %v3663 = vadd.f32 0.0, %v3662
      %v3664 = vpop.f32.mrb[0].mxu0
      %3665 = vmatprep.mubr.f32.mxu0 0.0
      %3666 = vmatmul.mubr.f32.gmra.mrb[0].mxu0 %v3576
      %v3667 = vpop.f32.mrb[0].mxu0
      %v3668 = vadd.f32 0.0, %v3667
      %v3669 = vpop.f32.mrb[0].mxu0
      %3670 = vmatprep.mubr.f32.mxu0 0.0
      %3671 = vmatmul.mubr.f32.gmra.mrb[0].mxu0 %v3579
      %v3672 = vpop.f32.mrb[0].mxu0
      %v3673 = vadd.f32 0.0, %v3672
      %v3674 = vpop.f32.mrb[0].mxu0
      %3675 = vmatprep.mubr.f32.mxu0 0.0
      %3676 = vmatmul.mubr.f32.gmra.mrb[0].mxu0 %v3582
      %v3677 = vpop.f32.mrb[0].mxu0
      %v3678 = vadd.f32 0.0, %v3677
      %v3679 = vpop.f32.mrb[0].mxu0
      %3680 = vmatprep.mubr.f32.mxu0 0.0
      %3681 = vmatmul.mubr.f32.gmra.mrb[0].mxu0 %v3585
      %v3682 = vpop.f32.mrb[0].mxu0
      %v3683 = vadd.f32 0.0, %v3682
      %v3684 = vpop.f32.mrb[0].mxu0
      %3685 = vmatprep.mubr.f32.mxu0 0.0
      %3686 = vmatmul.mubr.f32.gmra.mrb[0].mxu0 %v3588
      %v3687 = vpop.f32.mrb[0].mxu0
      %v3688 = vadd.f32 0.0, %v3687
      %v3689 = vpop.f32.mrb[0].mxu0
      %3690 = vmatprep.mubr.f32.mxu0 0.0
      %3691 = vmatmul.mubr.f32.gmra.mrb[0].mxu0 %v3591
      %v3692 = vpop.f32.mrb[0].mxu0
      %v3693 = vadd.f32 0.0, %v3692
      %v3694 = vpop.f32.mrb[0].mxu0
      %3695 = vmatprep.mubr.f32.mxu0 0.0
      %3696 = vmatmul.mubr.f32.gmra.mrb[0].mxu0 %v3594
      %v3697 = vpop.f32.mrb[0].mxu0
      %v3698 = vadd.f32 0.0, %v3697
      %v3699 = vpop.f32.mrb[0].mxu0
      %3700 = vdwg.mxu0
      %v3701 = vadd.f32 %v3549, %v3663
      %v3702 = vadd.f32 %v3550, %v3668
      %v3703 = vadd.f32 %v3551, %v3673
      %v3704 = vadd.f32 %v3552, %v3678
      %v3705 = vadd.f32 %v3553, %v3683
      %v3706 = vadd.f32 %v3554, %v3688
      %v3707 = vadd.f32 %v3555, %v3693
      %v3708 = vadd.f32 %v3556, %v3698
      %s3709 = scalar_lea.vmem %s11, 384
      %v3710 = vld [vmem:[%s3709] sm:$0xff]
      %v3711 = vld [vmem:[%s3709 + $0x8] sm:$0xff]
      %v3712 = vld [vmem:[%s3709 + $0x10] sm:$0xff]
      %v3713 = vld [vmem:[%s3709 + $0x18] sm:$0xff]
      %v3714 = vld [vmem:[%s3709 + $0x20] sm:$0xff]
      %v3715 = vld [vmem:[%s3709 + $0x28] sm:$0xff]
      %v3716 = vld [vmem:[%s3709 + $0x30] sm:$0xff]
      %v3717 = vld [vmem:[%s3709 + $0x38] sm:$0xff]
      %3718 = vrot.lane.b32.xlu0 %v2809, 120
      %v3719 = vpop.permute.xlu0 %3718
      %3720 = vrot.lane.b32.xlu0 %v2814, 120
      %v3721 = vpop.permute.xlu0 %3720
      %v3725 = vsel %vm2842, %v3710, 0
      %v3728 = vsel %vm2842, %v3711, 0
      %v3731 = vsel %vm2842, %v3712, 0
      %v3734 = vsel %vm2842, %v3713, 0
      %v3737 = vsel %vm2842, %v3714, 0
      %v3740 = vsel %vm2842, %v3715, 0
      %v3743 = vsel %vm2842, %v3716, 0
      %v3746 = vsel %vm2842, %v3717, 0
      %3748 = vmatprep.subr.mxu0 0.0
      %3749 = vmatpush1.msra.mxu0 %v3719
      %3750 = vmatprep.subr.mxu0 0.0
      %3751 = vmatpush1.msra.mxu0 %v3721
      %3752 = vmatprep.subr.mxu0 0.0
      %3753 = vmatpush1.msra.mxu0 0.0
      %3754 = vmatprep.subr.mxu0 0.0
      %3755 = vmatpush1.msra.mxu0 0.0
      %3756 = vmatprep.subr.mxu0 0.0
      %3757 = vmatpush1.msra.mxu0 0.0
      %3758 = vmatprep.subr.mxu0 0.0
      %3759 = vmatpush1.msra.mxu0 0.0
      %3760 = vmatprep.subr.mxu0 0.0
      %3761 = vmatpush1.msra.mxu0 0.0
      %3762 = vmatprep.subr.mxu0 0.0
      %3763 = vmatpush1.msra.mxu0 0.0
      %3764 = vmatprep.subr.mxu0 0.0
      %3765 = vmatpush1.msra.mxu0 0.0
      %3766 = vmatprep.subr.mxu0 0.0
      %3767 = vmatpush1.msra.mxu0 0.0
      %3768 = vmatprep.subr.mxu0 0.0
      %3769 = vmatpush1.msra.mxu0 0.0
      %3770 = vmatprep.subr.mxu0 0.0
      %3771 = vmatpush1.msra.mxu0 0.0
      %3772 = vmatprep.subr.mxu0 0.0
      %3773 = vmatpush1.msra.mxu0 0.0
      %3774 = vmatprep.subr.mxu0 0.0
      %3775 = vmatpush1.msra.mxu0 0.0
      %3776 = vmatprep.subr.mxu0 0.0
      %3777 = vmatpush1.msra.mxu0 0.0
      %3778 = vmatprep.subr.mxu0 0.0
      %3779 = vmatpush1.msra.mxu0 0.0
      %3780 = vmatprep.subr.mxu0 0.0
      %3781 = vmatpush1.msra.mxu0 0.0
      %3782 = vmatprep.subr.mxu0 0.0
      %3783 = vmatpush1.msra.mxu0 0.0
      %3784 = vmatprep.subr.mxu0 0.0
      %3785 = vmatpush1.msra.mxu0 0.0
      %3786 = vmatprep.subr.mxu0 0.0
      %3787 = vmatpush1.msra.mxu0 0.0
      %3788 = vmatprep.subr.mxu0 0.0
      %3789 = vmatpush1.msra.mxu0 0.0
      %3790 = vmatprep.subr.mxu0 0.0
      %3791 = vmatpush1.msra.mxu0 0.0
      %3792 = vmatprep.subr.mxu0 0.0
      %3793 = vmatpush1.msra.mxu0 0.0
      %3794 = vmatprep.subr.mxu0 0.0
      %3795 = vmatpush1.msra.mxu0 0.0
      %3796 = vmatprep.subr.mxu0 0.0
      %3797 = vmatpush1.msra.mxu0 0.0
      %3798 = vmatprep.subr.mxu0 0.0
      %3799 = vmatpush1.msra.mxu0 0.0
      %3800 = vmatprep.subr.mxu0 0.0
      %3801 = vmatpush1.msra.mxu0 0.0
      %3802 = vmatprep.subr.mxu0 0.0
      %3803 = vmatpush1.msra.mxu0 0.0
      %3804 = vmatprep.subr.mxu0 0.0
      %3805 = vmatpush1.msra.mxu0 0.0
      %3806 = vmatprep.subr.mxu0 0.0
      %3807 = vmatpush1.msra.mxu0 0.0
      %3808 = vmatprep.subr.mxu0 0.0
      %3809 = vmatpush1.msra.mxu0 0.0
      %3810 = vmatprep.subr.mxu0 0.0
      %3811 = vmatpush1.msra.mxu0 0.0
      %3812 = vmatprep.mubr.f32.mxu0 0.0
      %3813 = vmatmul.mubr.f32.gmra.mrb[0].mxu0 %v3725
      %v3814 = vpop.f32.mrb[0].mxu0
      %v3815 = vadd.f32 0.0, %v3814
      %v3816 = vpop.f32.mrb[0].mxu0
      %3817 = vmatprep.mubr.f32.mxu0 0.0
      %3818 = vmatmul.mubr.f32.gmra.mrb[0].mxu0 %v3728
      %v3819 = vpop.f32.mrb[0].mxu0
      %v3820 = vadd.f32 0.0, %v3819
      %v3821 = vpop.f32.mrb[0].mxu0
      %3822 = vmatprep.mubr.f32.mxu0 0.0
      %3823 = vmatmul.mubr.f32.gmra.mrb[0].mxu0 %v3731
      %v3824 = vpop.f32.mrb[0].mxu0
      %v3825 = vadd.f32 0.0, %v3824
      %v3826 = vpop.f32.mrb[0].mxu0
      %3827 = vmatprep.mubr.f32.mxu0 0.0
      %3828 = vmatmul.mubr.f32.gmra.mrb[0].mxu0 %v3734
      %v3829 = vpop.f32.mrb[0].mxu0
      %v3830 = vadd.f32 0.0, %v3829
      %v3831 = vpop.f32.mrb[0].mxu0
      %3832 = vmatprep.mubr.f32.mxu0 0.0
      %3833 = vmatmul.mubr.f32.gmra.mrb[0].mxu0 %v3737
      %v3834 = vpop.f32.mrb[0].mxu0
      %v3835 = vadd.f32 0.0, %v3834
      %v3836 = vpop.f32.mrb[0].mxu0
      %3837 = vmatprep.mubr.f32.mxu0 0.0
      %3838 = vmatmul.mubr.f32.gmra.mrb[0].mxu0 %v3740
      %v3839 = vpop.f32.mrb[0].mxu0
      %v3840 = vadd.f32 0.0, %v3839
      %v3841 = vpop.f32.mrb[0].mxu0
      %3842 = vmatprep.mubr.f32.mxu0 0.0
      %3843 = vmatmul.mubr.f32.gmra.mrb[0].mxu0 %v3743
      %v3844 = vpop.f32.mrb[0].mxu0
      %v3845 = vadd.f32 0.0, %v3844
      %v3846 = vpop.f32.mrb[0].mxu0
      %3847 = vmatprep.mubr.f32.mxu0 0.0
      %3848 = vmatmul.mubr.f32.gmra.mrb[0].mxu0 %v3746
      %v3849 = vpop.f32.mrb[0].mxu0
      %v3850 = vadd.f32 0.0, %v3849
      %v3851 = vpop.f32.mrb[0].mxu0
      %3852 = vdwg.mxu0
      %v3853 = vadd.f32 %v3701, %v3815
      %v3854 = vadd.f32 %v3702, %v3820
      %v3855 = vadd.f32 %v3703, %v3825
      %v3856 = vadd.f32 %v3704, %v3830
      %v3857 = vadd.f32 %v3705, %v3835
      %v3858 = vadd.f32 %v3706, %v3840
      %v3859 = vadd.f32 %v3707, %v3845
      %v3860 = vadd.f32 %v3708, %v3850
      %s3861 = scalar_lea.vmem %s11, 448
      %v3862 = vld [vmem:[%s3861] sm:$0xff]
      %v3863 = vld [vmem:[%s3861 + $0x8] sm:$0xff]
      %v3864 = vld [vmem:[%s3861 + $0x10] sm:$0xff]
      %v3865 = vld [vmem:[%s3861 + $0x18] sm:$0xff]
      %v3866 = vld [vmem:[%s3861 + $0x20] sm:$0xff]
      %v3867 = vld [vmem:[%s3861 + $0x28] sm:$0xff]
      %v3868 = vld [vmem:[%s3861 + $0x30] sm:$0xff]
      %v3869 = vld [vmem:[%s3861 + $0x38] sm:$0xff]
      %3870 = vrot.lane.b32.xlu0 %v2809, 119
      %v3871 = vpop.permute.xlu0 %3870
      %3872 = vrot.lane.b32.xlu0 %v2814, 119
      %v3873 = vpop.permute.xlu0 %3872
      %v3877 = vsel %vm2842, %v3862, 0
      %v3880 = vsel %vm2842, %v3863, 0
      %v3883 = vsel %vm2842, %v3864, 0
      %v3886 = vsel %vm2842, %v3865, 0
      %v3889 = vsel %vm2842, %v3866, 0
      %v3892 = vsel %vm2842, %v3867, 0
      %v3895 = vsel %vm2842, %v3868, 0
      %v3898 = vsel %vm2842, %v3869, 0
      %3900 = vmatprep.subr.mxu0 0.0
      %3901 = vmatpush1.msra.mxu0 %v3871
      %3902 = vmatprep.subr.mxu0 0.0
      %3903 = vmatpush1.msra.mxu0 %v3873
      %3904 = vmatprep.subr.mxu0 0.0
      %3905 = vmatpush1.msra.mxu0 0.0
      %3906 = vmatprep.subr.mxu0 0.0
      %3907 = vmatpush1.msra.mxu0 0.0
      %3908 = vmatprep.subr.mxu0 0.0
      %3909 = vmatpush1.msra.mxu0 0.0
      %3910 = vmatprep.subr.mxu0 0.0
      %3911 = vmatpush1.msra.mxu0 0.0
      %3912 = vmatprep.subr.mxu0 0.0
      %3913 = vmatpush1.msra.mxu0 0.0
      %3914 = vmatprep.subr.mxu0 0.0
      %3915 = vmatpush1.msra.mxu0 0.0
      %3916 = vmatprep.subr.mxu0 0.0
      %3917 = vmatpush1.msra.mxu0 0.0
      %3918 = vmatprep.subr.mxu0 0.0
      %3919 = vmatpush1.msra.mxu0 0.0
      %3920 = vmatprep.subr.mxu0 0.0
      %3921 = vmatpush1.msra.mxu0 0.0
      %3922 = vmatprep.subr.mxu0 0.0
      %3923 = vmatpush1.msra.mxu0 0.0
      %3924 = vmatprep.subr.mxu0 0.0
      %3925 = vmatpush1.msra.mxu0 0.0
      %3926 = vmatprep.subr.mxu0 0.0
      %3927 = vmatpush1.msra.mxu0 0.0
      %3928 = vmatprep.subr.mxu0 0.0
      %3929 = vmatpush1.msra.mxu0 0.0
      %3930 = vmatprep.subr.mxu0 0.0
      %3931 = vmatpush1.msra.mxu0 0.0
      %3932 = vmatprep.subr.mxu0 0.0
      %3933 = vmatpush1.msra.mxu0 0.0
      %3934 = vmatprep.subr.mxu0 0.0
      %3935 = vmatpush1.msra.mxu0 0.0
      %3936 = vmatprep.subr.mxu0 0.0
      %3937 = vmatpush1.msra.mxu0 0.0
      %3938 = vmatprep.subr.mxu0 0.0
      %3939 = vmatpush1.msra.mxu0 0.0
      %3940 = vmatprep.subr.mxu0 0.0
      %3941 = vmatpush1.msra.mxu0 0.0
      %3942 = vmatprep.subr.mxu0 0.0
      %3943 = vmatpush1.msra.mxu0 0.0
      %3944 = vmatprep.subr.mxu0 0.0
      %3945 = vmatpush1.msra.mxu0 0.0
      %3946 = vmatprep.subr.mxu0 0.0
      %3947 = vmatpush1.msra.mxu0 0.0
      %3948 = vmatprep.subr.mxu0 0.0
      %3949 = vmatpush1.msra.mxu0 0.0
      %3950 = vmatprep.subr.mxu0 0.0
      %3951 = vmatpush1.msra.mxu0 0.0
      %3952 = vmatprep.subr.mxu0 0.0
      %3953 = vmatpush1.msra.mxu0 0.0
      %3954 = vmatprep.subr.mxu0 0.0
      %3955 = vmatpush1.msra.mxu0 0.0
      %3956 = vmatprep.subr.mxu0 0.0
      %3957 = vmatpush1.msra.mxu0 0.0
      %3958 = vmatprep.subr.mxu0 0.0
      %3959 = vmatpush1.msra.mxu0 0.0
      %3960 = vmatprep.subr.mxu0 0.0
      %3961 = vmatpush1.msra.mxu0 0.0
      %3962 = vmatprep.subr.mxu0 0.0
      %3963 = vmatpush1.msra.mxu0 0.0
      %3964 = vmatprep.mubr.f32.mxu0 0.0
      %3965 = vmatmul.mubr.f32.gmra.mrb[0].mxu0 %v3877
      %v3966 = vpop.f32.mrb[0].mxu0
      %v3967 = vadd.f32 0.0, %v3966
      %v3968 = vpop.f32.mrb[0].mxu0
      %3969 = vmatprep.mubr.f32.mxu0 0.0
      %3970 = vmatmul.mubr.f32.gmra.mrb[0].mxu0 %v3880
      %v3971 = vpop.f32.mrb[0].mxu0
      %v3972 = vadd.f32 0.0, %v3971
      %v3973 = vpop.f32.mrb[0].mxu0
      %3974 = vmatprep.mubr.f32.mxu0 0.0
      %3975 = vmatmul.mubr.f32.gmra.mrb[0].mxu0 %v3883
      %v3976 = vpop.f32.mrb[0].mxu0
      %v3977 = vadd.f32 0.0, %v3976
      %v3978 = vpop.f32.mrb[0].mxu0
      %3979 = vmatprep.mubr.f32.mxu0 0.0
      %3980 = vmatmul.mubr.f32.gmra.mrb[0].mxu0 %v3886
      %v3981 = vpop.f32.mrb[0].mxu0
      %v3982 = vadd.f32 0.0, %v3981
      %v3983 = vpop.f32.mrb[0].mxu0
      %3984 = vmatprep.mubr.f32.mxu0 0.0
      %3985 = vmatmul.mubr.f32.gmra.mrb[0].mxu0 %v3889
      %v3986 = vpop.f32.mrb[0].mxu0
      %v3987 = vadd.f32 0.0, %v3986
      %v3988 = vpop.f32.mrb[0].mxu0
      %3989 = vmatprep.mubr.f32.mxu0 0.0
      %3990 = vmatmul.mubr.f32.gmra.mrb[0].mxu0 %v3892
      %v3991 = vpop.f32.mrb[0].mxu0
      %v3992 = vadd.f32 0.0, %v3991
      %v3993 = vpop.f32.mrb[0].mxu0
      %3994 = vmatprep.mubr.f32.mxu0 0.0
      %3995 = vmatmul.mubr.f32.gmra.mrb[0].mxu0 %v3895
      %v3996 = vpop.f32.mrb[0].mxu0
      %v3997 = vadd.f32 0.0, %v3996
      %v3998 = vpop.f32.mrb[0].mxu0
      %3999 = vmatprep.mubr.f32.mxu0 0.0
      %4000 = vmatmul.mubr.f32.gmra.mrb[0].mxu0 %v3898
      %v4001 = vpop.f32.mrb[0].mxu0
      %v4002 = vadd.f32 0.0, %v4001
      %v4003 = vpop.f32.mrb[0].mxu0
      %4004 = vdwg.mxu0
      %v4005 = vadd.f32 %v3853, %v3967
      %v4006 = vadd.f32 %v3854, %v3972
      %v4007 = vadd.f32 %v3855, %v3977
      %v4008 = vadd.f32 %v3856, %v3982
      %v4009 = vadd.f32 %v3857, %v3987
      %v4010 = vadd.f32 %v3858, %v3992
      %v4011 = vadd.f32 %v3859, %v3997
      %v4012 = vadd.f32 %v3860, %v4002
      %s4013 = scalar_lea.vmem %s11, 512
      %v4014 = vld [vmem:[%s4013] sm:$0xff]
      %v4015 = vld [vmem:[%s4013 + $0x8] sm:$0xff]
      %v4016 = vld [vmem:[%s4013 + $0x10] sm:$0xff]
      %v4017 = vld [vmem:[%s4013 + $0x18] sm:$0xff]
      %v4018 = vld [vmem:[%s4013 + $0x20] sm:$0xff]
      %v4019 = vld [vmem:[%s4013 + $0x28] sm:$0xff]
      %v4020 = vld [vmem:[%s4013 + $0x30] sm:$0xff]
      %v4021 = vld [vmem:[%s4013 + $0x38] sm:$0xff]
      %4022 = vrot.lane.b32.xlu0 %v2809, 118
      %v4023 = vpop.permute.xlu0 %4022
      %4024 = vrot.lane.b32.xlu0 %v2814, 118
      %v4025 = vpop.permute.xlu0 %4024
      %v4029 = vsel %vm2842, %v4014, 0
      %v4032 = vsel %vm2842, %v4015, 0
      %v4035 = vsel %vm2842, %v4016, 0
      %v4038 = vsel %vm2842, %v4017, 0
      %v4041 = vsel %vm2842, %v4018, 0
      %v4044 = vsel %vm2842, %v4019, 0
      %v4047 = vsel %vm2842, %v4020, 0
      %v4050 = vsel %vm2842, %v4021, 0
      %4052 = vmatprep.subr.mxu0 0.0
      %4053 = vmatpush1.msra.mxu0 %v4023
      %4054 = vmatprep.subr.mxu0 0.0
      %4055 = vmatpush1.msra.mxu0 %v4025
      %4056 = vmatprep.subr.mxu0 0.0
      %4057 = vmatpush1.msra.mxu0 0.0
      %4058 = vmatprep.subr.mxu0 0.0
      %4059 = vmatpush1.msra.mxu0 0.0
      %4060 = vmatprep.subr.mxu0 0.0
      %4061 = vmatpush1.msra.mxu0 0.0
      %4062 = vmatprep.subr.mxu0 0.0
      %4063 = vmatpush1.msra.mxu0 0.0
      %4064 = vmatprep.subr.mxu0 0.0
      %4065 = vmatpush1.msra.mxu0 0.0
      %4066 = vmatprep.subr.mxu0 0.0
      %4067 = vmatpush1.msra.mxu0 0.0
      %4068 = vmatprep.subr.mxu0 0.0
      %4069 = vmatpush1.msra.mxu0 0.0
      %4070 = vmatprep.subr.mxu0 0.0
      %4071 = vmatpush1.msra.mxu0 0.0
      %4072 = vmatprep.subr.mxu0 0.0
      %4073 = vmatpush1.msra.mxu0 0.0
      %4074 = vmatprep.subr.mxu0 0.0
      %4075 = vmatpush1.msra.mxu0 0.0
      %4076 = vmatprep.subr.mxu0 0.0
      %4077 = vmatpush1.msra.mxu0 0.0
      %4078 = vmatprep.subr.mxu0 0.0
      %4079 = vmatpush1.msra.mxu0 0.0
      %4080 = vmatprep.subr.mxu0 0.0
      %4081 = vmatpush1.msra.mxu0 0.0
      %4082 = vmatprep.subr.mxu0 0.0
      %4083 = vmatpush1.msra.mxu0 0.0
      %4084 = vmatprep.subr.mxu0 0.0
      %4085 = vmatpush1.msra.mxu0 0.0
      %4086 = vmatprep.subr.mxu0 0.0
      %4087 = vmatpush1.msra.mxu0 0.0
      %4088 = vmatprep.subr.mxu0 0.0
      %4089 = vmatpush1.msra.mxu0 0.0
      %4090 = vmatprep.subr.mxu0 0.0
      %4091 = vmatpush1.msra.mxu0 0.0
      %4092 = vmatprep.subr.mxu0 0.0
      %4093 = vmatpush1.msra.mxu0 0.0
      %4094 = vmatprep.subr.mxu0 0.0
      %4095 = vmatpush1.msra.mxu0 0.0
      %4096 = vmatprep.subr.mxu0 0.0
      %4097 = vmatpush1.msra.mxu0 0.0
      %4098 = vmatprep.subr.mxu0 0.0
      %4099 = vmatpush1.msra.mxu0 0.0
      %4100 = vmatprep.subr.mxu0 0.0
      %4101 = vmatpush1.msra.mxu0 0.0
      %4102 = vmatprep.subr.mxu0 0.0
      %4103 = vmatpush1.msra.mxu0 0.0
      %4104 = vmatprep.subr.mxu0 0.0
      %4105 = vmatpush1.msra.mxu0 0.0
      %4106 = vmatprep.subr.mxu0 0.0
      %4107 = vmatpush1.msra.mxu0 0.0
      %4108 = vmatprep.subr.mxu0 0.0
      %4109 = vmatpush1.msra.mxu0 0.0
      %4110 = vmatprep.subr.mxu0 0.0
      %4111 = vmatpush1.msra.mxu0 0.0
      %4112 = vmatprep.subr.mxu0 0.0
      %4113 = vmatpush1.msra.mxu0 0.0
      %4114 = vmatprep.subr.mxu0 0.0
      %4115 = vmatpush1.msra.mxu0 0.0
      %4116 = vmatprep.mubr.f32.mxu0 0.0
      %4117 = vmatmul.mubr.f32.gmra.mrb[0].mxu0 %v4029
      %v4118 = vpop.f32.mrb[0].mxu0
      %v4119 = vadd.f32 0.0, %v4118
      %v4120 = vpop.f32.mrb[0].mxu0
      %4121 = vmatprep.mubr.f32.mxu0 0.0
      %4122 = vmatmul.mubr.f32.gmra.mrb[0].mxu0 %v4032
      %v4123 = vpop.f32.mrb[0].mxu0
      %v4124 = vadd.f32 0.0, %v4123
      %v4125 = vpop.f32.mrb[0].mxu0
      %4126 = vmatprep.mubr.f32.mxu0 0.0
      %4127 = vmatmul.mubr.f32.gmra.mrb[0].mxu0 %v4035
      %v4128 = vpop.f32.mrb[0].mxu0
      %v4129 = vadd.f32 0.0, %v4128
      %v4130 = vpop.f32.mrb[0].mxu0
      %4131 = vmatprep.mubr.f32.mxu0 0.0
      %4132 = vmatmul.mubr.f32.gmra.mrb[0].mxu0 %v4038
      %v4133 = vpop.f32.mrb[0].mxu0
      %v4134 = vadd.f32 0.0, %v4133
      %v4135 = vpop.f32.mrb[0].mxu0
      %4136 = vmatprep.mubr.f32.mxu0 0.0
      %4137 = vmatmul.mubr.f32.gmra.mrb[0].mxu0 %v4041
      %v4138 = vpop.f32.mrb[0].mxu0
      %v4139 = vadd.f32 0.0, %v4138
      %v4140 = vpop.f32.mrb[0].mxu0
      %4141 = vmatprep.mubr.f32.mxu0 0.0
      %4142 = vmatmul.mubr.f32.gmra.mrb[0].mxu0 %v4044
      %v4143 = vpop.f32.mrb[0].mxu0
      %v4144 = vadd.f32 0.0, %v4143
      %v4145 = vpop.f32.mrb[0].mxu0
      %4146 = vmatprep.mubr.f32.mxu0 0.0
      %4147 = vmatmul.mubr.f32.gmra.mrb[0].mxu0 %v4047
      %v4148 = vpop.f32.mrb[0].mxu0
      %v4149 = vadd.f32 0.0, %v4148
      %v4150 = vpop.f32.mrb[0].mxu0
      %4151 = vmatprep.mubr.f32.mxu0 0.0
      %4152 = vmatmul.mubr.f32.gmra.mrb[0].mxu0 %v4050
      %v4153 = vpop.f32.mrb[0].mxu0
      %v4154 = vadd.f32 0.0, %v4153
      %v4155 = vpop.f32.mrb[0].mxu0
      %4156 = vdwg.mxu0
      %v4157 = vadd.f32 %v4005, %v4119
      %v4158 = vadd.f32 %v4006, %v4124
      %v4159 = vadd.f32 %v4007, %v4129
      %v4160 = vadd.f32 %v4008, %v4134
      %v4161 = vadd.f32 %v4009, %v4139
      %v4162 = vadd.f32 %v4010, %v4144
      %v4163 = vadd.f32 %v4011, %v4149
      %v4164 = vadd.f32 %v4012, %v4154
      %s4165 = scalar_lea.vmem %s11, 576
      %v4166 = vld [vmem:[%s4165] sm:$0xff]
      %v4167 = vld [vmem:[%s4165 + $0x8] sm:$0xff]
      %v4168 = vld [vmem:[%s4165 + $0x10] sm:$0xff]
      %v4169 = vld [vmem:[%s4165 + $0x18] sm:$0xff]
      %v4170 = vld [vmem:[%s4165 + $0x20] sm:$0xff]
      %v4171 = vld [vmem:[%s4165 + $0x28] sm:$0xff]
      %v4172 = vld [vmem:[%s4165 + $0x30] sm:$0xff]
      %v4173 = vld [vmem:[%s4165 + $0x38] sm:$0xff]
      %4174 = vrot.lane.b32.xlu0 %v2809, 117
      %v4175 = vpop.permute.xlu0 %4174
      %4176 = vrot.lane.b32.xlu0 %v2814, 117
      %v4177 = vpop.permute.xlu0 %4176
      %v4181 = vsel %vm2842, %v4166, 0
      %v4184 = vsel %vm2842, %v4167, 0
      %v4187 = vsel %vm2842, %v4168, 0
      %v4190 = vsel %vm2842, %v4169, 0
      %v4193 = vsel %vm2842, %v4170, 0
      %v4196 = vsel %vm2842, %v4171, 0
      %v4199 = vsel %vm2842, %v4172, 0
      %v4202 = vsel %vm2842, %v4173, 0
      %4204 = vmatprep.subr.mxu0 0.0
      %4205 = vmatpush1.msra.mxu0 %v4175
      %4206 = vmatprep.subr.mxu0 0.0
      %4207 = vmatpush1.msra.mxu0 %v4177
      %4208 = vmatprep.subr.mxu0 0.0
      %4209 = vmatpush1.msra.mxu0 0.0
      %4210 = vmatprep.subr.mxu0 0.0
      %4211 = vmatpush1.msra.mxu0 0.0
      %4212 = vmatprep.subr.mxu0 0.0
      %4213 = vmatpush1.msra.mxu0 0.0
      %4214 = vmatprep.subr.mxu0 0.0
      %4215 = vmatpush1.msra.mxu0 0.0
      %4216 = vmatprep.subr.mxu0 0.0
      %4217 = vmatpush1.msra.mxu0 0.0
      %4218 = vmatprep.subr.mxu0 0.0
      %4219 = vmatpush1.msra.mxu0 0.0
      %4220 = vmatprep.subr.mxu0 0.0
      %4221 = vmatpush1.msra.mxu0 0.0
      %4222 = vmatprep.subr.mxu0 0.0
      %4223 = vmatpush1.msra.mxu0 0.0
      %4224 = vmatprep.subr.mxu0 0.0
      %4225 = vmatpush1.msra.mxu0 0.0
      %4226 = vmatprep.subr.mxu0 0.0
      %4227 = vmatpush1.msra.mxu0 0.0
      %4228 = vmatprep.subr.mxu0 0.0
      %4229 = vmatpush1.msra.mxu0 0.0
      %4230 = vmatprep.subr.mxu0 0.0
      %4231 = vmatpush1.msra.mxu0 0.0
      %4232 = vmatprep.subr.mxu0 0.0
      %4233 = vmatpush1.msra.mxu0 0.0
      %4234 = vmatprep.subr.mxu0 0.0
      %4235 = vmatpush1.msra.mxu0 0.0
      %4236 = vmatprep.subr.mxu0 0.0
      %4237 = vmatpush1.msra.mxu0 0.0
      %4238 = vmatprep.subr.mxu0 0.0
      %4239 = vmatpush1.msra.mxu0 0.0
      %4240 = vmatprep.subr.mxu0 0.0
      %4241 = vmatpush1.msra.mxu0 0.0
      %4242 = vmatprep.subr.mxu0 0.0
      %4243 = vmatpush1.msra.mxu0 0.0
      %4244 = vmatprep.subr.mxu0 0.0
      %4245 = vmatpush1.msra.mxu0 0.0
      %4246 = vmatprep.subr.mxu0 0.0
      %4247 = vmatpush1.msra.mxu0 0.0
      %4248 = vmatprep.subr.mxu0 0.0
      %4249 = vmatpush1.msra.mxu0 0.0
      %4250 = vmatprep.subr.mxu0 0.0
      %4251 = vmatpush1.msra.mxu0 0.0
      %4252 = vmatprep.subr.mxu0 0.0
      %4253 = vmatpush1.msra.mxu0 0.0
      %4254 = vmatprep.subr.mxu0 0.0
      %4255 = vmatpush1.msra.mxu0 0.0
      %4256 = vmatprep.subr.mxu0 0.0
      %4257 = vmatpush1.msra.mxu0 0.0
      %4258 = vmatprep.subr.mxu0 0.0
      %4259 = vmatpush1.msra.mxu0 0.0
      %4260 = vmatprep.subr.mxu0 0.0
      %4261 = vmatpush1.msra.mxu0 0.0
      %4262 = vmatprep.subr.mxu0 0.0
      %4263 = vmatpush1.msra.mxu0 0.0
      %4264 = vmatprep.subr.mxu0 0.0
      %4265 = vmatpush1.msra.mxu0 0.0
      %4266 = vmatprep.subr.mxu0 0.0
      %4267 = vmatpush1.msra.mxu0 0.0
      %4268 = vmatprep.mubr.f32.mxu0 0.0
      %4269 = vmatmul.mubr.f32.gmra.mrb[0].mxu0 %v4181
      %v4270 = vpop.f32.mrb[0].mxu0
      %v4271 = vadd.f32 0.0, %v4270
      %v4272 = vpop.f32.mrb[0].mxu0
      %4273 = vmatprep.mubr.f32.mxu0 0.0
      %4274 = vmatmul.mubr.f32.gmra.mrb[0].mxu0 %v4184
      %v4275 = vpop.f32.mrb[0].mxu0
      %v4276 = vadd.f32 0.0, %v4275
      %v4277 = vpop.f32.mrb[0].mxu0
      %4278 = vmatprep.mubr.f32.mxu0 0.0
      %4279 = vmatmul.mubr.f32.gmra.mrb[0].mxu0 %v4187
      %v4280 = vpop.f32.mrb[0].mxu0
      %v4281 = vadd.f32 0.0, %v4280
      %v4282 = vpop.f32.mrb[0].mxu0
      %4283 = vmatprep.mubr.f32.mxu0 0.0
      %4284 = vmatmul.mubr.f32.gmra.mrb[0].mxu0 %v4190
      %v4285 = vpop.f32.mrb[0].mxu0
      %v4286 = vadd.f32 0.0, %v4285
      %v4287 = vpop.f32.mrb[0].mxu0
      %4288 = vmatprep.mubr.f32.mxu0 0.0
      %4289 = vmatmul.mubr.f32.gmra.mrb[0].mxu0 %v4193
      %v4290 = vpop.f32.mrb[0].mxu0
      %v4291 = vadd.f32 0.0, %v4290
      %v4292 = vpop.f32.mrb[0].mxu0
      %4293 = vmatprep.mubr.f32.mxu0 0.0
      %4294 = vmatmul.mubr.f32.gmra.mrb[0].mxu0 %v4196
      %v4295 = vpop.f32.mrb[0].mxu0
      %v4296 = vadd.f32 0.0, %v4295
      %v4297 = vpop.f32.mrb[0].mxu0
      %4298 = vmatprep.mubr.f32.mxu0 0.0
      %4299 = vmatmul.mubr.f32.gmra.mrb[0].mxu0 %v4199
      %v4300 = vpop.f32.mrb[0].mxu0
      %v4301 = vadd.f32 0.0, %v4300
      %v4302 = vpop.f32.mrb[0].mxu0
      %4303 = vmatprep.mubr.f32.mxu0 0.0
      %4304 = vmatmul.mubr.f32.gmra.mrb[0].mxu0 %v4202
      %v4305 = vpop.f32.mrb[0].mxu0
      %v4306 = vadd.f32 0.0, %v4305
      %v4307 = vpop.f32.mrb[0].mxu0
      %4308 = vdwg.mxu0
      %v4309 = vadd.f32 %v4157, %v4271
      %v4310 = vadd.f32 %v4158, %v4276
      %v4311 = vadd.f32 %v4159, %v4281
      %v4312 = vadd.f32 %v4160, %v4286
      %v4313 = vadd.f32 %v4161, %v4291
      %v4314 = vadd.f32 %v4162, %v4296
      %v4315 = vadd.f32 %v4163, %v4301
      %v4316 = vadd.f32 %v4164, %v4306
      %s4317 = scalar_lea.vmem %s11, 640
      %v4318 = vld [vmem:[%s4317] sm:$0xff]
      %v4319 = vld [vmem:[%s4317 + $0x8] sm:$0xff]
      %v4320 = vld [vmem:[%s4317 + $0x10] sm:$0xff]
      %v4321 = vld [vmem:[%s4317 + $0x18] sm:$0xff]
      %v4322 = vld [vmem:[%s4317 + $0x20] sm:$0xff]
      %v4323 = vld [vmem:[%s4317 + $0x28] sm:$0xff]
      %v4324 = vld [vmem:[%s4317 + $0x30] sm:$0xff]
      %v4325 = vld [vmem:[%s4317 + $0x38] sm:$0xff]
      %4326 = vrot.lane.b32.xlu0 %v2809, 114
      %v4327 = vpop.permute.xlu0 %4326
      %4328 = vrot.lane.b32.xlu0 %v2814, 114
      %v4329 = vpop.permute.xlu0 %4328
      %v4333 = vsel %vm2842, %v4318, 0
      %v4336 = vsel %vm2842, %v4319, 0
      %v4339 = vsel %vm2842, %v4320, 0
      %v4342 = vsel %vm2842, %v4321, 0
      %v4345 = vsel %vm2842, %v4322, 0
      %v4348 = vsel %vm2842, %v4323, 0
      %v4351 = vsel %vm2842, %v4324, 0
      %v4354 = vsel %vm2842, %v4325, 0
      %4356 = vmatprep.subr.mxu0 0.0
      %4357 = vmatpush1.msra.mxu0 %v4327
      %4358 = vmatprep.subr.mxu0 0.0
      %4359 = vmatpush1.msra.mxu0 %v4329
      %4360 = vmatprep.subr.mxu0 0.0
      %4361 = vmatpush1.msra.mxu0 0.0
      %4362 = vmatprep.subr.mxu0 0.0
      %4363 = vmatpush1.msra.mxu0 0.0
      %4364 = vmatprep.subr.mxu0 0.0
      %4365 = vmatpush1.msra.mxu0 0.0
      %4366 = vmatprep.subr.mxu0 0.0
      %4367 = vmatpush1.msra.mxu0 0.0
      %4368 = vmatprep.subr.mxu0 0.0
      %4369 = vmatpush1.msra.mxu0 0.0
      %4370 = vmatprep.subr.mxu0 0.0
      %4371 = vmatpush1.msra.mxu0 0.0
      %4372 = vmatprep.subr.mxu0 0.0
      %4373 = vmatpush1.msra.mxu0 0.0
      %4374 = vmatprep.subr.mxu0 0.0
      %4375 = vmatpush1.msra.mxu0 0.0
      %4376 = vmatprep.subr.mxu0 0.0
      %4377 = vmatpush1.msra.mxu0 0.0
      %4378 = vmatprep.subr.mxu0 0.0
      %4379 = vmatpush1.msra.mxu0 0.0
      %4380 = vmatprep.subr.mxu0 0.0
      %4381 = vmatpush1.msra.mxu0 0.0
      %4382 = vmatprep.subr.mxu0 0.0
      %4383 = vmatpush1.msra.mxu0 0.0
      %4384 = vmatprep.subr.mxu0 0.0
      %4385 = vmatpush1.msra.mxu0 0.0
      %4386 = vmatprep.subr.mxu0 0.0
      %4387 = vmatpush1.msra.mxu0 0.0
      %4388 = vmatprep.subr.mxu0 0.0
      %4389 = vmatpush1.msra.mxu0 0.0
      %4390 = vmatprep.subr.mxu0 0.0
      %4391 = vmatpush1.msra.mxu0 0.0
      %4392 = vmatprep.subr.mxu0 0.0
      %4393 = vmatpush1.msra.mxu0 0.0
      %4394 = vmatprep.subr.mxu0 0.0
      %4395 = vmatpush1.msra.mxu0 0.0
      %4396 = vmatprep.subr.mxu0 0.0
      %4397 = vmatpush1.msra.mxu0 0.0
      %4398 = vmatprep.subr.mxu0 0.0
      %4399 = vmatpush1.msra.mxu0 0.0
      %4400 = vmatprep.subr.mxu0 0.0
      %4401 = vmatpush1.msra.mxu0 0.0
      %4402 = vmatprep.subr.mxu0 0.0
      %4403 = vmatpush1.msra.mxu0 0.0
      %4404 = vmatprep.subr.mxu0 0.0
      %4405 = vmatpush1.msra.mxu0 0.0
      %4406 = vmatprep.subr.mxu0 0.0
      %4407 = vmatpush1.msra.mxu0 0.0
      %4408 = vmatprep.subr.mxu0 0.0
      %4409 = vmatpush1.msra.mxu0 0.0
      %4410 = vmatprep.subr.mxu0 0.0
      %4411 = vmatpush1.msra.mxu0 0.0
      %4412 = vmatprep.subr.mxu0 0.0
      %4413 = vmatpush1.msra.mxu0 0.0
      %4414 = vmatprep.subr.mxu0 0.0
      %4415 = vmatpush1.msra.mxu0 0.0
      %4416 = vmatprep.subr.mxu0 0.0
      %4417 = vmatpush1.msra.mxu0 0.0
      %4418 = vmatprep.subr.mxu0 0.0
      %4419 = vmatpush1.msra.mxu0 0.0
      %4420 = vmatprep.mubr.f32.mxu0 0.0
      %4421 = vmatmul.mubr.f32.gmra.mrb[0].mxu0 %v4333
      %v4422 = vpop.f32.mrb[0].mxu0
      %v4423 = vadd.f32 0.0, %v4422
      %v4424 = vpop.f32.mrb[0].mxu0
      %4425 = vmatprep.mubr.f32.mxu0 0.0
      %4426 = vmatmul.mubr.f32.gmra.mrb[0].mxu0 %v4336
      %v4427 = vpop.f32.mrb[0].mxu0
      %v4428 = vadd.f32 0.0, %v4427
      %v4429 = vpop.f32.mrb[0].mxu0
      %4430 = vmatprep.mubr.f32.mxu0 0.0
      %4431 = vmatmul.mubr.f32.gmra.mrb[0].mxu0 %v4339
      %v4432 = vpop.f32.mrb[0].mxu0
      %v4433 = vadd.f32 0.0, %v4432
      %v4434 = vpop.f32.mrb[0].mxu0
      %4435 = vmatprep.mubr.f32.mxu0 0.0
      %4436 = vmatmul.mubr.f32.gmra.mrb[0].mxu0 %v4342
      %v4437 = vpop.f32.mrb[0].mxu0
      %v4438 = vadd.f32 0.0, %v4437
      %v4439 = vpop.f32.mrb[0].mxu0
      %4440 = vmatprep.mubr.f32.mxu0 0.0
      %4441 = vmatmul.mubr.f32.gmra.mrb[0].mxu0 %v4345
      %v4442 = vpop.f32.mrb[0].mxu0
      %v4443 = vadd.f32 0.0, %v4442
      %v4444 = vpop.f32.mrb[0].mxu0
      %4445 = vmatprep.mubr.f32.mxu0 0.0
      %4446 = vmatmul.mubr.f32.gmra.mrb[0].mxu0 %v4348
      %v4447 = vpop.f32.mrb[0].mxu0
      %v4448 = vadd.f32 0.0, %v4447
      %v4449 = vpop.f32.mrb[0].mxu0
      %4450 = vmatprep.mubr.f32.mxu0 0.0
      %4451 = vmatmul.mubr.f32.gmra.mrb[0].mxu0 %v4351
      %v4452 = vpop.f32.mrb[0].mxu0
      %v4453 = vadd.f32 0.0, %v4452
      %v4454 = vpop.f32.mrb[0].mxu0
      %4455 = vmatprep.mubr.f32.mxu0 0.0
      %4456 = vmatmul.mubr.f32.gmra.mrb[0].mxu0 %v4354
      %v4457 = vpop.f32.mrb[0].mxu0
      %v4458 = vadd.f32 0.0, %v4457
      %v4459 = vpop.f32.mrb[0].mxu0
      %4460 = vdwg.mxu0
      %v4461 = vadd.f32 %v4309, %v4423
      %v4462 = vadd.f32 %v4310, %v4428
      %v4463 = vadd.f32 %v4311, %v4433
      %v4464 = vadd.f32 %v4312, %v4438
      %v4465 = vadd.f32 %v4313, %v4443
      %v4466 = vadd.f32 %v4314, %v4448
      %v4467 = vadd.f32 %v4315, %v4453
      %v4468 = vadd.f32 %v4316, %v4458
      %s4469 = scalar_lea.vmem %s11, 704
      %v4470 = vld [vmem:[%s4469] sm:$0xff]
      %v4471 = vld [vmem:[%s4469 + $0x8] sm:$0xff]
      %v4472 = vld [vmem:[%s4469 + $0x10] sm:$0xff]
      %v4473 = vld [vmem:[%s4469 + $0x18] sm:$0xff]
      %v4474 = vld [vmem:[%s4469 + $0x20] sm:$0xff]
      %v4475 = vld [vmem:[%s4469 + $0x28] sm:$0xff]
      %v4476 = vld [vmem:[%s4469 + $0x30] sm:$0xff]
      %v4477 = vld [vmem:[%s4469 + $0x38] sm:$0xff]
      %4478 = vrot.lane.b32.xlu0 %v2809, 113
      %v4479 = vpop.permute.xlu0 %4478
      %4480 = vrot.lane.b32.xlu0 %v2814, 113
      %v4481 = vpop.permute.xlu0 %4480
      %v4485 = vsel %vm2842, %v4470, 0
      %v4488 = vsel %vm2842, %v4471, 0
      %v4491 = vsel %vm2842, %v4472, 0
      %v4494 = vsel %vm2842, %v4473, 0
      %v4497 = vsel %vm2842, %v4474, 0
      %v4500 = vsel %vm2842, %v4475, 0
      %v4503 = vsel %vm2842, %v4476, 0
      %v4506 = vsel %vm2842, %v4477, 0
      %4508 = vmatprep.subr.mxu0 0.0
      %4509 = vmatpush1.msra.mxu0 %v4479
      %4510 = vmatprep.subr.mxu0 0.0
      %4511 = vmatpush1.msra.mxu0 %v4481
      %4512 = vmatprep.subr.mxu0 0.0
      %4513 = vmatpush1.msra.mxu0 0.0
      %4514 = vmatprep.subr.mxu0 0.0
      %4515 = vmatpush1.msra.mxu0 0.0
      %4516 = vmatprep.subr.mxu0 0.0
      %4517 = vmatpush1.msra.mxu0 0.0
      %4518 = vmatprep.subr.mxu0 0.0
      %4519 = vmatpush1.msra.mxu0 0.0
      %4520 = vmatprep.subr.mxu0 0.0
      %4521 = vmatpush1.msra.mxu0 0.0
      %4522 = vmatprep.subr.mxu0 0.0
      %4523 = vmatpush1.msra.mxu0 0.0
      %4524 = vmatprep.subr.mxu0 0.0
      %4525 = vmatpush1.msra.mxu0 0.0
      %4526 = vmatprep.subr.mxu0 0.0
      %4527 = vmatpush1.msra.mxu0 0.0
      %4528 = vmatprep.subr.mxu0 0.0
      %4529 = vmatpush1.msra.mxu0 0.0
      %4530 = vmatprep.subr.mxu0 0.0
      %4531 = vmatpush1.msra.mxu0 0.0
      %4532 = vmatprep.subr.mxu0 0.0
      %4533 = vmatpush1.msra.mxu0 0.0
      %4534 = vmatprep.subr.mxu0 0.0
      %4535 = vmatpush1.msra.mxu0 0.0
      %4536 = vmatprep.subr.mxu0 0.0
      %4537 = vmatpush1.msra.mxu0 0.0
      %4538 = vmatprep.subr.mxu0 0.0
      %4539 = vmatpush1.msra.mxu0 0.0
      %4540 = vmatprep.subr.mxu0 0.0
      %4541 = vmatpush1.msra.mxu0 0.0
      %4542 = vmatprep.subr.mxu0 0.0
      %4543 = vmatpush1.msra.mxu0 0.0
      %4544 = vmatprep.subr.mxu0 0.0
      %4545 = vmatpush1.msra.mxu0 0.0
      %4546 = vmatprep.subr.mxu0 0.0
      %4547 = vmatpush1.msra.mxu0 0.0
      %4548 = vmatprep.subr.mxu0 0.0
      %4549 = vmatpush1.msra.mxu0 0.0
      %4550 = vmatprep.subr.mxu0 0.0
      %4551 = vmatpush1.msra.mxu0 0.0
      %4552 = vmatprep.subr.mxu0 0.0
      %4553 = vmatpush1.msra.mxu0 0.0
      %4554 = vmatprep.subr.mxu0 0.0
      %4555 = vmatpush1.msra.mxu0 0.0
      %4556 = vmatprep.subr.mxu0 0.0
      %4557 = vmatpush1.msra.mxu0 0.0
      %4558 = vmatprep.subr.mxu0 0.0
      %4559 = vmatpush1.msra.mxu0 0.0
      %4560 = vmatprep.subr.mxu0 0.0
      %4561 = vmatpush1.msra.mxu0 0.0
      %4562 = vmatprep.subr.mxu0 0.0
      %4563 = vmatpush1.msra.mxu0 0.0
      %4564 = vmatprep.subr.mxu0 0.0
      %4565 = vmatpush1.msra.mxu0 0.0
      %4566 = vmatprep.subr.mxu0 0.0
      %4567 = vmatpush1.msra.mxu0 0.0
      %4568 = vmatprep.subr.mxu0 0.0
      %4569 = vmatpush1.msra.mxu0 0.0
      %4570 = vmatprep.subr.mxu0 0.0
      %4571 = vmatpush1.msra.mxu0 0.0
      %4572 = vmatprep.mubr.f32.mxu0 0.0
      %4573 = vmatmul.mubr.f32.gmra.mrb[0].mxu0 %v4485
      %v4574 = vpop.f32.mrb[0].mxu0
      %v4575 = vadd.f32 0.0, %v4574
      %v4576 = vpop.f32.mrb[0].mxu0
      %4577 = vmatprep.mubr.f32.mxu0 0.0
      %4578 = vmatmul.mubr.f32.gmra.mrb[0].mxu0 %v4488
      %v4579 = vpop.f32.mrb[0].mxu0
      %v4580 = vadd.f32 0.0, %v4579
      %v4581 = vpop.f32.mrb[0].mxu0
      %4582 = vmatprep.mubr.f32.mxu0 0.0
      %4583 = vmatmul.mubr.f32.gmra.mrb[0].mxu0 %v4491
      %v4584 = vpop.f32.mrb[0].mxu0
      %v4585 = vadd.f32 0.0, %v4584
      %v4586 = vpop.f32.mrb[0].mxu0
      %4587 = vmatprep.mubr.f32.mxu0 0.0
      %4588 = vmatmul.mubr.f32.gmra.mrb[0].mxu0 %v4494
      %v4589 = vpop.f32.mrb[0].mxu0
      %v4590 = vadd.f32 0.0, %v4589
      %v4591 = vpop.f32.mrb[0].mxu0
      %4592 = vmatprep.mubr.f32.mxu0 0.0
      %4593 = vmatmul.mubr.f32.gmra.mrb[0].mxu0 %v4497
      %v4594 = vpop.f32.mrb[0].mxu0
      %v4595 = vadd.f32 0.0, %v4594
      %v4596 = vpop.f32.mrb[0].mxu0
      %4597 = vmatprep.mubr.f32.mxu0 0.0
      %4598 = vmatmul.mubr.f32.gmra.mrb[0].mxu0 %v4500
      %v4599 = vpop.f32.mrb[0].mxu0
      %v4600 = vadd.f32 0.0, %v4599
      %v4601 = vpop.f32.mrb[0].mxu0
      %4602 = vmatprep.mubr.f32.mxu0 0.0
      %4603 = vmatmul.mubr.f32.gmra.mrb[0].mxu0 %v4503
      %v4604 = vpop.f32.mrb[0].mxu0
      %v4605 = vadd.f32 0.0, %v4604
      %v4606 = vpop.f32.mrb[0].mxu0
      %4607 = vmatprep.mubr.f32.mxu0 0.0
      %4608 = vmatmul.mubr.f32.gmra.mrb[0].mxu0 %v4506
      %v4609 = vpop.f32.mrb[0].mxu0
      %v4610 = vadd.f32 0.0, %v4609
      %v4611 = vpop.f32.mrb[0].mxu0
      %4612 = vdwg.mxu0
      %v4613 = vadd.f32 %v4461, %v4575
      %v4614 = vadd.f32 %v4462, %v4580
      %v4615 = vadd.f32 %v4463, %v4585
      %v4616 = vadd.f32 %v4464, %v4590
      %v4617 = vadd.f32 %v4465, %v4595
      %v4618 = vadd.f32 %v4466, %v4600
      %v4619 = vadd.f32 %v4467, %v4605
      %v4620 = vadd.f32 %v4468, %v4610
      %s4621 = scalar_lea.vmem %s11, 768
      %v4622 = vld [vmem:[%s4621] sm:$0xff]
      %v4623 = vld [vmem:[%s4621 + $0x8] sm:$0xff]
      %v4624 = vld [vmem:[%s4621 + $0x10] sm:$0xff]
      %v4625 = vld [vmem:[%s4621 + $0x18] sm:$0xff]
      %v4626 = vld [vmem:[%s4621 + $0x20] sm:$0xff]
      %v4627 = vld [vmem:[%s4621 + $0x28] sm:$0xff]
      %v4628 = vld [vmem:[%s4621 + $0x30] sm:$0xff]
      %v4629 = vld [vmem:[%s4621 + $0x38] sm:$0xff]
      %4630 = vrot.lane.b32.xlu0 %v2809, 112
      %v4631 = vpop.permute.xlu0 %4630
      %4632 = vrot.lane.b32.xlu0 %v2814, 112
      %v4633 = vpop.permute.xlu0 %4632
      %v4637 = vsel %vm2842, %v4622, 0
      %v4640 = vsel %vm2842, %v4623, 0
      %v4643 = vsel %vm2842, %v4624, 0
      %v4646 = vsel %vm2842, %v4625, 0
      %v4649 = vsel %vm2842, %v4626, 0
      %v4652 = vsel %vm2842, %v4627, 0
      %v4655 = vsel %vm2842, %v4628, 0
      %v4658 = vsel %vm2842, %v4629, 0
      %4660 = vmatprep.subr.mxu0 0.0
      %4661 = vmatpush1.msra.mxu0 %v4631
      %4662 = vmatprep.subr.mxu0 0.0
      %4663 = vmatpush1.msra.mxu0 %v4633
      %4664 = vmatprep.subr.mxu0 0.0
      %4665 = vmatpush1.msra.mxu0 0.0
      %4666 = vmatprep.subr.mxu0 0.0
      %4667 = vmatpush1.msra.mxu0 0.0
      %4668 = vmatprep.subr.mxu0 0.0
      %4669 = vmatpush1.msra.mxu0 0.0
      %4670 = vmatprep.subr.mxu0 0.0
      %4671 = vmatpush1.msra.mxu0 0.0
      %4672 = vmatprep.subr.mxu0 0.0
      %4673 = vmatpush1.msra.mxu0 0.0
      %4674 = vmatprep.subr.mxu0 0.0
      %4675 = vmatpush1.msra.mxu0 0.0
      %4676 = vmatprep.subr.mxu0 0.0
      %4677 = vmatpush1.msra.mxu0 0.0
      %4678 = vmatprep.subr.mxu0 0.0
      %4679 = vmatpush1.msra.mxu0 0.0
      %4680 = vmatprep.subr.mxu0 0.0
      %4681 = vmatpush1.msra.mxu0 0.0
      %4682 = vmatprep.subr.mxu0 0.0
      %4683 = vmatpush1.msra.mxu0 0.0
      %4684 = vmatprep.subr.mxu0 0.0
      %4685 = vmatpush1.msra.mxu0 0.0
      %4686 = vmatprep.subr.mxu0 0.0
      %4687 = vmatpush1.msra.mxu0 0.0
      %4688 = vmatprep.subr.mxu0 0.0
      %4689 = vmatpush1.msra.mxu0 0.0
      %4690 = vmatprep.subr.mxu0 0.0
      %4691 = vmatpush1.msra.mxu0 0.0
      %4692 = vmatprep.subr.mxu0 0.0
      %4693 = vmatpush1.msra.mxu0 0.0
      %4694 = vmatprep.subr.mxu0 0.0
      %4695 = vmatpush1.msra.mxu0 0.0
      %4696 = vmatprep.subr.mxu0 0.0
      %4697 = vmatpush1.msra.mxu0 0.0
      %4698 = vmatprep.subr.mxu0 0.0
      %4699 = vmatpush1.msra.mxu0 0.0
      %4700 = vmatprep.subr.mxu0 0.0
      %4701 = vmatpush1.msra.mxu0 0.0
      %4702 = vmatprep.subr.mxu0 0.0
      %4703 = vmatpush1.msra.mxu0 0.0
      %4704 = vmatprep.subr.mxu0 0.0
      %4705 = vmatpush1.msra.mxu0 0.0
      %4706 = vmatprep.subr.mxu0 0.0
      %4707 = vmatpush1.msra.mxu0 0.0
      %4708 = vmatprep.subr.mxu0 0.0
      %4709 = vmatpush1.msra.mxu0 0.0
      %4710 = vmatprep.subr.mxu0 0.0
      %4711 = vmatpush1.msra.mxu0 0.0
      %4712 = vmatprep.subr.mxu0 0.0
      %4713 = vmatpush1.msra.mxu0 0.0
      %4714 = vmatprep.subr.mxu0 0.0
      %4715 = vmatpush1.msra.mxu0 0.0
      %4716 = vmatprep.subr.mxu0 0.0
      %4717 = vmatpush1.msra.mxu0 0.0
      %4718 = vmatprep.subr.mxu0 0.0
      %4719 = vmatpush1.msra.mxu0 0.0
      %4720 = vmatprep.subr.mxu0 0.0
      %4721 = vmatpush1.msra.mxu0 0.0
      %4722 = vmatprep.subr.mxu0 0.0
      %4723 = vmatpush1.msra.mxu0 0.0
      %4724 = vmatprep.mubr.f32.mxu0 0.0
      %4725 = vmatmul.mubr.f32.gmra.mrb[0].mxu0 %v4637
      %v4726 = vpop.f32.mrb[0].mxu0
      %v4727 = vadd.f32 0.0, %v4726
      %v4728 = vpop.f32.mrb[0].mxu0
      %4729 = vmatprep.mubr.f32.mxu0 0.0
      %4730 = vmatmul.mubr.f32.gmra.mrb[0].mxu0 %v4640
      %v4731 = vpop.f32.mrb[0].mxu0
      %v4732 = vadd.f32 0.0, %v4731
      %v4733 = vpop.f32.mrb[0].mxu0
      %4734 = vmatprep.mubr.f32.mxu0 0.0
      %4735 = vmatmul.mubr.f32.gmra.mrb[0].mxu0 %v4643
      %v4736 = vpop.f32.mrb[0].mxu0
      %v4737 = vadd.f32 0.0, %v4736
      %v4738 = vpop.f32.mrb[0].mxu0
      %4739 = vmatprep.mubr.f32.mxu0 0.0
      %4740 = vmatmul.mubr.f32.gmra.mrb[0].mxu0 %v4646
      %v4741 = vpop.f32.mrb[0].mxu0
      %v4742 = vadd.f32 0.0, %v4741
      %v4743 = vpop.f32.mrb[0].mxu0
      %4744 = vmatprep.mubr.f32.mxu0 0.0
      %4745 = vmatmul.mubr.f32.gmra.mrb[0].mxu0 %v4649
      %v4746 = vpop.f32.mrb[0].mxu0
      %v4747 = vadd.f32 0.0, %v4746
      %v4748 = vpop.f32.mrb[0].mxu0
      %4749 = vmatprep.mubr.f32.mxu0 0.0
      %4750 = vmatmul.mubr.f32.gmra.mrb[0].mxu0 %v4652
      %v4751 = vpop.f32.mrb[0].mxu0
      %v4752 = vadd.f32 0.0, %v4751
      %v4753 = vpop.f32.mrb[0].mxu0
      %4754 = vmatprep.mubr.f32.mxu0 0.0
      %4755 = vmatmul.mubr.f32.gmra.mrb[0].mxu0 %v4655
      %v4756 = vpop.f32.mrb[0].mxu0
      %v4757 = vadd.f32 0.0, %v4756
      %v4758 = vpop.f32.mrb[0].mxu0
      %4759 = vmatprep.mubr.f32.mxu0 0.0
      %4760 = vmatmul.mubr.f32.gmra.mrb[0].mxu0 %v4658
      %v4761 = vpop.f32.mrb[0].mxu0
      %v4762 = vadd.f32 0.0, %v4761
      %v4763 = vpop.f32.mrb[0].mxu0
      %4764 = vdwg.mxu0
      %v4765 = vadd.f32 %v4613, %v4727
      %v4766 = vadd.f32 %v4614, %v4732
      %v4767 = vadd.f32 %v4615, %v4737
      %v4768 = vadd.f32 %v4616, %v4742
      %v4769 = vadd.f32 %v4617, %v4747
      %v4770 = vadd.f32 %v4618, %v4752
      %v4771 = vadd.f32 %v4619, %v4757
      %v4772 = vadd.f32 %v4620, %v4762
      %s4773 = scalar_lea.vmem %s11, 832
      %v4774 = vld [vmem:[%s4773] sm:$0xff]
      %v4775 = vld [vmem:[%s4773 + $0x8] sm:$0xff]
      %v4776 = vld [vmem:[%s4773 + $0x10] sm:$0xff]
      %v4777 = vld [vmem:[%s4773 + $0x18] sm:$0xff]
      %v4778 = vld [vmem:[%s4773 + $0x20] sm:$0xff]
      %v4779 = vld [vmem:[%s4773 + $0x28] sm:$0xff]
      %v4780 = vld [vmem:[%s4773 + $0x30] sm:$0xff]
      %v4781 = vld [vmem:[%s4773 + $0x38] sm:$0xff]
      %4782 = vrot.lane.b32.xlu0 %v2809, 111
      %v4783 = vpop.permute.xlu0 %4782
      %4784 = vrot.lane.b32.xlu0 %v2814, 111
      %v4785 = vpop.permute.xlu0 %4784
      %v4789 = vsel %vm2842, %v4774, 0
      %v4792 = vsel %vm2842, %v4775, 0
      %v4795 = vsel %vm2842, %v4776, 0
      %v4798 = vsel %vm2842, %v4777, 0
      %v4801 = vsel %vm2842, %v4778, 0
      %v4804 = vsel %vm2842, %v4779, 0
      %v4807 = vsel %vm2842, %v4780, 0
      %v4810 = vsel %vm2842, %v4781, 0
      %4812 = vmatprep.subr.mxu0 0.0
      %4813 = vmatpush1.msra.mxu0 %v4783
      %4814 = vmatprep.subr.mxu0 0.0
      %4815 = vmatpush1.msra.mxu0 %v4785
      %4816 = vmatprep.subr.mxu0 0.0
      %4817 = vmatpush1.msra.mxu0 0.0
      %4818 = vmatprep.subr.mxu0 0.0
      %4819 = vmatpush1.msra.mxu0 0.0
      %4820 = vmatprep.subr.mxu0 0.0
      %4821 = vmatpush1.msra.mxu0 0.0
      %4822 = vmatprep.subr.mxu0 0.0
      %4823 = vmatpush1.msra.mxu0 0.0
      %4824 = vmatprep.subr.mxu0 0.0
      %4825 = vmatpush1.msra.mxu0 0.0
      %4826 = vmatprep.subr.mxu0 0.0
      %4827 = vmatpush1.msra.mxu0 0.0
      %4828 = vmatprep.subr.mxu0 0.0
      %4829 = vmatpush1.msra.mxu0 0.0
      %4830 = vmatprep.subr.mxu0 0.0
      %4831 = vmatpush1.msra.mxu0 0.0
      %4832 = vmatprep.subr.mxu0 0.0
      %4833 = vmatpush1.msra.mxu0 0.0
      %4834 = vmatprep.subr.mxu0 0.0
      %4835 = vmatpush1.msra.mxu0 0.0
      %4836 = vmatprep.subr.mxu0 0.0
      %4837 = vmatpush1.msra.mxu0 0.0
      %4838 = vmatprep.subr.mxu0 0.0
      %4839 = vmatpush1.msra.mxu0 0.0
      %4840 = vmatprep.subr.mxu0 0.0
      %4841 = vmatpush1.msra.mxu0 0.0
      %4842 = vmatprep.subr.mxu0 0.0
      %4843 = vmatpush1.msra.mxu0 0.0
      %4844 = vmatprep.subr.mxu0 0.0
      %4845 = vmatpush1.msra.mxu0 0.0
      %4846 = vmatprep.subr.mxu0 0.0
      %4847 = vmatpush1.msra.mxu0 0.0
      %4848 = vmatprep.subr.mxu0 0.0
      %4849 = vmatpush1.msra.mxu0 0.0
      %4850 = vmatprep.subr.mxu0 0.0
      %4851 = vmatpush1.msra.mxu0 0.0
      %4852 = vmatprep.subr.mxu0 0.0
      %4853 = vmatpush1.msra.mxu0 0.0
      %4854 = vmatprep.subr.mxu0 0.0
      %4855 = vmatpush1.msra.mxu0 0.0
      %4856 = vmatprep.subr.mxu0 0.0
      %4857 = vmatpush1.msra.mxu0 0.0
      %4858 = vmatprep.subr.mxu0 0.0
      %4859 = vmatpush1.msra.mxu0 0.0
      %4860 = vmatprep.subr.mxu0 0.0
      %4861 = vmatpush1.msra.mxu0 0.0
      %4862 = vmatprep.subr.mxu0 0.0
      %4863 = vmatpush1.msra.mxu0 0.0
      %4864 = vmatprep.subr.mxu0 0.0
      %4865 = vmatpush1.msra.mxu0 0.0
      %4866 = vmatprep.subr.mxu0 0.0
      %4867 = vmatpush1.msra.mxu0 0.0
      %4868 = vmatprep.subr.mxu0 0.0
      %4869 = vmatpush1.msra.mxu0 0.0
      %4870 = vmatprep.subr.mxu0 0.0
      %4871 = vmatpush1.msra.mxu0 0.0
      %4872 = vmatprep.subr.mxu0 0.0
      %4873 = vmatpush1.msra.mxu0 0.0
      %4874 = vmatprep.subr.mxu0 0.0
      %4875 = vmatpush1.msra.mxu0 0.0
      %4876 = vmatprep.mubr.f32.mxu0 0.0
      %4877 = vmatmul.mubr.f32.gmra.mrb[0].mxu0 %v4789
      %v4878 = vpop.f32.mrb[0].mxu0
      %v4879 = vadd.f32 0.0, %v4878
      %v4880 = vpop.f32.mrb[0].mxu0
      %4881 = vmatprep.mubr.f32.mxu0 0.0
      %4882 = vmatmul.mubr.f32.gmra.mrb[0].mxu0 %v4792
      %v4883 = vpop.f32.mrb[0].mxu0
      %v4884 = vadd.f32 0.0, %v4883
      %v4885 = vpop.f32.mrb[0].mxu0
      %4886 = vmatprep.mubr.f32.mxu0 0.0
      %4887 = vmatmul.mubr.f32.gmra.mrb[0].mxu0 %v4795
      %v4888 = vpop.f32.mrb[0].mxu0
      %v4889 = vadd.f32 0.0, %v4888
      %v4890 = vpop.f32.mrb[0].mxu0
      %4891 = vmatprep.mubr.f32.mxu0 0.0
      %4892 = vmatmul.mubr.f32.gmra.mrb[0].mxu0 %v4798
      %v4893 = vpop.f32.mrb[0].mxu0
      %v4894 = vadd.f32 0.0, %v4893
      %v4895 = vpop.f32.mrb[0].mxu0
      %4896 = vmatprep.mubr.f32.mxu0 0.0
      %4897 = vmatmul.mubr.f32.gmra.mrb[0].mxu0 %v4801
      %v4898 = vpop.f32.mrb[0].mxu0
      %v4899 = vadd.f32 0.0, %v4898
      %v4900 = vpop.f32.mrb[0].mxu0
      %4901 = vmatprep.mubr.f32.mxu0 0.0
      %4902 = vmatmul.mubr.f32.gmra.mrb[0].mxu0 %v4804
      %v4903 = vpop.f32.mrb[0].mxu0
      %v4904 = vadd.f32 0.0, %v4903
      %v4905 = vpop.f32.mrb[0].mxu0
      %4906 = vmatprep.mubr.f32.mxu0 0.0
      %4907 = vmatmul.mubr.f32.gmra.mrb[0].mxu0 %v4807
      %v4908 = vpop.f32.mrb[0].mxu0
      %v4909 = vadd.f32 0.0, %v4908
      %v4910 = vpop.f32.mrb[0].mxu0
      %4911 = vmatprep.mubr.f32.mxu0 0.0
      %4912 = vmatmul.mubr.f32.gmra.mrb[0].mxu0 %v4810
      %v4913 = vpop.f32.mrb[0].mxu0
      %v4914 = vadd.f32 0.0, %v4913
      %v4915 = vpop.f32.mrb[0].mxu0
      %4916 = vdwg.mxu0
      %v4917 = vadd.f32 %v4765, %v4879
      %v4918 = vadd.f32 %v4766, %v4884
      %v4919 = vadd.f32 %v4767, %v4889
      %v4920 = vadd.f32 %v4768, %v4894
      %v4921 = vadd.f32 %v4769, %v4899
      %v4922 = vadd.f32 %v4770, %v4904
      %v4923 = vadd.f32 %v4771, %v4909
      %v4924 = vadd.f32 %v4772, %v4914
      %s4925 = scalar_lea.vmem %s11, 896
      %v4926 = vld [vmem:[%s4925] sm:$0xff]
      %v4927 = vld [vmem:[%s4925 + $0x8] sm:$0xff]
      %v4928 = vld [vmem:[%s4925 + $0x10] sm:$0xff]
      %v4929 = vld [vmem:[%s4925 + $0x18] sm:$0xff]
      %v4930 = vld [vmem:[%s4925 + $0x20] sm:$0xff]
      %v4931 = vld [vmem:[%s4925 + $0x28] sm:$0xff]
      %v4932 = vld [vmem:[%s4925 + $0x30] sm:$0xff]
      %v4933 = vld [vmem:[%s4925 + $0x38] sm:$0xff]
      %4934 = vrot.lane.b32.xlu0 %v2809, 110
      %v4935 = vpop.permute.xlu0 %4934
      %4936 = vrot.lane.b32.xlu0 %v2814, 110
      %v4937 = vpop.permute.xlu0 %4936
      %v4941 = vsel %vm2842, %v4926, 0
      %v4944 = vsel %vm2842, %v4927, 0
      %v4947 = vsel %vm2842, %v4928, 0
      %v4950 = vsel %vm2842, %v4929, 0
      %v4953 = vsel %vm2842, %v4930, 0
      %v4956 = vsel %vm2842, %v4931, 0
      %v4959 = vsel %vm2842, %v4932, 0
      %v4962 = vsel %vm2842, %v4933, 0
      %4964 = vmatprep.subr.mxu0 0.0
      %4965 = vmatpush1.msra.mxu0 %v4935
      %4966 = vmatprep.subr.mxu0 0.0
      %4967 = vmatpush1.msra.mxu0 %v4937
      %4968 = vmatprep.subr.mxu0 0.0
      %4969 = vmatpush1.msra.mxu0 0.0
      %4970 = vmatprep.subr.mxu0 0.0
      %4971 = vmatpush1.msra.mxu0 0.0
      %4972 = vmatprep.subr.mxu0 0.0
      %4973 = vmatpush1.msra.mxu0 0.0
      %4974 = vmatprep.subr.mxu0 0.0
      %4975 = vmatpush1.msra.mxu0 0.0
      %4976 = vmatprep.subr.mxu0 0.0
      %4977 = vmatpush1.msra.mxu0 0.0
      %4978 = vmatprep.subr.mxu0 0.0
      %4979 = vmatpush1.msra.mxu0 0.0
      %4980 = vmatprep.subr.mxu0 0.0
      %4981 = vmatpush1.msra.mxu0 0.0
      %4982 = vmatprep.subr.mxu0 0.0
      %4983 = vmatpush1.msra.mxu0 0.0
      %4984 = vmatprep.subr.mxu0 0.0
      %4985 = vmatpush1.msra.mxu0 0.0
      %4986 = vmatprep.subr.mxu0 0.0
      %4987 = vmatpush1.msra.mxu0 0.0
      %4988 = vmatprep.subr.mxu0 0.0
      %4989 = vmatpush1.msra.mxu0 0.0
      %4990 = vmatprep.subr.mxu0 0.0
      %4991 = vmatpush1.msra.mxu0 0.0
      %4992 = vmatprep.subr.mxu0 0.0
      %4993 = vmatpush1.msra.mxu0 0.0
      %4994 = vmatprep.subr.mxu0 0.0
      %4995 = vmatpush1.msra.mxu0 0.0
      %4996 = vmatprep.subr.mxu0 0.0
      %4997 = vmatpush1.msra.mxu0 0.0
      %4998 = vmatprep.subr.mxu0 0.0
      %4999 = vmatpush1.msra.mxu0 0.0
      %5000 = vmatprep.subr.mxu0 0.0
      %5001 = vmatpush1.msra.mxu0 0.0
      %5002 = vmatprep.subr.mxu0 0.0
      %5003 = vmatpush1.msra.mxu0 0.0
      %5004 = vmatprep.subr.mxu0 0.0
      %5005 = vmatpush1.msra.mxu0 0.0
      %5006 = vmatprep.subr.mxu0 0.0
      %5007 = vmatpush1.msra.mxu0 0.0
      %5008 = vmatprep.subr.mxu0 0.0
      %5009 = vmatpush1.msra.mxu0 0.0
      %5010 = vmatprep.subr.mxu0 0.0
      %5011 = vmatpush1.msra.mxu0 0.0
      %5012 = vmatprep.subr.mxu0 0.0
      %5013 = vmatpush1.msra.mxu0 0.0
      %5014 = vmatprep.subr.mxu0 0.0
      %5015 = vmatpush1.msra.mxu0 0.0
      %5016 = vmatprep.subr.mxu0 0.0
      %5017 = vmatpush1.msra.mxu0 0.0
      %5018 = vmatprep.subr.mxu0 0.0
      %5019 = vmatpush1.msra.mxu0 0.0
      %5020 = vmatprep.subr.mxu0 0.0
      %5021 = vmatpush1.msra.mxu0 0.0
      %5022 = vmatprep.subr.mxu0 0.0
      %5023 = vmatpush1.msra.mxu0 0.0
      %5024 = vmatprep.subr.mxu0 0.0
      %5025 = vmatpush1.msra.mxu0 0.0
      %5026 = vmatprep.subr.mxu0 0.0
      %5027 = vmatpush1.msra.mxu0 0.0
      %5028 = vmatprep.mubr.f32.mxu0 0.0
      %5029 = vmatmul.mubr.f32.gmra.mrb[0].mxu0 %v4941
      %v5030 = vpop.f32.mrb[0].mxu0
      %v5031 = vadd.f32 0.0, %v5030
      %v5032 = vpop.f32.mrb[0].mxu0
      %5033 = vmatprep.mubr.f32.mxu0 0.0
      %5034 = vmatmul.mubr.f32.gmra.mrb[0].mxu0 %v4944
      %v5035 = vpop.f32.mrb[0].mxu0
      %v5036 = vadd.f32 0.0, %v5035
      %v5037 = vpop.f32.mrb[0].mxu0
      %5038 = vmatprep.mubr.f32.mxu0 0.0
      %5039 = vmatmul.mubr.f32.gmra.mrb[0].mxu0 %v4947
      %v5040 = vpop.f32.mrb[0].mxu0
      %v5041 = vadd.f32 0.0, %v5040
      %v5042 = vpop.f32.mrb[0].mxu0
      %5043 = vmatprep.mubr.f32.mxu0 0.0
      %5044 = vmatmul.mubr.f32.gmra.mrb[0].mxu0 %v4950
      %v5045 = vpop.f32.mrb[0].mxu0
      %v5046 = vadd.f32 0.0, %v5045
      %v5047 = vpop.f32.mrb[0].mxu0
      %5048 = vmatprep.mubr.f32.mxu0 0.0
      %5049 = vmatmul.mubr.f32.gmra.mrb[0].mxu0 %v4953
      %v5050 = vpop.f32.mrb[0].mxu0
      %v5051 = vadd.f32 0.0, %v5050
      %v5052 = vpop.f32.mrb[0].mxu0
      %5053 = vmatprep.mubr.f32.mxu0 0.0
      %5054 = vmatmul.mubr.f32.gmra.mrb[0].mxu0 %v4956
      %v5055 = vpop.f32.mrb[0].mxu0
      %v5056 = vadd.f32 0.0, %v5055
      %v5057 = vpop.f32.mrb[0].mxu0
      %5058 = vmatprep.mubr.f32.mxu0 0.0
      %5059 = vmatmul.mubr.f32.gmra.mrb[0].mxu0 %v4959
      %v5060 = vpop.f32.mrb[0].mxu0
      %v5061 = vadd.f32 0.0, %v5060
      %v5062 = vpop.f32.mrb[0].mxu0
      %5063 = vmatprep.mubr.f32.mxu0 0.0
      %5064 = vmatmul.mubr.f32.gmra.mrb[0].mxu0 %v4962
      %v5065 = vpop.f32.mrb[0].mxu0
      %v5066 = vadd.f32 0.0, %v5065
      %v5067 = vpop.f32.mrb[0].mxu0
      %5068 = vdwg.mxu0
      %v5069 = vadd.f32 %v4917, %v5031
      %v5070 = vadd.f32 %v4918, %v5036
      %v5071 = vadd.f32 %v4919, %v5041
      %v5072 = vadd.f32 %v4920, %v5046
      %v5073 = vadd.f32 %v4921, %v5051
      %v5074 = vadd.f32 %v4922, %v5056
      %v5075 = vadd.f32 %v4923, %v5061
      %v5076 = vadd.f32 %v4924, %v5066
      %s5077 = scalar_lea.vmem %s11, 960
      %v5078 = vld [vmem:[%s5077] sm:$0xff]
      %v5079 = vld [vmem:[%s5077 + $0x8] sm:$0xff]
      %v5080 = vld [vmem:[%s5077 + $0x10] sm:$0xff]
      %v5081 = vld [vmem:[%s5077 + $0x18] sm:$0xff]
      %v5082 = vld [vmem:[%s5077 + $0x20] sm:$0xff]
      %v5083 = vld [vmem:[%s5077 + $0x28] sm:$0xff]
      %v5084 = vld [vmem:[%s5077 + $0x30] sm:$0xff]
      %v5085 = vld [vmem:[%s5077 + $0x38] sm:$0xff]
      %5086 = vrot.lane.b32.xlu0 %v2809, 107
      %v5087 = vpop.permute.xlu0 %5086
      %5088 = vrot.lane.b32.xlu0 %v2814, 107
      %v5089 = vpop.permute.xlu0 %5088
      %v5093 = vsel %vm2842, %v5078, 0
      %v5096 = vsel %vm2842, %v5079, 0
      %v5099 = vsel %vm2842, %v5080, 0
      %v5102 = vsel %vm2842, %v5081, 0
      %v5105 = vsel %vm2842, %v5082, 0
      %v5108 = vsel %vm2842, %v5083, 0
      %v5111 = vsel %vm2842, %v5084, 0
      %v5114 = vsel %vm2842, %v5085, 0
      %5116 = vmatprep.subr.mxu0 0.0
      %5117 = vmatpush1.msra.mxu0 %v5087
      %5118 = vmatprep.subr.mxu0 0.0
      %5119 = vmatpush1.msra.mxu0 %v5089
      %5120 = vmatprep.subr.mxu0 0.0
      %5121 = vmatpush1.msra.mxu0 0.0
      %5122 = vmatprep.subr.mxu0 0.0
      %5123 = vmatpush1.msra.mxu0 0.0
      %5124 = vmatprep.subr.mxu0 0.0
      %5125 = vmatpush1.msra.mxu0 0.0
      %5126 = vmatprep.subr.mxu0 0.0
      %5127 = vmatpush1.msra.mxu0 0.0
      %5128 = vmatprep.subr.mxu0 0.0
      %5129 = vmatpush1.msra.mxu0 0.0
      %5130 = vmatprep.subr.mxu0 0.0
      %5131 = vmatpush1.msra.mxu0 0.0
      %5132 = vmatprep.subr.mxu0 0.0
      %5133 = vmatpush1.msra.mxu0 0.0
      %5134 = vmatprep.subr.mxu0 0.0
      %5135 = vmatpush1.msra.mxu0 0.0
      %5136 = vmatprep.subr.mxu0 0.0
      %5137 = vmatpush1.msra.mxu0 0.0
      %5138 = vmatprep.subr.mxu0 0.0
      %5139 = vmatpush1.msra.mxu0 0.0
      %5140 = vmatprep.subr.mxu0 0.0
      %5141 = vmatpush1.msra.mxu0 0.0
      %5142 = vmatprep.subr.mxu0 0.0
      %5143 = vmatpush1.msra.mxu0 0.0
      %5144 = vmatprep.subr.mxu0 0.0
      %5145 = vmatpush1.msra.mxu0 0.0
      %5146 = vmatprep.subr.mxu0 0.0
      %5147 = vmatpush1.msra.mxu0 0.0
      %5148 = vmatprep.subr.mxu0 0.0
      %5149 = vmatpush1.msra.mxu0 0.0
      %5150 = vmatprep.subr.mxu0 0.0
      %5151 = vmatpush1.msra.mxu0 0.0
      %5152 = vmatprep.subr.mxu0 0.0
      %5153 = vmatpush1.msra.mxu0 0.0
      %5154 = vmatprep.subr.mxu0 0.0
      %5155 = vmatpush1.msra.mxu0 0.0
      %5156 = vmatprep.subr.mxu0 0.0
      %5157 = vmatpush1.msra.mxu0 0.0
      %5158 = vmatprep.subr.mxu0 0.0
      %5159 = vmatpush1.msra.mxu0 0.0
      %5160 = vmatprep.subr.mxu0 0.0
      %5161 = vmatpush1.msra.mxu0 0.0
      %5162 = vmatprep.subr.mxu0 0.0
      %5163 = vmatpush1.msra.mxu0 0.0
      %5164 = vmatprep.subr.mxu0 0.0
      %5165 = vmatpush1.msra.mxu0 0.0
      %5166 = vmatprep.subr.mxu0 0.0
      %5167 = vmatpush1.msra.mxu0 0.0
      %5168 = vmatprep.subr.mxu0 0.0
      %5169 = vmatpush1.msra.mxu0 0.0
      %5170 = vmatprep.subr.mxu0 0.0
      %5171 = vmatpush1.msra.mxu0 0.0
      %5172 = vmatprep.subr.mxu0 0.0
      %5173 = vmatpush1.msra.mxu0 0.0
      %5174 = vmatprep.subr.mxu0 0.0
      %5175 = vmatpush1.msra.mxu0 0.0
      %5176 = vmatprep.subr.mxu0 0.0
      %5177 = vmatpush1.msra.mxu0 0.0
      %5178 = vmatprep.subr.mxu0 0.0
      %5179 = vmatpush1.msra.mxu0 0.0
      %5180 = vmatprep.mubr.f32.mxu0 0.0
      %5181 = vmatmul.mubr.f32.gmra.mrb[0].mxu0 %v5093
      %v5182 = vpop.f32.mrb[0].mxu0
      %v5183 = vadd.f32 0.0, %v5182
      %v5184 = vpop.f32.mrb[0].mxu0
      %5185 = vmatprep.mubr.f32.mxu0 0.0
      %5186 = vmatmul.mubr.f32.gmra.mrb[0].mxu0 %v5096
      %v5187 = vpop.f32.mrb[0].mxu0
      %v5188 = vadd.f32 0.0, %v5187
      %v5189 = vpop.f32.mrb[0].mxu0
      %5190 = vmatprep.mubr.f32.mxu0 0.0
      %5191 = vmatmul.mubr.f32.gmra.mrb[0].mxu0 %v5099
      %v5192 = vpop.f32.mrb[0].mxu0
      %v5193 = vadd.f32 0.0, %v5192
      %v5194 = vpop.f32.mrb[0].mxu0
      %5195 = vmatprep.mubr.f32.mxu0 0.0
      %5196 = vmatmul.mubr.f32.gmra.mrb[0].mxu0 %v5102
      %v5197 = vpop.f32.mrb[0].mxu0
      %v5198 = vadd.f32 0.0, %v5197
      %v5199 = vpop.f32.mrb[0].mxu0
      %5200 = vmatprep.mubr.f32.mxu0 0.0
      %5201 = vmatmul.mubr.f32.gmra.mrb[0].mxu0 %v5105
      %v5202 = vpop.f32.mrb[0].mxu0
      %v5203 = vadd.f32 0.0, %v5202
      %v5204 = vpop.f32.mrb[0].mxu0
      %5205 = vmatprep.mubr.f32.mxu0 0.0
      %5206 = vmatmul.mubr.f32.gmra.mrb[0].mxu0 %v5108
      %v5207 = vpop.f32.mrb[0].mxu0
      %v5208 = vadd.f32 0.0, %v5207
      %v5209 = vpop.f32.mrb[0].mxu0
      %5210 = vmatprep.mubr.f32.mxu0 0.0
      %5211 = vmatmul.mubr.f32.gmra.mrb[0].mxu0 %v5111
      %v5212 = vpop.f32.mrb[0].mxu0
      %v5213 = vadd.f32 0.0, %v5212
      %v5214 = vpop.f32.mrb[0].mxu0
      %5215 = vmatprep.mubr.f32.mxu0 0.0
      %5216 = vmatmul.mubr.f32.gmra.mrb[0].mxu0 %v5114
      %v5217 = vpop.f32.mrb[0].mxu0
      %v5218 = vadd.f32 0.0, %v5217
      %v5219 = vpop.f32.mrb[0].mxu0
      %5220 = vdwg.mxu0
      %v5221 = vadd.f32 %v5069, %v5183
      %v5222 = vadd.f32 %v5070, %v5188
      %v5223 = vadd.f32 %v5071, %v5193
      %v5224 = vadd.f32 %v5072, %v5198
      %v5225 = vadd.f32 %v5073, %v5203
      %v5226 = vadd.f32 %v5074, %v5208
      %v5227 = vadd.f32 %v5075, %v5213
      %v5228 = vadd.f32 %v5076, %v5218
      %s5229 = scalar_lea.vmem %s11, 1024
      %v5230 = vld [vmem:[%s5229] sm:$0xff]
      %v5231 = vld [vmem:[%s5229 + $0x8] sm:$0xff]
      %v5232 = vld [vmem:[%s5229 + $0x10] sm:$0xff]
      %v5233 = vld [vmem:[%s5229 + $0x18] sm:$0xff]
      %v5234 = vld [vmem:[%s5229 + $0x20] sm:$0xff]
      %v5235 = vld [vmem:[%s5229 + $0x28] sm:$0xff]
      %v5236 = vld [vmem:[%s5229 + $0x30] sm:$0xff]
      %v5237 = vld [vmem:[%s5229 + $0x38] sm:$0xff]
      %5238 = vrot.lane.b32.xlu0 %v2809, 106
      %v5239 = vpop.permute.xlu0 %5238
      %5240 = vrot.lane.b32.xlu0 %v2814, 106
      %v5241 = vpop.permute.xlu0 %5240
      %v5245 = vsel %vm2842, %v5230, 0
      %v5248 = vsel %vm2842, %v5231, 0
      %v5251 = vsel %vm2842, %v5232, 0
      %v5254 = vsel %vm2842, %v5233, 0
      %v5257 = vsel %vm2842, %v5234, 0
      %v5260 = vsel %vm2842, %v5235, 0
      %v5263 = vsel %vm2842, %v5236, 0
      %v5266 = vsel %vm2842, %v5237, 0
      %5268 = vmatprep.subr.mxu0 0.0
      %5269 = vmatpush1.msra.mxu0 %v5239
      %5270 = vmatprep.subr.mxu0 0.0
      %5271 = vmatpush1.msra.mxu0 %v5241
      %5272 = vmatprep.subr.mxu0 0.0
      %5273 = vmatpush1.msra.mxu0 0.0
      %5274 = vmatprep.subr.mxu0 0.0
      %5275 = vmatpush1.msra.mxu0 0.0
      %5276 = vmatprep.subr.mxu0 0.0
      %5277 = vmatpush1.msra.mxu0 0.0
      %5278 = vmatprep.subr.mxu0 0.0
      %5279 = vmatpush1.msra.mxu0 0.0
      %5280 = vmatprep.subr.mxu0 0.0
      %5281 = vmatpush1.msra.mxu0 0.0
      %5282 = vmatprep.subr.mxu0 0.0
      %5283 = vmatpush1.msra.mxu0 0.0
      %5284 = vmatprep.subr.mxu0 0.0
      %5285 = vmatpush1.msra.mxu0 0.0
      %5286 = vmatprep.subr.mxu0 0.0
      %5287 = vmatpush1.msra.mxu0 0.0
      %5288 = vmatprep.subr.mxu0 0.0
      %5289 = vmatpush1.msra.mxu0 0.0
      %5290 = vmatprep.subr.mxu0 0.0
      %5291 = vmatpush1.msra.mxu0 0.0
      %5292 = vmatprep.subr.mxu0 0.0
      %5293 = vmatpush1.msra.mxu0 0.0
      %5294 = vmatprep.subr.mxu0 0.0
      %5295 = vmatpush1.msra.mxu0 0.0
      %5296 = vmatprep.subr.mxu0 0.0
      %5297 = vmatpush1.msra.mxu0 0.0
      %5298 = vmatprep.subr.mxu0 0.0
      %5299 = vmatpush1.msra.mxu0 0.0
      %5300 = vmatprep.subr.mxu0 0.0
      %5301 = vmatpush1.msra.mxu0 0.0
      %5302 = vmatprep.subr.mxu0 0.0
      %5303 = vmatpush1.msra.mxu0 0.0
      %5304 = vmatprep.subr.mxu0 0.0
      %5305 = vmatpush1.msra.mxu0 0.0
      %5306 = vmatprep.subr.mxu0 0.0
      %5307 = vmatpush1.msra.mxu0 0.0
      %5308 = vmatprep.subr.mxu0 0.0
      %5309 = vmatpush1.msra.mxu0 0.0
      %5310 = vmatprep.subr.mxu0 0.0
      %5311 = vmatpush1.msra.mxu0 0.0
      %5312 = vmatprep.subr.mxu0 0.0
      %5313 = vmatpush1.msra.mxu0 0.0
      %5314 = vmatprep.subr.mxu0 0.0
      %5315 = vmatpush1.msra.mxu0 0.0
      %5316 = vmatprep.subr.mxu0 0.0
      %5317 = vmatpush1.msra.mxu0 0.0
      %5318 = vmatprep.subr.mxu0 0.0
      %5319 = vmatpush1.msra.mxu0 0.0
      %5320 = vmatprep.subr.mxu0 0.0
      %5321 = vmatpush1.msra.mxu0 0.0
      %5322 = vmatprep.subr.mxu0 0.0
      %5323 = vmatpush1.msra.mxu0 0.0
      %5324 = vmatprep.subr.mxu0 0.0
      %5325 = vmatpush1.msra.mxu0 0.0
      %5326 = vmatprep.subr.mxu0 0.0
      %5327 = vmatpush1.msra.mxu0 0.0
      %5328 = vmatprep.subr.mxu0 0.0
      %5329 = vmatpush1.msra.mxu0 0.0
      %5330 = vmatprep.subr.mxu0 0.0
      %5331 = vmatpush1.msra.mxu0 0.0
      %5332 = vmatprep.mubr.f32.mxu0 0.0
      %5333 = vmatmul.mubr.f32.gmra.mrb[0].mxu0 %v5245
      %v5334 = vpop.f32.mrb[0].mxu0
      %v5335 = vadd.f32 0.0, %v5334
      %v5336 = vpop.f32.mrb[0].mxu0
      %5337 = vmatprep.mubr.f32.mxu0 0.0
      %5338 = vmatmul.mubr.f32.gmra.mrb[0].mxu0 %v5248
      %v5339 = vpop.f32.mrb[0].mxu0
      %v5340 = vadd.f32 0.0, %v5339
      %v5341 = vpop.f32.mrb[0].mxu0
      %5342 = vmatprep.mubr.f32.mxu0 0.0
      %5343 = vmatmul.mubr.f32.gmra.mrb[0].mxu0 %v5251
      %v5344 = vpop.f32.mrb[0].mxu0
      %v5345 = vadd.f32 0.0, %v5344
      %v5346 = vpop.f32.mrb[0].mxu0
      %5347 = vmatprep.mubr.f32.mxu0 0.0
      %5348 = vmatmul.mubr.f32.gmra.mrb[0].mxu0 %v5254
      %v5349 = vpop.f32.mrb[0].mxu0
      %v5350 = vadd.f32 0.0, %v5349
      %v5351 = vpop.f32.mrb[0].mxu0
      %5352 = vmatprep.mubr.f32.mxu0 0.0
      %5353 = vmatmul.mubr.f32.gmra.mrb[0].mxu0 %v5257
      %v5354 = vpop.f32.mrb[0].mxu0
      %v5355 = vadd.f32 0.0, %v5354
      %v5356 = vpop.f32.mrb[0].mxu0
      %5357 = vmatprep.mubr.f32.mxu0 0.0
      %5358 = vmatmul.mubr.f32.gmra.mrb[0].mxu0 %v5260
      %v5359 = vpop.f32.mrb[0].mxu0
      %v5360 = vadd.f32 0.0, %v5359
      %v5361 = vpop.f32.mrb[0].mxu0
      %5362 = vmatprep.mubr.f32.mxu0 0.0
      %5363 = vmatmul.mubr.f32.gmra.mrb[0].mxu0 %v5263
      %v5364 = vpop.f32.mrb[0].mxu0
      %v5365 = vadd.f32 0.0, %v5364
      %v5366 = vpop.f32.mrb[0].mxu0
      %5367 = vmatprep.mubr.f32.mxu0 0.0
      %5368 = vmatmul.mubr.f32.gmra.mrb[0].mxu0 %v5266
      %v5369 = vpop.f32.mrb[0].mxu0
      %v5370 = vadd.f32 0.0, %v5369
      %v5371 = vpop.f32.mrb[0].mxu0
      %5372 = vdwg.mxu0
      %v5373 = vadd.f32 %v5221, %v5335
      %v5374 = vadd.f32 %v5222, %v5340
      %v5375 = vadd.f32 %v5223, %v5345
      %v5376 = vadd.f32 %v5224, %v5350
      %v5377 = vadd.f32 %v5225, %v5355
      %v5378 = vadd.f32 %v5226, %v5360
      %v5379 = vadd.f32 %v5227, %v5365
      %v5380 = vadd.f32 %v5228, %v5370
      %s5381 = scalar_lea.vmem %s11, 1088
      %v5382 = vld [vmem:[%s5381] sm:$0xff]
      %v5383 = vld [vmem:[%s5381 + $0x8] sm:$0xff]
      %v5384 = vld [vmem:[%s5381 + $0x10] sm:$0xff]
      %v5385 = vld [vmem:[%s5381 + $0x18] sm:$0xff]
      %v5386 = vld [vmem:[%s5381 + $0x20] sm:$0xff]
      %v5387 = vld [vmem:[%s5381 + $0x28] sm:$0xff]
      %v5388 = vld [vmem:[%s5381 + $0x30] sm:$0xff]
      %v5389 = vld [vmem:[%s5381 + $0x38] sm:$0xff]
      %5390 = vrot.lane.b32.xlu0 %v2809, 105
      %v5391 = vpop.permute.xlu0 %5390
      %5392 = vrot.lane.b32.xlu0 %v2814, 105
      %v5393 = vpop.permute.xlu0 %5392
      %v5397 = vsel %vm2842, %v5382, 0
      %v5400 = vsel %vm2842, %v5383, 0
      %v5403 = vsel %vm2842, %v5384, 0
      %v5406 = vsel %vm2842, %v5385, 0
      %v5409 = vsel %vm2842, %v5386, 0
      %v5412 = vsel %vm2842, %v5387, 0
      %v5415 = vsel %vm2842, %v5388, 0
      %v5418 = vsel %vm2842, %v5389, 0
      %5420 = vmatprep.subr.mxu0 0.0
      %5421 = vmatpush1.msra.mxu0 %v5391
      %5422 = vmatprep.subr.mxu0 0.0
      %5423 = vmatpush1.msra.mxu0 %v5393
      %5424 = vmatprep.subr.mxu0 0.0
      %5425 = vmatpush1.msra.mxu0 0.0
      %5426 = vmatprep.subr.mxu0 0.0
      %5427 = vmatpush1.msra.mxu0 0.0
      %5428 = vmatprep.subr.mxu0 0.0
      %5429 = vmatpush1.msra.mxu0 0.0
      %5430 = vmatprep.subr.mxu0 0.0
      %5431 = vmatpush1.msra.mxu0 0.0
      %5432 = vmatprep.subr.mxu0 0.0
      %5433 = vmatpush1.msra.mxu0 0.0
      %5434 = vmatprep.subr.mxu0 0.0
      %5435 = vmatpush1.msra.mxu0 0.0
      %5436 = vmatprep.subr.mxu0 0.0
      %5437 = vmatpush1.msra.mxu0 0.0
      %5438 = vmatprep.subr.mxu0 0.0
      %5439 = vmatpush1.msra.mxu0 0.0
      %5440 = vmatprep.subr.mxu0 0.0
      %5441 = vmatpush1.msra.mxu0 0.0
      %5442 = vmatprep.subr.mxu0 0.0
      %5443 = vmatpush1.msra.mxu0 0.0
      %5444 = vmatprep.subr.mxu0 0.0
      %5445 = vmatpush1.msra.mxu0 0.0
      %5446 = vmatprep.subr.mxu0 0.0
      %5447 = vmatpush1.msra.mxu0 0.0
      %5448 = vmatprep.subr.mxu0 0.0
      %5449 = vmatpush1.msra.mxu0 0.0
      %5450 = vmatprep.subr.mxu0 0.0
      %5451 = vmatpush1.msra.mxu0 0.0
      %5452 = vmatprep.subr.mxu0 0.0
      %5453 = vmatpush1.msra.mxu0 0.0
      %5454 = vmatprep.subr.mxu0 0.0
      %5455 = vmatpush1.msra.mxu0 0.0
      %5456 = vmatprep.subr.mxu0 0.0
      %5457 = vmatpush1.msra.mxu0 0.0
      %5458 = vmatprep.subr.mxu0 0.0
      %5459 = vmatpush1.msra.mxu0 0.0
      %5460 = vmatprep.subr.mxu0 0.0
      %5461 = vmatpush1.msra.mxu0 0.0
      %5462 = vmatprep.subr.mxu0 0.0
      %5463 = vmatpush1.msra.mxu0 0.0
      %5464 = vmatprep.subr.mxu0 0.0
      %5465 = vmatpush1.msra.mxu0 0.0
      %5466 = vmatprep.subr.mxu0 0.0
      %5467 = vmatpush1.msra.mxu0 0.0
      %5468 = vmatprep.subr.mxu0 0.0
      %5469 = vmatpush1.msra.mxu0 0.0
      %5470 = vmatprep.subr.mxu0 0.0
      %5471 = vmatpush1.msra.mxu0 0.0
      %5472 = vmatprep.subr.mxu0 0.0
      %5473 = vmatpush1.msra.mxu0 0.0
      %5474 = vmatprep.subr.mxu0 0.0
      %5475 = vmatpush1.msra.mxu0 0.0
      %5476 = vmatprep.subr.mxu0 0.0
      %5477 = vmatpush1.msra.mxu0 0.0
      %5478 = vmatprep.subr.mxu0 0.0
      %5479 = vmatpush1.msra.mxu0 0.0
      %5480 = vmatprep.subr.mxu0 0.0
      %5481 = vmatpush1.msra.mxu0 0.0
      %5482 = vmatprep.subr.mxu0 0.0
      %5483 = vmatpush1.msra.mxu0 0.0
      %5484 = vmatprep.mubr.f32.mxu0 0.0
      %5485 = vmatmul.mubr.f32.gmra.mrb[0].mxu0 %v5397
      %v5486 = vpop.f32.mrb[0].mxu0
      %v5487 = vadd.f32 0.0, %v5486
      %v5488 = vpop.f32.mrb[0].mxu0
      %5489 = vmatprep.mubr.f32.mxu0 0.0
      %5490 = vmatmul.mubr.f32.gmra.mrb[0].mxu0 %v5400
      %v5491 = vpop.f32.mrb[0].mxu0
      %v5492 = vadd.f32 0.0, %v5491
      %v5493 = vpop.f32.mrb[0].mxu0
      %5494 = vmatprep.mubr.f32.mxu0 0.0
      %5495 = vmatmul.mubr.f32.gmra.mrb[0].mxu0 %v5403
      %v5496 = vpop.f32.mrb[0].mxu0
      %v5497 = vadd.f32 0.0, %v5496
      %v5498 = vpop.f32.mrb[0].mxu0
      %5499 = vmatprep.mubr.f32.mxu0 0.0
      %5500 = vmatmul.mubr.f32.gmra.mrb[0].mxu0 %v5406
      %v5501 = vpop.f32.mrb[0].mxu0
      %v5502 = vadd.f32 0.0, %v5501
      %v5503 = vpop.f32.mrb[0].mxu0
      %5504 = vmatprep.mubr.f32.mxu0 0.0
      %5505 = vmatmul.mubr.f32.gmra.mrb[0].mxu0 %v5409
      %v5506 = vpop.f32.mrb[0].mxu0
      %v5507 = vadd.f32 0.0, %v5506
      %v5508 = vpop.f32.mrb[0].mxu0
      %5509 = vmatprep.mubr.f32.mxu0 0.0
      %5510 = vmatmul.mubr.f32.gmra.mrb[0].mxu0 %v5412
      %v5511 = vpop.f32.mrb[0].mxu0
      %v5512 = vadd.f32 0.0, %v5511
      %v5513 = vpop.f32.mrb[0].mxu0
      %5514 = vmatprep.mubr.f32.mxu0 0.0
      %5515 = vmatmul.mubr.f32.gmra.mrb[0].mxu0 %v5415
      %v5516 = vpop.f32.mrb[0].mxu0
      %v5517 = vadd.f32 0.0, %v5516
      %v5518 = vpop.f32.mrb[0].mxu0
      %5519 = vmatprep.mubr.f32.mxu0 0.0
      %5520 = vmatmul.mubr.f32.gmra.mrb[0].mxu0 %v5418
      %v5521 = vpop.f32.mrb[0].mxu0
      %v5522 = vadd.f32 0.0, %v5521
      %v5523 = vpop.f32.mrb[0].mxu0
      %5524 = vdwg.mxu0
      %v5525 = vadd.f32 %v5373, %v5487
      %v5526 = vadd.f32 %v5374, %v5492
      %v5527 = vadd.f32 %v5375, %v5497
      %v5528 = vadd.f32 %v5376, %v5502
      %v5529 = vadd.f32 %v5377, %v5507
      %v5530 = vadd.f32 %v5378, %v5512
      %v5531 = vadd.f32 %v5379, %v5517
      %v5532 = vadd.f32 %v5380, %v5522
      %s5533 = scalar_lea.vmem %s11, 1152
      %v5534 = vld [vmem:[%s5533] sm:$0xff]
      %v5535 = vld [vmem:[%s5533 + $0x8] sm:$0xff]
      %v5536 = vld [vmem:[%s5533 + $0x10] sm:$0xff]
      %v5537 = vld [vmem:[%s5533 + $0x18] sm:$0xff]
      %v5538 = vld [vmem:[%s5533 + $0x20] sm:$0xff]
      %v5539 = vld [vmem:[%s5533 + $0x28] sm:$0xff]
      %v5540 = vld [vmem:[%s5533 + $0x30] sm:$0xff]
      %v5541 = vld [vmem:[%s5533 + $0x38] sm:$0xff]
      %5542 = vrot.lane.b32.xlu0 %v2809, 104
      %v5543 = vpop.permute.xlu0 %5542
      %5544 = vrot.lane.b32.xlu0 %v2814, 104
      %v5545 = vpop.permute.xlu0 %5544
      %v5549 = vsel %vm2842, %v5534, 0
      %v5552 = vsel %vm2842, %v5535, 0
      %v5555 = vsel %vm2842, %v5536, 0
      %v5558 = vsel %vm2842, %v5537, 0
      %v5561 = vsel %vm2842, %v5538, 0
      %v5564 = vsel %vm2842, %v5539, 0
      %v5567 = vsel %vm2842, %v5540, 0
      %v5570 = vsel %vm2842, %v5541, 0
      %5572 = vmatprep.subr.mxu0 0.0
      %5573 = vmatpush1.msra.mxu0 %v5543
      %5574 = vmatprep.subr.mxu0 0.0
      %5575 = vmatpush1.msra.mxu0 %v5545
      %5576 = vmatprep.subr.mxu0 0.0
      %5577 = vmatpush1.msra.mxu0 0.0
      %5578 = vmatprep.subr.mxu0 0.0
      %5579 = vmatpush1.msra.mxu0 0.0
      %5580 = vmatprep.subr.mxu0 0.0
      %5581 = vmatpush1.msra.mxu0 0.0
      %5582 = vmatprep.subr.mxu0 0.0
      %5583 = vmatpush1.msra.mxu0 0.0
      %5584 = vmatprep.subr.mxu0 0.0
      %5585 = vmatpush1.msra.mxu0 0.0
      %5586 = vmatprep.subr.mxu0 0.0
      %5587 = vmatpush1.msra.mxu0 0.0
      %5588 = vmatprep.subr.mxu0 0.0
      %5589 = vmatpush1.msra.mxu0 0.0
      %5590 = vmatprep.subr.mxu0 0.0
      %5591 = vmatpush1.msra.mxu0 0.0
      %5592 = vmatprep.subr.mxu0 0.0
      %5593 = vmatpush1.msra.mxu0 0.0
      %5594 = vmatprep.subr.mxu0 0.0
      %5595 = vmatpush1.msra.mxu0 0.0
      %5596 = vmatprep.subr.mxu0 0.0
      %5597 = vmatpush1.msra.mxu0 0.0
      %5598 = vmatprep.subr.mxu0 0.0
      %5599 = vmatpush1.msra.mxu0 0.0
      %5600 = vmatprep.subr.mxu0 0.0
      %5601 = vmatpush1.msra.mxu0 0.0
      %5602 = vmatprep.subr.mxu0 0.0
      %5603 = vmatpush1.msra.mxu0 0.0
      %5604 = vmatprep.subr.mxu0 0.0
      %5605 = vmatpush1.msra.mxu0 0.0
      %5606 = vmatprep.subr.mxu0 0.0
      %5607 = vmatpush1.msra.mxu0 0.0
      %5608 = vmatprep.subr.mxu0 0.0
      %5609 = vmatpush1.msra.mxu0 0.0
      %5610 = vmatprep.subr.mxu0 0.0
      %5611 = vmatpush1.msra.mxu0 0.0
      %5612 = vmatprep.subr.mxu0 0.0
      %5613 = vmatpush1.msra.mxu0 0.0
      %5614 = vmatprep.subr.mxu0 0.0
      %5615 = vmatpush1.msra.mxu0 0.0
      %5616 = vmatprep.subr.mxu0 0.0
      %5617 = vmatpush1.msra.mxu0 0.0
      %5618 = vmatprep.subr.mxu0 0.0
      %5619 = vmatpush1.msra.mxu0 0.0
      %5620 = vmatprep.subr.mxu0 0.0
      %5621 = vmatpush1.msra.mxu0 0.0
      %5622 = vmatprep.subr.mxu0 0.0
      %5623 = vmatpush1.msra.mxu0 0.0
      %5624 = vmatprep.subr.mxu0 0.0
      %5625 = vmatpush1.msra.mxu0 0.0
      %5626 = vmatprep.subr.mxu0 0.0
      %5627 = vmatpush1.msra.mxu0 0.0
      %5628 = vmatprep.subr.mxu0 0.0
      %5629 = vmatpush1.msra.mxu0 0.0
      %5630 = vmatprep.subr.mxu0 0.0
      %5631 = vmatpush1.msra.mxu0 0.0
      %5632 = vmatprep.subr.mxu0 0.0
      %5633 = vmatpush1.msra.mxu0 0.0
      %5634 = vmatprep.subr.mxu0 0.0
      %5635 = vmatpush1.msra.mxu0 0.0
      %5636 = vmatprep.mubr.f32.mxu0 0.0
      %5637 = vmatmul.mubr.f32.gmra.mrb[0].mxu0 %v5549
      %v5638 = vpop.f32.mrb[0].mxu0
      %v5639 = vadd.f32 0.0, %v5638
      %v5640 = vpop.f32.mrb[0].mxu0
      %5641 = vmatprep.mubr.f32.mxu0 0.0
      %5642 = vmatmul.mubr.f32.gmra.mrb[0].mxu0 %v5552
      %v5643 = vpop.f32.mrb[0].mxu0
      %v5644 = vadd.f32 0.0, %v5643
      %v5645 = vpop.f32.mrb[0].mxu0
      %5646 = vmatprep.mubr.f32.mxu0 0.0
      %5647 = vmatmul.mubr.f32.gmra.mrb[0].mxu0 %v5555
      %v5648 = vpop.f32.mrb[0].mxu0
      %v5649 = vadd.f32 0.0, %v5648
      %v5650 = vpop.f32.mrb[0].mxu0
      %5651 = vmatprep.mubr.f32.mxu0 0.0
      %5652 = vmatmul.mubr.f32.gmra.mrb[0].mxu0 %v5558
      %v5653 = vpop.f32.mrb[0].mxu0
      %v5654 = vadd.f32 0.0, %v5653
      %v5655 = vpop.f32.mrb[0].mxu0
      %5656 = vmatprep.mubr.f32.mxu0 0.0
      %5657 = vmatmul.mubr.f32.gmra.mrb[0].mxu0 %v5561
      %v5658 = vpop.f32.mrb[0].mxu0
      %v5659 = vadd.f32 0.0, %v5658
      %v5660 = vpop.f32.mrb[0].mxu0
      %5661 = vmatprep.mubr.f32.mxu0 0.0
      %5662 = vmatmul.mubr.f32.gmra.mrb[0].mxu0 %v5564
      %v5663 = vpop.f32.mrb[0].mxu0
      %v5664 = vadd.f32 0.0, %v5663
      %v5665 = vpop.f32.mrb[0].mxu0
      %5666 = vmatprep.mubr.f32.mxu0 0.0
      %5667 = vmatmul.mubr.f32.gmra.mrb[0].mxu0 %v5567
      %v5668 = vpop.f32.mrb[0].mxu0
      %v5669 = vadd.f32 0.0, %v5668
      %v5670 = vpop.f32.mrb[0].mxu0
      %5671 = vmatprep.mubr.f32.mxu0 0.0
      %5672 = vmatmul.mubr.f32.gmra.mrb[0].mxu0 %v5570
      %v5673 = vpop.f32.mrb[0].mxu0
      %v5674 = vadd.f32 0.0, %v5673
      %v5675 = vpop.f32.mrb[0].mxu0
      %5676 = vdwg.mxu0
      %v5677 = vadd.f32 %v5525, %v5639
      %v5678 = vadd.f32 %v5526, %v5644
      %v5679 = vadd.f32 %v5527, %v5649
      %v5680 = vadd.f32 %v5528, %v5654
      %v5681 = vadd.f32 %v5529, %v5659
      %v5682 = vadd.f32 %v5530, %v5664
      %v5683 = vadd.f32 %v5531, %v5669
      %v5684 = vadd.f32 %v5532, %v5674
      %s5685 = scalar_lea.vmem %s11, 1216
      %v5686 = vld [vmem:[%s5685] sm:$0xff]
      %v5687 = vld [vmem:[%s5685 + $0x8] sm:$0xff]
      %v5688 = vld [vmem:[%s5685 + $0x10] sm:$0xff]
      %v5689 = vld [vmem:[%s5685 + $0x18] sm:$0xff]
      %v5690 = vld [vmem:[%s5685 + $0x20] sm:$0xff]
      %v5691 = vld [vmem:[%s5685 + $0x28] sm:$0xff]
      %v5692 = vld [vmem:[%s5685 + $0x30] sm:$0xff]
      %v5693 = vld [vmem:[%s5685 + $0x38] sm:$0xff]
      %5694 = vrot.lane.b32.xlu0 %v2809, 103
      %v5695 = vpop.permute.xlu0 %5694
      %5696 = vrot.lane.b32.xlu0 %v2814, 103
      %v5697 = vpop.permute.xlu0 %5696
      %v5701 = vsel %vm2842, %v5686, 0
      %v5704 = vsel %vm2842, %v5687, 0
      %v5707 = vsel %vm2842, %v5688, 0
      %v5710 = vsel %vm2842, %v5689, 0
      %v5713 = vsel %vm2842, %v5690, 0
      %v5716 = vsel %vm2842, %v5691, 0
      %v5719 = vsel %vm2842, %v5692, 0
      %v5722 = vsel %vm2842, %v5693, 0
      %5724 = vmatprep.subr.mxu0 0.0
      %5725 = vmatpush1.msra.mxu0 %v5695
      %5726 = vmatprep.subr.mxu0 0.0
      %5727 = vmatpush1.msra.mxu0 %v5697
      %5728 = vmatprep.subr.mxu0 0.0
      %5729 = vmatpush1.msra.mxu0 0.0
      %5730 = vmatprep.subr.mxu0 0.0
      %5731 = vmatpush1.msra.mxu0 0.0
      %5732 = vmatprep.subr.mxu0 0.0
      %5733 = vmatpush1.msra.mxu0 0.0
      %5734 = vmatprep.subr.mxu0 0.0
      %5735 = vmatpush1.msra.mxu0 0.0
      %5736 = vmatprep.subr.mxu0 0.0
      %5737 = vmatpush1.msra.mxu0 0.0
      %5738 = vmatprep.subr.mxu0 0.0
      %5739 = vmatpush1.msra.mxu0 0.0
      %5740 = vmatprep.subr.mxu0 0.0
      %5741 = vmatpush1.msra.mxu0 0.0
      %5742 = vmatprep.subr.mxu0 0.0
      %5743 = vmatpush1.msra.mxu0 0.0
      %5744 = vmatprep.subr.mxu0 0.0
      %5745 = vmatpush1.msra.mxu0 0.0
      %5746 = vmatprep.subr.mxu0 0.0
      %5747 = vmatpush1.msra.mxu0 0.0
      %5748 = vmatprep.subr.mxu0 0.0
      %5749 = vmatpush1.msra.mxu0 0.0
      %5750 = vmatprep.subr.mxu0 0.0
      %5751 = vmatpush1.msra.mxu0 0.0
      %5752 = vmatprep.subr.mxu0 0.0
      %5753 = vmatpush1.msra.mxu0 0.0
      %5754 = vmatprep.subr.mxu0 0.0
      %5755 = vmatpush1.msra.mxu0 0.0
      %5756 = vmatprep.subr.mxu0 0.0
      %5757 = vmatpush1.msra.mxu0 0.0
      %5758 = vmatprep.subr.mxu0 0.0
      %5759 = vmatpush1.msra.mxu0 0.0
      %5760 = vmatprep.subr.mxu0 0.0
      %5761 = vmatpush1.msra.mxu0 0.0
      %5762 = vmatprep.subr.mxu0 0.0
      %5763 = vmatpush1.msra.mxu0 0.0
      %5764 = vmatprep.subr.mxu0 0.0
      %5765 = vmatpush1.msra.mxu0 0.0
      %5766 = vmatprep.subr.mxu0 0.0
      %5767 = vmatpush1.msra.mxu0 0.0
      %5768 = vmatprep.subr.mxu0 0.0
      %5769 = vmatpush1.msra.mxu0 0.0
      %5770 = vmatprep.subr.mxu0 0.0
      %5771 = vmatpush1.msra.mxu0 0.0
      %5772 = vmatprep.subr.mxu0 0.0
      %5773 = vmatpush1.msra.mxu0 0.0
      %5774 = vmatprep.subr.mxu0 0.0
      %5775 = vmatpush1.msra.mxu0 0.0
      %5776 = vmatprep.subr.mxu0 0.0
      %5777 = vmatpush1.msra.mxu0 0.0
      %5778 = vmatprep.subr.mxu0 0.0
      %5779 = vmatpush1.msra.mxu0 0.0
      %5780 = vmatprep.subr.mxu0 0.0
      %5781 = vmatpush1.msra.mxu0 0.0
      %5782 = vmatprep.subr.mxu0 0.0
      %5783 = vmatpush1.msra.mxu0 0.0
      %5784 = vmatprep.subr.mxu0 0.0
      %5785 = vmatpush1.msra.mxu0 0.0
      %5786 = vmatprep.subr.mxu0 0.0
      %5787 = vmatpush1.msra.mxu0 0.0
      %5788 = vmatprep.mubr.f32.mxu0 0.0
      %5789 = vmatmul.mubr.f32.gmra.mrb[0].mxu0 %v5701
      %v5790 = vpop.f32.mrb[0].mxu0
      %v5791 = vadd.f32 0.0, %v5790
      %v5792 = vpop.f32.mrb[0].mxu0
      %5793 = vmatprep.mubr.f32.mxu0 0.0
      %5794 = vmatmul.mubr.f32.gmra.mrb[0].mxu0 %v5704
      %v5795 = vpop.f32.mrb[0].mxu0
      %v5796 = vadd.f32 0.0, %v5795
      %v5797 = vpop.f32.mrb[0].mxu0
      %5798 = vmatprep.mubr.f32.mxu0 0.0
      %5799 = vmatmul.mubr.f32.gmra.mrb[0].mxu0 %v5707
      %v5800 = vpop.f32.mrb[0].mxu0
      %v5801 = vadd.f32 0.0, %v5800
      %v5802 = vpop.f32.mrb[0].mxu0
      %5803 = vmatprep.mubr.f32.mxu0 0.0
      %5804 = vmatmul.mubr.f32.gmra.mrb[0].mxu0 %v5710
      %v5805 = vpop.f32.mrb[0].mxu0
      %v5806 = vadd.f32 0.0, %v5805
      %v5807 = vpop.f32.mrb[0].mxu0
      %5808 = vmatprep.mubr.f32.mxu0 0.0
      %5809 = vmatmul.mubr.f32.gmra.mrb[0].mxu0 %v5713
      %v5810 = vpop.f32.mrb[0].mxu0
      %v5811 = vadd.f32 0.0, %v5810
      %v5812 = vpop.f32.mrb[0].mxu0
      %5813 = vmatprep.mubr.f32.mxu0 0.0
      %5814 = vmatmul.mubr.f32.gmra.mrb[0].mxu0 %v5716
      %v5815 = vpop.f32.mrb[0].mxu0
      %v5816 = vadd.f32 0.0, %v5815
      %v5817 = vpop.f32.mrb[0].mxu0
      %5818 = vmatprep.mubr.f32.mxu0 0.0
      %5819 = vmatmul.mubr.f32.gmra.mrb[0].mxu0 %v5719
      %v5820 = vpop.f32.mrb[0].mxu0
      %v5821 = vadd.f32 0.0, %v5820
      %v5822 = vpop.f32.mrb[0].mxu0
      %5823 = vmatprep.mubr.f32.mxu0 0.0
      %5824 = vmatmul.mubr.f32.gmra.mrb[0].mxu0 %v5722
      %v5825 = vpop.f32.mrb[0].mxu0
      %v5826 = vadd.f32 0.0, %v5825
      %v5827 = vpop.f32.mrb[0].mxu0
      %5828 = vdwg.mxu0
      %v5829 = vadd.f32 %v5677, %v5791
      %v5830 = vadd.f32 %v5678, %v5796
      %v5831 = vadd.f32 %v5679, %v5801
      %v5832 = vadd.f32 %v5680, %v5806
      %v5833 = vadd.f32 %v5681, %v5811
      %v5834 = vadd.f32 %v5682, %v5816
      %v5835 = vadd.f32 %v5683, %v5821
      %v5836 = vadd.f32 %v5684, %v5826
      %s5837 = scalar_lea.vmem %s11, 1280
      %v5838 = vld [vmem:[%s5837] sm:$0xff]
      %v5839 = vld [vmem:[%s5837 + $0x8] sm:$0xff]
      %v5840 = vld [vmem:[%s5837 + $0x10] sm:$0xff]
      %v5841 = vld [vmem:[%s5837 + $0x18] sm:$0xff]
      %v5842 = vld [vmem:[%s5837 + $0x20] sm:$0xff]
      %v5843 = vld [vmem:[%s5837 + $0x28] sm:$0xff]
      %v5844 = vld [vmem:[%s5837 + $0x30] sm:$0xff]
      %v5845 = vld [vmem:[%s5837 + $0x38] sm:$0xff]
      %5846 = vrot.lane.b32.xlu0 %v2809, 100
      %v5847 = vpop.permute.xlu0 %5846
      %5848 = vrot.lane.b32.xlu0 %v2814, 100
      %v5849 = vpop.permute.xlu0 %5848
      %v5853 = vsel %vm2842, %v5838, 0
      %v5856 = vsel %vm2842, %v5839, 0
      %v5859 = vsel %vm2842, %v5840, 0
      %v5862 = vsel %vm2842, %v5841, 0
      %v5865 = vsel %vm2842, %v5842, 0
      %v5868 = vsel %vm2842, %v5843, 0
      %v5871 = vsel %vm2842, %v5844, 0
      %v5874 = vsel %vm2842, %v5845, 0
      %5876 = vmatprep.subr.mxu0 0.0
      %5877 = vmatpush1.msra.mxu0 %v5847
      %5878 = vmatprep.subr.mxu0 0.0
      %5879 = vmatpush1.msra.mxu0 %v5849
      %5880 = vmatprep.subr.mxu0 0.0
      %5881 = vmatpush1.msra.mxu0 0.0
      %5882 = vmatprep.subr.mxu0 0.0
      %5883 = vmatpush1.msra.mxu0 0.0
      %5884 = vmatprep.subr.mxu0 0.0
      %5885 = vmatpush1.msra.mxu0 0.0
      %5886 = vmatprep.subr.mxu0 0.0
      %5887 = vmatpush1.msra.mxu0 0.0
      %5888 = vmatprep.subr.mxu0 0.0
      %5889 = vmatpush1.msra.mxu0 0.0
      %5890 = vmatprep.subr.mxu0 0.0
      %5891 = vmatpush1.msra.mxu0 0.0
      %5892 = vmatprep.subr.mxu0 0.0
      %5893 = vmatpush1.msra.mxu0 0.0
      %5894 = vmatprep.subr.mxu0 0.0
      %5895 = vmatpush1.msra.mxu0 0.0
      %5896 = vmatprep.subr.mxu0 0.0
      %5897 = vmatpush1.msra.mxu0 0.0
      %5898 = vmatprep.subr.mxu0 0.0
      %5899 = vmatpush1.msra.mxu0 0.0
      %5900 = vmatprep.subr.mxu0 0.0
      %5901 = vmatpush1.msra.mxu0 0.0
      %5902 = vmatprep.subr.mxu0 0.0
      %5903 = vmatpush1.msra.mxu0 0.0
      %5904 = vmatprep.subr.mxu0 0.0
      %5905 = vmatpush1.msra.mxu0 0.0
      %5906 = vmatprep.subr.mxu0 0.0
      %5907 = vmatpush1.msra.mxu0 0.0
      %5908 = vmatprep.subr.mxu0 0.0
      %5909 = vmatpush1.msra.mxu0 0.0
      %5910 = vmatprep.subr.mxu0 0.0
      %5911 = vmatpush1.msra.mxu0 0.0
      %5912 = vmatprep.subr.mxu0 0.0
      %5913 = vmatpush1.msra.mxu0 0.0
      %5914 = vmatprep.subr.mxu0 0.0
      %5915 = vmatpush1.msra.mxu0 0.0
      %5916 = vmatprep.subr.mxu0 0.0
      %5917 = vmatpush1.msra.mxu0 0.0
      %5918 = vmatprep.subr.mxu0 0.0
      %5919 = vmatpush1.msra.mxu0 0.0
      %5920 = vmatprep.subr.mxu0 0.0
      %5921 = vmatpush1.msra.mxu0 0.0
      %5922 = vmatprep.subr.mxu0 0.0
      %5923 = vmatpush1.msra.mxu0 0.0
      %5924 = vmatprep.subr.mxu0 0.0
      %5925 = vmatpush1.msra.mxu0 0.0
      %5926 = vmatprep.subr.mxu0 0.0
      %5927 = vmatpush1.msra.mxu0 0.0
      %5928 = vmatprep.subr.mxu0 0.0
      %5929 = vmatpush1.msra.mxu0 0.0
      %5930 = vmatprep.subr.mxu0 0.0
      %5931 = vmatpush1.msra.mxu0 0.0
      %5932 = vmatprep.subr.mxu0 0.0
      %5933 = vmatpush1.msra.mxu0 0.0
      %5934 = vmatprep.subr.mxu0 0.0
      %5935 = vmatpush1.msra.mxu0 0.0
      %5936 = vmatprep.subr.mxu0 0.0
      %5937 = vmatpush1.msra.mxu0 0.0
      %5938 = vmatprep.subr.mxu0 0.0
      %5939 = vmatpush1.msra.mxu0 0.0
      %5940 = vmatprep.mubr.f32.mxu0 0.0
      %5941 = vmatmul.mubr.f32.gmra.mrb[0].mxu0 %v5853
      %v5942 = vpop.f32.mrb[0].mxu0
      %v5943 = vadd.f32 0.0, %v5942
      %v5944 = vpop.f32.mrb[0].mxu0
      %5945 = vmatprep.mubr.f32.mxu0 0.0
      %5946 = vmatmul.mubr.f32.gmra.mrb[0].mxu0 %v5856
      %v5947 = vpop.f32.mrb[0].mxu0
      %v5948 = vadd.f32 0.0, %v5947
      %v5949 = vpop.f32.mrb[0].mxu0
      %5950 = vmatprep.mubr.f32.mxu0 0.0
      %5951 = vmatmul.mubr.f32.gmra.mrb[0].mxu0 %v5859
      %v5952 = vpop.f32.mrb[0].mxu0
      %v5953 = vadd.f32 0.0, %v5952
      %v5954 = vpop.f32.mrb[0].mxu0
      %5955 = vmatprep.mubr.f32.mxu0 0.0
      %5956 = vmatmul.mubr.f32.gmra.mrb[0].mxu0 %v5862
      %v5957 = vpop.f32.mrb[0].mxu0
      %v5958 = vadd.f32 0.0, %v5957
      %v5959 = vpop.f32.mrb[0].mxu0
      %5960 = vmatprep.mubr.f32.mxu0 0.0
      %5961 = vmatmul.mubr.f32.gmra.mrb[0].mxu0 %v5865
      %v5962 = vpop.f32.mrb[0].mxu0
      %v5963 = vadd.f32 0.0, %v5962
      %v5964 = vpop.f32.mrb[0].mxu0
      %5965 = vmatprep.mubr.f32.mxu0 0.0
      %5966 = vmatmul.mubr.f32.gmra.mrb[0].mxu0 %v5868
      %v5967 = vpop.f32.mrb[0].mxu0
      %v5968 = vadd.f32 0.0, %v5967
      %v5969 = vpop.f32.mrb[0].mxu0
      %5970 = vmatprep.mubr.f32.mxu0 0.0
      %5971 = vmatmul.mubr.f32.gmra.mrb[0].mxu0 %v5871
      %v5972 = vpop.f32.mrb[0].mxu0
      %v5973 = vadd.f32 0.0, %v5972
      %v5974 = vpop.f32.mrb[0].mxu0
      %5975 = vmatprep.mubr.f32.mxu0 0.0
      %5976 = vmatmul.mubr.f32.gmra.mrb[0].mxu0 %v5874
      %v5977 = vpop.f32.mrb[0].mxu0
      %v5978 = vadd.f32 0.0, %v5977
      %v5979 = vpop.f32.mrb[0].mxu0
      %5980 = vdwg.mxu0
      %v5981 = vadd.f32 %v5829, %v5943
      %v5982 = vadd.f32 %v5830, %v5948
      %v5983 = vadd.f32 %v5831, %v5953
      %v5984 = vadd.f32 %v5832, %v5958
      %v5985 = vadd.f32 %v5833, %v5963
      %v5986 = vadd.f32 %v5834, %v5968
      %v5987 = vadd.f32 %v5835, %v5973
      %v5988 = vadd.f32 %v5836, %v5978
      %s5989 = scalar_lea.vmem %s11, 1344
      %v5990 = vld [vmem:[%s5989] sm:$0xff]
      %v5991 = vld [vmem:[%s5989 + $0x8] sm:$0xff]
      %v5992 = vld [vmem:[%s5989 + $0x10] sm:$0xff]
      %v5993 = vld [vmem:[%s5989 + $0x18] sm:$0xff]
      %v5994 = vld [vmem:[%s5989 + $0x20] sm:$0xff]
      %v5995 = vld [vmem:[%s5989 + $0x28] sm:$0xff]
      %v5996 = vld [vmem:[%s5989 + $0x30] sm:$0xff]
      %v5997 = vld [vmem:[%s5989 + $0x38] sm:$0xff]
      %5998 = vrot.lane.b32.xlu0 %v2809, 99
      %v5999 = vpop.permute.xlu0 %5998
      %6000 = vrot.lane.b32.xlu0 %v2814, 99
      %v6001 = vpop.permute.xlu0 %6000
      %v6005 = vsel %vm2842, %v5990, 0
      %v6008 = vsel %vm2842, %v5991, 0
      %v6011 = vsel %vm2842, %v5992, 0
      %v6014 = vsel %vm2842, %v5993, 0
      %v6017 = vsel %vm2842, %v5994, 0
      %v6020 = vsel %vm2842, %v5995, 0
      %v6023 = vsel %vm2842, %v5996, 0
      %v6026 = vsel %vm2842, %v5997, 0
      %6028 = vmatprep.subr.mxu0 0.0
      %6029 = vmatpush1.msra.mxu0 %v5999
      %6030 = vmatprep.subr.mxu0 0.0
      %6031 = vmatpush1.msra.mxu0 %v6001
      %6032 = vmatprep.subr.mxu0 0.0
      %6033 = vmatpush1.msra.mxu0 0.0
      %6034 = vmatprep.subr.mxu0 0.0
      %6035 = vmatpush1.msra.mxu0 0.0
      %6036 = vmatprep.subr.mxu0 0.0
      %6037 = vmatpush1.msra.mxu0 0.0
      %6038 = vmatprep.subr.mxu0 0.0
      %6039 = vmatpush1.msra.mxu0 0.0
      %6040 = vmatprep.subr.mxu0 0.0
      %6041 = vmatpush1.msra.mxu0 0.0
      %6042 = vmatprep.subr.mxu0 0.0
      %6043 = vmatpush1.msra.mxu0 0.0
      %6044 = vmatprep.subr.mxu0 0.0
      %6045 = vmatpush1.msra.mxu0 0.0
      %6046 = vmatprep.subr.mxu0 0.0
      %6047 = vmatpush1.msra.mxu0 0.0
      %6048 = vmatprep.subr.mxu0 0.0
      %6049 = vmatpush1.msra.mxu0 0.0
      %6050 = vmatprep.subr.mxu0 0.0
      %6051 = vmatpush1.msra.mxu0 0.0
      %6052 = vmatprep.subr.mxu0 0.0
      %6053 = vmatpush1.msra.mxu0 0.0
      %6054 = vmatprep.subr.mxu0 0.0
      %6055 = vmatpush1.msra.mxu0 0.0
      %6056 = vmatprep.subr.mxu0 0.0
      %6057 = vmatpush1.msra.mxu0 0.0
      %6058 = vmatprep.subr.mxu0 0.0
      %6059 = vmatpush1.msra.mxu0 0.0
      %6060 = vmatprep.subr.mxu0 0.0
      %6061 = vmatpush1.msra.mxu0 0.0
      %6062 = vmatprep.subr.mxu0 0.0
      %6063 = vmatpush1.msra.mxu0 0.0
      %6064 = vmatprep.subr.mxu0 0.0
      %6065 = vmatpush1.msra.mxu0 0.0
      %6066 = vmatprep.subr.mxu0 0.0
      %6067 = vmatpush1.msra.mxu0 0.0
      %6068 = vmatprep.subr.mxu0 0.0
      %6069 = vmatpush1.msra.mxu0 0.0
      %6070 = vmatprep.subr.mxu0 0.0
      %6071 = vmatpush1.msra.mxu0 0.0
      %6072 = vmatprep.subr.mxu0 0.0
      %6073 = vmatpush1.msra.mxu0 0.0
      %6074 = vmatprep.subr.mxu0 0.0
      %6075 = vmatpush1.msra.mxu0 0.0
      %6076 = vmatprep.subr.mxu0 0.0
      %6077 = vmatpush1.msra.mxu0 0.0
      %6078 = vmatprep.subr.mxu0 0.0
      %6079 = vmatpush1.msra.mxu0 0.0
      %6080 = vmatprep.subr.mxu0 0.0
      %6081 = vmatpush1.msra.mxu0 0.0
      %6082 = vmatprep.subr.mxu0 0.0
      %6083 = vmatpush1.msra.mxu0 0.0
      %6084 = vmatprep.subr.mxu0 0.0
      %6085 = vmatpush1.msra.mxu0 0.0
      %6086 = vmatprep.subr.mxu0 0.0
      %6087 = vmatpush1.msra.mxu0 0.0
      %6088 = vmatprep.subr.mxu0 0.0
      %6089 = vmatpush1.msra.mxu0 0.0
      %6090 = vmatprep.subr.mxu0 0.0
      %6091 = vmatpush1.msra.mxu0 0.0
      %6092 = vmatprep.mubr.f32.mxu0 0.0
      %6093 = vmatmul.mubr.f32.gmra.mrb[0].mxu0 %v6005
      %v6094 = vpop.f32.mrb[0].mxu0
      %v6095 = vadd.f32 0.0, %v6094
      %v6096 = vpop.f32.mrb[0].mxu0
      %6097 = vmatprep.mubr.f32.mxu0 0.0
      %6098 = vmatmul.mubr.f32.gmra.mrb[0].mxu0 %v6008
      %v6099 = vpop.f32.mrb[0].mxu0
      %v6100 = vadd.f32 0.0, %v6099
      %v6101 = vpop.f32.mrb[0].mxu0
      %6102 = vmatprep.mubr.f32.mxu0 0.0
      %6103 = vmatmul.mubr.f32.gmra.mrb[0].mxu0 %v6011
      %v6104 = vpop.f32.mrb[0].mxu0
      %v6105 = vadd.f32 0.0, %v6104
      %v6106 = vpop.f32.mrb[0].mxu0
      %6107 = vmatprep.mubr.f32.mxu0 0.0
      %6108 = vmatmul.mubr.f32.gmra.mrb[0].mxu0 %v6014
      %v6109 = vpop.f32.mrb[0].mxu0
      %v6110 = vadd.f32 0.0, %v6109
      %v6111 = vpop.f32.mrb[0].mxu0
      %6112 = vmatprep.mubr.f32.mxu0 0.0
      %6113 = vmatmul.mubr.f32.gmra.mrb[0].mxu0 %v6017
      %v6114 = vpop.f32.mrb[0].mxu0
      %v6115 = vadd.f32 0.0, %v6114
      %v6116 = vpop.f32.mrb[0].mxu0
      %6117 = vmatprep.mubr.f32.mxu0 0.0
      %6118 = vmatmul.mubr.f32.gmra.mrb[0].mxu0 %v6020
      %v6119 = vpop.f32.mrb[0].mxu0
      %v6120 = vadd.f32 0.0, %v6119
      %v6121 = vpop.f32.mrb[0].mxu0
      %6122 = vmatprep.mubr.f32.mxu0 0.0
      %6123 = vmatmul.mubr.f32.gmra.mrb[0].mxu0 %v6023
      %v6124 = vpop.f32.mrb[0].mxu0
      %v6125 = vadd.f32 0.0, %v6124
      %v6126 = vpop.f32.mrb[0].mxu0
      %6127 = vmatprep.mubr.f32.mxu0 0.0
      %6128 = vmatmul.mubr.f32.gmra.mrb[0].mxu0 %v6026
      %v6129 = vpop.f32.mrb[0].mxu0
      %v6130 = vadd.f32 0.0, %v6129
      %v6131 = vpop.f32.mrb[0].mxu0
      %6132 = vdwg.mxu0
      %v6133 = vadd.f32 %v5981, %v6095
      %v6134 = vadd.f32 %v5982, %v6100
      %v6135 = vadd.f32 %v5983, %v6105
      %v6136 = vadd.f32 %v5984, %v6110
      %v6137 = vadd.f32 %v5985, %v6115
      %v6138 = vadd.f32 %v5986, %v6120
      %v6139 = vadd.f32 %v5987, %v6125
      %v6140 = vadd.f32 %v5988, %v6130
      %s6141 = scalar_lea.vmem %s11, 1408
      %v6142 = vld [vmem:[%s6141] sm:$0xff]
      %v6143 = vld [vmem:[%s6141 + $0x8] sm:$0xff]
      %v6144 = vld [vmem:[%s6141 + $0x10] sm:$0xff]
      %v6145 = vld [vmem:[%s6141 + $0x18] sm:$0xff]
      %v6146 = vld [vmem:[%s6141 + $0x20] sm:$0xff]
      %v6147 = vld [vmem:[%s6141 + $0x28] sm:$0xff]
      %v6148 = vld [vmem:[%s6141 + $0x30] sm:$0xff]
      %v6149 = vld [vmem:[%s6141 + $0x38] sm:$0xff]
      %6150 = vrot.lane.b32.xlu0 %v2809, 98
      %v6151 = vpop.permute.xlu0 %6150
      %6152 = vrot.lane.b32.xlu0 %v2814, 98
      %v6153 = vpop.permute.xlu0 %6152
      %v6157 = vsel %vm2842, %v6142, 0
      %v6160 = vsel %vm2842, %v6143, 0
      %v6163 = vsel %vm2842, %v6144, 0
      %v6166 = vsel %vm2842, %v6145, 0
      %v6169 = vsel %vm2842, %v6146, 0
      %v6172 = vsel %vm2842, %v6147, 0
      %v6175 = vsel %vm2842, %v6148, 0
      %v6178 = vsel %vm2842, %v6149, 0
      %6180 = vmatprep.subr.mxu0 0.0
      %6181 = vmatpush1.msra.mxu0 %v6151
      %6182 = vmatprep.subr.mxu0 0.0
      %6183 = vmatpush1.msra.mxu0 %v6153
      %6184 = vmatprep.subr.mxu0 0.0
      %6185 = vmatpush1.msra.mxu0 0.0
      %6186 = vmatprep.subr.mxu0 0.0
      %6187 = vmatpush1.msra.mxu0 0.0
      %6188 = vmatprep.subr.mxu0 0.0
      %6189 = vmatpush1.msra.mxu0 0.0
      %6190 = vmatprep.subr.mxu0 0.0
      %6191 = vmatpush1.msra.mxu0 0.0
      %6192 = vmatprep.subr.mxu0 0.0
      %6193 = vmatpush1.msra.mxu0 0.0
      %6194 = vmatprep.subr.mxu0 0.0
      %6195 = vmatpush1.msra.mxu0 0.0
      %6196 = vmatprep.subr.mxu0 0.0
      %6197 = vmatpush1.msra.mxu0 0.0
      %6198 = vmatprep.subr.mxu0 0.0
      %6199 = vmatpush1.msra.mxu0 0.0
      %6200 = vmatprep.subr.mxu0 0.0
      %6201 = vmatpush1.msra.mxu0 0.0
      %6202 = vmatprep.subr.mxu0 0.0
      %6203 = vmatpush1.msra.mxu0 0.0
      %6204 = vmatprep.subr.mxu0 0.0
      %6205 = vmatpush1.msra.mxu0 0.0
      %6206 = vmatprep.subr.mxu0 0.0
      %6207 = vmatpush1.msra.mxu0 0.0
      %6208 = vmatprep.subr.mxu0 0.0
      %6209 = vmatpush1.msra.mxu0 0.0
      %6210 = vmatprep.subr.mxu0 0.0
      %6211 = vmatpush1.msra.mxu0 0.0
      %6212 = vmatprep.subr.mxu0 0.0
      %6213 = vmatpush1.msra.mxu0 0.0
      %6214 = vmatprep.subr.mxu0 0.0
      %6215 = vmatpush1.msra.mxu0 0.0
      %6216 = vmatprep.subr.mxu0 0.0
      %6217 = vmatpush1.msra.mxu0 0.0
      %6218 = vmatprep.subr.mxu0 0.0
      %6219 = vmatpush1.msra.mxu0 0.0
      %6220 = vmatprep.subr.mxu0 0.0
      %6221 = vmatpush1.msra.mxu0 0.0
      %6222 = vmatprep.subr.mxu0 0.0
      %6223 = vmatpush1.msra.mxu0 0.0
      %6224 = vmatprep.subr.mxu0 0.0
      %6225 = vmatpush1.msra.mxu0 0.0
      %6226 = vmatprep.subr.mxu0 0.0
      %6227 = vmatpush1.msra.mxu0 0.0
      %6228 = vmatprep.subr.mxu0 0.0
      %6229 = vmatpush1.msra.mxu0 0.0
      %6230 = vmatprep.subr.mxu0 0.0
      %6231 = vmatpush1.msra.mxu0 0.0
      %6232 = vmatprep.subr.mxu0 0.0
      %6233 = vmatpush1.msra.mxu0 0.0
      %6234 = vmatprep.subr.mxu0 0.0
      %6235 = vmatpush1.msra.mxu0 0.0
      %6236 = vmatprep.subr.mxu0 0.0
      %6237 = vmatpush1.msra.mxu0 0.0
      %6238 = vmatprep.subr.mxu0 0.0
      %6239 = vmatpush1.msra.mxu0 0.0
      %6240 = vmatprep.subr.mxu0 0.0
      %6241 = vmatpush1.msra.mxu0 0.0
      %6242 = vmatprep.subr.mxu0 0.0
      %6243 = vmatpush1.msra.mxu0 0.0
      %6244 = vmatprep.mubr.f32.mxu0 0.0
      %6245 = vmatmul.mubr.f32.gmra.mrb[0].mxu0 %v6157
      %v6246 = vpop.f32.mrb[0].mxu0
      %v6247 = vadd.f32 0.0, %v6246
      %v6248 = vpop.f32.mrb[0].mxu0
      %6249 = vmatprep.mubr.f32.mxu0 0.0
      %6250 = vmatmul.mubr.f32.gmra.mrb[0].mxu0 %v6160
      %v6251 = vpop.f32.mrb[0].mxu0
      %v6252 = vadd.f32 0.0, %v6251
      %v6253 = vpop.f32.mrb[0].mxu0
      %6254 = vmatprep.mubr.f32.mxu0 0.0
      %6255 = vmatmul.mubr.f32.gmra.mrb[0].mxu0 %v6163
      %v6256 = vpop.f32.mrb[0].mxu0
      %v6257 = vadd.f32 0.0, %v6256
      %v6258 = vpop.f32.mrb[0].mxu0
      %6259 = vmatprep.mubr.f32.mxu0 0.0
      %6260 = vmatmul.mubr.f32.gmra.mrb[0].mxu0 %v6166
      %v6261 = vpop.f32.mrb[0].mxu0
      %v6262 = vadd.f32 0.0, %v6261
      %v6263 = vpop.f32.mrb[0].mxu0
      %6264 = vmatprep.mubr.f32.mxu0 0.0
      %6265 = vmatmul.mubr.f32.gmra.mrb[0].mxu0 %v6169
      %v6266 = vpop.f32.mrb[0].mxu0
      %v6267 = vadd.f32 0.0, %v6266
      %v6268 = vpop.f32.mrb[0].mxu0
      %6269 = vmatprep.mubr.f32.mxu0 0.0
      %6270 = vmatmul.mubr.f32.gmra.mrb[0].mxu0 %v6172
      %v6271 = vpop.f32.mrb[0].mxu0
      %v6272 = vadd.f32 0.0, %v6271
      %v6273 = vpop.f32.mrb[0].mxu0
      %6274 = vmatprep.mubr.f32.mxu0 0.0
      %6275 = vmatmul.mubr.f32.gmra.mrb[0].mxu0 %v6175
      %v6276 = vpop.f32.mrb[0].mxu0
      %v6277 = vadd.f32 0.0, %v6276
      %v6278 = vpop.f32.mrb[0].mxu0
      %6279 = vmatprep.mubr.f32.mxu0 0.0
      %6280 = vmatmul.mubr.f32.gmra.mrb[0].mxu0 %v6178
      %v6281 = vpop.f32.mrb[0].mxu0
      %v6282 = vadd.f32 0.0, %v6281
      %v6283 = vpop.f32.mrb[0].mxu0
      %6284 = vdwg.mxu0
      %v6285 = vadd.f32 %v6133, %v6247
      %v6286 = vadd.f32 %v6134, %v6252
      %v6287 = vadd.f32 %v6135, %v6257
      %v6288 = vadd.f32 %v6136, %v6262
      %v6289 = vadd.f32 %v6137, %v6267
      %v6290 = vadd.f32 %v6138, %v6272
      %v6291 = vadd.f32 %v6139, %v6277
      %v6292 = vadd.f32 %v6140, %v6282
      %s6293 = scalar_lea.vmem %s11, 1472
      %v6294 = vld [vmem:[%s6293] sm:$0xff]
      %v6295 = vld [vmem:[%s6293 + $0x8] sm:$0xff]
      %v6296 = vld [vmem:[%s6293 + $0x10] sm:$0xff]
      %v6297 = vld [vmem:[%s6293 + $0x18] sm:$0xff]
      %v6298 = vld [vmem:[%s6293 + $0x20] sm:$0xff]
      %v6299 = vld [vmem:[%s6293 + $0x28] sm:$0xff]
      %v6300 = vld [vmem:[%s6293 + $0x30] sm:$0xff]
      %v6301 = vld [vmem:[%s6293 + $0x38] sm:$0xff]
      %6302 = vrot.lane.b32.xlu0 %v2809, 97
      %v6303 = vpop.permute.xlu0 %6302
      %6304 = vrot.lane.b32.xlu0 %v2814, 97
      %v6305 = vpop.permute.xlu0 %6304
      %v6309 = vsel %vm2842, %v6294, 0
      %v6312 = vsel %vm2842, %v6295, 0
      %v6315 = vsel %vm2842, %v6296, 0
      %v6318 = vsel %vm2842, %v6297, 0
      %v6321 = vsel %vm2842, %v6298, 0
      %v6324 = vsel %vm2842, %v6299, 0
      %v6327 = vsel %vm2842, %v6300, 0
      %v6330 = vsel %vm2842, %v6301, 0
      %6332 = vmatprep.subr.mxu0 0.0
      %6333 = vmatpush1.msra.mxu0 %v6303
      %6334 = vmatprep.subr.mxu0 0.0
      %6335 = vmatpush1.msra.mxu0 %v6305
      %6336 = vmatprep.subr.mxu0 0.0
      %6337 = vmatpush1.msra.mxu0 0.0
      %6338 = vmatprep.subr.mxu0 0.0
      %6339 = vmatpush1.msra.mxu0 0.0
      %6340 = vmatprep.subr.mxu0 0.0
      %6341 = vmatpush1.msra.mxu0 0.0
      %6342 = vmatprep.subr.mxu0 0.0
      %6343 = vmatpush1.msra.mxu0 0.0
      %6344 = vmatprep.subr.mxu0 0.0
      %6345 = vmatpush1.msra.mxu0 0.0
      %6346 = vmatprep.subr.mxu0 0.0
      %6347 = vmatpush1.msra.mxu0 0.0
      %6348 = vmatprep.subr.mxu0 0.0
      %6349 = vmatpush1.msra.mxu0 0.0
      %6350 = vmatprep.subr.mxu0 0.0
      %6351 = vmatpush1.msra.mxu0 0.0
      %6352 = vmatprep.subr.mxu0 0.0
      %6353 = vmatpush1.msra.mxu0 0.0
      %6354 = vmatprep.subr.mxu0 0.0
      %6355 = vmatpush1.msra.mxu0 0.0
      %6356 = vmatprep.subr.mxu0 0.0
      %6357 = vmatpush1.msra.mxu0 0.0
      %6358 = vmatprep.subr.mxu0 0.0
      %6359 = vmatpush1.msra.mxu0 0.0
      %6360 = vmatprep.subr.mxu0 0.0
      %6361 = vmatpush1.msra.mxu0 0.0
      %6362 = vmatprep.subr.mxu0 0.0
      %6363 = vmatpush1.msra.mxu0 0.0
      %6364 = vmatprep.subr.mxu0 0.0
      %6365 = vmatpush1.msra.mxu0 0.0
      %6366 = vmatprep.subr.mxu0 0.0
      %6367 = vmatpush1.msra.mxu0 0.0
      %6368 = vmatprep.subr.mxu0 0.0
      %6369 = vmatpush1.msra.mxu0 0.0
      %6370 = vmatprep.subr.mxu0 0.0
      %6371 = vmatpush1.msra.mxu0 0.0
      %6372 = vmatprep.subr.mxu0 0.0
      %6373 = vmatpush1.msra.mxu0 0.0
      %6374 = vmatprep.subr.mxu0 0.0
      %6375 = vmatpush1.msra.mxu0 0.0
      %6376 = vmatprep.subr.mxu0 0.0
      %6377 = vmatpush1.msra.mxu0 0.0
      %6378 = vmatprep.subr.mxu0 0.0
      %6379 = vmatpush1.msra.mxu0 0.0
      %6380 = vmatprep.subr.mxu0 0.0
      %6381 = vmatpush1.msra.mxu0 0.0
      %6382 = vmatprep.subr.mxu0 0.0
      %6383 = vmatpush1.msra.mxu0 0.0
      %6384 = vmatprep.subr.mxu0 0.0
      %6385 = vmatpush1.msra.mxu0 0.0
      %6386 = vmatprep.subr.mxu0 0.0
      %6387 = vmatpush1.msra.mxu0 0.0
      %6388 = vmatprep.subr.mxu0 0.0
      %6389 = vmatpush1.msra.mxu0 0.0
      %6390 = vmatprep.subr.mxu0 0.0
      %6391 = vmatpush1.msra.mxu0 0.0
      %6392 = vmatprep.subr.mxu0 0.0
      %6393 = vmatpush1.msra.mxu0 0.0
      %6394 = vmatprep.subr.mxu0 0.0
      %6395 = vmatpush1.msra.mxu0 0.0
      %6396 = vmatprep.mubr.f32.mxu0 0.0
      %6397 = vmatmul.mubr.f32.gmra.mrb[0].mxu0 %v6309
      %v6398 = vpop.f32.mrb[0].mxu0
      %v6399 = vadd.f32 0.0, %v6398
      %v6400 = vpop.f32.mrb[0].mxu0
      %6401 = vmatprep.mubr.f32.mxu0 0.0
      %6402 = vmatmul.mubr.f32.gmra.mrb[0].mxu0 %v6312
      %v6403 = vpop.f32.mrb[0].mxu0
      %v6404 = vadd.f32 0.0, %v6403
      %v6405 = vpop.f32.mrb[0].mxu0
      %6406 = vmatprep.mubr.f32.mxu0 0.0
      %6407 = vmatmul.mubr.f32.gmra.mrb[0].mxu0 %v6315
      %v6408 = vpop.f32.mrb[0].mxu0
      %v6409 = vadd.f32 0.0, %v6408
      %v6410 = vpop.f32.mrb[0].mxu0
      %6411 = vmatprep.mubr.f32.mxu0 0.0
      %6412 = vmatmul.mubr.f32.gmra.mrb[0].mxu0 %v6318
      %v6413 = vpop.f32.mrb[0].mxu0
      %v6414 = vadd.f32 0.0, %v6413
      %v6415 = vpop.f32.mrb[0].mxu0
      %6416 = vmatprep.mubr.f32.mxu0 0.0
      %6417 = vmatmul.mubr.f32.gmra.mrb[0].mxu0 %v6321
      %v6418 = vpop.f32.mrb[0].mxu0
      %v6419 = vadd.f32 0.0, %v6418
      %v6420 = vpop.f32.mrb[0].mxu0
      %6421 = vmatprep.mubr.f32.mxu0 0.0
      %6422 = vmatmul.mubr.f32.gmra.mrb[0].mxu0 %v6324
      %v6423 = vpop.f32.mrb[0].mxu0
      %v6424 = vadd.f32 0.0, %v6423
      %v6425 = vpop.f32.mrb[0].mxu0
      %6426 = vmatprep.mubr.f32.mxu0 0.0
      %6427 = vmatmul.mubr.f32.gmra.mrb[0].mxu0 %v6327
      %v6428 = vpop.f32.mrb[0].mxu0
      %v6429 = vadd.f32 0.0, %v6428
      %v6430 = vpop.f32.mrb[0].mxu0
      %6431 = vmatprep.mubr.f32.mxu0 0.0
      %6432 = vmatmul.mubr.f32.gmra.mrb[0].mxu0 %v6330
      %v6433 = vpop.f32.mrb[0].mxu0
      %v6434 = vadd.f32 0.0, %v6433
      %v6435 = vpop.f32.mrb[0].mxu0
      %6436 = vdwg.mxu0
      %v6437 = vadd.f32 %v6285, %v6399
      %v6438 = vadd.f32 %v6286, %v6404
      %v6439 = vadd.f32 %v6287, %v6409
      %v6440 = vadd.f32 %v6288, %v6414
      %v6441 = vadd.f32 %v6289, %v6419
      %v6442 = vadd.f32 %v6290, %v6424
      %v6443 = vadd.f32 %v6291, %v6429
      %v6444 = vadd.f32 %v6292, %v6434
      %s6445 = scalar_lea.vmem %s11, 1536
      %v6446 = vld [vmem:[%s6445] sm:$0xff]
      %v6447 = vld [vmem:[%s6445 + $0x8] sm:$0xff]
      %v6448 = vld [vmem:[%s6445 + $0x10] sm:$0xff]
      %v6449 = vld [vmem:[%s6445 + $0x18] sm:$0xff]
      %v6450 = vld [vmem:[%s6445 + $0x20] sm:$0xff]
      %v6451 = vld [vmem:[%s6445 + $0x28] sm:$0xff]
      %v6452 = vld [vmem:[%s6445 + $0x30] sm:$0xff]
      %v6453 = vld [vmem:[%s6445 + $0x38] sm:$0xff]
      %6454 = vrot.lane.b32.xlu0 %v2809, 96
      %v6455 = vpop.permute.xlu0 %6454
      %6456 = vrot.lane.b32.xlu0 %v2814, 96
      %v6457 = vpop.permute.xlu0 %6456
      %v6461 = vsel %vm2842, %v6446, 0
      %v6464 = vsel %vm2842, %v6447, 0
      %v6467 = vsel %vm2842, %v6448, 0
      %v6470 = vsel %vm2842, %v6449, 0
      %v6473 = vsel %vm2842, %v6450, 0
      %v6476 = vsel %vm2842, %v6451, 0
      %v6479 = vsel %vm2842, %v6452, 0
      %v6482 = vsel %vm2842, %v6453, 0
      %6484 = vmatprep.subr.mxu0 0.0
      %6485 = vmatpush1.msra.mxu0 %v6455
      %6486 = vmatprep.subr.mxu0 0.0
      %6487 = vmatpush1.msra.mxu0 %v6457
      %6488 = vmatprep.subr.mxu0 0.0
      %6489 = vmatpush1.msra.mxu0 0.0
      %6490 = vmatprep.subr.mxu0 0.0
      %6491 = vmatpush1.msra.mxu0 0.0
      %6492 = vmatprep.subr.mxu0 0.0
      %6493 = vmatpush1.msra.mxu0 0.0
      %6494 = vmatprep.subr.mxu0 0.0
      %6495 = vmatpush1.msra.mxu0 0.0
      %6496 = vmatprep.subr.mxu0 0.0
      %6497 = vmatpush1.msra.mxu0 0.0
      %6498 = vmatprep.subr.mxu0 0.0
      %6499 = vmatpush1.msra.mxu0 0.0
      %6500 = vmatprep.subr.mxu0 0.0
      %6501 = vmatpush1.msra.mxu0 0.0
      %6502 = vmatprep.subr.mxu0 0.0
      %6503 = vmatpush1.msra.mxu0 0.0
      %6504 = vmatprep.subr.mxu0 0.0
      %6505 = vmatpush1.msra.mxu0 0.0
      %6506 = vmatprep.subr.mxu0 0.0
      %6507 = vmatpush1.msra.mxu0 0.0
      %6508 = vmatprep.subr.mxu0 0.0
      %6509 = vmatpush1.msra.mxu0 0.0
      %6510 = vmatprep.subr.mxu0 0.0
      %6511 = vmatpush1.msra.mxu0 0.0
      %6512 = vmatprep.subr.mxu0 0.0
      %6513 = vmatpush1.msra.mxu0 0.0
      %6514 = vmatprep.subr.mxu0 0.0
      %6515 = vmatpush1.msra.mxu0 0.0
      %6516 = vmatprep.subr.mxu0 0.0
      %6517 = vmatpush1.msra.mxu0 0.0
      %6518 = vmatprep.subr.mxu0 0.0
      %6519 = vmatpush1.msra.mxu0 0.0
      %6520 = vmatprep.subr.mxu0 0.0
      %6521 = vmatpush1.msra.mxu0 0.0
      %6522 = vmatprep.subr.mxu0 0.0
      %6523 = vmatpush1.msra.mxu0 0.0
      %6524 = vmatprep.subr.mxu0 0.0
      %6525 = vmatpush1.msra.mxu0 0.0
      %6526 = vmatprep.subr.mxu0 0.0
      %6527 = vmatpush1.msra.mxu0 0.0
      %6528 = vmatprep.subr.mxu0 0.0
      %6529 = vmatpush1.msra.mxu0 0.0
      %6530 = vmatprep.subr.mxu0 0.0
      %6531 = vmatpush1.msra.mxu0 0.0
      %6532 = vmatprep.subr.mxu0 0.0
      %6533 = vmatpush1.msra.mxu0 0.0
      %6534 = vmatprep.subr.mxu0 0.0
      %6535 = vmatpush1.msra.mxu0 0.0
      %6536 = vmatprep.subr.mxu0 0.0
      %6537 = vmatpush1.msra.mxu0 0.0
      %6538 = vmatprep.subr.mxu0 0.0
      %6539 = vmatpush1.msra.mxu0 0.0
      %6540 = vmatprep.subr.mxu0 0.0
      %6541 = vmatpush1.msra.mxu0 0.0
      %6542 = vmatprep.subr.mxu0 0.0
      %6543 = vmatpush1.msra.mxu0 0.0
      %6544 = vmatprep.subr.mxu0 0.0
      %6545 = vmatpush1.msra.mxu0 0.0
      %6546 = vmatprep.subr.mxu0 0.0
      %6547 = vmatpush1.msra.mxu0 0.0
      %6548 = vmatprep.mubr.f32.mxu0 0.0
      %6549 = vmatmul.mubr.f32.gmra.mrb[0].mxu0 %v6461
      %v6550 = vpop.f32.mrb[0].mxu0
      %v6551 = vadd.f32 0.0, %v6550
      %v6552 = vpop.f32.mrb[0].mxu0
      %6553 = vmatprep.mubr.f32.mxu0 0.0
      %6554 = vmatmul.mubr.f32.gmra.mrb[0].mxu0 %v6464
      %v6555 = vpop.f32.mrb[0].mxu0
      %v6556 = vadd.f32 0.0, %v6555
      %v6557 = vpop.f32.mrb[0].mxu0
      %6558 = vmatprep.mubr.f32.mxu0 0.0
      %6559 = vmatmul.mubr.f32.gmra.mrb[0].mxu0 %v6467
      %v6560 = vpop.f32.mrb[0].mxu0
      %v6561 = vadd.f32 0.0, %v6560
      %v6562 = vpop.f32.mrb[0].mxu0
      %6563 = vmatprep.mubr.f32.mxu0 0.0
      %6564 = vmatmul.mubr.f32.gmra.mrb[0].mxu0 %v6470
      %v6565 = vpop.f32.mrb[0].mxu0
      %v6566 = vadd.f32 0.0, %v6565
      %v6567 = vpop.f32.mrb[0].mxu0
      %6568 = vmatprep.mubr.f32.mxu0 0.0
      %6569 = vmatmul.mubr.f32.gmra.mrb[0].mxu0 %v6473
      %v6570 = vpop.f32.mrb[0].mxu0
      %v6571 = vadd.f32 0.0, %v6570
      %v6572 = vpop.f32.mrb[0].mxu0
      %6573 = vmatprep.mubr.f32.mxu0 0.0
      %6574 = vmatmul.mubr.f32.gmra.mrb[0].mxu0 %v6476
      %v6575 = vpop.f32.mrb[0].mxu0
      %v6576 = vadd.f32 0.0, %v6575
      %v6577 = vpop.f32.mrb[0].mxu0
      %6578 = vmatprep.mubr.f32.mxu0 0.0
      %6579 = vmatmul.mubr.f32.gmra.mrb[0].mxu0 %v6479
      %v6580 = vpop.f32.mrb[0].mxu0
      %v6581 = vadd.f32 0.0, %v6580
      %v6582 = vpop.f32.mrb[0].mxu0
      %6583 = vmatprep.mubr.f32.mxu0 0.0
      %6584 = vmatmul.mubr.f32.gmra.mrb[0].mxu0 %v6482
      %v6585 = vpop.f32.mrb[0].mxu0
      %v6586 = vadd.f32 0.0, %v6585
      %v6587 = vpop.f32.mrb[0].mxu0
      %6588 = vdwg.mxu0
      %v6589 = vadd.f32 %v6437, %v6551
      %v6590 = vadd.f32 %v6438, %v6556
      %v6591 = vadd.f32 %v6439, %v6561
      %v6592 = vadd.f32 %v6440, %v6566
      %v6593 = vadd.f32 %v6441, %v6571
      %v6594 = vadd.f32 %v6442, %v6576
      %v6595 = vadd.f32 %v6443, %v6581
      %v6596 = vadd.f32 %v6444, %v6586
      %v6597 = vld [vmem:[%s12] sm:$0xff]
      %v6598 = vld [vmem:[%s12 + $0x8] sm:$0xff]
      %v6599 = vld [vmem:[%s12 + $0x10] sm:$0xff]
      %v6600 = vld [vmem:[%s12 + $0x18] sm:$0xff]
      %v6601 = vld [vmem:[%s12 + $0x20] sm:$0xff]
      %v6602 = vld [vmem:[%s12 + $0x28] sm:$0xff]
      %v6603 = vld [vmem:[%s12 + $0x30] sm:$0xff]
      %v6604 = vld [vmem:[%s12 + $0x38] sm:$0xff]
      %6606 = vset.pattern.permute.xlu0 0
      %6607 = vperm.xlu0 %6606, %v6597
      %v6608 = vpop.permute.xlu0 %6607
      %6611 = vset.pattern.permute.xlu0 0
      %6612 = vperm.xlu0 %6611, %v6598
      %v6613 = vpop.permute.xlu0 %6612
      %6616 = vset.pattern.permute.xlu0 0
      %6617 = vperm.xlu0 %6616, %v6599
      %v6618 = vpop.permute.xlu0 %6617
      %6621 = vset.pattern.permute.xlu0 0
      %6622 = vperm.xlu0 %6621, %v6600
      %v6623 = vpop.permute.xlu0 %6622
      %6626 = vset.pattern.permute.xlu0 0
      %6627 = vperm.xlu0 %6626, %v6601
      %v6628 = vpop.permute.xlu0 %6627
      %6631 = vset.pattern.permute.xlu0 0
      %6632 = vperm.xlu0 %6631, %v6602
      %v6633 = vpop.permute.xlu0 %6632
      %6636 = vset.pattern.permute.xlu0 0
      %6637 = vperm.xlu0 %6636, %v6603
      %v6638 = vpop.permute.xlu0 %6637
      %6641 = vset.pattern.permute.xlu0 0
      %6642 = vperm.xlu0 %6641, %v6604
      %v6643 = vpop.permute.xlu0 %6642
      %v6645 = vmul.f32 %v6589, %v6608
      %v6646 = vmul.f32 %v6590, %v6613
      %v6647 = vmul.f32 %v6591, %v6618
      %v6648 = vmul.f32 %v6592, %v6623
      %v6649 = vmul.f32 %v6593, %v6628
      %v6650 = vmul.f32 %v6594, %v6633
      %v6651 = vmul.f32 %v6595, %v6638
      %v6652 = vmul.f32 %v6596, %v6643
      %v6653 = vld [vmem:[%s13] sm:$0xff]
      %v6654 = vld [vmem:[%s13 + $0x8] sm:$0xff]
      %v6655 = vld [vmem:[%s13 + $0x10] sm:$0xff]
      %v6656 = vld [vmem:[%s13 + $0x18] sm:$0xff]
      %v6657 = vld [vmem:[%s13 + $0x20] sm:$0xff]
      %v6658 = vld [vmem:[%s13 + $0x28] sm:$0xff]
      %v6659 = vld [vmem:[%s13 + $0x30] sm:$0xff]
      %v6660 = vld [vmem:[%s13 + $0x38] sm:$0xff]
      %6662 = vset.pattern.permute.xlu0 0
      %6663 = vperm.xlu0 %6662, %v6653
      %v6664 = vpop.permute.xlu0 %6663
      %6667 = vset.pattern.permute.xlu0 0
      %6668 = vperm.xlu0 %6667, %v6654
      %v6669 = vpop.permute.xlu0 %6668
      %6672 = vset.pattern.permute.xlu0 0
      %6673 = vperm.xlu0 %6672, %v6655
      %v6674 = vpop.permute.xlu0 %6673
      %6677 = vset.pattern.permute.xlu0 0
      %6678 = vperm.xlu0 %6677, %v6656
      %v6679 = vpop.permute.xlu0 %6678
      %6682 = vset.pattern.permute.xlu0 0
      %6683 = vperm.xlu0 %6682, %v6657
      %v6684 = vpop.permute.xlu0 %6683
      %6687 = vset.pattern.permute.xlu0 0
      %6688 = vperm.xlu0 %6687, %v6658
      %v6689 = vpop.permute.xlu0 %6688
      %6692 = vset.pattern.permute.xlu0 0
      %6693 = vperm.xlu0 %6692, %v6659
      %v6694 = vpop.permute.xlu0 %6693
      %6697 = vset.pattern.permute.xlu0 0
      %6698 = vperm.xlu0 %6697, %v6660
      %v6699 = vpop.permute.xlu0 %6698
      %v6701 = vadd.f32 %v6645, %v6664
      %v6702 = vadd.f32 %v6646, %v6669
      %v6703 = vadd.f32 %v6647, %v6674
      %v6704 = vadd.f32 %v6648, %v6679
      %v6705 = vadd.f32 %v6649, %v6684
      %v6706 = vadd.f32 %v6650, %v6689
      %v6707 = vadd.f32 %v6651, %v6694
      %v6708 = vadd.f32 %v6652, %v6699
      %v6709 = vld [vmem:[%s15] sm:$0xff]
      %v6710 = vld [vmem:[%s15 + $0x8] sm:$0xff]
      %v6711 = vld [vmem:[%s15 + $0x10] sm:$0xff]
      %v6712 = vld [vmem:[%s15 + $0x18] sm:$0xff]
      %v6713 = vld [vmem:[%s15 + $0x20] sm:$0xff]
      %v6714 = vld [vmem:[%s15 + $0x28] sm:$0xff]
      %v6715 = vld [vmem:[%s15 + $0x30] sm:$0xff]
      %v6716 = vld [vmem:[%s15 + $0x38] sm:$0xff]
      %v6717 = vld [vmem:[%s15 + $0x40] sm:$0xff]
      %v6718 = vld [vmem:[%s15 + $0x48] sm:$0xff]
      %v6719 = vld [vmem:[%s15 + $0x50] sm:$0xf]
      %v6720 = vld [vmem:[%s14] sm:$0xff]
      %v6721 = vld [vmem:[%s14 + $0x8] sm:$0xff]
      %v6722 = vld [vmem:[%s14 + $0x10] sm:$0xff]
      %v6723 = vld [vmem:[%s14 + $0x18] sm:$0xff]
      %v6724 = vld [vmem:[%s14 + $0x20] sm:$0xff]
      %v6725 = vld [vmem:[%s14 + $0x28] sm:$0xff]
      %v6726 = vld [vmem:[%s14 + $0x30] sm:$0xff]
      %v6727 = vld [vmem:[%s14 + $0x38] sm:$0xff]
      %v6728 = vld [vmem:[%s14 + $0x40] sm:$0xff]
      %v6729 = vld [vmem:[%s14 + $0x48] sm:$0xff]
      %v6730 = vld [vmem:[%s14 + $0x50] sm:$0xf]
      %vm6731 = vcmask 523264
      %v6733 = vsel %vm6731, %v6720, 0
      %v6736 = vsel %vm6731, %v6721, 0
      %v6739 = vsel %vm6731, %v6722, 0
      %v6742 = vsel %vm6731, %v6723, 0
      %v6745 = vsel %vm6731, %v6724, 0
      %v6748 = vsel %vm6731, %v6725, 0
      %v6751 = vsel %vm6731, %v6726, 0
      %v6754 = vsel %vm6731, %v6727, 0
      %v6757 = vsel %vm6731, %v6728, 0
      %v6760 = vsel %vm6731, %v6729, 0
      %v6763 = vsel %vm6731, %v6730, 0
      %6765 = vmatprep.subr.mxu0 0.0
      %6766 = vmatpush1.msra.mxu0 %v6701
      %6767 = vmatprep.subr.mxu0 0.0
      %6768 = vmatpush1.msra.mxu0 %v6702
      %6769 = vmatprep.subr.mxu0 0.0
      %6770 = vmatpush1.msra.mxu0 %v6703
      %6771 = vmatprep.subr.mxu0 0.0
      %6772 = vmatpush1.msra.mxu0 %v6704
      %6773 = vmatprep.subr.mxu0 0.0
      %6774 = vmatpush1.msra.mxu0 %v6705
      %6775 = vmatprep.subr.mxu0 0.0
      %6776 = vmatpush1.msra.mxu0 %v6706
      %6777 = vmatprep.subr.mxu0 0.0
      %6778 = vmatpush1.msra.mxu0 %v6707
      %6779 = vmatprep.subr.mxu0 0.0
      %6780 = vmatpush1.msra.mxu0 %v6708
      %6781 = vmatprep.subr.mxu0 0.0
      %6782 = vmatpush1.msra.mxu0 0.0
      %6783 = vmatprep.subr.mxu0 0.0
      %6784 = vmatpush1.msra.mxu0 0.0
      %6785 = vmatprep.subr.mxu0 0.0
      %6786 = vmatpush1.msra.mxu0 0.0
      %6787 = vmatprep.subr.mxu0 0.0
      %6788 = vmatpush1.msra.mxu0 0.0
      %6789 = vmatprep.subr.mxu0 0.0
      %6790 = vmatpush1.msra.mxu0 0.0
      %6791 = vmatprep.subr.mxu0 0.0
      %6792 = vmatpush1.msra.mxu0 0.0
      %6793 = vmatprep.subr.mxu0 0.0
      %6794 = vmatpush1.msra.mxu0 0.0
      %6795 = vmatprep.subr.mxu0 0.0
      %6796 = vmatpush1.msra.mxu0 0.0
      %6797 = vmatprep.subr.mxu0 0.0
      %6798 = vmatpush1.msra.mxu0 0.0
      %6799 = vmatprep.subr.mxu0 0.0
      %6800 = vmatpush1.msra.mxu0 0.0
      %6801 = vmatprep.subr.mxu0 0.0
      %6802 = vmatpush1.msra.mxu0 0.0
      %6803 = vmatprep.subr.mxu0 0.0
      %6804 = vmatpush1.msra.mxu0 0.0
      %6805 = vmatprep.subr.mxu0 0.0
      %6806 = vmatpush1.msra.mxu0 0.0
      %6807 = vmatprep.subr.mxu0 0.0
      %6808 = vmatpush1.msra.mxu0 0.0
      %6809 = vmatprep.subr.mxu0 0.0
      %6810 = vmatpush1.msra.mxu0 0.0
      %6811 = vmatprep.subr.mxu0 0.0
      %6812 = vmatpush1.msra.mxu0 0.0
      %6813 = vmatprep.subr.mxu0 0.0
      %6814 = vmatpush1.msra.mxu0 0.0
      %6815 = vmatprep.subr.mxu0 0.0
      %6816 = vmatpush1.msra.mxu0 0.0
      %6817 = vmatprep.subr.mxu0 0.0
      %6818 = vmatpush1.msra.mxu0 0.0
      %6819 = vmatprep.subr.mxu0 0.0
      %6820 = vmatpush1.msra.mxu0 0.0
      %6821 = vmatprep.subr.mxu0 0.0
      %6822 = vmatpush1.msra.mxu0 0.0
      %6823 = vmatprep.subr.mxu0 0.0
      %6824 = vmatpush1.msra.mxu0 0.0
      %6825 = vmatprep.subr.mxu0 0.0
      %6826 = vmatpush1.msra.mxu0 0.0
      %6827 = vmatprep.subr.mxu0 0.0
      %6828 = vmatpush1.msra.mxu0 0.0
      %6829 = vmatprep.mubr.f32.mxu0 0.0
      %6830 = vmatmul.mubr.f32.gmra.mrb[0].mxu0 %v6733
      %v6831 = vpop.f32.mrb[0].mxu0
      %v6832 = vadd.f32 0.0, %v6831
      %v6833 = vpop.f32.mrb[0].mxu0
      %6834 = vmatprep.mubr.f32.mxu0 0.0
      %6835 = vmatmul.mubr.f32.gmra.mrb[0].mxu0 %v6736
      %v6836 = vpop.f32.mrb[0].mxu0
      %v6837 = vadd.f32 0.0, %v6836
      %v6838 = vpop.f32.mrb[0].mxu0
      %6839 = vmatprep.mubr.f32.mxu0 0.0
      %6840 = vmatmul.mubr.f32.gmra.mrb[0].mxu0 %v6739
      %v6841 = vpop.f32.mrb[0].mxu0
      %v6842 = vadd.f32 0.0, %v6841
      %v6843 = vpop.f32.mrb[0].mxu0
      %6844 = vmatprep.mubr.f32.mxu0 0.0
      %6845 = vmatmul.mubr.f32.gmra.mrb[0].mxu0 %v6742
      %v6846 = vpop.f32.mrb[0].mxu0
      %v6847 = vadd.f32 0.0, %v6846
      %v6848 = vpop.f32.mrb[0].mxu0
      %6849 = vmatprep.mubr.f32.mxu0 0.0
      %6850 = vmatmul.mubr.f32.gmra.mrb[0].mxu0 %v6745
      %v6851 = vpop.f32.mrb[0].mxu0
      %v6852 = vadd.f32 0.0, %v6851
      %v6853 = vpop.f32.mrb[0].mxu0
      %6854 = vmatprep.mubr.f32.mxu0 0.0
      %6855 = vmatmul.mubr.f32.gmra.mrb[0].mxu0 %v6748
      %v6856 = vpop.f32.mrb[0].mxu0
      %v6857 = vadd.f32 0.0, %v6856
      %v6858 = vpop.f32.mrb[0].mxu0
      %6859 = vmatprep.mubr.f32.mxu0 0.0
      %6860 = vmatmul.mubr.f32.gmra.mrb[0].mxu0 %v6751
      %v6861 = vpop.f32.mrb[0].mxu0
      %v6862 = vadd.f32 0.0, %v6861
      %v6863 = vpop.f32.mrb[0].mxu0
      %6864 = vmatprep.mubr.f32.mxu0 0.0
      %6865 = vmatmul.mubr.f32.gmra.mrb[0].mxu0 %v6754
      %v6866 = vpop.f32.mrb[0].mxu0
      %v6867 = vadd.f32 0.0, %v6866
      %v6868 = vpop.f32.mrb[0].mxu0
      %6869 = vmatprep.mubr.f32.mxu0 0.0
      %6870 = vmatmul.mubr.f32.gmra.mrb[0].mxu0 %v6757
      %v6871 = vpop.f32.mrb[0].mxu0
      %v6872 = vadd.f32 0.0, %v6871
      %v6873 = vpop.f32.mrb[0].mxu0
      %6874 = vmatprep.mubr.f32.mxu0 0.0
      %6875 = vmatmul.mubr.f32.gmra.mrb[0].mxu0 %v6760
      %v6876 = vpop.f32.mrb[0].mxu0
      %v6877 = vadd.f32 0.0, %v6876
      %v6878 = vpop.f32.mrb[0].mxu0
      %6879 = vmatprep.mubr.f32.mxu0 0.0
      %6880 = vmatmul.mubr.f32.gmra.mrb[0].mxu0 %v6763
      %v6881 = vpop.f32.mrb[0].mxu0
      %v6882 = vadd.f32 0.0, %v6881
      %v6883 = vpop.f32.mrb[0].mxu0
      %6884 = vdwg.mxu0
      %v6885 = vadd.f32 %v6709, %v6832
      %v6886 = vadd.f32 %v6710, %v6837
      %v6887 = vadd.f32 %v6711, %v6842
      %v6888 = vadd.f32 %v6712, %v6847
      %v6889 = vadd.f32 %v6713, %v6852
      %v6890 = vadd.f32 %v6714, %v6857
      %v6891 = vadd.f32 %v6715, %v6862
      %v6892 = vadd.f32 %v6716, %v6867
      %v6893 = vadd.f32 %v6717, %v6872
      %v6894 = vadd.f32 %v6718, %v6877
      %v6895 = vadd.f32 %v6719, %v6882
      %s6896 = scalar_lea.vmem %s14, 88
      %v6897 = vld [vmem:[%s6896] sm:$0xff]
      %v6898 = vld [vmem:[%s6896 + $0x8] sm:$0xff]
      %v6899 = vld [vmem:[%s6896 + $0x10] sm:$0xff]
      %v6900 = vld [vmem:[%s6896 + $0x18] sm:$0xff]
      %v6901 = vld [vmem:[%s6896 + $0x20] sm:$0xff]
      %v6902 = vld [vmem:[%s6896 + $0x28] sm:$0xff]
      %v6903 = vld [vmem:[%s6896 + $0x30] sm:$0xff]
      %v6904 = vld [vmem:[%s6896 + $0x38] sm:$0xff]
      %v6905 = vld [vmem:[%s6896 + $0x40] sm:$0xff]
      %v6906 = vld [vmem:[%s6896 + $0x48] sm:$0xff]
      %v6907 = vld [vmem:[%s6896 + $0x50] sm:$0xf]
      %6916 = vrot.lane.b32.xlu0 %v6701, 127
      %v6917 = vpop.permute.xlu0 %6916
      %6918 = vrot.lane.b32.xlu0 %v6702, 127
      %v6919 = vpop.permute.xlu0 %6918
      %6920 = vrot.lane.b32.xlu0 %v6703, 127
      %v6921 = vpop.permute.xlu0 %6920
      %6922 = vrot.lane.b32.xlu0 %v6704, 127
      %v6923 = vpop.permute.xlu0 %6922
      %6924 = vrot.lane.b32.xlu0 %v6705, 127
      %v6925 = vpop.permute.xlu0 %6924
      %6926 = vrot.lane.b32.xlu0 %v6706, 127
      %v6927 = vpop.permute.xlu0 %6926
      %6928 = vrot.lane.b32.xlu0 %v6707, 127
      %v6929 = vpop.permute.xlu0 %6928
      %6930 = vrot.lane.b32.xlu0 %v6708, 127
      %v6931 = vpop.permute.xlu0 %6930
      %v6941 = vsel %vm6731, %v6897, 0
      %v6944 = vsel %vm6731, %v6898, 0
      %v6947 = vsel %vm6731, %v6899, 0
      %v6950 = vsel %vm6731, %v6900, 0
      %v6953 = vsel %vm6731, %v6901, 0
      %v6956 = vsel %vm6731, %v6902, 0
      %v6959 = vsel %vm6731, %v6903, 0
      %v6962 = vsel %vm6731, %v6904, 0
      %v6965 = vsel %vm6731, %v6905, 0
      %v6968 = vsel %vm6731, %v6906, 0
      %v6971 = vsel %vm6731, %v6907, 0
      %6973 = vmatprep.subr.mxu0 0.0
      %6974 = vmatpush1.msra.mxu0 %v6917
      %6975 = vmatprep.subr.mxu0 0.0
      %6976 = vmatpush1.msra.mxu0 %v6919
      %6977 = vmatprep.subr.mxu0 0.0
      %6978 = vmatpush1.msra.mxu0 %v6921
      %6979 = vmatprep.subr.mxu0 0.0
      %6980 = vmatpush1.msra.mxu0 %v6923
      %6981 = vmatprep.subr.mxu0 0.0
      %6982 = vmatpush1.msra.mxu0 %v6925
      %6983 = vmatprep.subr.mxu0 0.0
      %6984 = vmatpush1.msra.mxu0 %v6927
      %6985 = vmatprep.subr.mxu0 0.0
      %6986 = vmatpush1.msra.mxu0 %v6929
      %6987 = vmatprep.subr.mxu0 0.0
      %6988 = vmatpush1.msra.mxu0 %v6931
      %6989 = vmatprep.subr.mxu0 0.0
      %6990 = vmatpush1.msra.mxu0 0.0
      %6991 = vmatprep.subr.mxu0 0.0
      %6992 = vmatpush1.msra.mxu0 0.0
      %6993 = vmatprep.subr.mxu0 0.0
      %6994 = vmatpush1.msra.mxu0 0.0
      %6995 = vmatprep.subr.mxu0 0.0
      %6996 = vmatpush1.msra.mxu0 0.0
      %6997 = vmatprep.subr.mxu0 0.0
      %6998 = vmatpush1.msra.mxu0 0.0
      %6999 = vmatprep.subr.mxu0 0.0
      %7000 = vmatpush1.msra.mxu0 0.0
      %7001 = vmatprep.subr.mxu0 0.0
      %7002 = vmatpush1.msra.mxu0 0.0
      %7003 = vmatprep.subr.mxu0 0.0
      %7004 = vmatpush1.msra.mxu0 0.0
      %7005 = vmatprep.subr.mxu0 0.0
      %7006 = vmatpush1.msra.mxu0 0.0
      %7007 = vmatprep.subr.mxu0 0.0
      %7008 = vmatpush1.msra.mxu0 0.0
      %7009 = vmatprep.subr.mxu0 0.0
      %7010 = vmatpush1.msra.mxu0 0.0
      %7011 = vmatprep.subr.mxu0 0.0
      %7012 = vmatpush1.msra.mxu0 0.0
      %7013 = vmatprep.subr.mxu0 0.0
      %7014 = vmatpush1.msra.mxu0 0.0
      %7015 = vmatprep.subr.mxu0 0.0
      %7016 = vmatpush1.msra.mxu0 0.0
      %7017 = vmatprep.subr.mxu0 0.0
      %7018 = vmatpush1.msra.mxu0 0.0
      %7019 = vmatprep.subr.mxu0 0.0
      %7020 = vmatpush1.msra.mxu0 0.0
      %7021 = vmatprep.subr.mxu0 0.0
      %7022 = vmatpush1.msra.mxu0 0.0
      %7023 = vmatprep.subr.mxu0 0.0
      %7024 = vmatpush1.msra.mxu0 0.0
      %7025 = vmatprep.subr.mxu0 0.0
      %7026 = vmatpush1.msra.mxu0 0.0
      %7027 = vmatprep.subr.mxu0 0.0
      %7028 = vmatpush1.msra.mxu0 0.0
      %7029 = vmatprep.subr.mxu0 0.0
      %7030 = vmatpush1.msra.mxu0 0.0
      %7031 = vmatprep.subr.mxu0 0.0
      %7032 = vmatpush1.msra.mxu0 0.0
      %7033 = vmatprep.subr.mxu0 0.0
      %7034 = vmatpush1.msra.mxu0 0.0
      %7035 = vmatprep.subr.mxu0 0.0
      %7036 = vmatpush1.msra.mxu0 0.0
      %7037 = vmatprep.mubr.f32.mxu0 0.0
      %7038 = vmatmul.mubr.f32.gmra.mrb[0].mxu0 %v6941
      %v7039 = vpop.f32.mrb[0].mxu0
      %v7040 = vadd.f32 0.0, %v7039
      %v7041 = vpop.f32.mrb[0].mxu0
      %7042 = vmatprep.mubr.f32.mxu0 0.0
      %7043 = vmatmul.mubr.f32.gmra.mrb[0].mxu0 %v6944
      %v7044 = vpop.f32.mrb[0].mxu0
      %v7045 = vadd.f32 0.0, %v7044
      %v7046 = vpop.f32.mrb[0].mxu0
      %7047 = vmatprep.mubr.f32.mxu0 0.0
      %7048 = vmatmul.mubr.f32.gmra.mrb[0].mxu0 %v6947
      %v7049 = vpop.f32.mrb[0].mxu0
      %v7050 = vadd.f32 0.0, %v7049
      %v7051 = vpop.f32.mrb[0].mxu0
      %7052 = vmatprep.mubr.f32.mxu0 0.0
      %7053 = vmatmul.mubr.f32.gmra.mrb[0].mxu0 %v6950
      %v7054 = vpop.f32.mrb[0].mxu0
      %v7055 = vadd.f32 0.0, %v7054
      %v7056 = vpop.f32.mrb[0].mxu0
      %7057 = vmatprep.mubr.f32.mxu0 0.0
      %7058 = vmatmul.mubr.f32.gmra.mrb[0].mxu0 %v6953
      %v7059 = vpop.f32.mrb[0].mxu0
      %v7060 = vadd.f32 0.0, %v7059
      %v7061 = vpop.f32.mrb[0].mxu0
      %7062 = vmatprep.mubr.f32.mxu0 0.0
      %7063 = vmatmul.mubr.f32.gmra.mrb[0].mxu0 %v6956
      %v7064 = vpop.f32.mrb[0].mxu0
      %v7065 = vadd.f32 0.0, %v7064
      %v7066 = vpop.f32.mrb[0].mxu0
      %7067 = vmatprep.mubr.f32.mxu0 0.0
      %7068 = vmatmul.mubr.f32.gmra.mrb[0].mxu0 %v6959
      %v7069 = vpop.f32.mrb[0].mxu0
      %v7070 = vadd.f32 0.0, %v7069
      %v7071 = vpop.f32.mrb[0].mxu0
      %7072 = vmatprep.mubr.f32.mxu0 0.0
      %7073 = vmatmul.mubr.f32.gmra.mrb[0].mxu0 %v6962
      %v7074 = vpop.f32.mrb[0].mxu0
      %v7075 = vadd.f32 0.0, %v7074
      %v7076 = vpop.f32.mrb[0].mxu0
      %7077 = vmatprep.mubr.f32.mxu0 0.0
      %7078 = vmatmul.mubr.f32.gmra.mrb[0].mxu0 %v6965
      %v7079 = vpop.f32.mrb[0].mxu0
      %v7080 = vadd.f32 0.0, %v7079
      %v7081 = vpop.f32.mrb[0].mxu0
      %7082 = vmatprep.mubr.f32.mxu0 0.0
      %7083 = vmatmul.mubr.f32.gmra.mrb[0].mxu0 %v6968
      %v7084 = vpop.f32.mrb[0].mxu0
      %v7085 = vadd.f32 0.0, %v7084
      %v7086 = vpop.f32.mrb[0].mxu0
      %7087 = vmatprep.mubr.f32.mxu0 0.0
      %7088 = vmatmul.mubr.f32.gmra.mrb[0].mxu0 %v6971
      %v7089 = vpop.f32.mrb[0].mxu0
      %v7090 = vadd.f32 0.0, %v7089
      %v7091 = vpop.f32.mrb[0].mxu0
      %7092 = vdwg.mxu0
      %v7093 = vadd.f32 %v6885, %v7040
      %v7094 = vadd.f32 %v6886, %v7045
      %v7095 = vadd.f32 %v6887, %v7050
      %v7096 = vadd.f32 %v6888, %v7055
      %v7097 = vadd.f32 %v6889, %v7060
      %v7098 = vadd.f32 %v6890, %v7065
      %v7099 = vadd.f32 %v6891, %v7070
      %v7100 = vadd.f32 %v6892, %v7075
      %v7101 = vadd.f32 %v6893, %v7080
      %v7102 = vadd.f32 %v6894, %v7085
      %v7103 = vadd.f32 %v6895, %v7090
      %s7104 = scalar_lea.vmem %s14, 176
      %v7105 = vld [vmem:[%s7104] sm:$0xff]
      %v7106 = vld [vmem:[%s7104 + $0x8] sm:$0xff]
      %v7107 = vld [vmem:[%s7104 + $0x10] sm:$0xff]
      %v7108 = vld [vmem:[%s7104 + $0x18] sm:$0xff]
      %v7109 = vld [vmem:[%s7104 + $0x20] sm:$0xff]
      %v7110 = vld [vmem:[%s7104 + $0x28] sm:$0xff]
      %v7111 = vld [vmem:[%s7104 + $0x30] sm:$0xff]
      %v7112 = vld [vmem:[%s7104 + $0x38] sm:$0xff]
      %v7113 = vld [vmem:[%s7104 + $0x40] sm:$0xff]
      %v7114 = vld [vmem:[%s7104 + $0x48] sm:$0xff]
      %v7115 = vld [vmem:[%s7104 + $0x50] sm:$0xf]
      %7116 = vrot.lane.b32.xlu0 %v6701, 126
      %v7117 = vpop.permute.xlu0 %7116
      %7118 = vrot.lane.b32.xlu0 %v6702, 126
      %v7119 = vpop.permute.xlu0 %7118
      %7120 = vrot.lane.b32.xlu0 %v6703, 126
      %v7121 = vpop.permute.xlu0 %7120
      %7122 = vrot.lane.b32.xlu0 %v6704, 126
      %v7123 = vpop.permute.xlu0 %7122
      %7124 = vrot.lane.b32.xlu0 %v6705, 126
      %v7125 = vpop.permute.xlu0 %7124
      %7126 = vrot.lane.b32.xlu0 %v6706, 126
      %v7127 = vpop.permute.xlu0 %7126
      %7128 = vrot.lane.b32.xlu0 %v6707, 126
      %v7129 = vpop.permute.xlu0 %7128
      %7130 = vrot.lane.b32.xlu0 %v6708, 126
      %v7131 = vpop.permute.xlu0 %7130
      %v7141 = vsel %vm6731, %v7105, 0
      %v7144 = vsel %vm6731, %v7106, 0
      %v7147 = vsel %vm6731, %v7107, 0
      %v7150 = vsel %vm6731, %v7108, 0
      %v7153 = vsel %vm6731, %v7109, 0
      %v7156 = vsel %vm6731, %v7110, 0
      %v7159 = vsel %vm6731, %v7111, 0
      %v7162 = vsel %vm6731, %v7112, 0
      %v7165 = vsel %vm6731, %v7113, 0
      %v7168 = vsel %vm6731, %v7114, 0
      %v7171 = vsel %vm6731, %v7115, 0
      %7173 = vmatprep.subr.mxu0 0.0
      %7174 = vmatpush1.msra.mxu0 %v7117
      %7175 = vmatprep.subr.mxu0 0.0
      %7176 = vmatpush1.msra.mxu0 %v7119
      %7177 = vmatprep.subr.mxu0 0.0
      %7178 = vmatpush1.msra.mxu0 %v7121
      %7179 = vmatprep.subr.mxu0 0.0
      %7180 = vmatpush1.msra.mxu0 %v7123
      %7181 = vmatprep.subr.mxu0 0.0
      %7182 = vmatpush1.msra.mxu0 %v7125
      %7183 = vmatprep.subr.mxu0 0.0
      %7184 = vmatpush1.msra.mxu0 %v7127
      %7185 = vmatprep.subr.mxu0 0.0
      %7186 = vmatpush1.msra.mxu0 %v7129
      %7187 = vmatprep.subr.mxu0 0.0
      %7188 = vmatpush1.msra.mxu0 %v7131
      %7189 = vmatprep.subr.mxu0 0.0
      %7190 = vmatpush1.msra.mxu0 0.0
      %7191 = vmatprep.subr.mxu0 0.0
      %7192 = vmatpush1.msra.mxu0 0.0
      %7193 = vmatprep.subr.mxu0 0.0
      %7194 = vmatpush1.msra.mxu0 0.0
      %7195 = vmatprep.subr.mxu0 0.0
      %7196 = vmatpush1.msra.mxu0 0.0
      %7197 = vmatprep.subr.mxu0 0.0
      %7198 = vmatpush1.msra.mxu0 0.0
      %7199 = vmatprep.subr.mxu0 0.0
      %7200 = vmatpush1.msra.mxu0 0.0
      %7201 = vmatprep.subr.mxu0 0.0
      %7202 = vmatpush1.msra.mxu0 0.0
      %7203 = vmatprep.subr.mxu0 0.0
      %7204 = vmatpush1.msra.mxu0 0.0
      %7205 = vmatprep.subr.mxu0 0.0
      %7206 = vmatpush1.msra.mxu0 0.0
      %7207 = vmatprep.subr.mxu0 0.0
      %7208 = vmatpush1.msra.mxu0 0.0
      %7209 = vmatprep.subr.mxu0 0.0
      %7210 = vmatpush1.msra.mxu0 0.0
      %7211 = vmatprep.subr.mxu0 0.0
      %7212 = vmatpush1.msra.mxu0 0.0
      %7213 = vmatprep.subr.mxu0 0.0
      %7214 = vmatpush1.msra.mxu0 0.0
      %7215 = vmatprep.subr.mxu0 0.0
      %7216 = vmatpush1.msra.mxu0 0.0
      %7217 = vmatprep.subr.mxu0 0.0
      %7218 = vmatpush1.msra.mxu0 0.0
      %7219 = vmatprep.subr.mxu0 0.0
      %7220 = vmatpush1.msra.mxu0 0.0
      %7221 = vmatprep.subr.mxu0 0.0
      %7222 = vmatpush1.msra.mxu0 0.0
      %7223 = vmatprep.subr.mxu0 0.0
      %7224 = vmatpush1.msra.mxu0 0.0
      %7225 = vmatprep.subr.mxu0 0.0
      %7226 = vmatpush1.msra.mxu0 0.0
      %7227 = vmatprep.subr.mxu0 0.0
      %7228 = vmatpush1.msra.mxu0 0.0
      %7229 = vmatprep.subr.mxu0 0.0
      %7230 = vmatpush1.msra.mxu0 0.0
      %7231 = vmatprep.subr.mxu0 0.0
      %7232 = vmatpush1.msra.mxu0 0.0
      %7233 = vmatprep.subr.mxu0 0.0
      %7234 = vmatpush1.msra.mxu0 0.0
      %7235 = vmatprep.subr.mxu0 0.0
      %7236 = vmatpush1.msra.mxu0 0.0
      %7237 = vmatprep.mubr.f32.mxu0 0.0
      %7238 = vmatmul.mubr.f32.gmra.mrb[0].mxu0 %v7141
      %v7239 = vpop.f32.mrb[0].mxu0
      %v7240 = vadd.f32 0.0, %v7239
      %v7241 = vpop.f32.mrb[0].mxu0
      %7242 = vmatprep.mubr.f32.mxu0 0.0
      %7243 = vmatmul.mubr.f32.gmra.mrb[0].mxu0 %v7144
      %v7244 = vpop.f32.mrb[0].mxu0
      %v7245 = vadd.f32 0.0, %v7244
      %v7246 = vpop.f32.mrb[0].mxu0
      %7247 = vmatprep.mubr.f32.mxu0 0.0
      %7248 = vmatmul.mubr.f32.gmra.mrb[0].mxu0 %v7147
      %v7249 = vpop.f32.mrb[0].mxu0
      %v7250 = vadd.f32 0.0, %v7249
      %v7251 = vpop.f32.mrb[0].mxu0
      %7252 = vmatprep.mubr.f32.mxu0 0.0
      %7253 = vmatmul.mubr.f32.gmra.mrb[0].mxu0 %v7150
      %v7254 = vpop.f32.mrb[0].mxu0
      %v7255 = vadd.f32 0.0, %v7254
      %v7256 = vpop.f32.mrb[0].mxu0
      %7257 = vmatprep.mubr.f32.mxu0 0.0
      %7258 = vmatmul.mubr.f32.gmra.mrb[0].mxu0 %v7153
      %v7259 = vpop.f32.mrb[0].mxu0
      %v7260 = vadd.f32 0.0, %v7259
      %v7261 = vpop.f32.mrb[0].mxu0
      %7262 = vmatprep.mubr.f32.mxu0 0.0
      %7263 = vmatmul.mubr.f32.gmra.mrb[0].mxu0 %v7156
      %v7264 = vpop.f32.mrb[0].mxu0
      %v7265 = vadd.f32 0.0, %v7264
      %v7266 = vpop.f32.mrb[0].mxu0
      %7267 = vmatprep.mubr.f32.mxu0 0.0
      %7268 = vmatmul.mubr.f32.gmra.mrb[0].mxu0 %v7159
      %v7269 = vpop.f32.mrb[0].mxu0
      %v7270 = vadd.f32 0.0, %v7269
      %v7271 = vpop.f32.mrb[0].mxu0
      %7272 = vmatprep.mubr.f32.mxu0 0.0
      %7273 = vmatmul.mubr.f32.gmra.mrb[0].mxu0 %v7162
      %v7274 = vpop.f32.mrb[0].mxu0
      %v7275 = vadd.f32 0.0, %v7274
      %v7276 = vpop.f32.mrb[0].mxu0
      %7277 = vmatprep.mubr.f32.mxu0 0.0
      %7278 = vmatmul.mubr.f32.gmra.mrb[0].mxu0 %v7165
      %v7279 = vpop.f32.mrb[0].mxu0
      %v7280 = vadd.f32 0.0, %v7279
      %v7281 = vpop.f32.mrb[0].mxu0
      %7282 = vmatprep.mubr.f32.mxu0 0.0
      %7283 = vmatmul.mubr.f32.gmra.mrb[0].mxu0 %v7168
      %v7284 = vpop.f32.mrb[0].mxu0
      %v7285 = vadd.f32 0.0, %v7284
      %v7286 = vpop.f32.mrb[0].mxu0
      %7287 = vmatprep.mubr.f32.mxu0 0.0
      %7288 = vmatmul.mubr.f32.gmra.mrb[0].mxu0 %v7171
      %v7289 = vpop.f32.mrb[0].mxu0
      %v7290 = vadd.f32 0.0, %v7289
      %v7291 = vpop.f32.mrb[0].mxu0
      %7292 = vdwg.mxu0
      %v7293 = vadd.f32 %v7093, %v7240
      %v7294 = vadd.f32 %v7094, %v7245
      %v7295 = vadd.f32 %v7095, %v7250
      %v7296 = vadd.f32 %v7096, %v7255
      %v7297 = vadd.f32 %v7097, %v7260
      %v7298 = vadd.f32 %v7098, %v7265
      %v7299 = vadd.f32 %v7099, %v7270
      %v7300 = vadd.f32 %v7100, %v7275
      %v7301 = vadd.f32 %v7101, %v7280
      %v7302 = vadd.f32 %v7102, %v7285
      %v7303 = vadd.f32 %v7103, %v7290
      %s7304 = scalar_lea.vmem %s14, 264
      %v7305 = vld [vmem:[%s7304] sm:$0xff]
      %v7306 = vld [vmem:[%s7304 + $0x8] sm:$0xff]
      %v7307 = vld [vmem:[%s7304 + $0x10] sm:$0xff]
      %v7308 = vld [vmem:[%s7304 + $0x18] sm:$0xff]
      %v7309 = vld [vmem:[%s7304 + $0x20] sm:$0xff]
      %v7310 = vld [vmem:[%s7304 + $0x28] sm:$0xff]
      %v7311 = vld [vmem:[%s7304 + $0x30] sm:$0xff]
      %v7312 = vld [vmem:[%s7304 + $0x38] sm:$0xff]
      %v7313 = vld [vmem:[%s7304 + $0x40] sm:$0xff]
      %v7314 = vld [vmem:[%s7304 + $0x48] sm:$0xff]
      %v7315 = vld [vmem:[%s7304 + $0x50] sm:$0xf]
      %7316 = vrot.lane.b32.xlu0 %v6701, 121
      %v7317 = vpop.permute.xlu0 %7316
      %7318 = vrot.lane.b32.xlu0 %v6702, 121
      %v7319 = vpop.permute.xlu0 %7318
      %7320 = vrot.lane.b32.xlu0 %v6703, 121
      %v7321 = vpop.permute.xlu0 %7320
      %7322 = vrot.lane.b32.xlu0 %v6704, 121
      %v7323 = vpop.permute.xlu0 %7322
      %7324 = vrot.lane.b32.xlu0 %v6705, 121
      %v7325 = vpop.permute.xlu0 %7324
      %7326 = vrot.lane.b32.xlu0 %v6706, 121
      %v7327 = vpop.permute.xlu0 %7326
      %7328 = vrot.lane.b32.xlu0 %v6707, 121
      %v7329 = vpop.permute.xlu0 %7328
      %7330 = vrot.lane.b32.xlu0 %v6708, 121
      %v7331 = vpop.permute.xlu0 %7330
      %v7341 = vsel %vm6731, %v7305, 0
      %v7344 = vsel %vm6731, %v7306, 0
      %v7347 = vsel %vm6731, %v7307, 0
      %v7350 = vsel %vm6731, %v7308, 0
      %v7353 = vsel %vm6731, %v7309, 0
      %v7356 = vsel %vm6731, %v7310, 0
      %v7359 = vsel %vm6731, %v7311, 0
      %v7362 = vsel %vm6731, %v7312, 0
      %v7365 = vsel %vm6731, %v7313, 0
      %v7368 = vsel %vm6731, %v7314, 0
      %v7371 = vsel %vm6731, %v7315, 0
      %7373 = vmatprep.subr.mxu0 0.0
      %7374 = vmatpush1.msra.mxu0 %v7317
      %7375 = vmatprep.subr.mxu0 0.0
      %7376 = vmatpush1.msra.mxu0 %v7319
      %7377 = vmatprep.subr.mxu0 0.0
      %7378 = vmatpush1.msra.mxu0 %v7321
      %7379 = vmatprep.subr.mxu0 0.0
      %7380 = vmatpush1.msra.mxu0 %v7323
      %7381 = vmatprep.subr.mxu0 0.0
      %7382 = vmatpush1.msra.mxu0 %v7325
      %7383 = vmatprep.subr.mxu0 0.0
      %7384 = vmatpush1.msra.mxu0 %v7327
      %7385 = vmatprep.subr.mxu0 0.0
      %7386 = vmatpush1.msra.mxu0 %v7329
      %7387 = vmatprep.subr.mxu0 0.0
      %7388 = vmatpush1.msra.mxu0 %v7331
      %7389 = vmatprep.subr.mxu0 0.0
      %7390 = vmatpush1.msra.mxu0 0.0
      %7391 = vmatprep.subr.mxu0 0.0
      %7392 = vmatpush1.msra.mxu0 0.0
      %7393 = vmatprep.subr.mxu0 0.0
      %7394 = vmatpush1.msra.mxu0 0.0
      %7395 = vmatprep.subr.mxu0 0.0
      %7396 = vmatpush1.msra.mxu0 0.0
      %7397 = vmatprep.subr.mxu0 0.0
      %7398 = vmatpush1.msra.mxu0 0.0
      %7399 = vmatprep.subr.mxu0 0.0
      %7400 = vmatpush1.msra.mxu0 0.0
      %7401 = vmatprep.subr.mxu0 0.0
      %7402 = vmatpush1.msra.mxu0 0.0
      %7403 = vmatprep.subr.mxu0 0.0
      %7404 = vmatpush1.msra.mxu0 0.0
      %7405 = vmatprep.subr.mxu0 0.0
      %7406 = vmatpush1.msra.mxu0 0.0
      %7407 = vmatprep.subr.mxu0 0.0
      %7408 = vmatpush1.msra.mxu0 0.0
      %7409 = vmatprep.subr.mxu0 0.0
      %7410 = vmatpush1.msra.mxu0 0.0
      %7411 = vmatprep.subr.mxu0 0.0
      %7412 = vmatpush1.msra.mxu0 0.0
      %7413 = vmatprep.subr.mxu0 0.0
      %7414 = vmatpush1.msra.mxu0 0.0
      %7415 = vmatprep.subr.mxu0 0.0
      %7416 = vmatpush1.msra.mxu0 0.0
      %7417 = vmatprep.subr.mxu0 0.0
      %7418 = vmatpush1.msra.mxu0 0.0
      %7419 = vmatprep.subr.mxu0 0.0
      %7420 = vmatpush1.msra.mxu0 0.0
      %7421 = vmatprep.subr.mxu0 0.0
      %7422 = vmatpush1.msra.mxu0 0.0
      %7423 = vmatprep.subr.mxu0 0.0
      %7424 = vmatpush1.msra.mxu0 0.0
      %7425 = vmatprep.subr.mxu0 0.0
      %7426 = vmatpush1.msra.mxu0 0.0
      %7427 = vmatprep.subr.mxu0 0.0
      %7428 = vmatpush1.msra.mxu0 0.0
      %7429 = vmatprep.subr.mxu0 0.0
      %7430 = vmatpush1.msra.mxu0 0.0
      %7431 = vmatprep.subr.mxu0 0.0
      %7432 = vmatpush1.msra.mxu0 0.0
      %7433 = vmatprep.subr.mxu0 0.0
      %7434 = vmatpush1.msra.mxu0 0.0
      %7435 = vmatprep.subr.mxu0 0.0
      %7436 = vmatpush1.msra.mxu0 0.0
      %7437 = vmatprep.mubr.f32.mxu0 0.0
      %7438 = vmatmul.mubr.f32.gmra.mrb[0].mxu0 %v7341
      %v7439 = vpop.f32.mrb[0].mxu0
      %v7440 = vadd.f32 0.0, %v7439
      %v7441 = vpop.f32.mrb[0].mxu0
      %7442 = vmatprep.mubr.f32.mxu0 0.0
      %7443 = vmatmul.mubr.f32.gmra.mrb[0].mxu0 %v7344
      %v7444 = vpop.f32.mrb[0].mxu0
      %v7445 = vadd.f32 0.0, %v7444
      %v7446 = vpop.f32.mrb[0].mxu0
      %7447 = vmatprep.mubr.f32.mxu0 0.0
      %7448 = vmatmul.mubr.f32.gmra.mrb[0].mxu0 %v7347
      %v7449 = vpop.f32.mrb[0].mxu0
      %v7450 = vadd.f32 0.0, %v7449
      %v7451 = vpop.f32.mrb[0].mxu0
      %7452 = vmatprep.mubr.f32.mxu0 0.0
      %7453 = vmatmul.mubr.f32.gmra.mrb[0].mxu0 %v7350
      %v7454 = vpop.f32.mrb[0].mxu0
      %v7455 = vadd.f32 0.0, %v7454
      %v7456 = vpop.f32.mrb[0].mxu0
      %7457 = vmatprep.mubr.f32.mxu0 0.0
      %7458 = vmatmul.mubr.f32.gmra.mrb[0].mxu0 %v7353
      %v7459 = vpop.f32.mrb[0].mxu0
      %v7460 = vadd.f32 0.0, %v7459
      %v7461 = vpop.f32.mrb[0].mxu0
      %7462 = vmatprep.mubr.f32.mxu0 0.0
      %7463 = vmatmul.mubr.f32.gmra.mrb[0].mxu0 %v7356
      %v7464 = vpop.f32.mrb[0].mxu0
      %v7465 = vadd.f32 0.0, %v7464
      %v7466 = vpop.f32.mrb[0].mxu0
      %7467 = vmatprep.mubr.f32.mxu0 0.0
      %7468 = vmatmul.mubr.f32.gmra.mrb[0].mxu0 %v7359
      %v7469 = vpop.f32.mrb[0].mxu0
      %v7470 = vadd.f32 0.0, %v7469
      %v7471 = vpop.f32.mrb[0].mxu0
      %7472 = vmatprep.mubr.f32.mxu0 0.0
      %7473 = vmatmul.mubr.f32.gmra.mrb[0].mxu0 %v7362
      %v7474 = vpop.f32.mrb[0].mxu0
      %v7475 = vadd.f32 0.0, %v7474
      %v7476 = vpop.f32.mrb[0].mxu0
      %7477 = vmatprep.mubr.f32.mxu0 0.0
      %7478 = vmatmul.mubr.f32.gmra.mrb[0].mxu0 %v7365
      %v7479 = vpop.f32.mrb[0].mxu0
      %v7480 = vadd.f32 0.0, %v7479
      %v7481 = vpop.f32.mrb[0].mxu0
      %7482 = vmatprep.mubr.f32.mxu0 0.0
      %7483 = vmatmul.mubr.f32.gmra.mrb[0].mxu0 %v7368
      %v7484 = vpop.f32.mrb[0].mxu0
      %v7485 = vadd.f32 0.0, %v7484
      %v7486 = vpop.f32.mrb[0].mxu0
      %7487 = vmatprep.mubr.f32.mxu0 0.0
      %7488 = vmatmul.mubr.f32.gmra.mrb[0].mxu0 %v7371
      %v7489 = vpop.f32.mrb[0].mxu0
      %v7490 = vadd.f32 0.0, %v7489
      %v7491 = vpop.f32.mrb[0].mxu0
      %7492 = vdwg.mxu0
      %v7493 = vadd.f32 %v7293, %v7440
      %v7494 = vadd.f32 %v7294, %v7445
      %v7495 = vadd.f32 %v7295, %v7450
      %v7496 = vadd.f32 %v7296, %v7455
      %v7497 = vadd.f32 %v7297, %v7460
      %v7498 = vadd.f32 %v7298, %v7465
      %v7499 = vadd.f32 %v7299, %v7470
      %v7500 = vadd.f32 %v7300, %v7475
      %v7501 = vadd.f32 %v7301, %v7480
      %v7502 = vadd.f32 %v7302, %v7485
      %v7503 = vadd.f32 %v7303, %v7490
      %s7504 = scalar_lea.vmem %s14, 352
      %v7505 = vld [vmem:[%s7504] sm:$0xff]
      %v7506 = vld [vmem:[%s7504 + $0x8] sm:$0xff]
      %v7507 = vld [vmem:[%s7504 + $0x10] sm:$0xff]
      %v7508 = vld [vmem:[%s7504 + $0x18] sm:$0xff]
      %v7509 = vld [vmem:[%s7504 + $0x20] sm:$0xff]
      %v7510 = vld [vmem:[%s7504 + $0x28] sm:$0xff]
      %v7511 = vld [vmem:[%s7504 + $0x30] sm:$0xff]
      %v7512 = vld [vmem:[%s7504 + $0x38] sm:$0xff]
      %v7513 = vld [vmem:[%s7504 + $0x40] sm:$0xff]
      %v7514 = vld [vmem:[%s7504 + $0x48] sm:$0xff]
      %v7515 = vld [vmem:[%s7504 + $0x50] sm:$0xf]
      %7516 = vrot.lane.b32.xlu0 %v6701, 120
      %v7517 = vpop.permute.xlu0 %7516
      %7518 = vrot.lane.b32.xlu0 %v6702, 120
      %v7519 = vpop.permute.xlu0 %7518
      %7520 = vrot.lane.b32.xlu0 %v6703, 120
      %v7521 = vpop.permute.xlu0 %7520
      %7522 = vrot.lane.b32.xlu0 %v6704, 120
      %v7523 = vpop.permute.xlu0 %7522
      %7524 = vrot.lane.b32.xlu0 %v6705, 120
      %v7525 = vpop.permute.xlu0 %7524
      %7526 = vrot.lane.b32.xlu0 %v6706, 120
      %v7527 = vpop.permute.xlu0 %7526
      %7528 = vrot.lane.b32.xlu0 %v6707, 120
      %v7529 = vpop.permute.xlu0 %7528
      %7530 = vrot.lane.b32.xlu0 %v6708, 120
      %v7531 = vpop.permute.xlu0 %7530
      %v7541 = vsel %vm6731, %v7505, 0
      %v7544 = vsel %vm6731, %v7506, 0
      %v7547 = vsel %vm6731, %v7507, 0
      %v7550 = vsel %vm6731, %v7508, 0
      %v7553 = vsel %vm6731, %v7509, 0
      %v7556 = vsel %vm6731, %v7510, 0
      %v7559 = vsel %vm6731, %v7511, 0
      %v7562 = vsel %vm6731, %v7512, 0
      %v7565 = vsel %vm6731, %v7513, 0
      %v7568 = vsel %vm6731, %v7514, 0
      %v7571 = vsel %vm6731, %v7515, 0
      %7573 = vmatprep.subr.mxu0 0.0
      %7574 = vmatpush1.msra.mxu0 %v7517
      %7575 = vmatprep.subr.mxu0 0.0
      %7576 = vmatpush1.msra.mxu0 %v7519
      %7577 = vmatprep.subr.mxu0 0.0
      %7578 = vmatpush1.msra.mxu0 %v7521
      %7579 = vmatprep.subr.mxu0 0.0
      %7580 = vmatpush1.msra.mxu0 %v7523
      %7581 = vmatprep.subr.mxu0 0.0
      %7582 = vmatpush1.msra.mxu0 %v7525
      %7583 = vmatprep.subr.mxu0 0.0
      %7584 = vmatpush1.msra.mxu0 %v7527
      %7585 = vmatprep.subr.mxu0 0.0
      %7586 = vmatpush1.msra.mxu0 %v7529
      %7587 = vmatprep.subr.mxu0 0.0
      %7588 = vmatpush1.msra.mxu0 %v7531
      %7589 = vmatprep.subr.mxu0 0.0
      %7590 = vmatpush1.msra.mxu0 0.0
      %7591 = vmatprep.subr.mxu0 0.0
      %7592 = vmatpush1.msra.mxu0 0.0
      %7593 = vmatprep.subr.mxu0 0.0
      %7594 = vmatpush1.msra.mxu0 0.0
      %7595 = vmatprep.subr.mxu0 0.0
      %7596 = vmatpush1.msra.mxu0 0.0
      %7597 = vmatprep.subr.mxu0 0.0
      %7598 = vmatpush1.msra.mxu0 0.0
      %7599 = vmatprep.subr.mxu0 0.0
      %7600 = vmatpush1.msra.mxu0 0.0
      %7601 = vmatprep.subr.mxu0 0.0
      %7602 = vmatpush1.msra.mxu0 0.0
      %7603 = vmatprep.subr.mxu0 0.0
      %7604 = vmatpush1.msra.mxu0 0.0
      %7605 = vmatprep.subr.mxu0 0.0
      %7606 = vmatpush1.msra.mxu0 0.0
      %7607 = vmatprep.subr.mxu0 0.0
      %7608 = vmatpush1.msra.mxu0 0.0
      %7609 = vmatprep.subr.mxu0 0.0
      %7610 = vmatpush1.msra.mxu0 0.0
      %7611 = vmatprep.subr.mxu0 0.0
      %7612 = vmatpush1.msra.mxu0 0.0
      %7613 = vmatprep.subr.mxu0 0.0
      %7614 = vmatpush1.msra.mxu0 0.0
      %7615 = vmatprep.subr.mxu0 0.0
      %7616 = vmatpush1.msra.mxu0 0.0
      %7617 = vmatprep.subr.mxu0 0.0
      %7618 = vmatpush1.msra.mxu0 0.0
      %7619 = vmatprep.subr.mxu0 0.0
      %7620 = vmatpush1.msra.mxu0 0.0
      %7621 = vmatprep.subr.mxu0 0.0
      %7622 = vmatpush1.msra.mxu0 0.0
      %7623 = vmatprep.subr.mxu0 0.0
      %7624 = vmatpush1.msra.mxu0 0.0
      %7625 = vmatprep.subr.mxu0 0.0
      %7626 = vmatpush1.msra.mxu0 0.0
      %7627 = vmatprep.subr.mxu0 0.0
      %7628 = vmatpush1.msra.mxu0 0.0
      %7629 = vmatprep.subr.mxu0 0.0
      %7630 = vmatpush1.msra.mxu0 0.0
      %7631 = vmatprep.subr.mxu0 0.0
      %7632 = vmatpush1.msra.mxu0 0.0
      %7633 = vmatprep.subr.mxu0 0.0
      %7634 = vmatpush1.msra.mxu0 0.0
      %7635 = vmatprep.subr.mxu0 0.0
      %7636 = vmatpush1.msra.mxu0 0.0
      %7637 = vmatprep.mubr.f32.mxu0 0.0
      %7638 = vmatmul.mubr.f32.gmra.mrb[0].mxu0 %v7541
      %v7639 = vpop.f32.mrb[0].mxu0
      %v7640 = vadd.f32 0.0, %v7639
      %v7641 = vpop.f32.mrb[0].mxu0
      %7642 = vmatprep.mubr.f32.mxu0 0.0
      %7643 = vmatmul.mubr.f32.gmra.mrb[0].mxu0 %v7544
      %v7644 = vpop.f32.mrb[0].mxu0
      %v7645 = vadd.f32 0.0, %v7644
      %v7646 = vpop.f32.mrb[0].mxu0
      %7647 = vmatprep.mubr.f32.mxu0 0.0
      %7648 = vmatmul.mubr.f32.gmra.mrb[0].mxu0 %v7547
      %v7649 = vpop.f32.mrb[0].mxu0
      %v7650 = vadd.f32 0.0, %v7649
      %v7651 = vpop.f32.mrb[0].mxu0
      %7652 = vmatprep.mubr.f32.mxu0 0.0
      %7653 = vmatmul.mubr.f32.gmra.mrb[0].mxu0 %v7550
      %v7654 = vpop.f32.mrb[0].mxu0
      %v7655 = vadd.f32 0.0, %v7654
      %v7656 = vpop.f32.mrb[0].mxu0
      %7657 = vmatprep.mubr.f32.mxu0 0.0
      %7658 = vmatmul.mubr.f32.gmra.mrb[0].mxu0 %v7553
      %v7659 = vpop.f32.mrb[0].mxu0
      %v7660 = vadd.f32 0.0, %v7659
      %v7661 = vpop.f32.mrb[0].mxu0
      %7662 = vmatprep.mubr.f32.mxu0 0.0
      %7663 = vmatmul.mubr.f32.gmra.mrb[0].mxu0 %v7556
      %v7664 = vpop.f32.mrb[0].mxu0
      %v7665 = vadd.f32 0.0, %v7664
      %v7666 = vpop.f32.mrb[0].mxu0
      %7667 = vmatprep.mubr.f32.mxu0 0.0
      %7668 = vmatmul.mubr.f32.gmra.mrb[0].mxu0 %v7559
      %v7669 = vpop.f32.mrb[0].mxu0
      %v7670 = vadd.f32 0.0, %v7669
      %v7671 = vpop.f32.mrb[0].mxu0
      %7672 = vmatprep.mubr.f32.mxu0 0.0
      %7673 = vmatmul.mubr.f32.gmra.mrb[0].mxu0 %v7562
      %v7674 = vpop.f32.mrb[0].mxu0
      %v7675 = vadd.f32 0.0, %v7674
      %v7676 = vpop.f32.mrb[0].mxu0
      %7677 = vmatprep.mubr.f32.mxu0 0.0
      %7678 = vmatmul.mubr.f32.gmra.mrb[0].mxu0 %v7565
      %v7679 = vpop.f32.mrb[0].mxu0
      %v7680 = vadd.f32 0.0, %v7679
      %v7681 = vpop.f32.mrb[0].mxu0
      %7682 = vmatprep.mubr.f32.mxu0 0.0
      %7683 = vmatmul.mubr.f32.gmra.mrb[0].mxu0 %v7568
      %v7684 = vpop.f32.mrb[0].mxu0
      %v7685 = vadd.f32 0.0, %v7684
      %v7686 = vpop.f32.mrb[0].mxu0
      %7687 = vmatprep.mubr.f32.mxu0 0.0
      %7688 = vmatmul.mubr.f32.gmra.mrb[0].mxu0 %v7571
      %v7689 = vpop.f32.mrb[0].mxu0
      %v7690 = vadd.f32 0.0, %v7689
      %v7691 = vpop.f32.mrb[0].mxu0
      %7692 = vdwg.mxu0
      %v7693 = vadd.f32 %v7493, %v7640
      %v7694 = vadd.f32 %v7494, %v7645
      %v7695 = vadd.f32 %v7495, %v7650
      %v7696 = vadd.f32 %v7496, %v7655
      %v7697 = vadd.f32 %v7497, %v7660
      %v7698 = vadd.f32 %v7498, %v7665
      %v7699 = vadd.f32 %v7499, %v7670
      %v7700 = vadd.f32 %v7500, %v7675
      %v7701 = vadd.f32 %v7501, %v7680
      %v7702 = vadd.f32 %v7502, %v7685
      %v7703 = vadd.f32 %v7503, %v7690
      %s7704 = scalar_lea.vmem %s14, 440
      %v7705 = vld [vmem:[%s7704] sm:$0xff]
      %v7706 = vld [vmem:[%s7704 + $0x8] sm:$0xff]
      %v7707 = vld [vmem:[%s7704 + $0x10] sm:$0xff]
      %v7708 = vld [vmem:[%s7704 + $0x18] sm:$0xff]
      %v7709 = vld [vmem:[%s7704 + $0x20] sm:$0xff]
      %v7710 = vld [vmem:[%s7704 + $0x28] sm:$0xff]
      %v7711 = vld [vmem:[%s7704 + $0x30] sm:$0xff]
      %v7712 = vld [vmem:[%s7704 + $0x38] sm:$0xff]
      %v7713 = vld [vmem:[%s7704 + $0x40] sm:$0xff]
      %v7714 = vld [vmem:[%s7704 + $0x48] sm:$0xff]
      %v7715 = vld [vmem:[%s7704 + $0x50] sm:$0xf]
      %7716 = vrot.lane.b32.xlu0 %v6701, 119
      %v7717 = vpop.permute.xlu0 %7716
      %7718 = vrot.lane.b32.xlu0 %v6702, 119
      %v7719 = vpop.permute.xlu0 %7718
      %7720 = vrot.lane.b32.xlu0 %v6703, 119
      %v7721 = vpop.permute.xlu0 %7720
      %7722 = vrot.lane.b32.xlu0 %v6704, 119
      %v7723 = vpop.permute.xlu0 %7722
      %7724 = vrot.lane.b32.xlu0 %v6705, 119
      %v7725 = vpop.permute.xlu0 %7724
      %7726 = vrot.lane.b32.xlu0 %v6706, 119
      %v7727 = vpop.permute.xlu0 %7726
      %7728 = vrot.lane.b32.xlu0 %v6707, 119
      %v7729 = vpop.permute.xlu0 %7728
      %7730 = vrot.lane.b32.xlu0 %v6708, 119
      %v7731 = vpop.permute.xlu0 %7730
      %v7741 = vsel %vm6731, %v7705, 0
      %v7744 = vsel %vm6731, %v7706, 0
      %v7747 = vsel %vm6731, %v7707, 0
      %v7750 = vsel %vm6731, %v7708, 0
      %v7753 = vsel %vm6731, %v7709, 0
      %v7756 = vsel %vm6731, %v7710, 0
      %v7759 = vsel %vm6731, %v7711, 0
      %v7762 = vsel %vm6731, %v7712, 0
      %v7765 = vsel %vm6731, %v7713, 0
      %v7768 = vsel %vm6731, %v7714, 0
      %v7771 = vsel %vm6731, %v7715, 0
      %7773 = vmatprep.subr.mxu0 0.0
      %7774 = vmatpush1.msra.mxu0 %v7717
      %7775 = vmatprep.subr.mxu0 0.0
      %7776 = vmatpush1.msra.mxu0 %v7719
      %7777 = vmatprep.subr.mxu0 0.0
      %7778 = vmatpush1.msra.mxu0 %v7721
      %7779 = vmatprep.subr.mxu0 0.0
      %7780 = vmatpush1.msra.mxu0 %v7723
      %7781 = vmatprep.subr.mxu0 0.0
      %7782 = vmatpush1.msra.mxu0 %v7725
      %7783 = vmatprep.subr.mxu0 0.0
      %7784 = vmatpush1.msra.mxu0 %v7727
      %7785 = vmatprep.subr.mxu0 0.0
      %7786 = vmatpush1.msra.mxu0 %v7729
      %7787 = vmatprep.subr.mxu0 0.0
      %7788 = vmatpush1.msra.mxu0 %v7731
      %7789 = vmatprep.subr.mxu0 0.0
      %7790 = vmatpush1.msra.mxu0 0.0
      %7791 = vmatprep.subr.mxu0 0.0
      %7792 = vmatpush1.msra.mxu0 0.0
      %7793 = vmatprep.subr.mxu0 0.0
      %7794 = vmatpush1.msra.mxu0 0.0
      %7795 = vmatprep.subr.mxu0 0.0
      %7796 = vmatpush1.msra.mxu0 0.0
      %7797 = vmatprep.subr.mxu0 0.0
      %7798 = vmatpush1.msra.mxu0 0.0
      %7799 = vmatprep.subr.mxu0 0.0
      %7800 = vmatpush1.msra.mxu0 0.0
      %7801 = vmatprep.subr.mxu0 0.0
      %7802 = vmatpush1.msra.mxu0 0.0
      %7803 = vmatprep.subr.mxu0 0.0
      %7804 = vmatpush1.msra.mxu0 0.0
      %7805 = vmatprep.subr.mxu0 0.0
      %7806 = vmatpush1.msra.mxu0 0.0
      %7807 = vmatprep.subr.mxu0 0.0
      %7808 = vmatpush1.msra.mxu0 0.0
      %7809 = vmatprep.subr.mxu0 0.0
      %7810 = vmatpush1.msra.mxu0 0.0
      %7811 = vmatprep.subr.mxu0 0.0
      %7812 = vmatpush1.msra.mxu0 0.0
      %7813 = vmatprep.subr.mxu0 0.0
      %7814 = vmatpush1.msra.mxu0 0.0
      %7815 = vmatprep.subr.mxu0 0.0
      %7816 = vmatpush1.msra.mxu0 0.0
      %7817 = vmatprep.subr.mxu0 0.0
      %7818 = vmatpush1.msra.mxu0 0.0
      %7819 = vmatprep.subr.mxu0 0.0
      %7820 = vmatpush1.msra.mxu0 0.0
      %7821 = vmatprep.subr.mxu0 0.0
      %7822 = vmatpush1.msra.mxu0 0.0
      %7823 = vmatprep.subr.mxu0 0.0
      %7824 = vmatpush1.msra.mxu0 0.0
      %7825 = vmatprep.subr.mxu0 0.0
      %7826 = vmatpush1.msra.mxu0 0.0
      %7827 = vmatprep.subr.mxu0 0.0
      %7828 = vmatpush1.msra.mxu0 0.0
      %7829 = vmatprep.subr.mxu0 0.0
      %7830 = vmatpush1.msra.mxu0 0.0
      %7831 = vmatprep.subr.mxu0 0.0
      %7832 = vmatpush1.msra.mxu0 0.0
      %7833 = vmatprep.subr.mxu0 0.0
      %7834 = vmatpush1.msra.mxu0 0.0
      %7835 = vmatprep.subr.mxu0 0.0
      %7836 = vmatpush1.msra.mxu0 0.0
      %7837 = vmatprep.mubr.f32.mxu0 0.0
      %7838 = vmatmul.mubr.f32.gmra.mrb[0].mxu0 %v7741
      %v7839 = vpop.f32.mrb[0].mxu0
      %v7840 = vadd.f32 0.0, %v7839
      %v7841 = vpop.f32.mrb[0].mxu0
      %7842 = vmatprep.mubr.f32.mxu0 0.0
      %7843 = vmatmul.mubr.f32.gmra.mrb[0].mxu0 %v7744
      %v7844 = vpop.f32.mrb[0].mxu0
      %v7845 = vadd.f32 0.0, %v7844
      %v7846 = vpop.f32.mrb[0].mxu0
      %7847 = vmatprep.mubr.f32.mxu0 0.0
      %7848 = vmatmul.mubr.f32.gmra.mrb[0].mxu0 %v7747
      %v7849 = vpop.f32.mrb[0].mxu0
      %v7850 = vadd.f32 0.0, %v7849
      %v7851 = vpop.f32.mrb[0].mxu0
      %7852 = vmatprep.mubr.f32.mxu0 0.0
      %7853 = vmatmul.mubr.f32.gmra.mrb[0].mxu0 %v7750
      %v7854 = vpop.f32.mrb[0].mxu0
      %v7855 = vadd.f32 0.0, %v7854
      %v7856 = vpop.f32.mrb[0].mxu0
      %7857 = vmatprep.mubr.f32.mxu0 0.0
      %7858 = vmatmul.mubr.f32.gmra.mrb[0].mxu0 %v7753
      %v7859 = vpop.f32.mrb[0].mxu0
      %v7860 = vadd.f32 0.0, %v7859
      %v7861 = vpop.f32.mrb[0].mxu0
      %7862 = vmatprep.mubr.f32.mxu0 0.0
      %7863 = vmatmul.mubr.f32.gmra.mrb[0].mxu0 %v7756
      %v7864 = vpop.f32.mrb[0].mxu0
      %v7865 = vadd.f32 0.0, %v7864
      %v7866 = vpop.f32.mrb[0].mxu0
      %7867 = vmatprep.mubr.f32.mxu0 0.0
      %7868 = vmatmul.mubr.f32.gmra.mrb[0].mxu0 %v7759
      %v7869 = vpop.f32.mrb[0].mxu0
      %v7870 = vadd.f32 0.0, %v7869
      %v7871 = vpop.f32.mrb[0].mxu0
      %7872 = vmatprep.mubr.f32.mxu0 0.0
      %7873 = vmatmul.mubr.f32.gmra.mrb[0].mxu0 %v7762
      %v7874 = vpop.f32.mrb[0].mxu0
      %v7875 = vadd.f32 0.0, %v7874
      %v7876 = vpop.f32.mrb[0].mxu0
      %7877 = vmatprep.mubr.f32.mxu0 0.0
      %7878 = vmatmul.mubr.f32.gmra.mrb[0].mxu0 %v7765
      %v7879 = vpop.f32.mrb[0].mxu0
      %v7880 = vadd.f32 0.0, %v7879
      %v7881 = vpop.f32.mrb[0].mxu0
      %7882 = vmatprep.mubr.f32.mxu0 0.0
      %7883 = vmatmul.mubr.f32.gmra.mrb[0].mxu0 %v7768
      %v7884 = vpop.f32.mrb[0].mxu0
      %v7885 = vadd.f32 0.0, %v7884
      %v7886 = vpop.f32.mrb[0].mxu0
      %7887 = vmatprep.mubr.f32.mxu0 0.0
      %7888 = vmatmul.mubr.f32.gmra.mrb[0].mxu0 %v7771
      %v7889 = vpop.f32.mrb[0].mxu0
      %v7890 = vadd.f32 0.0, %v7889
      %v7891 = vpop.f32.mrb[0].mxu0
      %7892 = vdwg.mxu0
      %v7893 = vadd.f32 %v7693, %v7840
      %v7894 = vadd.f32 %v7694, %v7845
      %v7895 = vadd.f32 %v7695, %v7850
      %v7896 = vadd.f32 %v7696, %v7855
      %v7897 = vadd.f32 %v7697, %v7860
      %v7898 = vadd.f32 %v7698, %v7865
      %v7899 = vadd.f32 %v7699, %v7870
      %v7900 = vadd.f32 %v7700, %v7875
      %v7901 = vadd.f32 %v7701, %v7880
      %v7902 = vadd.f32 %v7702, %v7885
      %v7903 = vadd.f32 %v7703, %v7890
      %s7904 = scalar_lea.vmem %s14, 528
      %v7905 = vld [vmem:[%s7904] sm:$0xff]
      %v7906 = vld [vmem:[%s7904 + $0x8] sm:$0xff]
      %v7907 = vld [vmem:[%s7904 + $0x10] sm:$0xff]
      %v7908 = vld [vmem:[%s7904 + $0x18] sm:$0xff]
      %v7909 = vld [vmem:[%s7904 + $0x20] sm:$0xff]
      %v7910 = vld [vmem:[%s7904 + $0x28] sm:$0xff]
      %v7911 = vld [vmem:[%s7904 + $0x30] sm:$0xff]
      %v7912 = vld [vmem:[%s7904 + $0x38] sm:$0xff]
      %v7913 = vld [vmem:[%s7904 + $0x40] sm:$0xff]
      %v7914 = vld [vmem:[%s7904 + $0x48] sm:$0xff]
      %v7915 = vld [vmem:[%s7904 + $0x50] sm:$0xf]
      %7916 = vrot.lane.b32.xlu0 %v6701, 114
      %v7917 = vpop.permute.xlu0 %7916
      %7918 = vrot.lane.b32.xlu0 %v6702, 114
      %v7919 = vpop.permute.xlu0 %7918
      %7920 = vrot.lane.b32.xlu0 %v6703, 114
      %v7921 = vpop.permute.xlu0 %7920
      %7922 = vrot.lane.b32.xlu0 %v6704, 114
      %v7923 = vpop.permute.xlu0 %7922
      %7924 = vrot.lane.b32.xlu0 %v6705, 114
      %v7925 = vpop.permute.xlu0 %7924
      %7926 = vrot.lane.b32.xlu0 %v6706, 114
      %v7927 = vpop.permute.xlu0 %7926
      %7928 = vrot.lane.b32.xlu0 %v6707, 114
      %v7929 = vpop.permute.xlu0 %7928
      %7930 = vrot.lane.b32.xlu0 %v6708, 114
      %v7931 = vpop.permute.xlu0 %7930
      %v7941 = vsel %vm6731, %v7905, 0
      %v7944 = vsel %vm6731, %v7906, 0
      %v7947 = vsel %vm6731, %v7907, 0
      %v7950 = vsel %vm6731, %v7908, 0
      %v7953 = vsel %vm6731, %v7909, 0
      %v7956 = vsel %vm6731, %v7910, 0
      %v7959 = vsel %vm6731, %v7911, 0
      %v7962 = vsel %vm6731, %v7912, 0
      %v7965 = vsel %vm6731, %v7913, 0
      %v7968 = vsel %vm6731, %v7914, 0
      %v7971 = vsel %vm6731, %v7915, 0
      %7973 = vmatprep.subr.mxu0 0.0
      %7974 = vmatpush1.msra.mxu0 %v7917
      %7975 = vmatprep.subr.mxu0 0.0
      %7976 = vmatpush1.msra.mxu0 %v7919
      %7977 = vmatprep.subr.mxu0 0.0
      %7978 = vmatpush1.msra.mxu0 %v7921
      %7979 = vmatprep.subr.mxu0 0.0
      %7980 = vmatpush1.msra.mxu0 %v7923
      %7981 = vmatprep.subr.mxu0 0.0
      %7982 = vmatpush1.msra.mxu0 %v7925
      %7983 = vmatprep.subr.mxu0 0.0
      %7984 = vmatpush1.msra.mxu0 %v7927
      %7985 = vmatprep.subr.mxu0 0.0
      %7986 = vmatpush1.msra.mxu0 %v7929
      %7987 = vmatprep.subr.mxu0 0.0
      %7988 = vmatpush1.msra.mxu0 %v7931
      %7989 = vmatprep.subr.mxu0 0.0
      %7990 = vmatpush1.msra.mxu0 0.0
      %7991 = vmatprep.subr.mxu0 0.0
      %7992 = vmatpush1.msra.mxu0 0.0
      %7993 = vmatprep.subr.mxu0 0.0
      %7994 = vmatpush1.msra.mxu0 0.0
      %7995 = vmatprep.subr.mxu0 0.0
      %7996 = vmatpush1.msra.mxu0 0.0
      %7997 = vmatprep.subr.mxu0 0.0
      %7998 = vmatpush1.msra.mxu0 0.0
      %7999 = vmatprep.subr.mxu0 0.0
      %8000 = vmatpush1.msra.mxu0 0.0
      %8001 = vmatprep.subr.mxu0 0.0
      %8002 = vmatpush1.msra.mxu0 0.0
      %8003 = vmatprep.subr.mxu0 0.0
      %8004 = vmatpush1.msra.mxu0 0.0
      %8005 = vmatprep.subr.mxu0 0.0
      %8006 = vmatpush1.msra.mxu0 0.0
      %8007 = vmatprep.subr.mxu0 0.0
      %8008 = vmatpush1.msra.mxu0 0.0
      %8009 = vmatprep.subr.mxu0 0.0
      %8010 = vmatpush1.msra.mxu0 0.0
      %8011 = vmatprep.subr.mxu0 0.0
      %8012 = vmatpush1.msra.mxu0 0.0
      %8013 = vmatprep.subr.mxu0 0.0
      %8014 = vmatpush1.msra.mxu0 0.0
      %8015 = vmatprep.subr.mxu0 0.0
      %8016 = vmatpush1.msra.mxu0 0.0
      %8017 = vmatprep.subr.mxu0 0.0
      %8018 = vmatpush1.msra.mxu0 0.0
      %8019 = vmatprep.subr.mxu0 0.0
      %8020 = vmatpush1.msra.mxu0 0.0
      %8021 = vmatprep.subr.mxu0 0.0
      %8022 = vmatpush1.msra.mxu0 0.0
      %8023 = vmatprep.subr.mxu0 0.0
      %8024 = vmatpush1.msra.mxu0 0.0
      %8025 = vmatprep.subr.mxu0 0.0
      %8026 = vmatpush1.msra.mxu0 0.0
      %8027 = vmatprep.subr.mxu0 0.0
      %8028 = vmatpush1.msra.mxu0 0.0
      %8029 = vmatprep.subr.mxu0 0.0
      %8030 = vmatpush1.msra.mxu0 0.0
      %8031 = vmatprep.subr.mxu0 0.0
      %8032 = vmatpush1.msra.mxu0 0.0
      %8033 = vmatprep.subr.mxu0 0.0
      %8034 = vmatpush1.msra.mxu0 0.0
      %8035 = vmatprep.subr.mxu0 0.0
      %8036 = vmatpush1.msra.mxu0 0.0
      %8037 = vmatprep.mubr.f32.mxu0 0.0
      %8038 = vmatmul.mubr.f32.gmra.mrb[0].mxu0 %v7941
      %v8039 = vpop.f32.mrb[0].mxu0
      %v8040 = vadd.f32 0.0, %v8039
      %v8041 = vpop.f32.mrb[0].mxu0
      %8042 = vmatprep.mubr.f32.mxu0 0.0
      %8043 = vmatmul.mubr.f32.gmra.mrb[0].mxu0 %v7944
      %v8044 = vpop.f32.mrb[0].mxu0
      %v8045 = vadd.f32 0.0, %v8044
      %v8046 = vpop.f32.mrb[0].mxu0
      %8047 = vmatprep.mubr.f32.mxu0 0.0
      %8048 = vmatmul.mubr.f32.gmra.mrb[0].mxu0 %v7947
      %v8049 = vpop.f32.mrb[0].mxu0
      %v8050 = vadd.f32 0.0, %v8049
      %v8051 = vpop.f32.mrb[0].mxu0
      %8052 = vmatprep.mubr.f32.mxu0 0.0
      %8053 = vmatmul.mubr.f32.gmra.mrb[0].mxu0 %v7950
      %v8054 = vpop.f32.mrb[0].mxu0
      %v8055 = vadd.f32 0.0, %v8054
      %v8056 = vpop.f32.mrb[0].mxu0
      %8057 = vmatprep.mubr.f32.mxu0 0.0
      %8058 = vmatmul.mubr.f32.gmra.mrb[0].mxu0 %v7953
      %v8059 = vpop.f32.mrb[0].mxu0
      %v8060 = vadd.f32 0.0, %v8059
      %v8061 = vpop.f32.mrb[0].mxu0
      %8062 = vmatprep.mubr.f32.mxu0 0.0
      %8063 = vmatmul.mubr.f32.gmra.mrb[0].mxu0 %v7956
      %v8064 = vpop.f32.mrb[0].mxu0
      %v8065 = vadd.f32 0.0, %v8064
      %v8066 = vpop.f32.mrb[0].mxu0
      %8067 = vmatprep.mubr.f32.mxu0 0.0
      %8068 = vmatmul.mubr.f32.gmra.mrb[0].mxu0 %v7959
      %v8069 = vpop.f32.mrb[0].mxu0
      %v8070 = vadd.f32 0.0, %v8069
      %v8071 = vpop.f32.mrb[0].mxu0
      %8072 = vmatprep.mubr.f32.mxu0 0.0
      %8073 = vmatmul.mubr.f32.gmra.mrb[0].mxu0 %v7962
      %v8074 = vpop.f32.mrb[0].mxu0
      %v8075 = vadd.f32 0.0, %v8074
      %v8076 = vpop.f32.mrb[0].mxu0
      %8077 = vmatprep.mubr.f32.mxu0 0.0
      %8078 = vmatmul.mubr.f32.gmra.mrb[0].mxu0 %v7965
      %v8079 = vpop.f32.mrb[0].mxu0
      %v8080 = vadd.f32 0.0, %v8079
      %v8081 = vpop.f32.mrb[0].mxu0
      %8082 = vmatprep.mubr.f32.mxu0 0.0
      %8083 = vmatmul.mubr.f32.gmra.mrb[0].mxu0 %v7968
      %v8084 = vpop.f32.mrb[0].mxu0
      %v8085 = vadd.f32 0.0, %v8084
      %v8086 = vpop.f32.mrb[0].mxu0
      %8087 = vmatprep.mubr.f32.mxu0 0.0
      %8088 = vmatmul.mubr.f32.gmra.mrb[0].mxu0 %v7971
      %v8089 = vpop.f32.mrb[0].mxu0
      %v8090 = vadd.f32 0.0, %v8089
      %v8091 = vpop.f32.mrb[0].mxu0
      %8092 = vdwg.mxu0
      %v8093 = vadd.f32 %v7893, %v8040
      %v8094 = vadd.f32 %v7894, %v8045
      %v8095 = vadd.f32 %v7895, %v8050
      %v8096 = vadd.f32 %v7896, %v8055
      %v8097 = vadd.f32 %v7897, %v8060
      %v8098 = vadd.f32 %v7898, %v8065
      %v8099 = vadd.f32 %v7899, %v8070
      %v8100 = vadd.f32 %v7900, %v8075
      %v8101 = vadd.f32 %v7901, %v8080
      %v8102 = vadd.f32 %v7902, %v8085
      %v8103 = vadd.f32 %v7903, %v8090
      %s8104 = scalar_lea.vmem %s14, 616
      %v8105 = vld [vmem:[%s8104] sm:$0xff]
      %v8106 = vld [vmem:[%s8104 + $0x8] sm:$0xff]
      %v8107 = vld [vmem:[%s8104 + $0x10] sm:$0xff]
      %v8108 = vld [vmem:[%s8104 + $0x18] sm:$0xff]
      %v8109 = vld [vmem:[%s8104 + $0x20] sm:$0xff]
      %v8110 = vld [vmem:[%s8104 + $0x28] sm:$0xff]
      %v8111 = vld [vmem:[%s8104 + $0x30] sm:$0xff]
      %v8112 = vld [vmem:[%s8104 + $0x38] sm:$0xff]
      %v8113 = vld [vmem:[%s8104 + $0x40] sm:$0xff]
      %v8114 = vld [vmem:[%s8104 + $0x48] sm:$0xff]
      %v8115 = vld [vmem:[%s8104 + $0x50] sm:$0xf]
      %8116 = vrot.lane.b32.xlu0 %v6701, 113
      %v8117 = vpop.permute.xlu0 %8116
      %8118 = vrot.lane.b32.xlu0 %v6702, 113
      %v8119 = vpop.permute.xlu0 %8118
      %8120 = vrot.lane.b32.xlu0 %v6703, 113
      %v8121 = vpop.permute.xlu0 %8120
      %8122 = vrot.lane.b32.xlu0 %v6704, 113
      %v8123 = vpop.permute.xlu0 %8122
      %8124 = vrot.lane.b32.xlu0 %v6705, 113
      %v8125 = vpop.permute.xlu0 %8124
      %8126 = vrot.lane.b32.xlu0 %v6706, 113
      %v8127 = vpop.permute.xlu0 %8126
      %8128 = vrot.lane.b32.xlu0 %v6707, 113
      %v8129 = vpop.permute.xlu0 %8128
      %8130 = vrot.lane.b32.xlu0 %v6708, 113
      %v8131 = vpop.permute.xlu0 %8130
      %v8141 = vsel %vm6731, %v8105, 0
      %v8144 = vsel %vm6731, %v8106, 0
      %v8147 = vsel %vm6731, %v8107, 0
      %v8150 = vsel %vm6731, %v8108, 0
      %v8153 = vsel %vm6731, %v8109, 0
      %v8156 = vsel %vm6731, %v8110, 0
      %v8159 = vsel %vm6731, %v8111, 0
      %v8162 = vsel %vm6731, %v8112, 0
      %v8165 = vsel %vm6731, %v8113, 0
      %v8168 = vsel %vm6731, %v8114, 0
      %v8171 = vsel %vm6731, %v8115, 0
      %8173 = vmatprep.subr.mxu0 0.0
      %8174 = vmatpush1.msra.mxu0 %v8117
      %8175 = vmatprep.subr.mxu0 0.0
      %8176 = vmatpush1.msra.mxu0 %v8119
      %8177 = vmatprep.subr.mxu0 0.0
      %8178 = vmatpush1.msra.mxu0 %v8121
      %8179 = vmatprep.subr.mxu0 0.0
      %8180 = vmatpush1.msra.mxu0 %v8123
      %8181 = vmatprep.subr.mxu0 0.0
      %8182 = vmatpush1.msra.mxu0 %v8125
      %8183 = vmatprep.subr.mxu0 0.0
      %8184 = vmatpush1.msra.mxu0 %v8127
      %8185 = vmatprep.subr.mxu0 0.0
      %8186 = vmatpush1.msra.mxu0 %v8129
      %8187 = vmatprep.subr.mxu0 0.0
      %8188 = vmatpush1.msra.mxu0 %v8131
      %8189 = vmatprep.subr.mxu0 0.0
      %8190 = vmatpush1.msra.mxu0 0.0
      %8191 = vmatprep.subr.mxu0 0.0
      %8192 = vmatpush1.msra.mxu0 0.0
      %8193 = vmatprep.subr.mxu0 0.0
      %8194 = vmatpush1.msra.mxu0 0.0
      %8195 = vmatprep.subr.mxu0 0.0
      %8196 = vmatpush1.msra.mxu0 0.0
      %8197 = vmatprep.subr.mxu0 0.0
      %8198 = vmatpush1.msra.mxu0 0.0
      %8199 = vmatprep.subr.mxu0 0.0
      %8200 = vmatpush1.msra.mxu0 0.0
      %8201 = vmatprep.subr.mxu0 0.0
      %8202 = vmatpush1.msra.mxu0 0.0
      %8203 = vmatprep.subr.mxu0 0.0
      %8204 = vmatpush1.msra.mxu0 0.0
      %8205 = vmatprep.subr.mxu0 0.0
      %8206 = vmatpush1.msra.mxu0 0.0
      %8207 = vmatprep.subr.mxu0 0.0
      %8208 = vmatpush1.msra.mxu0 0.0
      %8209 = vmatprep.subr.mxu0 0.0
      %8210 = vmatpush1.msra.mxu0 0.0
      %8211 = vmatprep.subr.mxu0 0.0
      %8212 = vmatpush1.msra.mxu0 0.0
      %8213 = vmatprep.subr.mxu0 0.0
      %8214 = vmatpush1.msra.mxu0 0.0
      %8215 = vmatprep.subr.mxu0 0.0
      %8216 = vmatpush1.msra.mxu0 0.0
      %8217 = vmatprep.subr.mxu0 0.0
      %8218 = vmatpush1.msra.mxu0 0.0
      %8219 = vmatprep.subr.mxu0 0.0
      %8220 = vmatpush1.msra.mxu0 0.0
      %8221 = vmatprep.subr.mxu0 0.0
      %8222 = vmatpush1.msra.mxu0 0.0
      %8223 = vmatprep.subr.mxu0 0.0
      %8224 = vmatpush1.msra.mxu0 0.0
      %8225 = vmatprep.subr.mxu0 0.0
      %8226 = vmatpush1.msra.mxu0 0.0
      %8227 = vmatprep.subr.mxu0 0.0
      %8228 = vmatpush1.msra.mxu0 0.0
      %8229 = vmatprep.subr.mxu0 0.0
      %8230 = vmatpush1.msra.mxu0 0.0
      %8231 = vmatprep.subr.mxu0 0.0
      %8232 = vmatpush1.msra.mxu0 0.0
      %8233 = vmatprep.subr.mxu0 0.0
      %8234 = vmatpush1.msra.mxu0 0.0
      %8235 = vmatprep.subr.mxu0 0.0
      %8236 = vmatpush1.msra.mxu0 0.0
      %8237 = vmatprep.mubr.f32.mxu0 0.0
      %8238 = vmatmul.mubr.f32.gmra.mrb[0].mxu0 %v8141
      %v8239 = vpop.f32.mrb[0].mxu0
      %v8240 = vadd.f32 0.0, %v8239
      %v8241 = vpop.f32.mrb[0].mxu0
      %8242 = vmatprep.mubr.f32.mxu0 0.0
      %8243 = vmatmul.mubr.f32.gmra.mrb[0].mxu0 %v8144
      %v8244 = vpop.f32.mrb[0].mxu0
      %v8245 = vadd.f32 0.0, %v8244
      %v8246 = vpop.f32.mrb[0].mxu0
      %8247 = vmatprep.mubr.f32.mxu0 0.0
      %8248 = vmatmul.mubr.f32.gmra.mrb[0].mxu0 %v8147
      %v8249 = vpop.f32.mrb[0].mxu0
      %v8250 = vadd.f32 0.0, %v8249
      %v8251 = vpop.f32.mrb[0].mxu0
      %8252 = vmatprep.mubr.f32.mxu0 0.0
      %8253 = vmatmul.mubr.f32.gmra.mrb[0].mxu0 %v8150
      %v8254 = vpop.f32.mrb[0].mxu0
      %v8255 = vadd.f32 0.0, %v8254
      %v8256 = vpop.f32.mrb[0].mxu0
      %8257 = vmatprep.mubr.f32.mxu0 0.0
      %8258 = vmatmul.mubr.f32.gmra.mrb[0].mxu0 %v8153
      %v8259 = vpop.f32.mrb[0].mxu0
      %v8260 = vadd.f32 0.0, %v8259
      %v8261 = vpop.f32.mrb[0].mxu0
      %8262 = vmatprep.mubr.f32.mxu0 0.0
      %8263 = vmatmul.mubr.f32.gmra.mrb[0].mxu0 %v8156
      %v8264 = vpop.f32.mrb[0].mxu0
      %v8265 = vadd.f32 0.0, %v8264
      %v8266 = vpop.f32.mrb[0].mxu0
      %8267 = vmatprep.mubr.f32.mxu0 0.0
      %8268 = vmatmul.mubr.f32.gmra.mrb[0].mxu0 %v8159
      %v8269 = vpop.f32.mrb[0].mxu0
      %v8270 = vadd.f32 0.0, %v8269
      %v8271 = vpop.f32.mrb[0].mxu0
      %8272 = vmatprep.mubr.f32.mxu0 0.0
      %8273 = vmatmul.mubr.f32.gmra.mrb[0].mxu0 %v8162
      %v8274 = vpop.f32.mrb[0].mxu0
      %v8275 = vadd.f32 0.0, %v8274
      %v8276 = vpop.f32.mrb[0].mxu0
      %8277 = vmatprep.mubr.f32.mxu0 0.0
      %8278 = vmatmul.mubr.f32.gmra.mrb[0].mxu0 %v8165
      %v8279 = vpop.f32.mrb[0].mxu0
      %v8280 = vadd.f32 0.0, %v8279
      %v8281 = vpop.f32.mrb[0].mxu0
      %8282 = vmatprep.mubr.f32.mxu0 0.0
      %8283 = vmatmul.mubr.f32.gmra.mrb[0].mxu0 %v8168
      %v8284 = vpop.f32.mrb[0].mxu0
      %v8285 = vadd.f32 0.0, %v8284
      %v8286 = vpop.f32.mrb[0].mxu0
      %8287 = vmatprep.mubr.f32.mxu0 0.0
      %8288 = vmatmul.mubr.f32.gmra.mrb[0].mxu0 %v8171
      %v8289 = vpop.f32.mrb[0].mxu0
      %v8290 = vadd.f32 0.0, %v8289
      %v8291 = vpop.f32.mrb[0].mxu0
      %8292 = vdwg.mxu0
      %v8293 = vadd.f32 %v8093, %v8240
      %v8294 = vadd.f32 %v8094, %v8245
      %v8295 = vadd.f32 %v8095, %v8250
      %v8296 = vadd.f32 %v8096, %v8255
      %v8297 = vadd.f32 %v8097, %v8260
      %v8298 = vadd.f32 %v8098, %v8265
      %v8299 = vadd.f32 %v8099, %v8270
      %v8300 = vadd.f32 %v8100, %v8275
      %v8301 = vadd.f32 %v8101, %v8280
      %v8302 = vadd.f32 %v8102, %v8285
      %v8303 = vadd.f32 %v8103, %v8290
      %s8304 = scalar_lea.vmem %s14, 704
      %v8305 = vld [vmem:[%s8304] sm:$0xff]
      %v8306 = vld [vmem:[%s8304 + $0x8] sm:$0xff]
      %v8307 = vld [vmem:[%s8304 + $0x10] sm:$0xff]
      %v8308 = vld [vmem:[%s8304 + $0x18] sm:$0xff]
      %v8309 = vld [vmem:[%s8304 + $0x20] sm:$0xff]
      %v8310 = vld [vmem:[%s8304 + $0x28] sm:$0xff]
      %v8311 = vld [vmem:[%s8304 + $0x30] sm:$0xff]
      %v8312 = vld [vmem:[%s8304 + $0x38] sm:$0xff]
      %v8313 = vld [vmem:[%s8304 + $0x40] sm:$0xff]
      %v8314 = vld [vmem:[%s8304 + $0x48] sm:$0xff]
      %v8315 = vld [vmem:[%s8304 + $0x50] sm:$0xf]
      %8316 = vrot.lane.b32.xlu0 %v6701, 112
      %v8317 = vpop.permute.xlu0 %8316
      %8318 = vrot.lane.b32.xlu0 %v6702, 112
      %v8319 = vpop.permute.xlu0 %8318
      %8320 = vrot.lane.b32.xlu0 %v6703, 112
      %v8321 = vpop.permute.xlu0 %8320
      %8322 = vrot.lane.b32.xlu0 %v6704, 112
      %v8323 = vpop.permute.xlu0 %8322
      %8324 = vrot.lane.b32.xlu0 %v6705, 112
      %v8325 = vpop.permute.xlu0 %8324
      %8326 = vrot.lane.b32.xlu0 %v6706, 112
      %v8327 = vpop.permute.xlu0 %8326
      %8328 = vrot.lane.b32.xlu0 %v6707, 112
      %v8329 = vpop.permute.xlu0 %8328
      %8330 = vrot.lane.b32.xlu0 %v6708, 112
      %v8331 = vpop.permute.xlu0 %8330
      %v8341 = vsel %vm6731, %v8305, 0
      %v8344 = vsel %vm6731, %v8306, 0
      %v8347 = vsel %vm6731, %v8307, 0
      %v8350 = vsel %vm6731, %v8308, 0
      %v8353 = vsel %vm6731, %v8309, 0
      %v8356 = vsel %vm6731, %v8310, 0
      %v8359 = vsel %vm6731, %v8311, 0
      %v8362 = vsel %vm6731, %v8312, 0
      %v8365 = vsel %vm6731, %v8313, 0
      %v8368 = vsel %vm6731, %v8314, 0
      %v8371 = vsel %vm6731, %v8315, 0
      %8373 = vmatprep.subr.mxu0 0.0
      %8374 = vmatpush1.msra.mxu0 %v8317
      %8375 = vmatprep.subr.mxu0 0.0
      %8376 = vmatpush1.msra.mxu0 %v8319
      %8377 = vmatprep.subr.mxu0 0.0
      %8378 = vmatpush1.msra.mxu0 %v8321
      %8379 = vmatprep.subr.mxu0 0.0
      %8380 = vmatpush1.msra.mxu0 %v8323
      %8381 = vmatprep.subr.mxu0 0.0
      %8382 = vmatpush1.msra.mxu0 %v8325
      %8383 = vmatprep.subr.mxu0 0.0
      %8384 = vmatpush1.msra.mxu0 %v8327
      %8385 = vmatprep.subr.mxu0 0.0
      %8386 = vmatpush1.msra.mxu0 %v8329
      %8387 = vmatprep.subr.mxu0 0.0
      %8388 = vmatpush1.msra.mxu0 %v8331
      %8389 = vmatprep.subr.mxu0 0.0
      %8390 = vmatpush1.msra.mxu0 0.0
      %8391 = vmatprep.subr.mxu0 0.0
      %8392 = vmatpush1.msra.mxu0 0.0
      %8393 = vmatprep.subr.mxu0 0.0
      %8394 = vmatpush1.msra.mxu0 0.0
      %8395 = vmatprep.subr.mxu0 0.0
      %8396 = vmatpush1.msra.mxu0 0.0
      %8397 = vmatprep.subr.mxu0 0.0
      %8398 = vmatpush1.msra.mxu0 0.0
      %8399 = vmatprep.subr.mxu0 0.0
      %8400 = vmatpush1.msra.mxu0 0.0
      %8401 = vmatprep.subr.mxu0 0.0
      %8402 = vmatpush1.msra.mxu0 0.0
      %8403 = vmatprep.subr.mxu0 0.0
      %8404 = vmatpush1.msra.mxu0 0.0
      %8405 = vmatprep.subr.mxu0 0.0
      %8406 = vmatpush1.msra.mxu0 0.0
      %8407 = vmatprep.subr.mxu0 0.0
      %8408 = vmatpush1.msra.mxu0 0.0
      %8409 = vmatprep.subr.mxu0 0.0
      %8410 = vmatpush1.msra.mxu0 0.0
      %8411 = vmatprep.subr.mxu0 0.0
      %8412 = vmatpush1.msra.mxu0 0.0
      %8413 = vmatprep.subr.mxu0 0.0
      %8414 = vmatpush1.msra.mxu0 0.0
      %8415 = vmatprep.subr.mxu0 0.0
      %8416 = vmatpush1.msra.mxu0 0.0
      %8417 = vmatprep.subr.mxu0 0.0
      %8418 = vmatpush1.msra.mxu0 0.0
      %8419 = vmatprep.subr.mxu0 0.0
      %8420 = vmatpush1.msra.mxu0 0.0
      %8421 = vmatprep.subr.mxu0 0.0
      %8422 = vmatpush1.msra.mxu0 0.0
      %8423 = vmatprep.subr.mxu0 0.0
      %8424 = vmatpush1.msra.mxu0 0.0
      %8425 = vmatprep.subr.mxu0 0.0
      %8426 = vmatpush1.msra.mxu0 0.0
      %8427 = vmatprep.subr.mxu0 0.0
      %8428 = vmatpush1.msra.mxu0 0.0
      %8429 = vmatprep.subr.mxu0 0.0
      %8430 = vmatpush1.msra.mxu0 0.0
      %8431 = vmatprep.subr.mxu0 0.0
      %8432 = vmatpush1.msra.mxu0 0.0
      %8433 = vmatprep.subr.mxu0 0.0
      %8434 = vmatpush1.msra.mxu0 0.0
      %8435 = vmatprep.subr.mxu0 0.0
      %8436 = vmatpush1.msra.mxu0 0.0
      %8437 = vmatprep.mubr.f32.mxu0 0.0
      %8438 = vmatmul.mubr.f32.gmra.mrb[0].mxu0 %v8341
      %v8439 = vpop.f32.mrb[0].mxu0
      %v8440 = vadd.f32 0.0, %v8439
      %v8441 = vpop.f32.mrb[0].mxu0
      %8442 = vmatprep.mubr.f32.mxu0 0.0
      %8443 = vmatmul.mubr.f32.gmra.mrb[0].mxu0 %v8344
      %v8444 = vpop.f32.mrb[0].mxu0
      %v8445 = vadd.f32 0.0, %v8444
      %v8446 = vpop.f32.mrb[0].mxu0
      %8447 = vmatprep.mubr.f32.mxu0 0.0
      %8448 = vmatmul.mubr.f32.gmra.mrb[0].mxu0 %v8347
      %v8449 = vpop.f32.mrb[0].mxu0
      %v8450 = vadd.f32 0.0, %v8449
      %v8451 = vpop.f32.mrb[0].mxu0
      %8452 = vmatprep.mubr.f32.mxu0 0.0
      %8453 = vmatmul.mubr.f32.gmra.mrb[0].mxu0 %v8350
      %v8454 = vpop.f32.mrb[0].mxu0
      %v8455 = vadd.f32 0.0, %v8454
      %v8456 = vpop.f32.mrb[0].mxu0
      %8457 = vmatprep.mubr.f32.mxu0 0.0
      %8458 = vmatmul.mubr.f32.gmra.mrb[0].mxu0 %v8353
      %v8459 = vpop.f32.mrb[0].mxu0
      %v8460 = vadd.f32 0.0, %v8459
      %v8461 = vpop.f32.mrb[0].mxu0
      %8462 = vmatprep.mubr.f32.mxu0 0.0
      %8463 = vmatmul.mubr.f32.gmra.mrb[0].mxu0 %v8356
      %v8464 = vpop.f32.mrb[0].mxu0
      %v8465 = vadd.f32 0.0, %v8464
      %v8466 = vpop.f32.mrb[0].mxu0
      %8467 = vmatprep.mubr.f32.mxu0 0.0
      %8468 = vmatmul.mubr.f32.gmra.mrb[0].mxu0 %v8359
      %v8469 = vpop.f32.mrb[0].mxu0
      %v8470 = vadd.f32 0.0, %v8469
      %v8471 = vpop.f32.mrb[0].mxu0
      %8472 = vmatprep.mubr.f32.mxu0 0.0
      %8473 = vmatmul.mubr.f32.gmra.mrb[0].mxu0 %v8362
      %v8474 = vpop.f32.mrb[0].mxu0
      %v8475 = vadd.f32 0.0, %v8474
      %v8476 = vpop.f32.mrb[0].mxu0
      %8477 = vmatprep.mubr.f32.mxu0 0.0
      %8478 = vmatmul.mubr.f32.gmra.mrb[0].mxu0 %v8365
      %v8479 = vpop.f32.mrb[0].mxu0
      %v8480 = vadd.f32 0.0, %v8479
      %v8481 = vpop.f32.mrb[0].mxu0
      %8482 = vmatprep.mubr.f32.mxu0 0.0
      %8483 = vmatmul.mubr.f32.gmra.mrb[0].mxu0 %v8368
      %v8484 = vpop.f32.mrb[0].mxu0
      %v8485 = vadd.f32 0.0, %v8484
      %v8486 = vpop.f32.mrb[0].mxu0
      %8487 = vmatprep.mubr.f32.mxu0 0.0
      %8488 = vmatmul.mubr.f32.gmra.mrb[0].mxu0 %v8371
      %v8489 = vpop.f32.mrb[0].mxu0
      %v8490 = vadd.f32 0.0, %v8489
      %v8491 = vpop.f32.mrb[0].mxu0
      %8492 = vdwg.mxu0
      %v8493 = vadd.f32 %v8293, %v8440
      %v8494 = vadd.f32 %v8294, %v8445
      %v8495 = vadd.f32 %v8295, %v8450
      %v8496 = vadd.f32 %v8296, %v8455
      %v8497 = vadd.f32 %v8297, %v8460
      %v8498 = vadd.f32 %v8298, %v8465
      %v8499 = vadd.f32 %v8299, %v8470
      %v8500 = vadd.f32 %v8300, %v8475
      %v8501 = vadd.f32 %v8301, %v8480
      %v8502 = vadd.f32 %v8302, %v8485
      %v8503 = vadd.f32 %v8303, %v8490
      %v8504 = vmax.f32 %v8493, 0.0
      %v8505 = vmax.f32 %v8494, 0.0
      %v8506 = vmax.f32 %v8495, 0.0
      %v8507 = vmax.f32 %v8496, 0.0
      %v8508 = vmax.f32 %v8497, 0.0
      %v8509 = vmax.f32 %v8498, 0.0
      %v8510 = vmax.f32 %v8499, 0.0
      %v8511 = vmax.f32 %v8500, 0.0
      %v8512 = vmax.f32 %v8501, 0.0
      %v8513 = vmax.f32 %v8502, 0.0
      %v8514 = vmax.f32 %v8503, 0.0
      %v8515 = vld [vmem:[%s16] sm:$0xff]
      %v8516 = vld [vmem:[%s16 + $0x8] sm:$0xff]
      %v8517 = vld [vmem:[%s16 + $0x10] sm:$0xff]
      %v8518 = vld [vmem:[%s16 + $0x18] sm:$0xff]
      %v8519 = vld [vmem:[%s16 + $0x20] sm:$0xff]
      %v8520 = vld [vmem:[%s17] sm:$0xff]
      %v8521 = vld [vmem:[%s17 + $0x8] sm:$0xff]
      %v8522 = vld [vmem:[%s17 + $0x10] sm:$0xff]
      %v8523 = vld [vmem:[%s17 + $0x18] sm:$0xff]
      %v8524 = vld [vmem:[%s17 + $0x20] sm:$0xff]
      %vm8525 = vcmask 687104
      %v8527 = vsel %vm8525, %v8515, 0
      %v8530 = vsel %vm8525, %v8516, 0
      %v8533 = vsel %vm8525, %v8517, 0
      %v8536 = vsel %vm8525, %v8518, 0
      %v8539 = vsel %vm8525, %v8519, 0
      %vm8541 = vcmask 1043456
      %v8543 = vsel %vm8541, %v8514, 0
      %8545 = vmatprep.subr.mxu0 0.0
      %8546 = vmatpush1.msra.mxu0 %v8504
      %8547 = vmatprep.subr.mxu0 0.0
      %8548 = vmatpush1.msra.mxu0 %v8505
      %8549 = vmatprep.subr.mxu0 0.0
      %8550 = vmatpush1.msra.mxu0 %v8506
      %8551 = vmatprep.subr.mxu0 0.0
      %8552 = vmatpush1.msra.mxu0 %v8507
      %8553 = vmatprep.subr.mxu0 0.0
      %8554 = vmatpush1.msra.mxu0 %v8508
      %8555 = vmatprep.subr.mxu0 0.0
      %8556 = vmatpush1.msra.mxu0 %v8509
      %8557 = vmatprep.subr.mxu0 0.0
      %8558 = vmatpush1.msra.mxu0 %v8510
      %8559 = vmatprep.subr.mxu0 0.0
      %8560 = vmatpush1.msra.mxu0 %v8511
      %8561 = vmatprep.subr.mxu0 0.0
      %8562 = vmatpush1.msra.mxu0 %v8512
      %8563 = vmatprep.subr.mxu0 0.0
      %8564 = vmatpush1.msra.mxu0 %v8513
      %8565 = vmatprep.subr.mxu0 0.0
      %8566 = vmatpush1.msra.mxu0 %v8543
      %8567 = vmatprep.subr.mxu0 0.0
      %8568 = vmatpush1.msra.mxu0 0.0
      %8569 = vmatprep.subr.mxu0 0.0
      %8570 = vmatpush1.msra.mxu0 0.0
      %8571 = vmatprep.subr.mxu0 0.0
      %8572 = vmatpush1.msra.mxu0 0.0
      %8573 = vmatprep.subr.mxu0 0.0
      %8574 = vmatpush1.msra.mxu0 0.0
      %8575 = vmatprep.subr.mxu0 0.0
      %8576 = vmatpush1.msra.mxu0 0.0
      %8577 = vmatprep.subr.mxu0 0.0
      %8578 = vmatpush1.msra.mxu0 0.0
      %8579 = vmatprep.subr.mxu0 0.0
      %8580 = vmatpush1.msra.mxu0 0.0
      %8581 = vmatprep.subr.mxu0 0.0
      %8582 = vmatpush1.msra.mxu0 0.0
      %8583 = vmatprep.subr.mxu0 0.0
      %8584 = vmatpush1.msra.mxu0 0.0
      %8585 = vmatprep.subr.mxu0 0.0
      %8586 = vmatpush1.msra.mxu0 0.0
      %8587 = vmatprep.subr.mxu0 0.0
      %8588 = vmatpush1.msra.mxu0 0.0
      %8589 = vmatprep.subr.mxu0 0.0
      %8590 = vmatpush1.msra.mxu0 0.0
      %8591 = vmatprep.subr.mxu0 0.0
      %8592 = vmatpush1.msra.mxu0 0.0
      %8593 = vmatprep.subr.mxu0 0.0
      %8594 = vmatpush1.msra.mxu0 0.0
      %8595 = vmatprep.subr.mxu0 0.0
      %8596 = vmatpush1.msra.mxu0 0.0
      %8597 = vmatprep.subr.mxu0 0.0
      %8598 = vmatpush1.msra.mxu0 0.0
      %8599 = vmatprep.subr.mxu0 0.0
      %8600 = vmatpush1.msra.mxu0 0.0
      %8601 = vmatprep.subr.mxu0 0.0
      %8602 = vmatpush1.msra.mxu0 0.0
      %8603 = vmatprep.subr.mxu0 0.0
      %8604 = vmatpush1.msra.mxu0 0.0
      %8605 = vmatprep.subr.mxu0 0.0
      %8606 = vmatpush1.msra.mxu0 0.0
      %8607 = vmatprep.subr.mxu0 0.0
      %8608 = vmatpush1.msra.mxu0 0.0
      %8609 = vmatprep.mubr.f32.mxu0 0.0
      %8610 = vmatmul.mubr.f32.gmra.mrb[0].mxu0 %v8527
      %v8611 = vpop.f32.mrb[0].mxu0
      %v8612 = vadd.f32 %v8520, %v8611
      %v8613 = vpop.f32.mrb[0].mxu0
      %8614 = vmatprep.mubr.f32.mxu0 0.0
      %8615 = vmatmul.mubr.f32.gmra.mrb[0].mxu0 %v8530
      %v8616 = vpop.f32.mrb[0].mxu0
      %v8617 = vadd.f32 %v8521, %v8616
      %v8618 = vpop.f32.mrb[0].mxu0
      %8619 = vmatprep.mubr.f32.mxu0 0.0
      %8620 = vmatmul.mubr.f32.gmra.mrb[0].mxu0 %v8533
      %v8621 = vpop.f32.mrb[0].mxu0
      %v8622 = vadd.f32 %v8522, %v8621
      %v8623 = vpop.f32.mrb[0].mxu0
      %8624 = vmatprep.mubr.f32.mxu0 0.0
      %8625 = vmatmul.mubr.f32.gmra.mrb[0].mxu0 %v8536
      %v8626 = vpop.f32.mrb[0].mxu0
      %v8627 = vadd.f32 %v8523, %v8626
      %v8628 = vpop.f32.mrb[0].mxu0
      %8629 = vmatprep.mubr.f32.mxu0 0.0
      %8630 = vmatmul.mubr.f32.gmra.mrb[0].mxu0 %v8539
      %v8631 = vpop.f32.mrb[0].mxu0
      %v8632 = vadd.f32 %v8524, %v8631
      %v8633 = vpop.f32.mrb[0].mxu0
      %8634 = vdwg.mxu0
      %vm8635 = vcmask 7168
      %8636 = vst.msk [vmem:[%s572] sm:$0xff] %vm8635, %v8612
      %8637 = vst.msk [vmem:[%s572 + $0x8] sm:$0xff] %vm8635, %v8617
      %8638 = vst.msk [vmem:[%s572 + $0x10] sm:$0xff] %vm8635, %v8622
      %8639 = vst.msk [vmem:[%s572 + $0x18] sm:$0xff] %vm8635, %v8627
      %8640 = vst.msk [vmem:[%s572 + $0x20] sm:$0xff] %vm8635, %v8632
      %p8641 = scmp.lt.s32.totalorder %s29, 1
      %s8642 = scalar_select %p8641, %s29, 1
      %s8643 = smul.addr %s8642, 5
      %s8644 = smul.addr %s8643, 8
      %s8645 = scalar_lea.vmem %s18, %s8644
      // Predicated region
      $region93: #{lenet_forward.1} parent=91 // pred_check
        %p8646 = pneg %p430
      $region94: #{lenet_forward.1} parent=91 // pred_check_branch
        %8648 = sbr.rel (%p8646) target = $region96
      $region95: #{lenet_forward.1} parent=91 // pred_region
        _
      $region96: #{lenet_forward.1} parent=91 // pred_fallthru
        _
    $region92: #{lenet_forward.1} parent=5 // pred_fallthru
      _
    %p8649 = scmp.le.s32.totalorder 2, %s24
    // Predicated region
    $region97: #{lenet_forward.1} parent=5 // pred_check
      %p8650 = pneg %p8649
    $region98: #{lenet_forward.1} parent=5 // pred_check_branch
      %8652 = sbr.rel (%p8650) target = $region100
    $region99: #{lenet_forward.1} parent=5 // pred_region
      %s8653 = ssub.s32 %s24, 2
      // Predicated region
      $region101: #{lenet_forward.1} parent=99 // pred_check
        %p8654 = pneg %p436
      $region102: #{lenet_forward.1} parent=99 // pred_check_branch
        %8656 = sbr.rel (%p8654) target = $region104
      $region103: #{lenet_forward.1} parent=99 // pred_region
        %p8657 = scmp.lt.s32.totalorder %s30, 1
        %s8658 = scalar_select %p8657, %s30, 1
        %s8659 = smul.addr %s8658, 5
        %s8660 = smul.addr %s8659, 8
        %s8661 = scalar_lea.vmem %s18, %s8660
      $region104: #{lenet_forward.1} parent=99 // pred_fallthru
        _
    $region100: #{lenet_forward.1} parent=5 // pred_fallthru
      _
  $region6: #{lenet_forward.1} parent=0 // loop_footer
    %s28 = sadd.s32 1, %s24
  $region7: #{lenet_forward.1} parent=0 // loop_footer_branch
    %23 = sbr.rel target = $region3
  $region8: #{lenet_forward.1} parent=0 // loop_exit
    _

</llo_original>
